<compile_context>
chip_gen: v7x
topology: tpu7x:2x2x1
jax: 0.10.0
libtpu: 0.0.40
codegen_flags: <defaults>
</compile_context>

<pallas_src>
import numpy as np
import jax
import jax.numpy as jnp
from jax.experimental import pallas as pl
from jax.experimental.pallas import tpu as pltpu


# ---------------------------------------------------------------------------
# Helpers
# ---------------------------------------------------------------------------
def _round_up(x, m):
    return ((x + m - 1) // m) * m


def _padded_f32_bytes(shape):
    """f32 bytes of a VMEM-resident block after (8, 128) tiling padding."""
    dims = [int(d) for d in shape]
    dims[-1] = _round_up(dims[-1], 128)
    if len(dims) >= 2:
        dims[-2] = _round_up(dims[-2], 8)
    n = 1
    for d in dims:
        n *= d
    return 4 * n


def _layer_chain(l0, blocks):
    """Per-layer (L_in, P_out, Cin, Cout) for Conv1d(k=2,s=1,p=0)+MaxPool1d(2,2)."""
    chain = []
    L = l0
    for p in blocks:
        cin, cout = p["w0"].shape
        P = (L - 1) // 2                 # == floor((conv_len - 2)/2) + 1
        assert P >= 1 and 2 * P <= L - 1  # xe2 strided read stays in bounds
        chain.append((int(L), int(P), int(cin), int(cout)))
        L = P
    return chain


_FUSE_MIN_CIN = 128   # fuse conv taps into one K=2*Cin matmul when vreg-aligned


# ---------------------------------------------------------------------------
# Fused kernel (one grid step == full forward pass for `bblk` samples)
# ---------------------------------------------------------------------------
def _make_fused_kernel(chain, l0, bblk, out_classes):
    nl = len(chain)
    O = out_classes

    def kernel(*refs):
        x_ref = refs[0]                          # (bblk*L0, C0)  NLC, samples stacked on rows
        wrefs = refs[1:1 + 3 * nl]               # per layer: w0 (Cin,Cout), w1, b (1,Cout)
        wfc_ref = refs[1 + 3 * nl]               # (O, L_last, C_last)  lane dim = C_last
        fcb_ref = refs[2 + 3 * nl]               # (1, O)
        out_ref = refs[3 + 3 * nl]               # (bblk, O)
        pool_scr = refs[4 + 3 * nl:]             # nl-1 pooled-activation scratches

        lane = jax.lax.broadcasted_iota(jnp.int32, (1, O), 1)

        for s in range(bblk):                    # static unroll over the batch block
            src = x_ref
            base = s * l0
            pooled = None
            for i, (l_in, p_len, cin, cout) in enumerate(chain):
                w0 = wrefs[3 * i][...]
                w1 = wrefs[3 * i + 1][...]
                b = wrefs[3 * i + 2][...]

                # Even/odd conv phases via stride-2 sublane reads of the source
                # ref; the maxpool becomes a register max of the two phases, so
                # the full-length conv output is never materialized.
                xe = src[pl.ds(base + 0, p_len, stride=2), :]
                xo = src[pl.ds(base + 1, p_len, stride=2), :]
                xe2 = src[pl.ds(base + 2, p_len, stride=2), :]

                if cin >= _FUSE_MIN_CIN and cin % 128 == 0:
                    # Fused taps: one K=2*Cin matmul per phase (K=256 fills the
                    # v6e/v7x MXU); concat offsets are whole vregs -> free.
                    wcat = jnp.concatenate([w0, w1], axis=0)        # (2Cin, Cout)
                    ce = jnp.dot(jnp.concatenate([xe, xo], axis=1), wcat,
                                 preferred_element_type=jnp.float32)
                    co = jnp.dot(jnp.concatenate([xo, xe2], axis=1), wcat,
                                 preferred_element_type=jnp.float32)
                else:
                    # Small-Cin layers: keep the two-tap form (sub-vreg lane
                    # concat would cost a relayout comparable to the saved add).
                    ce = (jnp.dot(xe, w0, preferred_element_type=jnp.float32)
                          + jnp.dot(xo, w1, preferred_element_type=jnp.float32))
                    co = (jnp.dot(xo, w0, preferred_element_type=jnp.float32)
                          + jnp.dot(xe2, w1, preferred_element_type=jnp.float32))

                # (BN-folded bias) + ReLU + MaxPool, all in registers.
                pooled = jnp.maximum(jnp.maximum(ce, co) + b, 0.0)   # (P, Cout)
                if i < nl - 1:
                    pool_scr[i][...] = pooled
                    src = pool_scr[i]
                    base = 0

            # Final Linear.  wfc is (O, L_last, C_last): lane-exact and already
            # reordered for the PyTorch NCL flatten.  O=2 -> two VPU
            # multiply+reduce passes (no M=1 MXU matmuls).
            acc = fcb_ref[...]                                       # (1, O)
            for o in range(O):
                prod = pooled * wfc_ref[o]                           # (L_last, C_last)
                so = jnp.sum(jnp.sum(prod, axis=1, keepdims=True),
                             axis=0, keepdims=True)                  # (1, 1)
                acc = acc + jnp.where(lane == o, so, 0.0)
            out_ref[pl.ds(s, 1), :] = acc

    return kernel


# ---------------------------------------------------------------------------
# Wrapper around pallas_call
# ---------------------------------------------------------------------------
def cnn_forward(x_ncl, params, batch_block=2):
    """PyTorch-equivalent CNN.forward. x_ncl: (B, C_in, NPTS) -> (B, out_classes)."""
    x_nlc = jnp.transpose(x_ncl, (0, 2, 1)).astype(jnp.float32)  # NCL -> NLC once
    B, L0, C0 = x_nlc.shape
    blocks = params["blocks"]
    nl = len(blocks)
    wfc = params["fc_w_olc"]                       # (O, L_last, C_last)
    fcb = params["fc_b"]                           # (1, O)
    O, l_last, c_last = wfc.shape

    chain = _layer_chain(L0, blocks)
    assert chain[-1][1] == l_last and chain[-1][3] == c_last

    # Batch blocking: amortize per-grid-step overhead (v5e/v6e single TC),
    # batch axis stays "parallel" so v7x's two cores still split it.
    bblk = max(1, min(int(batch_block), B))
    nblk = (B + bblk - 1) // bblk
    b_pad = nblk * bblk
    if b_pad != B:
        x_nlc = jnp.concatenate(
            [x_nlc, jnp.zeros((b_pad - B, L0, C0), x_nlc.dtype)], axis=0)
    x_stacked = x_nlc.reshape(nblk, bblk * L0, C0)   # samples stacked along rows

    in_specs = [pl.BlockSpec((None, bblk * L0, C0), lambda g: (g, 0, 0))]
    args = [x_stacked]
    for p in blocks:
        cin, cout = p["w0"].shape
        in_specs.append(pl.BlockSpec((cin, cout), lambda g: (0, 0)))
        in_specs.append(pl.BlockSpec((cin, cout), lambda g: (0, 0)))
        in_specs.append(pl.BlockSpec((1, cout), lambda g: (0, 0)))
        args += [p["w0"], p["w1"], p["b"]]
    in_specs.append(pl.BlockSpec((O, l_last, c_last), lambda g: (0, 0, 0)))
    in_specs.append(pl.BlockSpec((1, O), lambda g: (0, 0)))
    args += [wfc, fcb]

    # Per-layer pooled-activation scratch (last layer's output stays in regs).
    scratch_shapes = [pltpu.VMEM((chain[i][1], chain[i][3]), jnp.float32)
                      for i in range(nl - 1)]

    # Explicit VMEM budget (counts (8,128) padding, 2 pipeline buffers/block).
    vmem = 2 * _padded_f32_bytes((bblk * L0, C0))
    for p in blocks:
        cin, cout = p["w0"].shape
        vmem += 2 * (2 * _padded_f32_bytes((cin, cout)) + _padded_f32_bytes((1, cout)))
    vmem += 2 * _padded_f32_bytes(wfc.shape) + 2 * _padded_f32_bytes((1, O))
    vmem += 2 * _padded_f32_bytes((bblk, O))
    for i in range(nl - 1):
        vmem += _padded_f32_bytes((chain[i][1], chain[i][3]))
    vmem_limit = int(min(max(vmem + (8 << 20), 32 << 20), 64 << 20))

    kern = _make_fused_kernel(chain, L0, bblk, O)
    out = pl.pallas_call(
        kern,
        out_shape=jax.ShapeDtypeStruct((nblk, bblk, O), jnp.float32),
        grid_spec=pltpu.PrefetchScalarGridSpec(
            num_scalar_prefetch=0,
            grid=(nblk,),
            in_specs=in_specs,
            out_specs=pl.BlockSpec((None, bblk, O), lambda g: (g, 0, 0)),
            scratch_shapes=scratch_shapes,
        ),
        compiler_params=pltpu.CompilerParams(
            dimension_semantics=("parallel",),
            vmem_limit_bytes=vmem_limit),
    )(*args)
    return out.reshape(b_pad, O)[:B]


# ---------------------------------------------------------------------------
# Parameter construction (PyTorch-shaped raw params) + host-side folding
# ---------------------------------------------------------------------------
def make_params(key, num_layer=6, out_classes=2, input_classes=3, npts=256):
    num_chan = np.power(2, np.arange(9) + 2)
    num_chan[0] = input_classes
    num_chan = num_chan[:num_layer + 1]           # [3, 8, 16, 32, 64, 128, 256]

    eps = 1e-5
    raw_blocks = []
    L = npts
    for cin, cout in zip(num_chan[:-1], num_chan[1:]):
        cin, cout = int(cin), int(cout)
        key, kw, kb, kg, kbe = jax.random.split(key, 5)
        w = jax.random.normal(kw, (cout, cin, 2), jnp.float32) * (1.0 / np.sqrt(cin * 2))
        b = jax.random.normal(kb, (cout,), jnp.float32) * 0.05
        gamma = 1.0 + 0.1 * jax.random.normal(kg, (cout,), jnp.float32)
        beta = 0.1 * jax.random.normal(kbe, (cout,), jnp.float32)
        raw_blocks.append(dict(w=w, b=b, gamma=gamma, beta=beta,
                               mean=jnp.zeros((cout,), jnp.float32),
                               var=jnp.ones((cout,), jnp.float32)))
        L = ((L - 1) - 2) // 2 + 1                # conv then pool length

    C_last = int(num_chan[-1])
    F = C_last * L
    key, kfw, kfb = jax.random.split(key, 3)
    fc_w = jax.random.normal(kfw, (out_classes, F), jnp.float32) * (1.0 / np.sqrt(F))
    fc_b = jax.random.normal(kfb, (out_classes,), jnp.float32) * 0.05
    return dict(raw_blocks=raw_blocks, fc_w=fc_w, fc_b=fc_b, eps=eps,
                L_last=L, C_last=C_last)


def fold_params(raw):
    """Fold eval-mode BatchNorm into the conv weights/bias; store the FC weight
    as (O, L_last, C_last) so its lane dim is C_last (lane-exact) and the
    PyTorch NCL flatten becomes a plain (L, C) contraction inside the kernel."""
    eps = raw["eps"]
    blocks = []
    for rb in raw["raw_blocks"]:
        scale = rb["gamma"] / jnp.sqrt(rb["var"] + eps)           # (Cout,)
        shift = rb["beta"] - rb["mean"] * scale
        blocks.append(dict(
            w0=jnp.transpose(rb["w"][:, :, 0]) * scale[None, :],  # (Cin, Cout)
            w1=jnp.transpose(rb["w"][:, :, 1]) * scale[None, :],
            b=(rb["b"] * scale + shift).reshape(1, -1),
        ))
    L, C = raw["L_last"], raw["C_last"]
    O = raw["fc_w"].shape[0]
    # PyTorch flatten index is c*L + l  ->  wfc[o, l, c] = fc_w[o, c*L + l]
    wfc = jnp.transpose(raw["fc_w"].reshape(O, C, L), (0, 2, 1))  # (O, L, C)
    return dict(blocks=blocks, fc_w_olc=wfc, fc_b=raw["fc_b"].reshape(1, O))


# ---------------------------------------------------------------------------
# Pure-JAX reference (raw, un-folded params) for validation
# ---------------------------------------------------------------------------
def cnn_reference(x_ncl, raw):
    eps = raw["eps"]
    x = x_ncl                                      # keep NCL like PyTorch
    for rb in raw["raw_blocks"]:
        w, b = rb["w"], rb["b"]
        y = (jnp.einsum("bcl,oc->bol", x[:, :, :-1], w[:, :, 0])
             + jnp.einsum("bcl,oc->bol", x[:, :, 1:], w[:, :, 1])
             + b[None, :, None])
        scale = rb["gamma"] / jnp.sqrt(rb["var"] + eps)
        shift = rb["beta"] - rb["mean"] * scale
        y = jnp.maximum(y * scale[None, :, None] + shift[None, :, None], 0.0)
        P = (y.shape[2] - 2) // 2 + 1
        x = jnp.maximum(y[:, :, 0:2 * P:2], y[:, :, 1:2 * P:2])
    feat = x.reshape(x.shape[0], -1)               # NCL flatten == out.view(B, -1)
    return feat @ raw["fc_w"].T + raw["fc_b"][None, :]


if __name__ == "__main__":
    key = jax.random.PRNGKey(0)
    B, C_IN, NPTS = 2, 3, 256                      # small shapes (module default npts=5500)
    key, kx = jax.random.split(key)
    raw = make_params(key, num_layer=6, out_classes=2, input_classes=C_IN, npts=NPTS)
    params = fold_params(raw)
    x = jax.random.normal(kx, (B, C_IN, NPTS), jnp.float32)   # PyTorch NCL input

    out = jax.block_until_ready(cnn_forward(x, params, batch_block=2))

    ref = cnn_reference(x, raw)
    np.testing.assert_allclose(np.asarray(out), np.asarray(ref), rtol=1e-3, atol=1e-3)
    assert out.shape == (B, 2)
    print("KERNEL_OK")
</pallas_src>

<mosaic_0001>
module attributes {stable_mosaic.version = 11 : i64} {
  func.func @kernel(%arg0: i32, %arg1: memref<1x512x3xf32, #tpu.memory_space<vmem>>, %arg2: memref<3x8xf32, #tpu.memory_space<vmem>>, %arg3: memref<3x8xf32, #tpu.memory_space<vmem>>, %arg4: memref<1x8xf32, #tpu.memory_space<vmem>>, %arg5: memref<8x16xf32, #tpu.memory_space<vmem>>, %arg6: memref<8x16xf32, #tpu.memory_space<vmem>>, %arg7: memref<1x16xf32, #tpu.memory_space<vmem>>, %arg8: memref<16x32xf32, #tpu.memory_space<vmem>>, %arg9: memref<16x32xf32, #tpu.memory_space<vmem>>, %arg10: memref<1x32xf32, #tpu.memory_space<vmem>>, %arg11: memref<32x64xf32, #tpu.memory_space<vmem>>, %arg12: memref<32x64xf32, #tpu.memory_space<vmem>>, %arg13: memref<1x64xf32, #tpu.memory_space<vmem>>, %arg14: memref<64x128xf32, #tpu.memory_space<vmem>>, %arg15: memref<64x128xf32, #tpu.memory_space<vmem>>, %arg16: memref<1x128xf32, #tpu.memory_space<vmem>>, %arg17: memref<128x256xf32, #tpu.memory_space<vmem>>, %arg18: memref<128x256xf32, #tpu.memory_space<vmem>>, %arg19: memref<1x256xf32, #tpu.memory_space<vmem>>, %arg20: memref<2x3x256xf32, #tpu.memory_space<vmem>>, %arg21: memref<1x2xf32, #tpu.memory_space<vmem>>, %arg22: memref<1x2x2xf32, #tpu.memory_space<vmem>>, %arg23: memref<127x8xf32, #tpu.memory_space<vmem>>, %arg24: memref<63x16xf32, #tpu.memory_space<vmem>>, %arg25: memref<31x32xf32, #tpu.memory_space<vmem>>, %arg26: memref<15x64xf32, #tpu.memory_space<vmem>>, %arg27: memref<7x128xf32, #tpu.memory_space<vmem>>) attributes {dimension_semantics = [#tpu.dimension_semantics<parallel>], iteration_bounds = array<i64: 1>, scalar_prefetch = 0 : i64, scratch_operands = 5 : i64, tpu.core_type = #tpu.core_type<tc>, window_params = [{transform_indices = @transform_0, window_bounds = array<i64: 1, 512, 3>}, {pipeline_mode = #tpu.pipeline_mode<synchronous>, transform_indices = @transform_1, window_bounds = array<i64: 3, 8>}, {pipeline_mode = #tpu.pipeline_mode<synchronous>, transform_indices = @transform_2, window_bounds = array<i64: 3, 8>}, {pipeline_mode = #tpu.pipeline_mode<synchronous>, transform_indices = @transform_3, window_bounds = array<i64: 1, 8>}, {pipeline_mode = #tpu.pipeline_mode<synchronous>, transform_indices = @transform_4, window_bounds = array<i64: 8, 16>}, {pipeline_mode = #tpu.pipeline_mode<synchronous>, transform_indices = @transform_5, window_bounds = array<i64: 8, 16>}, {pipeline_mode = #tpu.pipeline_mode<synchronous>, transform_indices = @transform_6, window_bounds = array<i64: 1, 16>}, {pipeline_mode = #tpu.pipeline_mode<synchronous>, transform_indices = @transform_7, window_bounds = array<i64: 16, 32>}, {pipeline_mode = #tpu.pipeline_mode<synchronous>, transform_indices = @transform_8, window_bounds = array<i64: 16, 32>}, {pipeline_mode = #tpu.pipeline_mode<synchronous>, transform_indices = @transform_9, window_bounds = array<i64: 1, 32>}, {pipeline_mode = #tpu.pipeline_mode<synchronous>, transform_indices = @transform_10, window_bounds = array<i64: 32, 64>}, {pipeline_mode = #tpu.pipeline_mode<synchronous>, transform_indices = @transform_11, window_bounds = array<i64: 32, 64>}, {pipeline_mode = #tpu.pipeline_mode<synchronous>, transform_indices = @transform_12, window_bounds = array<i64: 1, 64>}, {pipeline_mode = #tpu.pipeline_mode<synchronous>, transform_indices = @transform_13, window_bounds = array<i64: 64, 128>}, {pipeline_mode = #tpu.pipeline_mode<synchronous>, transform_indices = @transform_14, window_bounds = array<i64: 64, 128>}, {pipeline_mode = #tpu.pipeline_mode<synchronous>, transform_indices = @transform_15, window_bounds = array<i64: 1, 128>}, {pipeline_mode = #tpu.pipeline_mode<synchronous>, transform_indices = @transform_16, window_bounds = array<i64: 128, 256>}, {pipeline_mode = #tpu.pipeline_mode<synchronous>, transform_indices = @transform_17, window_bounds = array<i64: 128, 256>}, {pipeline_mode = #tpu.pipeline_mode<synchronous>, transform_indices = @transform_18, window_bounds = array<i64: 1, 256>}, {pipeline_mode = #tpu.pipeline_mode<synchronous>, transform_indices = @transform_19, window_bounds = array<i64: 2, 3, 256>}, {pipeline_mode = #tpu.pipeline_mode<synchronous>, transform_indices = @transform_20, window_bounds = array<i64: 1, 2>}, {transform_indices = @transform_21, window_bounds = array<i64: 1, 2, 2>}]} {
    %0 = tpu.iota {dimensions = array<i32: 1>} : vector<1x2xi32>
    %c0 = arith.constant 0 : index
    %c0_0 = arith.constant 0 : index
    %1 = vector.load %arg2[%c0, %c0_0] : memref<3x8xf32, #tpu.memory_space<vmem>>, vector<3x8xf32>
    %c0_1 = arith.constant 0 : index
    %c0_2 = arith.constant 0 : index
    %2 = vector.load %arg3[%c0_1, %c0_2] : memref<3x8xf32, #tpu.memory_space<vmem>>, vector<3x8xf32>
    %c0_3 = arith.constant 0 : index
    %c0_4 = arith.constant 0 : index
    %3 = vector.load %arg4[%c0_3, %c0_4] : memref<1x8xf32, #tpu.memory_space<vmem>>, vector<1x8xf32>
    %c0_5 = arith.constant 0 : index
    %c0_6 = arith.constant 0 : index
    %c0_7 = arith.constant 0 : index
    %4 = tpu.strided_load %arg1[%c0_5, %c0_6, %c0_7] {strides = array<i32: 1, 2, 1>} : memref<1x512x3xf32, #tpu.memory_space<vmem>>, vector<1x127x3xf32>
    %5 = vector.shape_cast %4 : vector<1x127x3xf32> to vector<127x3xf32>
    %c0_8 = arith.constant 0 : index
    %c1 = arith.constant 1 : index
    %c0_9 = arith.constant 0 : index
    %6 = tpu.strided_load %arg1[%c0_8, %c1, %c0_9] {strides = array<i32: 1, 2, 1>} : memref<1x512x3xf32, #tpu.memory_space<vmem>>, vector<1x127x3xf32>
    %7 = vector.shape_cast %6 : vector<1x127x3xf32> to vector<127x3xf32>
    %c0_10 = arith.constant 0 : index
    %c2 = arith.constant 2 : index
    %c0_11 = arith.constant 0 : index
    %8 = tpu.strided_load %arg1[%c0_10, %c2, %c0_11] {strides = array<i32: 1, 2, 1>} : memref<1x512x3xf32, #tpu.memory_space<vmem>>, vector<1x127x3xf32>
    %9 = vector.shape_cast %8 : vector<1x127x3xf32> to vector<127x3xf32>
    %cst = arith.constant dense<0.000000e+00> : vector<127x8xf32>
    %10 = tpu.matmul %5, %1, %cst {dimension_numbers = #tpu.dot_dimension_numbers<[1], [0], [0], [1], [0, 0, 1, 1], [], []>} : vector<127x3xf32>, vector<3x8xf32>, vector<127x8xf32> -> vector<127x8xf32>
    %cst_12 = arith.constant dense<0.000000e+00> : vector<127x8xf32>
    %11 = tpu.matmul %7, %2, %cst_12 {dimension_numbers = #tpu.dot_dimension_numbers<[1], [0], [0], [1], [0, 0, 1, 1], [], []>} : vector<127x3xf32>, vector<3x8xf32>, vector<127x8xf32> -> vector<127x8xf32>
    %12 = arith.addf %10, %11 : vector<127x8xf32>
    %cst_13 = arith.constant dense<0.000000e+00> : vector<127x8xf32>
    %13 = tpu.matmul %7, %1, %cst_13 {dimension_numbers = #tpu.dot_dimension_numbers<[1], [0], [0], [1], [0, 0, 1, 1], [], []>} : vector<127x3xf32>, vector<3x8xf32>, vector<127x8xf32> -> vector<127x8xf32>
    %cst_14 = arith.constant dense<0.000000e+00> : vector<127x8xf32>
    %14 = tpu.matmul %9, %2, %cst_14 {dimension_numbers = #tpu.dot_dimension_numbers<[1], [0], [0], [1], [0, 0, 1, 1], [], []>} : vector<127x3xf32>, vector<3x8xf32>, vector<127x8xf32> -> vector<127x8xf32>
    %15 = arith.addf %13, %14 : vector<127x8xf32>
    %16 = arith.maximumf %12, %15 : vector<127x8xf32>
    %17 = vector.broadcast %3 : vector<1x8xf32> to vector<127x8xf32>
    %18 = arith.addf %16, %17 : vector<127x8xf32>
    %cst_15 = arith.constant 0.000000e+00 : f32
    %19 = vector.broadcast %cst_15 : f32 to vector<127x8xf32>
    %20 = arith.maximumf %18, %19 : vector<127x8xf32>
    %c0_16 = arith.constant 0 : index
    %c0_17 = arith.constant 0 : index
    %21 = vector.load %arg23[%c0_16, %c0_17] : memref<127x8xf32, #tpu.memory_space<vmem>>, vector<127x8xf32>
    tpu.vector_store %arg23[%c0_16, %c0_17], %20 {strides = array<i32>} : memref<127x8xf32, #tpu.memory_space<vmem>>, vector<127x8xf32>,
    %c0_18 = arith.constant 0 : index
    %c0_19 = arith.constant 0 : index
    %22 = vector.load %arg5[%c0_18, %c0_19] : memref<8x16xf32, #tpu.memory_space<vmem>>, vector<8x16xf32>
    %c0_20 = arith.constant 0 : index
    %c0_21 = arith.constant 0 : index
    %23 = vector.load %arg6[%c0_20, %c0_21] : memref<8x16xf32, #tpu.memory_space<vmem>>, vector<8x16xf32>
    %c0_22 = arith.constant 0 : index
    %c0_23 = arith.constant 0 : index
    %24 = vector.load %arg7[%c0_22, %c0_23] : memref<1x16xf32, #tpu.memory_space<vmem>>, vector<1x16xf32>
    %c0_24 = arith.constant 0 : index
    %c0_25 = arith.constant 0 : index
    %25 = tpu.strided_load %arg23[%c0_24, %c0_25] {strides = array<i32: 2, 1>} : memref<127x8xf32, #tpu.memory_space<vmem>>, vector<63x8xf32>
    %c1_26 = arith.constant 1 : index
    %c0_27 = arith.constant 0 : index
    %26 = tpu.strided_load %arg23[%c1_26, %c0_27] {strides = array<i32: 2, 1>} : memref<127x8xf32, #tpu.memory_space<vmem>>, vector<63x8xf32>
    %c2_28 = arith.constant 2 : index
    %c0_29 = arith.constant 0 : index
    %27 = tpu.strided_load %arg23[%c2_28, %c0_29] {strides = array<i32: 2, 1>} : memref<127x8xf32, #tpu.memory_space<vmem>>, vector<63x8xf32>
    %cst_30 = arith.constant dense<0.000000e+00> : vector<63x16xf32>
    %28 = tpu.matmul %25, %22, %cst_30 {dimension_numbers = #tpu.dot_dimension_numbers<[1], [0], [0], [1], [0, 0, 1, 1], [], []>} : vector<63x8xf32>, vector<8x16xf32>, vector<63x16xf32> -> vector<63x16xf32>
    %cst_31 = arith.constant dense<0.000000e+00> : vector<63x16xf32>
    %29 = tpu.matmul %26, %23, %cst_31 {dimension_numbers = #tpu.dot_dimension_numbers<[1], [0], [0], [1], [0, 0, 1, 1], [], []>} : vector<63x8xf32>, vector<8x16xf32>, vector<63x16xf32> -> vector<63x16xf32>
    %30 = arith.addf %28, %29 : vector<63x16xf32>
    %cst_32 = arith.constant dense<0.000000e+00> : vector<63x16xf32>
    %31 = tpu.matmul %26, %22, %cst_32 {dimension_numbers = #tpu.dot_dimension_numbers<[1], [0], [0], [1], [0, 0, 1, 1], [], []>} : vector<63x8xf32>, vector<8x16xf32>, vector<63x16xf32> -> vector<63x16xf32>
    %cst_33 = arith.constant dense<0.000000e+00> : vector<63x16xf32>
    %32 = tpu.matmul %27, %23, %cst_33 {dimension_numbers = #tpu.dot_dimension_numbers<[1], [0], [0], [1], [0, 0, 1, 1], [], []>} : vector<63x8xf32>, vector<8x16xf32>, vector<63x16xf32> -> vector<63x16xf32>
    %33 = arith.addf %31, %32 : vector<63x16xf32>
    %34 = arith.maximumf %30, %33 : vector<63x16xf32>
    %35 = vector.broadcast %24 : vector<1x16xf32> to vector<63x16xf32>
    %36 = arith.addf %34, %35 : vector<63x16xf32>
    %cst_34 = arith.constant 0.000000e+00 : f32
    %37 = vector.broadcast %cst_34 : f32 to vector<63x16xf32>
    %38 = arith.maximumf %36, %37 : vector<63x16xf32>
    %c0_35 = arith.constant 0 : index
    %c0_36 = arith.constant 0 : index
    %39 = vector.load %arg24[%c0_35, %c0_36] : memref<63x16xf32, #tpu.memory_space<vmem>>, vector<63x16xf32>
    tpu.vector_store %arg24[%c0_35, %c0_36], %38 {strides = array<i32>} : memref<63x16xf32, #tpu.memory_space<vmem>>, vector<63x16xf32>,
    %c0_37 = arith.constant 0 : index
    %c0_38 = arith.constant 0 : index
    %40 = vector.load %arg8[%c0_37, %c0_38] : memref<16x32xf32, #tpu.memory_space<vmem>>, vector<16x32xf32>
    %c0_39 = arith.constant 0 : index
    %c0_40 = arith.constant 0 : index
    %41 = vector.load %arg9[%c0_39, %c0_40] : memref<16x32xf32, #tpu.memory_space<vmem>>, vector<16x32xf32>
    %c0_41 = arith.constant 0 : index
    %c0_42 = arith.constant 0 : index
    %42 = vector.load %arg10[%c0_41, %c0_42] : memref<1x32xf32, #tpu.memory_space<vmem>>, vector<1x32xf32>
    %c0_43 = arith.constant 0 : index
    %c0_44 = arith.constant 0 : index
    %43 = tpu.strided_load %arg24[%c0_43, %c0_44] {strides = array<i32: 2, 1>} : memref<63x16xf32, #tpu.memory_space<vmem>>, vector<31x16xf32>
    %c1_45 = arith.constant 1 : index
    %c0_46 = arith.constant 0 : index
    %44 = tpu.strided_load %arg24[%c1_45, %c0_46] {strides = array<i32: 2, 1>} : memref<63x16xf32, #tpu.memory_space<vmem>>, vector<31x16xf32>
    %c2_47 = arith.constant 2 : index
    %c0_48 = arith.constant 0 : index
    %45 = tpu.strided_load %arg24[%c2_47, %c0_48] {strides = array<i32: 2, 1>} : memref<63x16xf32, #tpu.memory_space<vmem>>, vector<31x16xf32>
    %cst_49 = arith.constant dense<0.000000e+00> : vector<31x32xf32>
    %46 = tpu.matmul %43, %40, %cst_49 {dimension_numbers = #tpu.dot_dimension_numbers<[1], [0], [0], [1], [0, 0, 1, 1], [], []>} : vector<31x16xf32>, vector<16x32xf32>, vector<31x32xf32> -> vector<31x32xf32>
    %cst_50 = arith.constant dense<0.000000e+00> : vector<31x32xf32>
    %47 = tpu.matmul %44, %41, %cst_50 {dimension_numbers = #tpu.dot_dimension_numbers<[1], [0], [0], [1], [0, 0, 1, 1], [], []>} : vector<31x16xf32>, vector<16x32xf32>, vector<31x32xf32> -> vector<31x32xf32>
    %48 = arith.addf %46, %47 : vector<31x32xf32>
    %cst_51 = arith.constant dense<0.000000e+00> : vector<31x32xf32>
    %49 = tpu.matmul %44, %40, %cst_51 {dimension_numbers = #tpu.dot_dimension_numbers<[1], [0], [0], [1], [0, 0, 1, 1], [], []>} : vector<31x16xf32>, vector<16x32xf32>, vector<31x32xf32> -> vector<31x32xf32>
    %cst_52 = arith.constant dense<0.000000e+00> : vector<31x32xf32>
    %50 = tpu.matmul %45, %41, %cst_52 {dimension_numbers = #tpu.dot_dimension_numbers<[1], [0], [0], [1], [0, 0, 1, 1], [], []>} : vector<31x16xf32>, vector<16x32xf32>, vector<31x32xf32> -> vector<31x32xf32>
    %51 = arith.addf %49, %50 : vector<31x32xf32>
    %52 = arith.maximumf %48, %51 : vector<31x32xf32>
    %53 = vector.broadcast %42 : vector<1x32xf32> to vector<31x32xf32>
    %54 = arith.addf %52, %53 : vector<31x32xf32>
    %cst_53 = arith.constant 0.000000e+00 : f32
    %55 = vector.broadcast %cst_53 : f32 to vector<31x32xf32>
    %56 = arith.maximumf %54, %55 : vector<31x32xf32>
    %c0_54 = arith.constant 0 : index
    %c0_55 = arith.constant 0 : index
    %57 = vector.load %arg25[%c0_54, %c0_55] : memref<31x32xf32, #tpu.memory_space<vmem>>, vector<31x32xf32>
    tpu.vector_store %arg25[%c0_54, %c0_55], %56 {strides = array<i32>} : memref<31x32xf32, #tpu.memory_space<vmem>>, vector<31x32xf32>,
    %c0_56 = arith.constant 0 : index
    %c0_57 = arith.constant 0 : index
    %58 = vector.load %arg11[%c0_56, %c0_57] : memref<32x64xf32, #tpu.memory_space<vmem>>, vector<32x64xf32>
    %c0_58 = arith.constant 0 : index
    %c0_59 = arith.constant 0 : index
    %59 = vector.load %arg12[%c0_58, %c0_59] : memref<32x64xf32, #tpu.memory_space<vmem>>, vector<32x64xf32>
    %c0_60 = arith.constant 0 : index
    %c0_61 = arith.constant 0 : index
    %60 = vector.load %arg13[%c0_60, %c0_61] : memref<1x64xf32, #tpu.memory_space<vmem>>, vector<1x64xf32>
    %c0_62 = arith.constant 0 : index
    %c0_63 = arith.constant 0 : index
    %61 = tpu.strided_load %arg25[%c0_62, %c0_63] {strides = array<i32: 2, 1>} : memref<31x32xf32, #tpu.memory_space<vmem>>, vector<15x32xf32>
    %c1_64 = arith.constant 1 : index
    %c0_65 = arith.constant 0 : index
    %62 = tpu.strided_load %arg25[%c1_64, %c0_65] {strides = array<i32: 2, 1>} : memref<31x32xf32, #tpu.memory_space<vmem>>, vector<15x32xf32>
    %c2_66 = arith.constant 2 : index
    %c0_67 = arith.constant 0 : index
    %63 = tpu.strided_load %arg25[%c2_66, %c0_67] {strides = array<i32: 2, 1>} : memref<31x32xf32, #tpu.memory_space<vmem>>, vector<15x32xf32>
    %cst_68 = arith.constant dense<0.000000e+00> : vector<15x64xf32>
    %64 = tpu.matmul %61, %58, %cst_68 {dimension_numbers = #tpu.dot_dimension_numbers<[1], [0], [0], [1], [0, 0, 1, 1], [], []>} : vector<15x32xf32>, vector<32x64xf32>, vector<15x64xf32> -> vector<15x64xf32>
    %cst_69 = arith.constant dense<0.000000e+00> : vector<15x64xf32>
    %65 = tpu.matmul %62, %59, %cst_69 {dimension_numbers = #tpu.dot_dimension_numbers<[1], [0], [0], [1], [0, 0, 1, 1], [], []>} : vector<15x32xf32>, vector<32x64xf32>, vector<15x64xf32> -> vector<15x64xf32>
    %66 = arith.addf %64, %65 : vector<15x64xf32>
    %cst_70 = arith.constant dense<0.000000e+00> : vector<15x64xf32>
    %67 = tpu.matmul %62, %58, %cst_70 {dimension_numbers = #tpu.dot_dimension_numbers<[1], [0], [0], [1], [0, 0, 1, 1], [], []>} : vector<15x32xf32>, vector<32x64xf32>, vector<15x64xf32> -> vector<15x64xf32>
    %cst_71 = arith.constant dense<0.000000e+00> : vector<15x64xf32>
    %68 = tpu.matmul %63, %59, %cst_71 {dimension_numbers = #tpu.dot_dimension_numbers<[1], [0], [0], [1], [0, 0, 1, 1], [], []>} : vector<15x32xf32>, vector<32x64xf32>, vector<15x64xf32> -> vector<15x64xf32>
    %69 = arith.addf %67, %68 : vector<15x64xf32>
    %70 = arith.maximumf %66, %69 : vector<15x64xf32>
    %71 = vector.broadcast %60 : vector<1x64xf32> to vector<15x64xf32>
    %72 = arith.addf %70, %71 : vector<15x64xf32>
    %cst_72 = arith.constant 0.000000e+00 : f32
    %73 = vector.broadcast %cst_72 : f32 to vector<15x64xf32>
    %74 = arith.maximumf %72, %73 : vector<15x64xf32>
    %c0_73 = arith.constant 0 : index
    %c0_74 = arith.constant 0 : index
    %75 = vector.load %arg26[%c0_73, %c0_74] : memref<15x64xf32, #tpu.memory_space<vmem>>, vector<15x64xf32>
    tpu.vector_store %arg26[%c0_73, %c0_74], %74 {strides = array<i32>} : memref<15x64xf32, #tpu.memory_space<vmem>>, vector<15x64xf32>,
    %c0_75 = arith.constant 0 : index
    %c0_76 = arith.constant 0 : index
    %76 = vector.load %arg14[%c0_75, %c0_76] : memref<64x128xf32, #tpu.memory_space<vmem>>, vector<64x128xf32>
    %c0_77 = arith.constant 0 : index
    %c0_78 = arith.constant 0 : index
    %77 = vector.load %arg15[%c0_77, %c0_78] : memref<64x128xf32, #tpu.memory_space<vmem>>, vector<64x128xf32>
    %c0_79 = arith.constant 0 : index
    %c0_80 = arith.constant 0 : index
    %78 = vector.load %arg16[%c0_79, %c0_80] : memref<1x128xf32, #tpu.memory_space<vmem>>, vector<1x128xf32>
    %c0_81 = arith.constant 0 : index
    %c0_82 = arith.constant 0 : index
    %79 = tpu.strided_load %arg26[%c0_81, %c0_82] {strides = array<i32: 2, 1>} : memref<15x64xf32, #tpu.memory_space<vmem>>, vector<7x64xf32>
    %c1_83 = arith.constant 1 : index
    %c0_84 = arith.constant 0 : index
    %80 = tpu.strided_load %arg26[%c1_83, %c0_84] {strides = array<i32: 2, 1>} : memref<15x64xf32, #tpu.memory_space<vmem>>, vector<7x64xf32>
    %c2_85 = arith.constant 2 : index
    %c0_86 = arith.constant 0 : index
    %81 = tpu.strided_load %arg26[%c2_85, %c0_86] {strides = array<i32: 2, 1>} : memref<15x64xf32, #tpu.memory_space<vmem>>, vector<7x64xf32>
    %cst_87 = arith.constant dense<0.000000e+00> : vector<7x128xf32>
    %82 = tpu.matmul %79, %76, %cst_87 {dimension_numbers = #tpu.dot_dimension_numbers<[1], [0], [0], [1], [0, 0, 1, 1], [], []>} : vector<7x64xf32>, vector<64x128xf32>, vector<7x128xf32> -> vector<7x128xf32>
    %cst_88 = arith.constant dense<0.000000e+00> : vector<7x128xf32>
    %83 = tpu.matmul %80, %77, %cst_88 {dimension_numbers = #tpu.dot_dimension_numbers<[1], [0], [0], [1], [0, 0, 1, 1], [], []>} : vector<7x64xf32>, vector<64x128xf32>, vector<7x128xf32> -> vector<7x128xf32>
    %84 = arith.addf %82, %83 : vector<7x128xf32>
    %cst_89 = arith.constant dense<0.000000e+00> : vector<7x128xf32>
    %85 = tpu.matmul %80, %76, %cst_89 {dimension_numbers = #tpu.dot_dimension_numbers<[1], [0], [0], [1], [0, 0, 1, 1], [], []>} : vector<7x64xf32>, vector<64x128xf32>, vector<7x128xf32> -> vector<7x128xf32>
    %cst_90 = arith.constant dense<0.000000e+00> : vector<7x128xf32>
    %86 = tpu.matmul %81, %77, %cst_90 {dimension_numbers = #tpu.dot_dimension_numbers<[1], [0], [0], [1], [0, 0, 1, 1], [], []>} : vector<7x64xf32>, vector<64x128xf32>, vector<7x128xf32> -> vector<7x128xf32>
    %87 = arith.addf %85, %86 : vector<7x128xf32>
    %88 = arith.maximumf %84, %87 : vector<7x128xf32>
    %89 = vector.broadcast %78 : vector<1x128xf32> to vector<7x128xf32>
    %90 = arith.addf %88, %89 : vector<7x128xf32>
    %cst_91 = arith.constant 0.000000e+00 : f32
    %91 = vector.broadcast %cst_91 : f32 to vector<7x128xf32>
    %92 = arith.maximumf %90, %91 : vector<7x128xf32>
    %c0_92 = arith.constant 0 : index
    %c0_93 = arith.constant 0 : index
    %93 = vector.load %arg27[%c0_92, %c0_93] : memref<7x128xf32, #tpu.memory_space<vmem>>, vector<7x128xf32>
    tpu.vector_store %arg27[%c0_92, %c0_93], %92 {strides = array<i32>} : memref<7x128xf32, #tpu.memory_space<vmem>>, vector<7x128xf32>,
    %c0_94 = arith.constant 0 : index
    %c0_95 = arith.constant 0 : index
    %94 = vector.load %arg17[%c0_94, %c0_95] : memref<128x256xf32, #tpu.memory_space<vmem>>, vector<128x256xf32>
    %c0_96 = arith.constant 0 : index
    %c0_97 = arith.constant 0 : index
    %95 = vector.load %arg18[%c0_96, %c0_97] : memref<128x256xf32, #tpu.memory_space<vmem>>, vector<128x256xf32>
    %c0_98 = arith.constant 0 : index
    %c0_99 = arith.constant 0 : index
    %96 = vector.load %arg19[%c0_98, %c0_99] : memref<1x256xf32, #tpu.memory_space<vmem>>, vector<1x256xf32>
    %c0_100 = arith.constant 0 : index
    %c0_101 = arith.constant 0 : index
    %97 = tpu.strided_load %arg27[%c0_100, %c0_101] {strides = array<i32: 2, 1>} : memref<7x128xf32, #tpu.memory_space<vmem>>, vector<3x128xf32>
    %c1_102 = arith.constant 1 : index
    %c0_103 = arith.constant 0 : index
    %98 = tpu.strided_load %arg27[%c1_102, %c0_103] {strides = array<i32: 2, 1>} : memref<7x128xf32, #tpu.memory_space<vmem>>, vector<3x128xf32>
    %c2_104 = arith.constant 2 : index
    %c0_105 = arith.constant 0 : index
    %99 = tpu.strided_load %arg27[%c2_104, %c0_105] {strides = array<i32: 2, 1>} : memref<7x128xf32, #tpu.memory_space<vmem>>, vector<3x128xf32>
    %100 = tpu.concatenate %94, %95 in 0 : vector<128x256xf32>, vector<128x256xf32> -> vector<256x256xf32>
    %101 = tpu.concatenate %97, %98 in 1 : vector<3x128xf32>, vector<3x128xf32> -> vector<3x256xf32>
    %cst_106 = arith.constant dense<0.000000e+00> : vector<3x256xf32>
    %102 = tpu.matmul %101, %100, %cst_106 {dimension_numbers = #tpu.dot_dimension_numbers<[1], [0], [0], [1], [0, 0, 1, 1], [], []>} : vector<3x256xf32>, vector<256x256xf32>, vector<3x256xf32> -> vector<3x256xf32>
    %103 = tpu.concatenate %98, %99 in 1 : vector<3x128xf32>, vector<3x128xf32> -> vector<3x256xf32>
    %cst_107 = arith.constant dense<0.000000e+00> : vector<3x256xf32>
    %104 = tpu.matmul %103, %100, %cst_107 {dimension_numbers = #tpu.dot_dimension_numbers<[1], [0], [0], [1], [0, 0, 1, 1], [], []>} : vector<3x256xf32>, vector<256x256xf32>, vector<3x256xf32> -> vector<3x256xf32>
    %105 = arith.maximumf %102, %104 : vector<3x256xf32>
    %106 = vector.broadcast %96 : vector<1x256xf32> to vector<3x256xf32>
    %107 = arith.addf %105, %106 : vector<3x256xf32>
    %cst_108 = arith.constant 0.000000e+00 : f32
    %108 = vector.broadcast %cst_108 : f32 to vector<3x256xf32>
    %109 = arith.maximumf %107, %108 : vector<3x256xf32>
    %c0_109 = arith.constant 0 : index
    %c0_110 = arith.constant 0 : index
    %110 = vector.load %arg21[%c0_109, %c0_110] : memref<1x2xf32, #tpu.memory_space<vmem>>, vector<1x2xf32>
    %c0_111 = arith.constant 0 : index
    %c0_112 = arith.constant 0 : index
    %c0_113 = arith.constant 0 : index
    %111 = vector.load %arg20[%c0_111, %c0_112, %c0_113] : memref<2x3x256xf32, #tpu.memory_space<vmem>>, vector<1x3x256xf32>
    %112 = vector.shape_cast %111 : vector<1x3x256xf32> to vector<3x256xf32>
    %113 = arith.mulf %109, %112 : vector<3x256xf32>
    %cst_114 = arith.constant dense<0.000000e+00> : vector<3xf32>
    %114 = vector.multi_reduction <add>, %113, %cst_114 [1] : vector<3x256xf32> to vector<3xf32>
    %115 = vector.shape_cast %114 : vector<3xf32> to vector<3x1xf32>
    %cst_115 = arith.constant dense<0.000000e+00> : vector<1xf32>
    %116 = vector.multi_reduction <add>, %115, %cst_115 [0] : vector<3x1xf32> to vector<1xf32>
    %117 = vector.shape_cast %116 : vector<1xf32> to vector<1x1xf32>
    %c0_i32 = arith.constant 0 : i32
    %118 = vector.broadcast %c0_i32 : i32 to vector<1x2xi32>
    %119 = arith.cmpi eq, %0, %118 : vector<1x2xi32>
    %cst_116 = arith.constant 0.000000e+00 : f32
    %120 = vector.shape_cast %117 : vector<1x1xf32> to vector<1x1xf32>
    %121 = vector.broadcast %120 : vector<1x1xf32> to vector<1x2xf32>
    %122 = vector.broadcast %cst_116 : f32 to vector<1x2xf32>
    %123 = arith.select %119, %121, %122 : vector<1x2xi1>, vector<1x2xf32>
    %124 = arith.addf %110, %123 : vector<1x2xf32>
    %c1_117 = arith.constant 1 : index
    %c0_118 = arith.constant 0 : index
    %c0_119 = arith.constant 0 : index
    %125 = vector.load %arg20[%c1_117, %c0_118, %c0_119] : memref<2x3x256xf32, #tpu.memory_space<vmem>>, vector<1x3x256xf32>
    %126 = vector.shape_cast %125 : vector<1x3x256xf32> to vector<3x256xf32>
    %127 = arith.mulf %109, %126 : vector<3x256xf32>
    %cst_120 = arith.constant dense<0.000000e+00> : vector<3xf32>
    %128 = vector.multi_reduction <add>, %127, %cst_120 [1] : vector<3x256xf32> to vector<3xf32>
    %129 = vector.shape_cast %128 : vector<3xf32> to vector<3x1xf32>
    %cst_121 = arith.constant dense<0.000000e+00> : vector<1xf32>
    %130 = vector.multi_reduction <add>, %129, %cst_121 [0] : vector<3x1xf32> to vector<1xf32>
    %131 = vector.shape_cast %130 : vector<1xf32> to vector<1x1xf32>
    %c1_i32 = arith.constant 1 : i32
    %132 = vector.broadcast %c1_i32 : i32 to vector<1x2xi32>
    %133 = arith.cmpi eq, %0, %132 : vector<1x2xi32>
    %cst_122 = arith.constant 0.000000e+00 : f32
    %134 = vector.shape_cast %131 : vector<1x1xf32> to vector<1x1xf32>
    %135 = vector.broadcast %134 : vector<1x1xf32> to vector<1x2xf32>
    %136 = vector.broadcast %cst_122 : f32 to vector<1x2xf32>
    %137 = arith.select %133, %135, %136 : vector<1x2xi1>, vector<1x2xf32>
    %138 = arith.addf %124, %137 : vector<1x2xf32>
    %c0_123 = arith.constant 0 : index
    %c0_124 = arith.constant 0 : index
    %c0_125 = arith.constant 0 : index
    %139 = vector.load %arg22[%c0_123, %c0_124, %c0_125] : memref<1x2x2xf32, #tpu.memory_space<vmem>>, vector<1x1x2xf32>
    %140 = vector.shape_cast %139 : vector<1x1x2xf32> to vector<1x2xf32>
    %141 = vector.shape_cast %138 : vector<1x2xf32> to vector<1x1x2xf32>
    tpu.vector_store %arg22[%c0_123, %c0_124, %c0_125], %141 {strides = array<i32>} : memref<1x2x2xf32, #tpu.memory_space<vmem>>, vector<1x1x2xf32>,
    %c0_126 = arith.constant 0 : index
    %c0_127 = arith.constant 0 : index
    %142 = vector.load %arg2[%c0_126, %c0_127] : memref<3x8xf32, #tpu.memory_space<vmem>>, vector<3x8xf32>
    %c0_128 = arith.constant 0 : index
    %c0_129 = arith.constant 0 : index
    %143 = vector.load %arg3[%c0_128, %c0_129] : memref<3x8xf32, #tpu.memory_space<vmem>>, vector<3x8xf32>
    %c0_130 = arith.constant 0 : index
    %c0_131 = arith.constant 0 : index
    %144 = vector.load %arg4[%c0_130, %c0_131] : memref<1x8xf32, #tpu.memory_space<vmem>>, vector<1x8xf32>
    %c0_132 = arith.constant 0 : index
    %c256 = arith.constant 256 : index
    %c0_133 = arith.constant 0 : index
    %145 = tpu.strided_load %arg1[%c0_132, %c256, %c0_133] {strides = array<i32: 1, 2, 1>} : memref<1x512x3xf32, #tpu.memory_space<vmem>>, vector<1x127x3xf32>
    %146 = vector.shape_cast %145 : vector<1x127x3xf32> to vector<127x3xf32>
    %c0_134 = arith.constant 0 : index
    %c257 = arith.constant 257 : index
    %c0_135 = arith.constant 0 : index
    %147 = tpu.strided_load %arg1[%c0_134, %c257, %c0_135] {strides = array<i32: 1, 2, 1>} : memref<1x512x3xf32, #tpu.memory_space<vmem>>, vector<1x127x3xf32>
    %148 = vector.shape_cast %147 : vector<1x127x3xf32> to vector<127x3xf32>
    %c0_136 = arith.constant 0 : index
    %c258 = arith.constant 258 : index
    %c0_137 = arith.constant 0 : index
    %149 = tpu.strided_load %arg1[%c0_136, %c258, %c0_137] {strides = array<i32: 1, 2, 1>} : memref<1x512x3xf32, #tpu.memory_space<vmem>>, vector<1x127x3xf32>
    %150 = vector.shape_cast %149 : vector<1x127x3xf32> to vector<127x3xf32>
    %cst_138 = arith.constant dense<0.000000e+00> : vector<127x8xf32>
    %151 = tpu.matmul %146, %142, %cst_138 {dimension_numbers = #tpu.dot_dimension_numbers<[1], [0], [0], [1], [0, 0, 1, 1], [], []>} : vector<127x3xf32>, vector<3x8xf32>, vector<127x8xf32> -> vector<127x8xf32>
    %cst_139 = arith.constant dense<0.000000e+00> : vector<127x8xf32>
    %152 = tpu.matmul %148, %143, %cst_139 {dimension_numbers = #tpu.dot_dimension_numbers<[1], [0], [0], [1], [0, 0, 1, 1], [], []>} : vector<127x3xf32>, vector<3x8xf32>, vector<127x8xf32> -> vector<127x8xf32>
    %153 = arith.addf %151, %152 : vector<127x8xf32>
    %cst_140 = arith.constant dense<0.000000e+00> : vector<127x8xf32>
    %154 = tpu.matmul %148, %142, %cst_140 {dimension_numbers = #tpu.dot_dimension_numbers<[1], [0], [0], [1], [0, 0, 1, 1], [], []>} : vector<127x3xf32>, vector<3x8xf32>, vector<127x8xf32> -> vector<127x8xf32>
    %cst_141 = arith.constant dense<0.000000e+00> : vector<127x8xf32>
    %155 = tpu.matmul %150, %143, %cst_141 {dimension_numbers = #tpu.dot_dimension_numbers<[1], [0], [0], [1], [0, 0, 1, 1], [], []>} : vector<127x3xf32>, vector<3x8xf32>, vector<127x8xf32> -> vector<127x8xf32>
    %156 = arith.addf %154, %155 : vector<127x8xf32>
    %157 = arith.maximumf %153, %156 : vector<127x8xf32>
    %158 = vector.broadcast %144 : vector<1x8xf32> to vector<127x8xf32>
    %159 = arith.addf %157, %158 : vector<127x8xf32>
    %cst_142 = arith.constant 0.000000e+00 : f32
    %160 = vector.broadcast %cst_142 : f32 to vector<127x8xf32>
    %161 = arith.maximumf %159, %160 : vector<127x8xf32>
    %c0_143 = arith.constant 0 : index
    %c0_144 = arith.constant 0 : index
    %162 = vector.load %arg23[%c0_143, %c0_144] : memref<127x8xf32, #tpu.memory_space<vmem>>, vector<127x8xf32>
    tpu.vector_store %arg23[%c0_143, %c0_144], %161 {strides = array<i32>} : memref<127x8xf32, #tpu.memory_space<vmem>>, vector<127x8xf32>,
    %c0_145 = arith.constant 0 : index
    %c0_146 = arith.constant 0 : index
    %163 = vector.load %arg5[%c0_145, %c0_146] : memref<8x16xf32, #tpu.memory_space<vmem>>, vector<8x16xf32>
    %c0_147 = arith.constant 0 : index
    %c0_148 = arith.constant 0 : index
    %164 = vector.load %arg6[%c0_147, %c0_148] : memref<8x16xf32, #tpu.memory_space<vmem>>, vector<8x16xf32>
    %c0_149 = arith.constant 0 : index
    %c0_150 = arith.constant 0 : index
    %165 = vector.load %arg7[%c0_149, %c0_150] : memref<1x16xf32, #tpu.memory_space<vmem>>, vector<1x16xf32>
    %c0_151 = arith.constant 0 : index
    %c0_152 = arith.constant 0 : index
    %166 = tpu.strided_load %arg23[%c0_151, %c0_152] {strides = array<i32: 2, 1>} : memref<127x8xf32, #tpu.memory_space<vmem>>, vector<63x8xf32>
    %c1_153 = arith.constant 1 : index
    %c0_154 = arith.constant 0 : index
    %167 = tpu.strided_load %arg23[%c1_153, %c0_154] {strides = array<i32: 2, 1>} : memref<127x8xf32, #tpu.memory_space<vmem>>, vector<63x8xf32>
    %c2_155 = arith.constant 2 : index
    %c0_156 = arith.constant 0 : index
    %168 = tpu.strided_load %arg23[%c2_155, %c0_156] {strides = array<i32: 2, 1>} : memref<127x8xf32, #tpu.memory_space<vmem>>, vector<63x8xf32>
    %cst_157 = arith.constant dense<0.000000e+00> : vector<63x16xf32>
    %169 = tpu.matmul %166, %163, %cst_157 {dimension_numbers = #tpu.dot_dimension_numbers<[1], [0], [0], [1], [0, 0, 1, 1], [], []>} : vector<63x8xf32>, vector<8x16xf32>, vector<63x16xf32> -> vector<63x16xf32>
    %cst_158 = arith.constant dense<0.000000e+00> : vector<63x16xf32>
    %170 = tpu.matmul %167, %164, %cst_158 {dimension_numbers = #tpu.dot_dimension_numbers<[1], [0], [0], [1], [0, 0, 1, 1], [], []>} : vector<63x8xf32>, vector<8x16xf32>, vector<63x16xf32> -> vector<63x16xf32>
    %171 = arith.addf %169, %170 : vector<63x16xf32>
    %cst_159 = arith.constant dense<0.000000e+00> : vector<63x16xf32>
    %172 = tpu.matmul %167, %163, %cst_159 {dimension_numbers = #tpu.dot_dimension_numbers<[1], [0], [0], [1], [0, 0, 1, 1], [], []>} : vector<63x8xf32>, vector<8x16xf32>, vector<63x16xf32> -> vector<63x16xf32>
    %cst_160 = arith.constant dense<0.000000e+00> : vector<63x16xf32>
    %173 = tpu.matmul %168, %164, %cst_160 {dimension_numbers = #tpu.dot_dimension_numbers<[1], [0], [0], [1], [0, 0, 1, 1], [], []>} : vector<63x8xf32>, vector<8x16xf32>, vector<63x16xf32> -> vector<63x16xf32>
    %174 = arith.addf %172, %173 : vector<63x16xf32>
    %175 = arith.maximumf %171, %174 : vector<63x16xf32>
    %176 = vector.broadcast %165 : vector<1x16xf32> to vector<63x16xf32>
    %177 = arith.addf %175, %176 : vector<63x16xf32>
    %cst_161 = arith.constant 0.000000e+00 : f32
    %178 = vector.broadcast %cst_161 : f32 to vector<63x16xf32>
    %179 = arith.maximumf %177, %178 : vector<63x16xf32>
    %c0_162 = arith.constant 0 : index
    %c0_163 = arith.constant 0 : index
    %180 = vector.load %arg24[%c0_162, %c0_163] : memref<63x16xf32, #tpu.memory_space<vmem>>, vector<63x16xf32>
    tpu.vector_store %arg24[%c0_162, %c0_163], %179 {strides = array<i32>} : memref<63x16xf32, #tpu.memory_space<vmem>>, vector<63x16xf32>,
    %c0_164 = arith.constant 0 : index
    %c0_165 = arith.constant 0 : index
    %181 = vector.load %arg8[%c0_164, %c0_165] : memref<16x32xf32, #tpu.memory_space<vmem>>, vector<16x32xf32>
    %c0_166 = arith.constant 0 : index
    %c0_167 = arith.constant 0 : index
    %182 = vector.load %arg9[%c0_166, %c0_167] : memref<16x32xf32, #tpu.memory_space<vmem>>, vector<16x32xf32>
    %c0_168 = arith.constant 0 : index
    %c0_169 = arith.constant 0 : index
    %183 = vector.load %arg10[%c0_168, %c0_169] : memref<1x32xf32, #tpu.memory_space<vmem>>, vector<1x32xf32>
    %c0_170 = arith.constant 0 : index
    %c0_171 = arith.constant 0 : index
    %184 = tpu.strided_load %arg24[%c0_170, %c0_171] {strides = array<i32: 2, 1>} : memref<63x16xf32, #tpu.memory_space<vmem>>, vector<31x16xf32>
    %c1_172 = arith.constant 1 : index
    %c0_173 = arith.constant 0 : index
    %185 = tpu.strided_load %arg24[%c1_172, %c0_173] {strides = array<i32: 2, 1>} : memref<63x16xf32, #tpu.memory_space<vmem>>, vector<31x16xf32>
    %c2_174 = arith.constant 2 : index
    %c0_175 = arith.constant 0 : index
    %186 = tpu.strided_load %arg24[%c2_174, %c0_175] {strides = array<i32: 2, 1>} : memref<63x16xf32, #tpu.memory_space<vmem>>, vector<31x16xf32>
    %cst_176 = arith.constant dense<0.000000e+00> : vector<31x32xf32>
    %187 = tpu.matmul %184, %181, %cst_176 {dimension_numbers = #tpu.dot_dimension_numbers<[1], [0], [0], [1], [0, 0, 1, 1], [], []>} : vector<31x16xf32>, vector<16x32xf32>, vector<31x32xf32> -> vector<31x32xf32>
    %cst_177 = arith.constant dense<0.000000e+00> : vector<31x32xf32>
    %188 = tpu.matmul %185, %182, %cst_177 {dimension_numbers = #tpu.dot_dimension_numbers<[1], [0], [0], [1], [0, 0, 1, 1], [], []>} : vector<31x16xf32>, vector<16x32xf32>, vector<31x32xf32> -> vector<31x32xf32>
    %189 = arith.addf %187, %188 : vector<31x32xf32>
    %cst_178 = arith.constant dense<0.000000e+00> : vector<31x32xf32>
    %190 = tpu.matmul %185, %181, %cst_178 {dimension_numbers = #tpu.dot_dimension_numbers<[1], [0], [0], [1], [0, 0, 1, 1], [], []>} : vector<31x16xf32>, vector<16x32xf32>, vector<31x32xf32> -> vector<31x32xf32>
    %cst_179 = arith.constant dense<0.000000e+00> : vector<31x32xf32>
    %191 = tpu.matmul %186, %182, %cst_179 {dimension_numbers = #tpu.dot_dimension_numbers<[1], [0], [0], [1], [0, 0, 1, 1], [], []>} : vector<31x16xf32>, vector<16x32xf32>, vector<31x32xf32> -> vector<31x32xf32>
    %192 = arith.addf %190, %191 : vector<31x32xf32>
    %193 = arith.maximumf %189, %192 : vector<31x32xf32>
    %194 = vector.broadcast %183 : vector<1x32xf32> to vector<31x32xf32>
    %195 = arith.addf %193, %194 : vector<31x32xf32>
    %cst_180 = arith.constant 0.000000e+00 : f32
    %196 = vector.broadcast %cst_180 : f32 to vector<31x32xf32>
    %197 = arith.maximumf %195, %196 : vector<31x32xf32>
    %c0_181 = arith.constant 0 : index
    %c0_182 = arith.constant 0 : index
    %198 = vector.load %arg25[%c0_181, %c0_182] : memref<31x32xf32, #tpu.memory_space<vmem>>, vector<31x32xf32>
    tpu.vector_store %arg25[%c0_181, %c0_182], %197 {strides = array<i32>} : memref<31x32xf32, #tpu.memory_space<vmem>>, vector<31x32xf32>,
    %c0_183 = arith.constant 0 : index
    %c0_184 = arith.constant 0 : index
    %199 = vector.load %arg11[%c0_183, %c0_184] : memref<32x64xf32, #tpu.memory_space<vmem>>, vector<32x64xf32>
    %c0_185 = arith.constant 0 : index
    %c0_186 = arith.constant 0 : index
    %200 = vector.load %arg12[%c0_185, %c0_186] : memref<32x64xf32, #tpu.memory_space<vmem>>, vector<32x64xf32>
    %c0_187 = arith.constant 0 : index
    %c0_188 = arith.constant 0 : index
    %201 = vector.load %arg13[%c0_187, %c0_188] : memref<1x64xf32, #tpu.memory_space<vmem>>, vector<1x64xf32>
    %c0_189 = arith.constant 0 : index
    %c0_190 = arith.constant 0 : index
    %202 = tpu.strided_load %arg25[%c0_189, %c0_190] {strides = array<i32: 2, 1>} : memref<31x32xf32, #tpu.memory_space<vmem>>, vector<15x32xf32>
    %c1_191 = arith.constant 1 : index
    %c0_192 = arith.constant 0 : index
    %203 = tpu.strided_load %arg25[%c1_191, %c0_192] {strides = array<i32: 2, 1>} : memref<31x32xf32, #tpu.memory_space<vmem>>, vector<15x32xf32>
    %c2_193 = arith.constant 2 : index
    %c0_194 = arith.constant 0 : index
    %204 = tpu.strided_load %arg25[%c2_193, %c0_194] {strides = array<i32: 2, 1>} : memref<31x32xf32, #tpu.memory_space<vmem>>, vector<15x32xf32>
    %cst_195 = arith.constant dense<0.000000e+00> : vector<15x64xf32>
    %205 = tpu.matmul %202, %199, %cst_195 {dimension_numbers = #tpu.dot_dimension_numbers<[1], [0], [0], [1], [0, 0, 1, 1], [], []>} : vector<15x32xf32>, vector<32x64xf32>, vector<15x64xf32> -> vector<15x64xf32>
    %cst_196 = arith.constant dense<0.000000e+00> : vector<15x64xf32>
    %206 = tpu.matmul %203, %200, %cst_196 {dimension_numbers = #tpu.dot_dimension_numbers<[1], [0], [0], [1], [0, 0, 1, 1], [], []>} : vector<15x32xf32>, vector<32x64xf32>, vector<15x64xf32> -> vector<15x64xf32>
    %207 = arith.addf %205, %206 : vector<15x64xf32>
    %cst_197 = arith.constant dense<0.000000e+00> : vector<15x64xf32>
    %208 = tpu.matmul %203, %199, %cst_197 {dimension_numbers = #tpu.dot_dimension_numbers<[1], [0], [0], [1], [0, 0, 1, 1], [], []>} : vector<15x32xf32>, vector<32x64xf32>, vector<15x64xf32> -> vector<15x64xf32>
    %cst_198 = arith.constant dense<0.000000e+00> : vector<15x64xf32>
    %209 = tpu.matmul %204, %200, %cst_198 {dimension_numbers = #tpu.dot_dimension_numbers<[1], [0], [0], [1], [0, 0, 1, 1], [], []>} : vector<15x32xf32>, vector<32x64xf32>, vector<15x64xf32> -> vector<15x64xf32>
    %210 = arith.addf %208, %209 : vector<15x64xf32>
    %211 = arith.maximumf %207, %210 : vector<15x64xf32>
    %212 = vector.broadcast %201 : vector<1x64xf32> to vector<15x64xf32>
    %213 = arith.addf %211, %212 : vector<15x64xf32>
    %cst_199 = arith.constant 0.000000e+00 : f32
    %214 = vector.broadcast %cst_199 : f32 to vector<15x64xf32>
    %215 = arith.maximumf %213, %214 : vector<15x64xf32>
    %c0_200 = arith.constant 0 : index
    %c0_201 = arith.constant 0 : index
    %216 = vector.load %arg26[%c0_200, %c0_201] : memref<15x64xf32, #tpu.memory_space<vmem>>, vector<15x64xf32>
    tpu.vector_store %arg26[%c0_200, %c0_201], %215 {strides = array<i32>} : memref<15x64xf32, #tpu.memory_space<vmem>>, vector<15x64xf32>,
    %c0_202 = arith.constant 0 : index
    %c0_203 = arith.constant 0 : index
    %217 = vector.load %arg14[%c0_202, %c0_203] : memref<64x128xf32, #tpu.memory_space<vmem>>, vector<64x128xf32>
    %c0_204 = arith.constant 0 : index
    %c0_205 = arith.constant 0 : index
    %218 = vector.load %arg15[%c0_204, %c0_205] : memref<64x128xf32, #tpu.memory_space<vmem>>, vector<64x128xf32>
    %c0_206 = arith.constant 0 : index
    %c0_207 = arith.constant 0 : index
    %219 = vector.load %arg16[%c0_206, %c0_207] : memref<1x128xf32, #tpu.memory_space<vmem>>, vector<1x128xf32>
    %c0_208 = arith.constant 0 : index
    %c0_209 = arith.constant 0 : index
    %220 = tpu.strided_load %arg26[%c0_208, %c0_209] {strides = array<i32: 2, 1>} : memref<15x64xf32, #tpu.memory_space<vmem>>, vector<7x64xf32>
    %c1_210 = arith.constant 1 : index
    %c0_211 = arith.constant 0 : index
    %221 = tpu.strided_load %arg26[%c1_210, %c0_211] {strides = array<i32: 2, 1>} : memref<15x64xf32, #tpu.memory_space<vmem>>, vector<7x64xf32>
    %c2_212 = arith.constant 2 : index
    %c0_213 = arith.constant 0 : index
    %222 = tpu.strided_load %arg26[%c2_212, %c0_213] {strides = array<i32: 2, 1>} : memref<15x64xf32, #tpu.memory_space<vmem>>, vector<7x64xf32>
    %cst_214 = arith.constant dense<0.000000e+00> : vector<7x128xf32>
    %223 = tpu.matmul %220, %217, %cst_214 {dimension_numbers = #tpu.dot_dimension_numbers<[1], [0], [0], [1], [0, 0, 1, 1], [], []>} : vector<7x64xf32>, vector<64x128xf32>, vector<7x128xf32> -> vector<7x128xf32>
    %cst_215 = arith.constant dense<0.000000e+00> : vector<7x128xf32>
    %224 = tpu.matmul %221, %218, %cst_215 {dimension_numbers = #tpu.dot_dimension_numbers<[1], [0], [0], [1], [0, 0, 1, 1], [], []>} : vector<7x64xf32>, vector<64x128xf32>, vector<7x128xf32> -> vector<7x128xf32>
    %225 = arith.addf %223, %224 : vector<7x128xf32>
    %cst_216 = arith.constant dense<0.000000e+00> : vector<7x128xf32>
    %226 = tpu.matmul %221, %217, %cst_216 {dimension_numbers = #tpu.dot_dimension_numbers<[1], [0], [0], [1], [0, 0, 1, 1], [], []>} : vector<7x64xf32>, vector<64x128xf32>, vector<7x128xf32> -> vector<7x128xf32>
    %cst_217 = arith.constant dense<0.000000e+00> : vector<7x128xf32>
    %227 = tpu.matmul %222, %218, %cst_217 {dimension_numbers = #tpu.dot_dimension_numbers<[1], [0], [0], [1], [0, 0, 1, 1], [], []>} : vector<7x64xf32>, vector<64x128xf32>, vector<7x128xf32> -> vector<7x128xf32>
    %228 = arith.addf %226, %227 : vector<7x128xf32>
    %229 = arith.maximumf %225, %228 : vector<7x128xf32>
    %230 = vector.broadcast %219 : vector<1x128xf32> to vector<7x128xf32>
    %231 = arith.addf %229, %230 : vector<7x128xf32>
    %cst_218 = arith.constant 0.000000e+00 : f32
    %232 = vector.broadcast %cst_218 : f32 to vector<7x128xf32>
    %233 = arith.maximumf %231, %232 : vector<7x128xf32>
    %c0_219 = arith.constant 0 : index
    %c0_220 = arith.constant 0 : index
    %234 = vector.load %arg27[%c0_219, %c0_220] : memref<7x128xf32, #tpu.memory_space<vmem>>, vector<7x128xf32>
    tpu.vector_store %arg27[%c0_219, %c0_220], %233 {strides = array<i32>} : memref<7x128xf32, #tpu.memory_space<vmem>>, vector<7x128xf32>,
    %c0_221 = arith.constant 0 : index
    %c0_222 = arith.constant 0 : index
    %235 = vector.load %arg17[%c0_221, %c0_222] : memref<128x256xf32, #tpu.memory_space<vmem>>, vector<128x256xf32>
    %c0_223 = arith.constant 0 : index
    %c0_224 = arith.constant 0 : index
    %236 = vector.load %arg18[%c0_223, %c0_224] : memref<128x256xf32, #tpu.memory_space<vmem>>, vector<128x256xf32>
    %c0_225 = arith.constant 0 : index
    %c0_226 = arith.constant 0 : index
    %237 = vector.load %arg19[%c0_225, %c0_226] : memref<1x256xf32, #tpu.memory_space<vmem>>, vector<1x256xf32>
    %c0_227 = arith.constant 0 : index
    %c0_228 = arith.constant 0 : index
    %238 = tpu.strided_load %arg27[%c0_227, %c0_228] {strides = array<i32: 2, 1>} : memref<7x128xf32, #tpu.memory_space<vmem>>, vector<3x128xf32>
    %c1_229 = arith.constant 1 : index
    %c0_230 = arith.constant 0 : index
    %239 = tpu.strided_load %arg27[%c1_229, %c0_230] {strides = array<i32: 2, 1>} : memref<7x128xf32, #tpu.memory_space<vmem>>, vector<3x128xf32>
    %c2_231 = arith.constant 2 : index
    %c0_232 = arith.constant 0 : index
    %240 = tpu.strided_load %arg27[%c2_231, %c0_232] {strides = array<i32: 2, 1>} : memref<7x128xf32, #tpu.memory_space<vmem>>, vector<3x128xf32>
    %241 = tpu.concatenate %235, %236 in 0 : vector<128x256xf32>, vector<128x256xf32> -> vector<256x256xf32>
    %242 = tpu.concatenate %238, %239 in 1 : vector<3x128xf32>, vector<3x128xf32> -> vector<3x256xf32>
    %cst_233 = arith.constant dense<0.000000e+00> : vector<3x256xf32>
    %243 = tpu.matmul %242, %241, %cst_233 {dimension_numbers = #tpu.dot_dimension_numbers<[1], [0], [0], [1], [0, 0, 1, 1], [], []>} : vector<3x256xf32>, vector<256x256xf32>, vector<3x256xf32> -> vector<3x256xf32>
    %244 = tpu.concatenate %239, %240 in 1 : vector<3x128xf32>, vector<3x128xf32> -> vector<3x256xf32>
    %cst_234 = arith.constant dense<0.000000e+00> : vector<3x256xf32>
    %245 = tpu.matmul %244, %241, %cst_234 {dimension_numbers = #tpu.dot_dimension_numbers<[1], [0], [0], [1], [0, 0, 1, 1], [], []>} : vector<3x256xf32>, vector<256x256xf32>, vector<3x256xf32> -> vector<3x256xf32>
    %246 = arith.maximumf %243, %245 : vector<3x256xf32>
    %247 = vector.broadcast %237 : vector<1x256xf32> to vector<3x256xf32>
    %248 = arith.addf %246, %247 : vector<3x256xf32>
    %cst_235 = arith.constant 0.000000e+00 : f32
    %249 = vector.broadcast %cst_235 : f32 to vector<3x256xf32>
    %250 = arith.maximumf %248, %249 : vector<3x256xf32>
    %c0_236 = arith.constant 0 : index
    %c0_237 = arith.constant 0 : index
    %251 = vector.load %arg21[%c0_236, %c0_237] : memref<1x2xf32, #tpu.memory_space<vmem>>, vector<1x2xf32>
    %c0_238 = arith.constant 0 : index
    %c0_239 = arith.constant 0 : index
    %c0_240 = arith.constant 0 : index
    %252 = vector.load %arg20[%c0_238, %c0_239, %c0_240] : memref<2x3x256xf32, #tpu.memory_space<vmem>>, vector<1x3x256xf32>
    %253 = vector.shape_cast %252 : vector<1x3x256xf32> to vector<3x256xf32>
    %254 = arith.mulf %250, %253 : vector<3x256xf32>
    %cst_241 = arith.constant dense<0.000000e+00> : vector<3xf32>
    %255 = vector.multi_reduction <add>, %254, %cst_241 [1] : vector<3x256xf32> to vector<3xf32>
    %256 = vector.shape_cast %255 : vector<3xf32> to vector<3x1xf32>
    %cst_242 = arith.constant dense<0.000000e+00> : vector<1xf32>
    %257 = vector.multi_reduction <add>, %256, %cst_242 [0] : vector<3x1xf32> to vector<1xf32>
    %258 = vector.shape_cast %257 : vector<1xf32> to vector<1x1xf32>
    %c0_i32_243 = arith.constant 0 : i32
    %259 = vector.broadcast %c0_i32_243 : i32 to vector<1x2xi32>
    %260 = arith.cmpi eq, %0, %259 : vector<1x2xi32>
    %cst_244 = arith.constant 0.000000e+00 : f32
    %261 = vector.shape_cast %258 : vector<1x1xf32> to vector<1x1xf32>
    %262 = vector.broadcast %261 : vector<1x1xf32> to vector<1x2xf32>
    %263 = vector.broadcast %cst_244 : f32 to vector<1x2xf32>
    %264 = arith.select %260, %262, %263 : vector<1x2xi1>, vector<1x2xf32>
    %265 = arith.addf %251, %264 : vector<1x2xf32>
    %c1_245 = arith.constant 1 : index
    %c0_246 = arith.constant 0 : index
    %c0_247 = arith.constant 0 : index
    %266 = vector.load %arg20[%c1_245, %c0_246, %c0_247] : memref<2x3x256xf32, #tpu.memory_space<vmem>>, vector<1x3x256xf32>
    %267 = vector.shape_cast %266 : vector<1x3x256xf32> to vector<3x256xf32>
    %268 = arith.mulf %250, %267 : vector<3x256xf32>
    %cst_248 = arith.constant dense<0.000000e+00> : vector<3xf32>
    %269 = vector.multi_reduction <add>, %268, %cst_248 [1] : vector<3x256xf32> to vector<3xf32>
    %270 = vector.shape_cast %269 : vector<3xf32> to vector<3x1xf32>
    %cst_249 = arith.constant dense<0.000000e+00> : vector<1xf32>
    %271 = vector.multi_reduction <add>, %270, %cst_249 [0] : vector<3x1xf32> to vector<1xf32>
    %272 = vector.shape_cast %271 : vector<1xf32> to vector<1x1xf32>
    %c1_i32_250 = arith.constant 1 : i32
    %273 = vector.broadcast %c1_i32_250 : i32 to vector<1x2xi32>
    %274 = arith.cmpi eq, %0, %273 : vector<1x2xi32>
    %cst_251 = arith.constant 0.000000e+00 : f32
    %275 = vector.shape_cast %272 : vector<1x1xf32> to vector<1x1xf32>
    %276 = vector.broadcast %275 : vector<1x1xf32> to vector<1x2xf32>
    %277 = vector.broadcast %cst_251 : f32 to vector<1x2xf32>
    %278 = arith.select %274, %276, %277 : vector<1x2xi1>, vector<1x2xf32>
    %279 = arith.addf %265, %278 : vector<1x2xf32>
    %c0_252 = arith.constant 0 : index
    %c1_253 = arith.constant 1 : index
    %c0_254 = arith.constant 0 : index
    %280 = vector.load %arg22[%c0_252, %c1_253, %c0_254] : memref<1x2x2xf32, #tpu.memory_space<vmem>>, vector<1x1x2xf32>
    %281 = vector.shape_cast %280 : vector<1x1x2xf32> to vector<1x2xf32>
    %282 = vector.shape_cast %279 : vector<1x2xf32> to vector<1x1x2xf32>
    tpu.vector_store %arg22[%c0_252, %c1_253, %c0_254], %282 {strides = array<i32>} : memref<1x2x2xf32, #tpu.memory_space<vmem>>, vector<1x1x2xf32>,
    return
  }
  func.func @transform_0(%arg0: i32) -> (i32, i32, i32) {
    %c0_i32 = arith.constant 0 : i32
    %c0_i32_0 = arith.constant 0 : i32
    %c0_i32_1 = arith.constant 0 : i32
    return %arg0, %c0_i32, %c0_i32_0 : i32, i32, i32
  }
  func.func @transform_1(%arg0: i32) -> (i32, i32) {
    %c0_i32 = arith.constant 0 : i32
    %c0_i32_0 = arith.constant 0 : i32
    %c0_i32_1 = arith.constant 0 : i32
    return %c0_i32, %c0_i32_0 : i32, i32
  }
  func.func @transform_2(%arg0: i32) -> (i32, i32) {
    %c0_i32 = arith.constant 0 : i32
    %c0_i32_0 = arith.constant 0 : i32
    %c0_i32_1 = arith.constant 0 : i32
    return %c0_i32, %c0_i32_0 : i32, i32
  }
  func.func @transform_3(%arg0: i32) -> (i32, i32) {
    %c0_i32 = arith.constant 0 : i32
    %c0_i32_0 = arith.constant 0 : i32
    %c0_i32_1 = arith.constant 0 : i32
    return %c0_i32, %c0_i32_0 : i32, i32
  }
  func.func @transform_4(%arg0: i32) -> (i32, i32) {
    %c0_i32 = arith.constant 0 : i32
    %c0_i32_0 = arith.constant 0 : i32
    %c0_i32_1 = arith.constant 0 : i32
    return %c0_i32, %c0_i32_0 : i32, i32
  }
  func.func @transform_5(%arg0: i32) -> (i32, i32) {
    %c0_i32 = arith.constant 0 : i32
    %c0_i32_0 = arith.constant 0 : i32
    %c0_i32_1 = arith.constant 0 : i32
    return %c0_i32, %c0_i32_0 : i32, i32
  }
  func.func @transform_6(%arg0: i32) -> (i32, i32) {
    %c0_i32 = arith.constant 0 : i32
    %c0_i32_0 = arith.constant 0 : i32
    %c0_i32_1 = arith.constant 0 : i32
    return %c0_i32, %c0_i32_0 : i32, i32
  }
  func.func @transform_7(%arg0: i32) -> (i32, i32) {
    %c0_i32 = arith.constant 0 : i32
    %c0_i32_0 = arith.constant 0 : i32
    %c0_i32_1 = arith.constant 0 : i32
    return %c0_i32, %c0_i32_0 : i32, i32
  }
  func.func @transform_8(%arg0: i32) -> (i32, i32) {
    %c0_i32 = arith.constant 0 : i32
    %c0_i32_0 = arith.constant 0 : i32
    %c0_i32_1 = arith.constant 0 : i32
    return %c0_i32, %c0_i32_0 : i32, i32
  }
  func.func @transform_9(%arg0: i32) -> (i32, i32) {
    %c0_i32 = arith.constant 0 : i32
    %c0_i32_0 = arith.constant 0 : i32
    %c0_i32_1 = arith.constant 0 : i32
    return %c0_i32, %c0_i32_0 : i32, i32
  }
  func.func @transform_10(%arg0: i32) -> (i32, i32) {
    %c0_i32 = arith.constant 0 : i32
    %c0_i32_0 = arith.constant 0 : i32
    %c0_i32_1 = arith.constant 0 : i32
    return %c0_i32, %c0_i32_0 : i32, i32
  }
  func.func @transform_11(%arg0: i32) -> (i32, i32) {
    %c0_i32 = arith.constant 0 : i32
    %c0_i32_0 = arith.constant 0 : i32
    %c0_i32_1 = arith.constant 0 : i32
    return %c0_i32, %c0_i32_0 : i32, i32
  }
  func.func @transform_12(%arg0: i32) -> (i32, i32) {
    %c0_i32 = arith.constant 0 : i32
    %c0_i32_0 = arith.constant 0 : i32
    %c0_i32_1 = arith.constant 0 : i32
    return %c0_i32, %c0_i32_0 : i32, i32
  }
  func.func @transform_13(%arg0: i32) -> (i32, i32) {
    %c0_i32 = arith.constant 0 : i32
    %c0_i32_0 = arith.constant 0 : i32
    %c0_i32_1 = arith.constant 0 : i32
    return %c0_i32, %c0_i32_0 : i32, i32
  }
  func.func @transform_14(%arg0: i32) -> (i32, i32) {
    %c0_i32 = arith.constant 0 : i32
    %c0_i32_0 = arith.constant 0 : i32
    %c0_i32_1 = arith.constant 0 : i32
    return %c0_i32, %c0_i32_0 : i32, i32
  }
  func.func @transform_15(%arg0: i32) -> (i32, i32) {
    %c0_i32 = arith.constant 0 : i32
    %c0_i32_0 = arith.constant 0 : i32
    %c0_i32_1 = arith.constant 0 : i32
    return %c0_i32, %c0_i32_0 : i32, i32
  }
  func.func @transform_16(%arg0: i32) -> (i32, i32) {
    %c0_i32 = arith.constant 0 : i32
    %c0_i32_0 = arith.constant 0 : i32
    %c0_i32_1 = arith.constant 0 : i32
    return %c0_i32, %c0_i32_0 : i32, i32
  }
  func.func @transform_17(%arg0: i32) -> (i32, i32) {
    %c0_i32 = arith.constant 0 : i32
    %c0_i32_0 = arith.constant 0 : i32
    %c0_i32_1 = arith.constant 0 : i32
    return %c0_i32, %c0_i32_0 : i32, i32
  }
  func.func @transform_18(%arg0: i32) -> (i32, i32) {
    %c0_i32 = arith.constant 0 : i32
    %c0_i32_0 = arith.constant 0 : i32
    %c0_i32_1 = arith.constant 0 : i32
    return %c0_i32, %c0_i32_0 : i32, i32
  }
  func.func @transform_19(%arg0: i32) -> (i32, i32, i32) {
    %c0_i32 = arith.constant 0 : i32
    %c0_i32_0 = arith.constant 0 : i32
    %c0_i32_1 = arith.constant 0 : i32
    %c0_i32_2 = arith.constant 0 : i32
    return %c0_i32, %c0_i32_0, %c0_i32_1 : i32, i32, i32
  }
  func.func @transform_20(%arg0: i32) -> (i32, i32) {
    %c0_i32 = arith.constant 0 : i32
    %c0_i32_0 = arith.constant 0 : i32
    %c0_i32_1 = arith.constant 0 : i32
    return %c0_i32, %c0_i32_0 : i32, i32
  }
  func.func @transform_21(%arg0: i32) -> (i32, i32, i32) {
    %c0_i32 = arith.constant 0 : i32
    %c0_i32_0 = arith.constant 0 : i32
    %c0_i32_1 = arith.constant 0 : i32
    return %arg0, %c0_i32, %c0_i32_0 : i32, i32, i32
  }
}

</mosaic_0001>

<llo_original>
// kernel: tpu_custom_call.1
$region0: #{tpu_custom_call.1}
  #allocation0 [shape = 'u32[]', space=smem, size = 0x4, offset = 0x4, fixed_abs, tag = 'smem constant byte address 0x4 - core index']
  #allocation1 [shape = 'u32[144,128]{1,0:T(1,128)}', space=vmem, size = 0x12000, scoped, tag = 'internal scratch']
  #allocation2 [shape = 'f32[127,8]{1,0:T(8,128)}', space=vmem, size = 0x10000, scoped, tag = 'scratch operand']
  #allocation3 [shape = 'f32[63,16]{1,0:T(8,128)}', space=vmem, size = 0x8000, scoped, tag = 'scratch operand']
  #allocation4 [shape = 'f32[31,32]{1,0:T(8,128)}', space=vmem, size = 0x4000, scoped, tag = 'scratch operand']
  #allocation5 [shape = 'f32[15,64]{1,0:T(8,128)}', space=vmem, size = 0x2000, scoped, tag = 'scratch operand']
  #allocation6 [shape = 'f32[7,128]{1,0:T(8,128)}', space=vmem, size = 0x1000, scoped, tag = 'scratch operand']
  %s0 = inlined_call_operand.vmem [shape: f32[1,512,3], index: 0, kind: input, shape index: {}]
  %s1 = inlined_call_operand.hbm [shape: f32[3,8], index: 1, kind: input, shape index: {}]
  %s2 = inlined_call_operand.hbm [shape: f32[3,8], index: 2, kind: input, shape index: {}]
  %s3 = inlined_call_operand.vmem [shape: f32[1,8], index: 3, kind: input, shape index: {}]
  %s4 = inlined_call_operand.hbm [shape: f32[8,16], index: 4, kind: input, shape index: {}]
  %s5 = inlined_call_operand.hbm [shape: f32[8,16], index: 5, kind: input, shape index: {}]
  %s6 = inlined_call_operand.hbm [shape: f32[1,16], index: 6, kind: input, shape index: {}]
  %s7 = inlined_call_operand.hbm [shape: f32[16,32], index: 7, kind: input, shape index: {}]
  %s8 = inlined_call_operand.hbm [shape: f32[16,32], index: 8, kind: input, shape index: {}]
  %s9 = inlined_call_operand.hbm [shape: f32[1,32], index: 9, kind: input, shape index: {}]
  %s10 = inlined_call_operand.hbm [shape: f32[32,64], index: 10, kind: input, shape index: {}]
  %s11 = inlined_call_operand.hbm [shape: f32[32,64], index: 11, kind: input, shape index: {}]
  %s12 = inlined_call_operand.vmem [shape: f32[1,64], index: 12, kind: input, shape index: {}]
  %s13 = inlined_call_operand.vmem [shape: f32[64,128], index: 13, kind: input, shape index: {}]
  %s14 = inlined_call_operand.hbm [shape: f32[64,128], index: 14, kind: input, shape index: {}]
  %s15 = inlined_call_operand.vmem [shape: f32[1,128], index: 15, kind: input, shape index: {}]
  %s16 = inlined_call_operand.vmem [shape: f32[128,256], index: 16, kind: input, shape index: {}]
  %s17 = inlined_call_operand.vmem [shape: f32[128,256], index: 17, kind: input, shape index: {}]
  %s18 = inlined_call_operand.vmem [shape: f32[1,256], index: 18, kind: input, shape index: {}]
  %s19 = inlined_call_operand.vmem [shape: f32[2,3,256], index: 19, kind: input, shape index: {}]
  %s20 = inlined_call_operand.vmem [shape: f32[1,2], index: 20, kind: input, shape index: {}]
  %s21 = inlined_call_operand.hbm [shape: f32[1,2,2], index: 21, kind: output, shape index: {}]
  %s22 = sld [smem:[#allocation0]]
  $region138: #{tpu_custom_call.1} parent=0
    _
  %s24 = ssub.s32 1, %s22
  %s25 = scalar_select 0, %s24, %s22
  $region1: #{tpu_custom_call.1} parent=0
    #allocation7 [shape = 'u8[2048]{0}', space=vmem, size = 0x800, scoped, tag = 'input window, operand 1, single buffered']
    #allocation8 [shape = 's32[1]{0}', space=sflag, size = 0x4, scoped, tag = 'scoped memory for tpu_custom_call.1']
    #allocation9 [shape = 's32[1]{0}', space=sflag, size = 0x4, scoped, tag = 'scoped memory for tpu_custom_call.1']
    #allocation10 [shape = 'u8[2048]{0}', space=vmem, size = 0x800, scoped, tag = 'input window, operand 2, single buffered']
    #allocation11 [shape = 's32[1]{0}', space=sflag, size = 0x4, scoped, tag = 'scoped memory for tpu_custom_call.1']
    #allocation12 [shape = 'u8[4096]{0}', space=vmem, size = 0x1000, scoped, tag = 'input window, operand 4, single buffered']
    #allocation13 [shape = 'u8[4096]{0}', space=vmem, size = 0x1000, scoped, tag = 'input window, operand 5, single buffered']
    #allocation14 [shape = 's32[1]{0}', space=sflag, size = 0x4, scoped, tag = 'scoped memory for tpu_custom_call.1']
    #allocation15 [shape = 'u8[512]{0}', space=vmem, size = 0x400, scoped, tag = 'input window, operand 6, single buffered']
    #allocation16 [shape = 'u8[8192]{0}', space=vmem, size = 0x2000, scoped, tag = 'input window, operand 7, single buffered']
    #allocation17 [shape = 's32[1]{0}', space=sflag, size = 0x4, scoped, tag = 'scoped memory for tpu_custom_call.1']
    #allocation18 [shape = 'u8[8192]{0}', space=vmem, size = 0x2000, scoped, tag = 'input window, operand 8, single buffered']
    #allocation19 [shape = 'u8[512]{0}', space=vmem, size = 0x400, scoped, tag = 'input window, operand 9, single buffered']
    #allocation20 [shape = 's32[1]{0}', space=sflag, size = 0x4, scoped, tag = 'scoped memory for tpu_custom_call.1']
    #allocation21 [shape = 'u8[16384]{0}', space=vmem, size = 0x4000, scoped, tag = 'input window, operand 10, single buffered']
    #allocation22 [shape = 'u8[16384]{0}', space=vmem, size = 0x4000, scoped, tag = 'input window, operand 11, single buffered']
    #allocation23 [shape = 's32[1]{0}', space=sflag, size = 0x4, scoped, tag = 'scoped memory for tpu_custom_call.1']
    #allocation24 [shape = 'u8[32768]{0}', space=vmem, size = 0x8000, scoped, tag = 'input window, operand 14, single buffered']
    #allocation25 [shape = 'u8[1024]{0}', space=vmem, size = 0x400, scoped, tag = 'output window, operand 0, single buffered']
    %26 = vsyncpa [#allocation8], 0
    %27 = vsyncpa [#allocation11], 0
    %28 = vsyncpa [#allocation14], 0
    %29 = vsyncpa [#allocation17], 0
    %30 = vsyncpa [#allocation20], 0
    %31 = vsyncpa [#allocation23], 0
    %32 = vsyncpa [#allocation9], 0
    // Predicated region
    $region2: #{tpu_custom_call.1} parent=1 // pred_check
      _
    $region3: #{tpu_custom_call.1} parent=1 // pred_check_branch
      %34 = sbr.rel (0) target = $region5
    $region4: #{tpu_custom_call.1} parent=1 // pred_region
      _
    $region5: #{tpu_custom_call.1} parent=1 // pred_fallthru
      _
    // Predicated region
    $region6: #{tpu_custom_call.1} parent=1 // pred_check
      _
    $region7: #{tpu_custom_call.1} parent=1 // pred_check_branch
      %36 = sbr.rel (0) target = $region9
    $region8: #{tpu_custom_call.1} parent=1 // pred_region
      %s38 = ssub.s32 64, 64
      %39 = vsyncadd [#allocation8], %s38
      %s41 = sshll.u32 [#allocation7], 4
      %s42 = int_to_ptr.vmem [resolvable:$true] %s41
      %44 = dma.hbm_to_vmem [thread:$0]  %s1, 64, %s42, [#allocation8]
    $region9: #{tpu_custom_call.1} parent=1 // pred_fallthru
      _
    // Predicated region
    $region10: #{tpu_custom_call.1} parent=1 // pred_check
      _
    $region11: #{tpu_custom_call.1} parent=1 // pred_check_branch
      %46 = sbr.rel (0) target = $region13
    $region12: #{tpu_custom_call.1} parent=1 // pred_region
      %s48 = ssub.s32 64, 64
      %49 = vsyncadd [#allocation11], %s48
      %s51 = sshll.u32 [#allocation10], 4
      %s52 = int_to_ptr.vmem [resolvable:$true] %s51
      %54 = dma.hbm_to_vmem [thread:$0]  %s2, 64, %s52, [#allocation11]
    $region13: #{tpu_custom_call.1} parent=1 // pred_fallthru
      _
    // Predicated region
    $region14: #{tpu_custom_call.1} parent=1 // pred_check
      _
    $region15: #{tpu_custom_call.1} parent=1 // pred_check_branch
      %56 = sbr.rel (0) target = $region17
    $region16: #{tpu_custom_call.1} parent=1 // pred_region
      _
    $region17: #{tpu_custom_call.1} parent=1 // pred_fallthru
      _
    // Predicated region
    $region18: #{tpu_custom_call.1} parent=1 // pred_check
      _
    $region19: #{tpu_custom_call.1} parent=1 // pred_check_branch
      %58 = sbr.rel (0) target = $region21
    $region20: #{tpu_custom_call.1} parent=1 // pred_region
      %s60 = ssub.s32 128, 128
      %61 = vsyncadd [#allocation11], %s60
      %s63 = sshll.u32 [#allocation12], 4
      %s64 = int_to_ptr.vmem [resolvable:$true] %s63
      %66 = dma.hbm_to_vmem [thread:$0]  %s4, 128, %s64, [#allocation11]
    $region21: #{tpu_custom_call.1} parent=1 // pred_fallthru
      _
    // Predicated region
    $region22: #{tpu_custom_call.1} parent=1 // pred_check
      _
    $region23: #{tpu_custom_call.1} parent=1 // pred_check_branch
      %68 = sbr.rel (0) target = $region25
    $region24: #{tpu_custom_call.1} parent=1 // pred_region
      %s70 = ssub.s32 128, 128
      %71 = vsyncadd [#allocation14], %s70
      %s73 = sshll.u32 [#allocation13], 4
      %s74 = int_to_ptr.vmem [resolvable:$true] %s73
      %76 = dma.hbm_to_vmem [thread:$0]  %s5, 128, %s74, [#allocation14]
    $region25: #{tpu_custom_call.1} parent=1 // pred_fallthru
      _
    // Predicated region
    $region26: #{tpu_custom_call.1} parent=1 // pred_check
      _
    $region27: #{tpu_custom_call.1} parent=1 // pred_check_branch
      %78 = sbr.rel (0) target = $region29
    $region28: #{tpu_custom_call.1} parent=1 // pred_region
      %s80 = ssub.s32 16, 16
      %81 = vsyncadd [#allocation14], %s80
      %s83 = sshll.u32 [#allocation15], 4
      %s84 = int_to_ptr.vmem [resolvable:$true] %s83
      %86 = dma.hbm_to_vmem [thread:$0]  %s6, 16, %s84, [#allocation14]
    $region29: #{tpu_custom_call.1} parent=1 // pred_fallthru
      _
    // Predicated region
    $region30: #{tpu_custom_call.1} parent=1 // pred_check
      _
    $region31: #{tpu_custom_call.1} parent=1 // pred_check_branch
      %88 = sbr.rel (0) target = $region33
    $region32: #{tpu_custom_call.1} parent=1 // pred_region
      %s90 = ssub.s32 256, 256
      %91 = vsyncadd [#allocation17], %s90
      %s92 = sshll.u32 [#allocation16], 4
      %s93 = int_to_ptr.vmem [resolvable:$true] %s92
      %98 = dma.hbm_to_vmem [thread:$0]  %s7, 256, %s93, [#allocation17], 128, 128, 8
    $region33: #{tpu_custom_call.1} parent=1 // pred_fallthru
      _
    // Predicated region
    $region34: #{tpu_custom_call.1} parent=1 // pred_check
      _
    $region35: #{tpu_custom_call.1} parent=1 // pred_check_branch
      %100 = sbr.rel (0) target = $region37
    $region36: #{tpu_custom_call.1} parent=1 // pred_region
      %s102 = ssub.s32 256, 256
      %103 = vsyncadd [#allocation17], %s102
      %s104 = sshll.u32 [#allocation18], 4
      %s105 = int_to_ptr.vmem [resolvable:$true] %s104
      %110 = dma.hbm_to_vmem [thread:$0]  %s8, 256, %s105, [#allocation17], 128, 128, 8
    $region37: #{tpu_custom_call.1} parent=1 // pred_fallthru
      _
    // Predicated region
    $region38: #{tpu_custom_call.1} parent=1 // pred_check
      _
    $region39: #{tpu_custom_call.1} parent=1 // pred_check_branch
      %112 = sbr.rel (0) target = $region41
    $region40: #{tpu_custom_call.1} parent=1 // pred_region
      %s114 = ssub.s32 16, 16
      %115 = vsyncadd [#allocation20], %s114
      %s117 = sshll.u32 [#allocation19], 4
      %s118 = int_to_ptr.vmem [resolvable:$true] %s117
      %120 = dma.hbm_to_vmem [thread:$0]  %s9, 16, %s118, [#allocation20]
    $region41: #{tpu_custom_call.1} parent=1 // pred_fallthru
      _
    // Predicated region
    $region42: #{tpu_custom_call.1} parent=1 // pred_check
      _
    $region43: #{tpu_custom_call.1} parent=1 // pred_check_branch
      %122 = sbr.rel (0) target = $region45
    $region44: #{tpu_custom_call.1} parent=1 // pred_region
      %s124 = ssub.s32 512, 512
      %125 = vsyncadd [#allocation20], %s124
      %s126 = sshll.u32 [#allocation21], 4
      %s127 = int_to_ptr.vmem [resolvable:$true] %s126
      %132 = dma.hbm_to_vmem [thread:$0]  %s10, 512, %s127, [#allocation20], 128, 128, 8
    $region45: #{tpu_custom_call.1} parent=1 // pred_fallthru
      _
    // Predicated region
    $region46: #{tpu_custom_call.1} parent=1 // pred_check
      _
    $region47: #{tpu_custom_call.1} parent=1 // pred_check_branch
      %134 = sbr.rel (0) target = $region49
    $region48: #{tpu_custom_call.1} parent=1 // pred_region
      %s136 = ssub.s32 512, 512
      %137 = vsyncadd [#allocation23], %s136
      %s138 = sshll.u32 [#allocation22], 4
      %s139 = int_to_ptr.vmem [resolvable:$true] %s138
      %144 = dma.hbm_to_vmem [thread:$0]  %s11, 512, %s139, [#allocation23], 128, 128, 8
    $region49: #{tpu_custom_call.1} parent=1 // pred_fallthru
      _
    // Predicated region
    $region50: #{tpu_custom_call.1} parent=1 // pred_check
      _
    $region51: #{tpu_custom_call.1} parent=1 // pred_check_branch
      %146 = sbr.rel (0) target = $region53
    $region52: #{tpu_custom_call.1} parent=1 // pred_region
      _
    $region53: #{tpu_custom_call.1} parent=1 // pred_fallthru
      _
    // Predicated region
    $region54: #{tpu_custom_call.1} parent=1 // pred_check
      _
    $region55: #{tpu_custom_call.1} parent=1 // pred_check_branch
      %148 = sbr.rel (0) target = $region57
    $region56: #{tpu_custom_call.1} parent=1 // pred_region
      _
    $region57: #{tpu_custom_call.1} parent=1 // pred_fallthru
      _
    // Predicated region
    $region58: #{tpu_custom_call.1} parent=1 // pred_check
      _
    $region59: #{tpu_custom_call.1} parent=1 // pred_check_branch
      %150 = sbr.rel (0) target = $region61
    $region60: #{tpu_custom_call.1} parent=1 // pred_region
      %s152 = ssub.s32 1024, 1024
      %153 = vsyncadd [#allocation23], %s152
      %s154 = sshll.u32 [#allocation24], 4
      %s155 = int_to_ptr.vmem [resolvable:$true] %s154
      %160 = dma.hbm_to_vmem [thread:$0]  %s14, 1024, %s155, [#allocation23], 128, 128, 8
    $region61: #{tpu_custom_call.1} parent=1 // pred_fallthru
      _
    // Predicated region
    $region62: #{tpu_custom_call.1} parent=1 // pred_check
      _
    $region63: #{tpu_custom_call.1} parent=1 // pred_check_branch
      %162 = sbr.rel (0) target = $region65
    $region64: #{tpu_custom_call.1} parent=1 // pred_region
      _
    $region65: #{tpu_custom_call.1} parent=1 // pred_fallthru
      _
    // Predicated region
    $region66: #{tpu_custom_call.1} parent=1 // pred_check
      _
    $region67: #{tpu_custom_call.1} parent=1 // pred_check_branch
      %164 = sbr.rel (0) target = $region69
    $region68: #{tpu_custom_call.1} parent=1 // pred_region
      _
    $region69: #{tpu_custom_call.1} parent=1 // pred_fallthru
      _
    // Predicated region
    $region70: #{tpu_custom_call.1} parent=1 // pred_check
      _
    $region71: #{tpu_custom_call.1} parent=1 // pred_check_branch
      %166 = sbr.rel (0) target = $region73
    $region72: #{tpu_custom_call.1} parent=1 // pred_region
      _
    $region73: #{tpu_custom_call.1} parent=1 // pred_fallthru
      _
    // Predicated region
    $region74: #{tpu_custom_call.1} parent=1 // pred_check
      _
    $region75: #{tpu_custom_call.1} parent=1 // pred_check_branch
      %168 = sbr.rel (0) target = $region77
    $region76: #{tpu_custom_call.1} parent=1 // pred_region
      _
    $region77: #{tpu_custom_call.1} parent=1 // pred_fallthru
      _
    // Predicated region
    $region78: #{tpu_custom_call.1} parent=1 // pred_check
      _
    $region79: #{tpu_custom_call.1} parent=1 // pred_check_branch
      %170 = sbr.rel (0) target = $region81
    $region80: #{tpu_custom_call.1} parent=1 // pred_region
      _
    $region81: #{tpu_custom_call.1} parent=1 // pred_fallthru
      _
    // Predicated region
    $region82: #{tpu_custom_call.1} parent=1 // pred_check
      _
    $region83: #{tpu_custom_call.1} parent=1 // pred_check_branch
      %172 = sbr.rel (0) target = $region85
    $region84: #{tpu_custom_call.1} parent=1 // pred_region
      _
    $region85: #{tpu_custom_call.1} parent=1 // pred_fallthru
      _
    // Predicated region
    $region86: #{tpu_custom_call.1} parent=1 // pred_check
      _
    $region87: #{tpu_custom_call.1} parent=1 // pred_check_branch
      %174 = sbr.rel (0) target = $region89
    $region88: #{tpu_custom_call.1} parent=1 // pred_region
      %175 = dma.done [#allocation8], 64
    $region89: #{tpu_custom_call.1} parent=1 // pred_fallthru
      _
    // Predicated region
    $region90: #{tpu_custom_call.1} parent=1 // pred_check
      _
    $region91: #{tpu_custom_call.1} parent=1 // pred_check_branch
      %177 = sbr.rel (0) target = $region93
    $region92: #{tpu_custom_call.1} parent=1 // pred_region
      %178 = dma.done [#allocation11], 64
    $region93: #{tpu_custom_call.1} parent=1 // pred_fallthru
      _
    // Predicated region
    $region94: #{tpu_custom_call.1} parent=1 // pred_check
      _
    $region95: #{tpu_custom_call.1} parent=1 // pred_check_branch
      %180 = sbr.rel (0) target = $region97
    $region96: #{tpu_custom_call.1} parent=1 // pred_region
      %181 = dma.done [#allocation11], 128
    $region97: #{tpu_custom_call.1} parent=1 // pred_fallthru
      _
    // Predicated region
    $region98: #{tpu_custom_call.1} parent=1 // pred_check
      _
    $region99: #{tpu_custom_call.1} parent=1 // pred_check_branch
      %183 = sbr.rel (0) target = $region101
    $region100: #{tpu_custom_call.1} parent=1 // pred_region
      %184 = dma.done [#allocation14], 128
    $region101: #{tpu_custom_call.1} parent=1 // pred_fallthru
      _
    // Predicated region
    $region102: #{tpu_custom_call.1} parent=1 // pred_check
      _
    $region103: #{tpu_custom_call.1} parent=1 // pred_check_branch
      %186 = sbr.rel (0) target = $region105
    $region104: #{tpu_custom_call.1} parent=1 // pred_region
      %187 = dma.done [#allocation14], 16
    $region105: #{tpu_custom_call.1} parent=1 // pred_fallthru
      _
    // Predicated region
    $region106: #{tpu_custom_call.1} parent=1 // pred_check
      _
    $region107: #{tpu_custom_call.1} parent=1 // pred_check_branch
      %189 = sbr.rel (0) target = $region109
    $region108: #{tpu_custom_call.1} parent=1 // pred_region
      %190 = dma.done [#allocation17], 256
    $region109: #{tpu_custom_call.1} parent=1 // pred_fallthru
      _
    // Predicated region
    $region110: #{tpu_custom_call.1} parent=1 // pred_check
      _
    $region111: #{tpu_custom_call.1} parent=1 // pred_check_branch
      %192 = sbr.rel (0) target = $region113
    $region112: #{tpu_custom_call.1} parent=1 // pred_region
      %193 = dma.done [#allocation17], 256
    $region113: #{tpu_custom_call.1} parent=1 // pred_fallthru
      _
    // Predicated region
    $region114: #{tpu_custom_call.1} parent=1 // pred_check
      _
    $region115: #{tpu_custom_call.1} parent=1 // pred_check_branch
      %195 = sbr.rel (0) target = $region117
    $region116: #{tpu_custom_call.1} parent=1 // pred_region
      %196 = dma.done [#allocation20], 16
    $region117: #{tpu_custom_call.1} parent=1 // pred_fallthru
      _
    // Predicated region
    $region118: #{tpu_custom_call.1} parent=1 // pred_check
      _
    $region119: #{tpu_custom_call.1} parent=1 // pred_check_branch
      %198 = sbr.rel (0) target = $region121
    $region120: #{tpu_custom_call.1} parent=1 // pred_region
      %199 = dma.done [#allocation20], 512
    $region121: #{tpu_custom_call.1} parent=1 // pred_fallthru
      _
    // Predicated region
    $region122: #{tpu_custom_call.1} parent=1 // pred_check
      _
    $region123: #{tpu_custom_call.1} parent=1 // pred_check_branch
      %201 = sbr.rel (0) target = $region125
    $region124: #{tpu_custom_call.1} parent=1 // pred_region
      %202 = dma.done [#allocation23], 512
    $region125: #{tpu_custom_call.1} parent=1 // pred_fallthru
      _
    // Predicated region
    $region126: #{tpu_custom_call.1} parent=1 // pred_check
      _
    $region127: #{tpu_custom_call.1} parent=1 // pred_check_branch
      %204 = sbr.rel (0) target = $region129
    $region128: #{tpu_custom_call.1} parent=1 // pred_region
      %205 = dma.done [#allocation23], 1024
    $region129: #{tpu_custom_call.1} parent=1 // pred_fallthru
      _
    %v206 = vlaneseq
    %v207 = vand.u32 %v206, 127
    %v208 = vld [vmem:[#allocation7] sm:$0x7]
    %v209 = vld [vmem:[#allocation10] sm:$0x7]
    %v210 = vld [vmem:[%s3] sm:$0x1]
    %v211 = vld [vmem:[%s0] ss:$2 sm:$0xff]
    %s212 = scalar_lea.vmem %s0, 16
    %v213 = vld [vmem:[%s212] ss:$2 sm:$0xff]
    %s214 = scalar_lea.vmem %s0, 32
    %v215 = vld [vmem:[%s214] ss:$2 sm:$0xff]
    %s216 = scalar_lea.vmem %s0, 48
    %v217 = vld [vmem:[%s216] ss:$2 sm:$0xff]
    %s218 = scalar_lea.vmem %s0, 64
    %v219 = vld [vmem:[%s218] ss:$2 sm:$0xff]
    %s220 = scalar_lea.vmem %s0, 80
    %v221 = vld [vmem:[%s220] ss:$2 sm:$0xff]
    %s222 = scalar_lea.vmem %s0, 96
    %v223 = vld [vmem:[%s222] ss:$2 sm:$0xff]
    %s224 = scalar_lea.vmem %s0, 112
    %v225 = vld [vmem:[%s224] ss:$2 sm:$0xff]
    %s226 = scalar_lea.vmem %s0, 128
    %v227 = vld [vmem:[%s226] ss:$2 sm:$0xff]
    %s228 = scalar_lea.vmem %s0, 144
    %v229 = vld [vmem:[%s228] ss:$2 sm:$0xff]
    %s230 = scalar_lea.vmem %s0, 160
    %v231 = vld [vmem:[%s230] ss:$2 sm:$0xff]
    %s232 = scalar_lea.vmem %s0, 176
    %v233 = vld [vmem:[%s232] ss:$2 sm:$0xff]
    %s234 = scalar_lea.vmem %s0, 192
    %v235 = vld [vmem:[%s234] ss:$2 sm:$0xff]
    %s236 = scalar_lea.vmem %s0, 208
    %v237 = vld [vmem:[%s236] ss:$2 sm:$0xff]
    %s238 = scalar_lea.vmem %s0, 224
    %v239 = vld [vmem:[%s238] ss:$2 sm:$0xff]
    %s240 = scalar_lea.vmem %s0, 240
    %v241 = vld [vmem:[%s240] ss:$2 sm:$0x7f]
    %s242 = scalar_lea.vmem %s0, 1
    %v243 = vld [vmem:[%s242] ss:$2 sm:$0xff]
    %s244 = scalar_lea.vmem %s0, 17
    %v245 = vld [vmem:[%s244] ss:$2 sm:$0xff]
    %s246 = scalar_lea.vmem %s0, 33
    %v247 = vld [vmem:[%s246] ss:$2 sm:$0xff]
    %s248 = scalar_lea.vmem %s0, 49
    %v249 = vld [vmem:[%s248] ss:$2 sm:$0xff]
    %s250 = scalar_lea.vmem %s0, 65
    %v251 = vld [vmem:[%s250] ss:$2 sm:$0xff]
    %s252 = scalar_lea.vmem %s0, 81
    %v253 = vld [vmem:[%s252] ss:$2 sm:$0xff]
    %s254 = scalar_lea.vmem %s0, 97
    %v255 = vld [vmem:[%s254] ss:$2 sm:$0xff]
    %s256 = scalar_lea.vmem %s0, 113
    %v257 = vld [vmem:[%s256] ss:$2 sm:$0xff]
    %s258 = scalar_lea.vmem %s0, 129
    %v259 = vld [vmem:[%s258] ss:$2 sm:$0xff]
    %s260 = scalar_lea.vmem %s0, 145
    %v261 = vld [vmem:[%s260] ss:$2 sm:$0xff]
    %s262 = scalar_lea.vmem %s0, 161
    %v263 = vld [vmem:[%s262] ss:$2 sm:$0xff]
    %s264 = scalar_lea.vmem %s0, 177
    %v265 = vld [vmem:[%s264] ss:$2 sm:$0xff]
    %s266 = scalar_lea.vmem %s0, 193
    %v267 = vld [vmem:[%s266] ss:$2 sm:$0xff]
    %s268 = scalar_lea.vmem %s0, 209
    %v269 = vld [vmem:[%s268] ss:$2 sm:$0xff]
    %s270 = scalar_lea.vmem %s0, 225
    %v271 = vld [vmem:[%s270] ss:$2 sm:$0xff]
    %s272 = scalar_lea.vmem %s0, 241
    %v273 = vld [vmem:[%s272] ss:$2 sm:$0x7f]
    %s274 = scalar_lea.vmem %s0, 2
    %v275 = vld [vmem:[%s274] ss:$2 sm:$0xff]
    %s276 = scalar_lea.vmem %s0, 18
    %v277 = vld [vmem:[%s276] ss:$2 sm:$0xff]
    %s278 = scalar_lea.vmem %s0, 34
    %v279 = vld [vmem:[%s278] ss:$2 sm:$0xff]
    %s280 = scalar_lea.vmem %s0, 50
    %v281 = vld [vmem:[%s280] ss:$2 sm:$0xff]
    %s282 = scalar_lea.vmem %s0, 66
    %v283 = vld [vmem:[%s282] ss:$2 sm:$0xff]
    %s284 = scalar_lea.vmem %s0, 82
    %v285 = vld [vmem:[%s284] ss:$2 sm:$0xff]
    %s286 = scalar_lea.vmem %s0, 98
    %v287 = vld [vmem:[%s286] ss:$2 sm:$0xff]
    %s288 = scalar_lea.vmem %s0, 114
    %v289 = vld [vmem:[%s288] ss:$2 sm:$0xff]
    %s290 = scalar_lea.vmem %s0, 130
    %v291 = vld [vmem:[%s290] ss:$2 sm:$0xff]
    %s292 = scalar_lea.vmem %s0, 146
    %v293 = vld [vmem:[%s292] ss:$2 sm:$0xff]
    %s294 = scalar_lea.vmem %s0, 162
    %v295 = vld [vmem:[%s294] ss:$2 sm:$0xff]
    %s296 = scalar_lea.vmem %s0, 178
    %v297 = vld [vmem:[%s296] ss:$2 sm:$0xff]
    %s298 = scalar_lea.vmem %s0, 194
    %v299 = vld [vmem:[%s298] ss:$2 sm:$0xff]
    %s300 = scalar_lea.vmem %s0, 210
    %v301 = vld [vmem:[%s300] ss:$2 sm:$0xff]
    %s302 = scalar_lea.vmem %s0, 226
    %v303 = vld [vmem:[%s302] ss:$2 sm:$0xff]
    %s304 = scalar_lea.vmem %s0, 242
    %v305 = vld [vmem:[%s304] ss:$2 sm:$0x7f]
    %vm306 = vcmask 23552
    %v308 = vsel %vm306, %v243, 0
    %v311 = vsel %vm306, %v245, 0
    %v314 = vsel %vm306, %v247, 0
    %v317 = vsel %vm306, %v249, 0
    %v320 = vsel %vm306, %v251, 0
    %v323 = vsel %vm306, %v253, 0
    %v326 = vsel %vm306, %v255, 0
    %v329 = vsel %vm306, %v257, 0
    %v332 = vsel %vm306, %v259, 0
    %v335 = vsel %vm306, %v261, 0
    %v338 = vsel %vm306, %v263, 0
    %v341 = vsel %vm306, %v265, 0
    %v344 = vsel %vm306, %v267, 0
    %v347 = vsel %vm306, %v269, 0
    %v350 = vsel %vm306, %v271, 0
    %v353 = vsel %vm306, %v273, 0
    %vm355 = vcmask 1042432
    %v357 = vsel %vm355, %v209, 0
    %359 = vmatprep.subr.mxu0 0.0
    %360 = vmatpush1.msra.mxu0 %v357
    %361 = vmatprep.subr.mxu0 0.0
    %362 = vmatpush1.msra.mxu0 0.0
    %363 = vmatprep.subr.mxu0 0.0
    %364 = vmatpush1.msra.mxu0 0.0
    %365 = vmatprep.subr.mxu0 0.0
    %366 = vmatpush1.msra.mxu0 0.0
    %367 = vmatprep.subr.mxu0 0.0
    %368 = vmatpush1.msra.mxu0 0.0
    %369 = vmatprep.subr.mxu0 0.0
    %370 = vmatpush1.msra.mxu0 0.0
    %371 = vmatprep.subr.mxu0 0.0
    %372 = vmatpush1.msra.mxu0 0.0
    %373 = vmatprep.subr.mxu0 0.0
    %374 = vmatpush1.msra.mxu0 0.0
    %375 = vmatprep.subr.mxu0 0.0
    %376 = vmatpush1.msra.mxu0 0.0
    %377 = vmatprep.subr.mxu0 0.0
    %378 = vmatpush1.msra.mxu0 0.0
    %379 = vmatprep.subr.mxu0 0.0
    %380 = vmatpush1.msra.mxu0 0.0
    %381 = vmatprep.subr.mxu0 0.0
    %382 = vmatpush1.msra.mxu0 0.0
    %383 = vmatprep.subr.mxu0 0.0
    %384 = vmatpush1.msra.mxu0 0.0
    %385 = vmatprep.subr.mxu0 0.0
    %386 = vmatpush1.msra.mxu0 0.0
    %387 = vmatprep.subr.mxu0 0.0
    %388 = vmatpush1.msra.mxu0 0.0
    %389 = vmatprep.subr.mxu0 0.0
    %390 = vmatpush1.msra.mxu0 0.0
    %391 = vmatprep.subr.mxu0 0.0
    %392 = vmatpush1.msra.mxu0 0.0
    %393 = vmatprep.subr.mxu0 0.0
    %394 = vmatpush1.msra.mxu0 0.0
    %395 = vmatprep.subr.mxu0 0.0
    %396 = vmatpush1.msra.mxu0 0.0
    %397 = vmatprep.subr.mxu0 0.0
    %398 = vmatpush1.msra.mxu0 0.0
    %399 = vmatprep.subr.mxu0 0.0
    %400 = vmatpush1.msra.mxu0 0.0
    %401 = vmatprep.subr.mxu0 0.0
    %402 = vmatpush1.msra.mxu0 0.0
    %403 = vmatprep.subr.mxu0 0.0
    %404 = vmatpush1.msra.mxu0 0.0
    %405 = vmatprep.subr.mxu0 0.0
    %406 = vmatpush1.msra.mxu0 0.0
    %407 = vmatprep.subr.mxu0 0.0
    %408 = vmatpush1.msra.mxu0 0.0
    %409 = vmatprep.subr.mxu0 0.0
    %410 = vmatpush1.msra.mxu0 0.0
    %411 = vmatprep.subr.mxu0 0.0
    %412 = vmatpush1.msra.mxu0 0.0
    %413 = vmatprep.subr.mxu0 0.0
    %414 = vmatpush1.msra.mxu0 0.0
    %415 = vmatprep.subr.mxu0 0.0
    %416 = vmatpush1.msra.mxu0 0.0
    %417 = vmatprep.subr.mxu0 0.0
    %418 = vmatpush1.msra.mxu0 0.0
    %419 = vmatprep.subr.mxu0 0.0
    %420 = vmatpush1.msra.mxu0 0.0
    %421 = vmatprep.subr.mxu0 0.0
    %422 = vmatpush1.msra.mxu0 0.0
    %423 = vmatprep.mubr.f32.mxu0 0.0
    %424 = vmatmul.mubr.f32.gmra.mrb[0].mxu0 %v308
    %v425 = vpop.f32.mrb[0].mxu0
    %v426 = vadd.f32 0.0, %v425
    %v427 = vpop.f32.mrb[0].mxu0
    %428 = vmatprep.mubr.f32.mxu0 0.0
    %429 = vmatmul.mubr.f32.gmra.mrb[0].mxu0 %v311
    %v430 = vpop.f32.mrb[0].mxu0
    %v431 = vadd.f32 0.0, %v430
    %v432 = vpop.f32.mrb[0].mxu0
    %433 = vmatprep.mubr.f32.mxu0 0.0
    %434 = vmatmul.mubr.f32.gmra.mrb[0].mxu0 %v314
    %v435 = vpop.f32.mrb[0].mxu0
    %v436 = vadd.f32 0.0, %v435
    %v437 = vpop.f32.mrb[0].mxu0
    %438 = vmatprep.mubr.f32.mxu0 0.0
    %439 = vmatmul.mubr.f32.gmra.mrb[0].mxu0 %v317
    %v440 = vpop.f32.mrb[0].mxu0
    %v441 = vadd.f32 0.0, %v440
    %v442 = vpop.f32.mrb[0].mxu0
    %443 = vmatprep.mubr.f32.mxu0 0.0
    %444 = vmatmul.mubr.f32.gmra.mrb[0].mxu0 %v320
    %v445 = vpop.f32.mrb[0].mxu0
    %v446 = vadd.f32 0.0, %v445
    %v447 = vpop.f32.mrb[0].mxu0
    %448 = vmatprep.mubr.f32.mxu0 0.0
    %449 = vmatmul.mubr.f32.gmra.mrb[0].mxu0 %v323
    %v450 = vpop.f32.mrb[0].mxu0
    %v451 = vadd.f32 0.0, %v450
    %v452 = vpop.f32.mrb[0].mxu0
    %453 = vmatprep.mubr.f32.mxu0 0.0
    %454 = vmatmul.mubr.f32.gmra.mrb[0].mxu0 %v326
    %v455 = vpop.f32.mrb[0].mxu0
    %v456 = vadd.f32 0.0, %v455
    %v457 = vpop.f32.mrb[0].mxu0
    %458 = vmatprep.mubr.f32.mxu0 0.0
    %459 = vmatmul.mubr.f32.gmra.mrb[0].mxu0 %v329
    %v460 = vpop.f32.mrb[0].mxu0
    %v461 = vadd.f32 0.0, %v460
    %v462 = vpop.f32.mrb[0].mxu0
    %463 = vmatprep.mubr.f32.mxu0 0.0
    %464 = vmatmul.mubr.f32.gmra.mrb[0].mxu0 %v332
    %v465 = vpop.f32.mrb[0].mxu0
    %v466 = vadd.f32 0.0, %v465
    %v467 = vpop.f32.mrb[0].mxu0
    %468 = vmatprep.mubr.f32.mxu0 0.0
    %469 = vmatmul.mubr.f32.gmra.mrb[0].mxu0 %v335
    %v470 = vpop.f32.mrb[0].mxu0
    %v471 = vadd.f32 0.0, %v470
    %v472 = vpop.f32.mrb[0].mxu0
    %473 = vmatprep.mubr.f32.mxu0 0.0
    %474 = vmatmul.mubr.f32.gmra.mrb[0].mxu0 %v338
    %v475 = vpop.f32.mrb[0].mxu0
    %v476 = vadd.f32 0.0, %v475
    %v477 = vpop.f32.mrb[0].mxu0
    %478 = vmatprep.mubr.f32.mxu0 0.0
    %479 = vmatmul.mubr.f32.gmra.mrb[0].mxu0 %v341
    %v480 = vpop.f32.mrb[0].mxu0
    %v481 = vadd.f32 0.0, %v480
    %v482 = vpop.f32.mrb[0].mxu0
    %483 = vmatprep.mubr.f32.mxu0 0.0
    %484 = vmatmul.mubr.f32.gmra.mrb[0].mxu0 %v344
    %v485 = vpop.f32.mrb[0].mxu0
    %v486 = vadd.f32 0.0, %v485
    %v487 = vpop.f32.mrb[0].mxu0
    %488 = vmatprep.mubr.f32.mxu0 0.0
    %489 = vmatmul.mubr.f32.gmra.mrb[0].mxu0 %v347
    %v490 = vpop.f32.mrb[0].mxu0
    %v491 = vadd.f32 0.0, %v490
    %v492 = vpop.f32.mrb[0].mxu0
    %493 = vmatprep.mubr.f32.mxu0 0.0
    %494 = vmatmul.mubr.f32.gmra.mrb[0].mxu0 %v350
    %v495 = vpop.f32.mrb[0].mxu0
    %v496 = vadd.f32 0.0, %v495
    %v497 = vpop.f32.mrb[0].mxu0
    %498 = vmatprep.mubr.f32.mxu0 0.0
    %499 = vmatmul.mubr.f32.gmra.mrb[0].mxu0 %v353
    %v500 = vpop.f32.mrb[0].mxu0
    %v501 = vadd.f32 0.0, %v500
    %v502 = vpop.f32.mrb[0].mxu0
    %503 = vdwg.mxu0
    %v505 = vsel %vm306, %v211, 0
    %v508 = vsel %vm306, %v213, 0
    %v511 = vsel %vm306, %v215, 0
    %v514 = vsel %vm306, %v217, 0
    %v517 = vsel %vm306, %v219, 0
    %v520 = vsel %vm306, %v221, 0
    %v523 = vsel %vm306, %v223, 0
    %v526 = vsel %vm306, %v225, 0
    %v529 = vsel %vm306, %v227, 0
    %v532 = vsel %vm306, %v229, 0
    %v535 = vsel %vm306, %v231, 0
    %v538 = vsel %vm306, %v233, 0
    %v541 = vsel %vm306, %v235, 0
    %v544 = vsel %vm306, %v237, 0
    %v547 = vsel %vm306, %v239, 0
    %v550 = vsel %vm306, %v241, 0
    %v553 = vsel %vm355, %v208, 0
    %555 = vmatprep.subr.mxu0 0.0
    %556 = vmatpush1.msra.mxu0 %v553
    %557 = vmatprep.subr.mxu0 0.0
    %558 = vmatpush1.msra.mxu0 0.0
    %559 = vmatprep.subr.mxu0 0.0
    %560 = vmatpush1.msra.mxu0 0.0
    %561 = vmatprep.subr.mxu0 0.0
    %562 = vmatpush1.msra.mxu0 0.0
    %563 = vmatprep.subr.mxu0 0.0
    %564 = vmatpush1.msra.mxu0 0.0
    %565 = vmatprep.subr.mxu0 0.0
    %566 = vmatpush1.msra.mxu0 0.0
    %567 = vmatprep.subr.mxu0 0.0
    %568 = vmatpush1.msra.mxu0 0.0
    %569 = vmatprep.subr.mxu0 0.0
    %570 = vmatpush1.msra.mxu0 0.0
    %571 = vmatprep.subr.mxu0 0.0
    %572 = vmatpush1.msra.mxu0 0.0
    %573 = vmatprep.subr.mxu0 0.0
    %574 = vmatpush1.msra.mxu0 0.0
    %575 = vmatprep.subr.mxu0 0.0
    %576 = vmatpush1.msra.mxu0 0.0
    %577 = vmatprep.subr.mxu0 0.0
    %578 = vmatpush1.msra.mxu0 0.0
    %579 = vmatprep.subr.mxu0 0.0
    %580 = vmatpush1.msra.mxu0 0.0
    %581 = vmatprep.subr.mxu0 0.0
    %582 = vmatpush1.msra.mxu0 0.0
    %583 = vmatprep.subr.mxu0 0.0
    %584 = vmatpush1.msra.mxu0 0.0
    %585 = vmatprep.subr.mxu0 0.0
    %586 = vmatpush1.msra.mxu0 0.0
    %587 = vmatprep.subr.mxu0 0.0
    %588 = vmatpush1.msra.mxu0 0.0
    %589 = vmatprep.subr.mxu0 0.0
    %590 = vmatpush1.msra.mxu0 0.0
    %591 = vmatprep.subr.mxu0 0.0
    %592 = vmatpush1.msra.mxu0 0.0
    %593 = vmatprep.subr.mxu0 0.0
    %594 = vmatpush1.msra.mxu0 0.0
    %595 = vmatprep.subr.mxu0 0.0
    %596 = vmatpush1.msra.mxu0 0.0
    %597 = vmatprep.subr.mxu0 0.0
    %598 = vmatpush1.msra.mxu0 0.0
    %599 = vmatprep.subr.mxu0 0.0
    %600 = vmatpush1.msra.mxu0 0.0
    %601 = vmatprep.subr.mxu0 0.0
    %602 = vmatpush1.msra.mxu0 0.0
    %603 = vmatprep.subr.mxu0 0.0
    %604 = vmatpush1.msra.mxu0 0.0
    %605 = vmatprep.subr.mxu0 0.0
    %606 = vmatpush1.msra.mxu0 0.0
    %607 = vmatprep.subr.mxu0 0.0
    %608 = vmatpush1.msra.mxu0 0.0
    %609 = vmatprep.subr.mxu0 0.0
    %610 = vmatpush1.msra.mxu0 0.0
    %611 = vmatprep.subr.mxu0 0.0
    %612 = vmatpush1.msra.mxu0 0.0
    %613 = vmatprep.subr.mxu0 0.0
    %614 = vmatpush1.msra.mxu0 0.0
    %615 = vmatprep.subr.mxu0 0.0
    %616 = vmatpush1.msra.mxu0 0.0
    %617 = vmatprep.subr.mxu0 0.0
    %618 = vmatpush1.msra.mxu0 0.0
    %619 = vmatprep.mubr.f32.mxu0 0.0
    %620 = vmatmul.mubr.f32.gmra.mrb[0].mxu0 %v505
    %v621 = vpop.f32.mrb[0].mxu0
    %v622 = vadd.f32 %v426, %v621
    %v623 = vpop.f32.mrb[0].mxu0
    %624 = vmatprep.mubr.f32.mxu0 0.0
    %625 = vmatmul.mubr.f32.gmra.mrb[0].mxu0 %v508
    %v626 = vpop.f32.mrb[0].mxu0
    %v627 = vadd.f32 %v431, %v626
    %v628 = vpop.f32.mrb[0].mxu0
    %629 = vmatprep.mubr.f32.mxu0 0.0
    %630 = vmatmul.mubr.f32.gmra.mrb[0].mxu0 %v511
    %v631 = vpop.f32.mrb[0].mxu0
    %v632 = vadd.f32 %v436, %v631
    %v633 = vpop.f32.mrb[0].mxu0
    %634 = vmatprep.mubr.f32.mxu0 0.0
    %635 = vmatmul.mubr.f32.gmra.mrb[0].mxu0 %v514
    %v636 = vpop.f32.mrb[0].mxu0
    %v637 = vadd.f32 %v441, %v636
    %v638 = vpop.f32.mrb[0].mxu0
    %639 = vmatprep.mubr.f32.mxu0 0.0
    %640 = vmatmul.mubr.f32.gmra.mrb[0].mxu0 %v517
    %v641 = vpop.f32.mrb[0].mxu0
    %v642 = vadd.f32 %v446, %v641
    %v643 = vpop.f32.mrb[0].mxu0
    %644 = vmatprep.mubr.f32.mxu0 0.0
    %645 = vmatmul.mubr.f32.gmra.mrb[0].mxu0 %v520
    %v646 = vpop.f32.mrb[0].mxu0
    %v647 = vadd.f32 %v451, %v646
    %v648 = vpop.f32.mrb[0].mxu0
    %649 = vmatprep.mubr.f32.mxu0 0.0
    %650 = vmatmul.mubr.f32.gmra.mrb[0].mxu0 %v523
    %v651 = vpop.f32.mrb[0].mxu0
    %v652 = vadd.f32 %v456, %v651
    %v653 = vpop.f32.mrb[0].mxu0
    %654 = vmatprep.mubr.f32.mxu0 0.0
    %655 = vmatmul.mubr.f32.gmra.mrb[0].mxu0 %v526
    %v656 = vpop.f32.mrb[0].mxu0
    %v657 = vadd.f32 %v461, %v656
    %v658 = vpop.f32.mrb[0].mxu0
    %659 = vmatprep.mubr.f32.mxu0 0.0
    %660 = vmatmul.mubr.f32.gmra.mrb[0].mxu0 %v529
    %v661 = vpop.f32.mrb[0].mxu0
    %v662 = vadd.f32 %v466, %v661
    %v663 = vpop.f32.mrb[0].mxu0
    %664 = vmatprep.mubr.f32.mxu0 0.0
    %665 = vmatmul.mubr.f32.gmra.mrb[0].mxu0 %v532
    %v666 = vpop.f32.mrb[0].mxu0
    %v667 = vadd.f32 %v471, %v666
    %v668 = vpop.f32.mrb[0].mxu0
    %669 = vmatprep.mubr.f32.mxu0 0.0
    %670 = vmatmul.mubr.f32.gmra.mrb[0].mxu0 %v535
    %v671 = vpop.f32.mrb[0].mxu0
    %v672 = vadd.f32 %v476, %v671
    %v673 = vpop.f32.mrb[0].mxu0
    %674 = vmatprep.mubr.f32.mxu0 0.0
    %675 = vmatmul.mubr.f32.gmra.mrb[0].mxu0 %v538
    %v676 = vpop.f32.mrb[0].mxu0
    %v677 = vadd.f32 %v481, %v676
    %v678 = vpop.f32.mrb[0].mxu0
    %679 = vmatprep.mubr.f32.mxu0 0.0
    %680 = vmatmul.mubr.f32.gmra.mrb[0].mxu0 %v541
    %v681 = vpop.f32.mrb[0].mxu0
    %v682 = vadd.f32 %v486, %v681
    %v683 = vpop.f32.mrb[0].mxu0
    %684 = vmatprep.mubr.f32.mxu0 0.0
    %685 = vmatmul.mubr.f32.gmra.mrb[0].mxu0 %v544
    %v686 = vpop.f32.mrb[0].mxu0
    %v687 = vadd.f32 %v491, %v686
    %v688 = vpop.f32.mrb[0].mxu0
    %689 = vmatprep.mubr.f32.mxu0 0.0
    %690 = vmatmul.mubr.f32.gmra.mrb[0].mxu0 %v547
    %v691 = vpop.f32.mrb[0].mxu0
    %v692 = vadd.f32 %v496, %v691
    %v693 = vpop.f32.mrb[0].mxu0
    %694 = vmatprep.mubr.f32.mxu0 0.0
    %695 = vmatmul.mubr.f32.gmra.mrb[0].mxu0 %v550
    %v696 = vpop.f32.mrb[0].mxu0
    %v697 = vadd.f32 %v501, %v696
    %v698 = vpop.f32.mrb[0].mxu0
    %699 = vdwg.mxu0
    %v701 = vsel %vm306, %v275, 0
    %v704 = vsel %vm306, %v277, 0
    %v707 = vsel %vm306, %v279, 0
    %v710 = vsel %vm306, %v281, 0
    %v713 = vsel %vm306, %v283, 0
    %v716 = vsel %vm306, %v285, 0
    %v719 = vsel %vm306, %v287, 0
    %v722 = vsel %vm306, %v289, 0
    %v725 = vsel %vm306, %v291, 0
    %v728 = vsel %vm306, %v293, 0
    %v731 = vsel %vm306, %v295, 0
    %v734 = vsel %vm306, %v297, 0
    %v737 = vsel %vm306, %v299, 0
    %v740 = vsel %vm306, %v301, 0
    %v743 = vsel %vm306, %v303, 0
    %v746 = vsel %vm306, %v305, 0
    %748 = vmatprep.subr.mxu0 0.0
    %749 = vmatpush1.msra.mxu0 %v357
    %750 = vmatprep.subr.mxu0 0.0
    %751 = vmatpush1.msra.mxu0 0.0
    %752 = vmatprep.subr.mxu0 0.0
    %753 = vmatpush1.msra.mxu0 0.0
    %754 = vmatprep.subr.mxu0 0.0
    %755 = vmatpush1.msra.mxu0 0.0
    %756 = vmatprep.subr.mxu0 0.0
    %757 = vmatpush1.msra.mxu0 0.0
    %758 = vmatprep.subr.mxu0 0.0
    %759 = vmatpush1.msra.mxu0 0.0
    %760 = vmatprep.subr.mxu0 0.0
    %761 = vmatpush1.msra.mxu0 0.0
    %762 = vmatprep.subr.mxu0 0.0
    %763 = vmatpush1.msra.mxu0 0.0
    %764 = vmatprep.subr.mxu0 0.0
    %765 = vmatpush1.msra.mxu0 0.0
    %766 = vmatprep.subr.mxu0 0.0
    %767 = vmatpush1.msra.mxu0 0.0
    %768 = vmatprep.subr.mxu0 0.0
    %769 = vmatpush1.msra.mxu0 0.0
    %770 = vmatprep.subr.mxu0 0.0
    %771 = vmatpush1.msra.mxu0 0.0
    %772 = vmatprep.subr.mxu0 0.0
    %773 = vmatpush1.msra.mxu0 0.0
    %774 = vmatprep.subr.mxu0 0.0
    %775 = vmatpush1.msra.mxu0 0.0
    %776 = vmatprep.subr.mxu0 0.0
    %777 = vmatpush1.msra.mxu0 0.0
    %778 = vmatprep.subr.mxu0 0.0
    %779 = vmatpush1.msra.mxu0 0.0
    %780 = vmatprep.subr.mxu0 0.0
    %781 = vmatpush1.msra.mxu0 0.0
    %782 = vmatprep.subr.mxu0 0.0
    %783 = vmatpush1.msra.mxu0 0.0
    %784 = vmatprep.subr.mxu0 0.0
    %785 = vmatpush1.msra.mxu0 0.0
    %786 = vmatprep.subr.mxu0 0.0
    %787 = vmatpush1.msra.mxu0 0.0
    %788 = vmatprep.subr.mxu0 0.0
    %789 = vmatpush1.msra.mxu0 0.0
    %790 = vmatprep.subr.mxu0 0.0
    %791 = vmatpush1.msra.mxu0 0.0
    %792 = vmatprep.subr.mxu0 0.0
    %793 = vmatpush1.msra.mxu0 0.0
    %794 = vmatprep.subr.mxu0 0.0
    %795 = vmatpush1.msra.mxu0 0.0
    %796 = vmatprep.subr.mxu0 0.0
    %797 = vmatpush1.msra.mxu0 0.0
    %798 = vmatprep.subr.mxu0 0.0
    %799 = vmatpush1.msra.mxu0 0.0
    %800 = vmatprep.subr.mxu0 0.0
    %801 = vmatpush1.msra.mxu0 0.0
    %802 = vmatprep.subr.mxu0 0.0
    %803 = vmatpush1.msra.mxu0 0.0
    %804 = vmatprep.subr.mxu0 0.0
    %805 = vmatpush1.msra.mxu0 0.0
    %806 = vmatprep.subr.mxu0 0.0
    %807 = vmatpush1.msra.mxu0 0.0
    %808 = vmatprep.subr.mxu0 0.0
    %809 = vmatpush1.msra.mxu0 0.0
    %810 = vmatprep.subr.mxu0 0.0
    %811 = vmatpush1.msra.mxu0 0.0
    %812 = vmatprep.mubr.f32.mxu0 0.0
    %813 = vmatmul.mubr.f32.gmra.mrb[0].mxu0 %v701
    %v814 = vpop.f32.mrb[0].mxu0
    %v815 = vadd.f32 0.0, %v814
    %v816 = vpop.f32.mrb[0].mxu0
    %817 = vmatprep.mubr.f32.mxu0 0.0
    %818 = vmatmul.mubr.f32.gmra.mrb[0].mxu0 %v704
    %v819 = vpop.f32.mrb[0].mxu0
    %v820 = vadd.f32 0.0, %v819
    %v821 = vpop.f32.mrb[0].mxu0
    %822 = vmatprep.mubr.f32.mxu0 0.0
    %823 = vmatmul.mubr.f32.gmra.mrb[0].mxu0 %v707
    %v824 = vpop.f32.mrb[0].mxu0
    %v825 = vadd.f32 0.0, %v824
    %v826 = vpop.f32.mrb[0].mxu0
    %827 = vmatprep.mubr.f32.mxu0 0.0
    %828 = vmatmul.mubr.f32.gmra.mrb[0].mxu0 %v710
    %v829 = vpop.f32.mrb[0].mxu0
    %v830 = vadd.f32 0.0, %v829
    %v831 = vpop.f32.mrb[0].mxu0
    %832 = vmatprep.mubr.f32.mxu0 0.0
    %833 = vmatmul.mubr.f32.gmra.mrb[0].mxu0 %v713
    %v834 = vpop.f32.mrb[0].mxu0
    %v835 = vadd.f32 0.0, %v834
    %v836 = vpop.f32.mrb[0].mxu0
    %837 = vmatprep.mubr.f32.mxu0 0.0
    %838 = vmatmul.mubr.f32.gmra.mrb[0].mxu0 %v716
    %v839 = vpop.f32.mrb[0].mxu0
    %v840 = vadd.f32 0.0, %v839
    %v841 = vpop.f32.mrb[0].mxu0
    %842 = vmatprep.mubr.f32.mxu0 0.0
    %843 = vmatmul.mubr.f32.gmra.mrb[0].mxu0 %v719
    %v844 = vpop.f32.mrb[0].mxu0
    %v845 = vadd.f32 0.0, %v844
    %v846 = vpop.f32.mrb[0].mxu0
    %847 = vmatprep.mubr.f32.mxu0 0.0
    %848 = vmatmul.mubr.f32.gmra.mrb[0].mxu0 %v722
    %v849 = vpop.f32.mrb[0].mxu0
    %v850 = vadd.f32 0.0, %v849
    %v851 = vpop.f32.mrb[0].mxu0
    %852 = vmatprep.mubr.f32.mxu0 0.0
    %853 = vmatmul.mubr.f32.gmra.mrb[0].mxu0 %v725
    %v854 = vpop.f32.mrb[0].mxu0
    %v855 = vadd.f32 0.0, %v854
    %v856 = vpop.f32.mrb[0].mxu0
    %857 = vmatprep.mubr.f32.mxu0 0.0
    %858 = vmatmul.mubr.f32.gmra.mrb[0].mxu0 %v728
    %v859 = vpop.f32.mrb[0].mxu0
    %v860 = vadd.f32 0.0, %v859
    %v861 = vpop.f32.mrb[0].mxu0
    %862 = vmatprep.mubr.f32.mxu0 0.0
    %863 = vmatmul.mubr.f32.gmra.mrb[0].mxu0 %v731
    %v864 = vpop.f32.mrb[0].mxu0
    %v865 = vadd.f32 0.0, %v864
    %v866 = vpop.f32.mrb[0].mxu0
    %867 = vmatprep.mubr.f32.mxu0 0.0
    %868 = vmatmul.mubr.f32.gmra.mrb[0].mxu0 %v734
    %v869 = vpop.f32.mrb[0].mxu0
    %v870 = vadd.f32 0.0, %v869
    %v871 = vpop.f32.mrb[0].mxu0
    %872 = vmatprep.mubr.f32.mxu0 0.0
    %873 = vmatmul.mubr.f32.gmra.mrb[0].mxu0 %v737
    %v874 = vpop.f32.mrb[0].mxu0
    %v875 = vadd.f32 0.0, %v874
    %v876 = vpop.f32.mrb[0].mxu0
    %877 = vmatprep.mubr.f32.mxu0 0.0
    %878 = vmatmul.mubr.f32.gmra.mrb[0].mxu0 %v740
    %v879 = vpop.f32.mrb[0].mxu0
    %v880 = vadd.f32 0.0, %v879
    %v881 = vpop.f32.mrb[0].mxu0
    %882 = vmatprep.mubr.f32.mxu0 0.0
    %883 = vmatmul.mubr.f32.gmra.mrb[0].mxu0 %v743
    %v884 = vpop.f32.mrb[0].mxu0
    %v885 = vadd.f32 0.0, %v884
    %v886 = vpop.f32.mrb[0].mxu0
    %887 = vmatprep.mubr.f32.mxu0 0.0
    %888 = vmatmul.mubr.f32.gmra.mrb[0].mxu0 %v746
    %v889 = vpop.f32.mrb[0].mxu0
    %v890 = vadd.f32 0.0, %v889
    %v891 = vpop.f32.mrb[0].mxu0
    %892 = vdwg.mxu0
    %893 = vmatprep.subr.mxu0 0.0
    %894 = vmatpush1.msra.mxu0 %v553
    %895 = vmatprep.subr.mxu0 0.0
    %896 = vmatpush1.msra.mxu0 0.0
    %897 = vmatprep.subr.mxu0 0.0
    %898 = vmatpush1.msra.mxu0 0.0
    %899 = vmatprep.subr.mxu0 0.0
    %900 = vmatpush1.msra.mxu0 0.0
    %901 = vmatprep.subr.mxu0 0.0
    %902 = vmatpush1.msra.mxu0 0.0
    %903 = vmatprep.subr.mxu0 0.0
    %904 = vmatpush1.msra.mxu0 0.0
    %905 = vmatprep.subr.mxu0 0.0
    %906 = vmatpush1.msra.mxu0 0.0
    %907 = vmatprep.subr.mxu0 0.0
    %908 = vmatpush1.msra.mxu0 0.0
    %909 = vmatprep.subr.mxu0 0.0
    %910 = vmatpush1.msra.mxu0 0.0
    %911 = vmatprep.subr.mxu0 0.0
    %912 = vmatpush1.msra.mxu0 0.0
    %913 = vmatprep.subr.mxu0 0.0
    %914 = vmatpush1.msra.mxu0 0.0
    %915 = vmatprep.subr.mxu0 0.0
    %916 = vmatpush1.msra.mxu0 0.0
    %917 = vmatprep.subr.mxu0 0.0
    %918 = vmatpush1.msra.mxu0 0.0
    %919 = vmatprep.subr.mxu0 0.0
    %920 = vmatpush1.msra.mxu0 0.0
    %921 = vmatprep.subr.mxu0 0.0
    %922 = vmatpush1.msra.mxu0 0.0
    %923 = vmatprep.subr.mxu0 0.0
    %924 = vmatpush1.msra.mxu0 0.0
    %925 = vmatprep.subr.mxu0 0.0
    %926 = vmatpush1.msra.mxu0 0.0
    %927 = vmatprep.subr.mxu0 0.0
    %928 = vmatpush1.msra.mxu0 0.0
    %929 = vmatprep.subr.mxu0 0.0
    %930 = vmatpush1.msra.mxu0 0.0
    %931 = vmatprep.subr.mxu0 0.0
    %932 = vmatpush1.msra.mxu0 0.0
    %933 = vmatprep.subr.mxu0 0.0
    %934 = vmatpush1.msra.mxu0 0.0
    %935 = vmatprep.subr.mxu0 0.0
    %936 = vmatpush1.msra.mxu0 0.0
    %937 = vmatprep.subr.mxu0 0.0
    %938 = vmatpush1.msra.mxu0 0.0
    %939 = vmatprep.subr.mxu0 0.0
    %940 = vmatpush1.msra.mxu0 0.0
    %941 = vmatprep.subr.mxu0 0.0
    %942 = vmatpush1.msra.mxu0 0.0
    %943 = vmatprep.subr.mxu0 0.0
    %944 = vmatpush1.msra.mxu0 0.0
    %945 = vmatprep.subr.mxu0 0.0
    %946 = vmatpush1.msra.mxu0 0.0
    %947 = vmatprep.subr.mxu0 0.0
    %948 = vmatpush1.msra.mxu0 0.0
    %949 = vmatprep.subr.mxu0 0.0
    %950 = vmatpush1.msra.mxu0 0.0
    %951 = vmatprep.subr.mxu0 0.0
    %952 = vmatpush1.msra.mxu0 0.0
    %953 = vmatprep.subr.mxu0 0.0
    %954 = vmatpush1.msra.mxu0 0.0
    %955 = vmatprep.subr.mxu0 0.0
    %956 = vmatpush1.msra.mxu0 0.0
    %957 = vmatprep.mubr.f32.mxu0 0.0
    %958 = vmatmul.mubr.f32.gmra.mrb[0].mxu0 %v308
    %v959 = vpop.f32.mrb[0].mxu0
    %v960 = vadd.f32 %v815, %v959
    %v961 = vpop.f32.mrb[0].mxu0
    %962 = vmatprep.mubr.f32.mxu0 0.0
    %963 = vmatmul.mubr.f32.gmra.mrb[0].mxu0 %v311
    %v964 = vpop.f32.mrb[0].mxu0
    %v965 = vadd.f32 %v820, %v964
    %v966 = vpop.f32.mrb[0].mxu0
    %967 = vmatprep.mubr.f32.mxu0 0.0
    %968 = vmatmul.mubr.f32.gmra.mrb[0].mxu0 %v314
    %v969 = vpop.f32.mrb[0].mxu0
    %v970 = vadd.f32 %v825, %v969
    %v971 = vpop.f32.mrb[0].mxu0
    %972 = vmatprep.mubr.f32.mxu0 0.0
    %973 = vmatmul.mubr.f32.gmra.mrb[0].mxu0 %v317
    %v974 = vpop.f32.mrb[0].mxu0
    %v975 = vadd.f32 %v830, %v974
    %v976 = vpop.f32.mrb[0].mxu0
    %977 = vmatprep.mubr.f32.mxu0 0.0
    %978 = vmatmul.mubr.f32.gmra.mrb[0].mxu0 %v320
    %v979 = vpop.f32.mrb[0].mxu0
    %v980 = vadd.f32 %v835, %v979
    %v981 = vpop.f32.mrb[0].mxu0
    %982 = vmatprep.mubr.f32.mxu0 0.0
    %983 = vmatmul.mubr.f32.gmra.mrb[0].mxu0 %v323
    %v984 = vpop.f32.mrb[0].mxu0
    %v985 = vadd.f32 %v840, %v984
    %v986 = vpop.f32.mrb[0].mxu0
    %987 = vmatprep.mubr.f32.mxu0 0.0
    %988 = vmatmul.mubr.f32.gmra.mrb[0].mxu0 %v326
    %v989 = vpop.f32.mrb[0].mxu0
    %v990 = vadd.f32 %v845, %v989
    %v991 = vpop.f32.mrb[0].mxu0
    %992 = vmatprep.mubr.f32.mxu0 0.0
    %993 = vmatmul.mubr.f32.gmra.mrb[0].mxu0 %v329
    %v994 = vpop.f32.mrb[0].mxu0
    %v995 = vadd.f32 %v850, %v994
    %v996 = vpop.f32.mrb[0].mxu0
    %997 = vmatprep.mubr.f32.mxu0 0.0
    %998 = vmatmul.mubr.f32.gmra.mrb[0].mxu0 %v332
    %v999 = vpop.f32.mrb[0].mxu0
    %v1000 = vadd.f32 %v855, %v999
    %v1001 = vpop.f32.mrb[0].mxu0
    %1002 = vmatprep.mubr.f32.mxu0 0.0
    %1003 = vmatmul.mubr.f32.gmra.mrb[0].mxu0 %v335
    %v1004 = vpop.f32.mrb[0].mxu0
    %v1005 = vadd.f32 %v860, %v1004
    %v1006 = vpop.f32.mrb[0].mxu0
    %1007 = vmatprep.mubr.f32.mxu0 0.0
    %1008 = vmatmul.mubr.f32.gmra.mrb[0].mxu0 %v338
    %v1009 = vpop.f32.mrb[0].mxu0
    %v1010 = vadd.f32 %v865, %v1009
    %v1011 = vpop.f32.mrb[0].mxu0
    %1012 = vmatprep.mubr.f32.mxu0 0.0
    %1013 = vmatmul.mubr.f32.gmra.mrb[0].mxu0 %v341
    %v1014 = vpop.f32.mrb[0].mxu0
    %v1015 = vadd.f32 %v870, %v1014
    %v1016 = vpop.f32.mrb[0].mxu0
    %1017 = vmatprep.mubr.f32.mxu0 0.0
    %1018 = vmatmul.mubr.f32.gmra.mrb[0].mxu0 %v344
    %v1019 = vpop.f32.mrb[0].mxu0
    %v1020 = vadd.f32 %v875, %v1019
    %v1021 = vpop.f32.mrb[0].mxu0
    %1022 = vmatprep.mubr.f32.mxu0 0.0
    %1023 = vmatmul.mubr.f32.gmra.mrb[0].mxu0 %v347
    %v1024 = vpop.f32.mrb[0].mxu0
    %v1025 = vadd.f32 %v880, %v1024
    %v1026 = vpop.f32.mrb[0].mxu0
    %1027 = vmatprep.mubr.f32.mxu0 0.0
    %1028 = vmatmul.mubr.f32.gmra.mrb[0].mxu0 %v350
    %v1029 = vpop.f32.mrb[0].mxu0
    %v1030 = vadd.f32 %v885, %v1029
    %v1031 = vpop.f32.mrb[0].mxu0
    %1032 = vmatprep.mubr.f32.mxu0 0.0
    %1033 = vmatmul.mubr.f32.gmra.mrb[0].mxu0 %v353
    %v1034 = vpop.f32.mrb[0].mxu0
    %v1035 = vadd.f32 %v890, %v1034
    %v1036 = vpop.f32.mrb[0].mxu0
    %1037 = vdwg.mxu0
    %v1038 = vmax.f32 %v622, %v960
    %v1039 = vmax.f32 %v627, %v965
    %v1040 = vmax.f32 %v632, %v970
    %v1041 = vmax.f32 %v637, %v975
    %v1042 = vmax.f32 %v642, %v980
    %v1043 = vmax.f32 %v647, %v985
    %v1044 = vmax.f32 %v652, %v990
    %v1045 = vmax.f32 %v657, %v995
    %v1046 = vmax.f32 %v662, %v1000
    %v1047 = vmax.f32 %v667, %v1005
    %v1048 = vmax.f32 %v672, %v1010
    %v1049 = vmax.f32 %v677, %v1015
    %v1050 = vmax.f32 %v682, %v1020
    %v1051 = vmax.f32 %v687, %v1025
    %v1052 = vmax.f32 %v692, %v1030
    %v1053 = vmax.f32 %v697, %v1035
    %v1055 = vlaneseq
    %v1056 = vshrl.u32 %v1055, 7
    %v1057 = vsub.s32 0, %v1056
    %v1058 = vrot.slane %v210, %v1057
    %v1060 = vadd.f32 %v1038, %v1058
    %v1061 = vadd.f32 %v1039, %v1058
    %v1062 = vadd.f32 %v1040, %v1058
    %v1063 = vadd.f32 %v1041, %v1058
    %v1064 = vadd.f32 %v1042, %v1058
    %v1065 = vadd.f32 %v1043, %v1058
    %v1066 = vadd.f32 %v1044, %v1058
    %v1067 = vadd.f32 %v1045, %v1058
    %v1068 = vadd.f32 %v1046, %v1058
    %v1069 = vadd.f32 %v1047, %v1058
    %v1070 = vadd.f32 %v1048, %v1058
    %v1071 = vadd.f32 %v1049, %v1058
    %v1072 = vadd.f32 %v1050, %v1058
    %v1073 = vadd.f32 %v1051, %v1058
    %v1074 = vadd.f32 %v1052, %v1058
    %v1075 = vadd.f32 %v1053, %v1058
    %v1076 = vmax.f32 %v1060, 0.0
    %v1077 = vmax.f32 %v1061, 0.0
    %v1078 = vmax.f32 %v1062, 0.0
    %v1079 = vmax.f32 %v1063, 0.0
    %v1080 = vmax.f32 %v1064, 0.0
    %v1081 = vmax.f32 %v1065, 0.0
    %v1082 = vmax.f32 %v1066, 0.0
    %v1083 = vmax.f32 %v1067, 0.0
    %v1084 = vmax.f32 %v1068, 0.0
    %v1085 = vmax.f32 %v1069, 0.0
    %v1086 = vmax.f32 %v1070, 0.0
    %v1087 = vmax.f32 %v1071, 0.0
    %v1088 = vmax.f32 %v1072, 0.0
    %v1089 = vmax.f32 %v1073, 0.0
    %v1090 = vmax.f32 %v1074, 0.0
    %v1091 = vmax.f32 %v1075, 0.0
    %vm1092 = vcmask 64512
    %1093 = vst.msk [vmem:[#allocation2] sm:$0xff] %vm1092, %v1076
    %1094 = vst.msk [vmem:[#allocation2 + $0x8] sm:$0xff] %vm1092, %v1077
    %1095 = vst.msk [vmem:[#allocation2 + $0x10] sm:$0xff] %vm1092, %v1078
    %1096 = vst.msk [vmem:[#allocation2 + $0x18] sm:$0xff] %vm1092, %v1079
    %1097 = vst.msk [vmem:[#allocation2 + $0x20] sm:$0xff] %vm1092, %v1080
    %1098 = vst.msk [vmem:[#allocation2 + $0x28] sm:$0xff] %vm1092, %v1081
    %1099 = vst.msk [vmem:[#allocation2 + $0x30] sm:$0xff] %vm1092, %v1082
    %1100 = vst.msk [vmem:[#allocation2 + $0x38] sm:$0xff] %vm1092, %v1083
    %1101 = vst.msk [vmem:[#allocation2 + $0x40] sm:$0xff] %vm1092, %v1084
    %1102 = vst.msk [vmem:[#allocation2 + $0x48] sm:$0xff] %vm1092, %v1085
    %1103 = vst.msk [vmem:[#allocation2 + $0x50] sm:$0xff] %vm1092, %v1086
    %1104 = vst.msk [vmem:[#allocation2 + $0x58] sm:$0xff] %vm1092, %v1087
    %1105 = vst.msk [vmem:[#allocation2 + $0x60] sm:$0xff] %vm1092, %v1088
    %1106 = vst.msk [vmem:[#allocation2 + $0x68] sm:$0xff] %vm1092, %v1089
    %1107 = vst.msk [vmem:[#allocation2 + $0x70] sm:$0xff] %vm1092, %v1090
    %vm1108 = vcmask 63488
    %1109 = vst.msk [vmem:[#allocation2 + $0x78] sm:$0x7f] %vm1108, %v1091
    %v1110 = vld [vmem:[#allocation12] sm:$0xff]
    %v1111 = vld [vmem:[#allocation13] sm:$0xff]
    %v1112 = vld [vmem:[#allocation15] sm:$0x1]
    %v1113 = vld [vmem:[#allocation2] ss:$2 sm:$0xff]
    %s1114 = scalar_lea.vmem [#allocation2], 16
    %v1115 = vld [vmem:[%s1114] ss:$2 sm:$0xff]
    %s1116 = scalar_lea.vmem [#allocation2], 32
    %v1117 = vld [vmem:[%s1116] ss:$2 sm:$0xff]
    %s1118 = scalar_lea.vmem [#allocation2], 48
    %v1119 = vld [vmem:[%s1118] ss:$2 sm:$0xff]
    %s1120 = scalar_lea.vmem [#allocation2], 64
    %v1121 = vld [vmem:[%s1120] ss:$2 sm:$0xff]
    %s1122 = scalar_lea.vmem [#allocation2], 80
    %v1123 = vld [vmem:[%s1122] ss:$2 sm:$0xff]
    %s1124 = scalar_lea.vmem [#allocation2], 96
    %v1125 = vld [vmem:[%s1124] ss:$2 sm:$0xff]
    %s1126 = scalar_lea.vmem [#allocation2], 112
    %v1127 = vld [vmem:[%s1126] ss:$2 sm:$0x7f]
    %s1128 = scalar_lea.vmem [#allocation2], 1
    %v1129 = vld [vmem:[%s1128] ss:$2 sm:$0xff]
    %s1130 = scalar_lea.vmem [#allocation2], 17
    %v1131 = vld [vmem:[%s1130] ss:$2 sm:$0xff]
    %s1132 = scalar_lea.vmem [#allocation2], 33
    %v1133 = vld [vmem:[%s1132] ss:$2 sm:$0xff]
    %s1134 = scalar_lea.vmem [#allocation2], 49
    %v1135 = vld [vmem:[%s1134] ss:$2 sm:$0xff]
    %s1136 = scalar_lea.vmem [#allocation2], 65
    %v1137 = vld [vmem:[%s1136] ss:$2 sm:$0xff]
    %s1138 = scalar_lea.vmem [#allocation2], 81
    %v1139 = vld [vmem:[%s1138] ss:$2 sm:$0xff]
    %s1140 = scalar_lea.vmem [#allocation2], 97
    %v1141 = vld [vmem:[%s1140] ss:$2 sm:$0xff]
    %s1142 = scalar_lea.vmem [#allocation2], 113
    %v1143 = vld [vmem:[%s1142] ss:$2 sm:$0x7f]
    %s1144 = scalar_lea.vmem [#allocation2], 2
    %v1145 = vld [vmem:[%s1144] ss:$2 sm:$0xff]
    %s1146 = scalar_lea.vmem [#allocation2], 18
    %v1147 = vld [vmem:[%s1146] ss:$2 sm:$0xff]
    %s1148 = scalar_lea.vmem [#allocation2], 34
    %v1149 = vld [vmem:[%s1148] ss:$2 sm:$0xff]
    %s1150 = scalar_lea.vmem [#allocation2], 50
    %v1151 = vld [vmem:[%s1150] ss:$2 sm:$0xff]
    %s1152 = scalar_lea.vmem [#allocation2], 66
    %v1153 = vld [vmem:[%s1152] ss:$2 sm:$0xff]
    %s1154 = scalar_lea.vmem [#allocation2], 82
    %v1155 = vld [vmem:[%s1154] ss:$2 sm:$0xff]
    %s1156 = scalar_lea.vmem [#allocation2], 98
    %v1157 = vld [vmem:[%s1156] ss:$2 sm:$0xff]
    %s1158 = scalar_lea.vmem [#allocation2], 114
    %v1159 = vld [vmem:[%s1158] ss:$2 sm:$0x7f]
    %v1161 = vsel %vm1092, %v1129, 0
    %v1164 = vsel %vm1092, %v1131, 0
    %v1167 = vsel %vm1092, %v1133, 0
    %v1170 = vsel %vm1092, %v1135, 0
    %v1173 = vsel %vm1092, %v1137, 0
    %v1176 = vsel %vm1092, %v1139, 0
    %v1179 = vsel %vm1092, %v1141, 0
    %v1182 = vsel %vm1092, %v1143, 0
    %1184 = vmatprep.subr.mxu0 0.0
    %1185 = vmatpush1.msra.mxu0 %v1111
    %1186 = vmatprep.subr.mxu0 0.0
    %1187 = vmatpush1.msra.mxu0 0.0
    %1188 = vmatprep.subr.mxu0 0.0
    %1189 = vmatpush1.msra.mxu0 0.0
    %1190 = vmatprep.subr.mxu0 0.0
    %1191 = vmatpush1.msra.mxu0 0.0
    %1192 = vmatprep.subr.mxu0 0.0
    %1193 = vmatpush1.msra.mxu0 0.0
    %1194 = vmatprep.subr.mxu0 0.0
    %1195 = vmatpush1.msra.mxu0 0.0
    %1196 = vmatprep.subr.mxu0 0.0
    %1197 = vmatpush1.msra.mxu0 0.0
    %1198 = vmatprep.subr.mxu0 0.0
    %1199 = vmatpush1.msra.mxu0 0.0
    %1200 = vmatprep.subr.mxu0 0.0
    %1201 = vmatpush1.msra.mxu0 0.0
    %1202 = vmatprep.subr.mxu0 0.0
    %1203 = vmatpush1.msra.mxu0 0.0
    %1204 = vmatprep.subr.mxu0 0.0
    %1205 = vmatpush1.msra.mxu0 0.0
    %1206 = vmatprep.subr.mxu0 0.0
    %1207 = vmatpush1.msra.mxu0 0.0
    %1208 = vmatprep.subr.mxu0 0.0
    %1209 = vmatpush1.msra.mxu0 0.0
    %1210 = vmatprep.subr.mxu0 0.0
    %1211 = vmatpush1.msra.mxu0 0.0
    %1212 = vmatprep.subr.mxu0 0.0
    %1213 = vmatpush1.msra.mxu0 0.0
    %1214 = vmatprep.subr.mxu0 0.0
    %1215 = vmatpush1.msra.mxu0 0.0
    %1216 = vmatprep.subr.mxu0 0.0
    %1217 = vmatpush1.msra.mxu0 0.0
    %1218 = vmatprep.subr.mxu0 0.0
    %1219 = vmatpush1.msra.mxu0 0.0
    %1220 = vmatprep.subr.mxu0 0.0
    %1221 = vmatpush1.msra.mxu0 0.0
    %1222 = vmatprep.subr.mxu0 0.0
    %1223 = vmatpush1.msra.mxu0 0.0
    %1224 = vmatprep.subr.mxu0 0.0
    %1225 = vmatpush1.msra.mxu0 0.0
    %1226 = vmatprep.subr.mxu0 0.0
    %1227 = vmatpush1.msra.mxu0 0.0
    %1228 = vmatprep.subr.mxu0 0.0
    %1229 = vmatpush1.msra.mxu0 0.0
    %1230 = vmatprep.subr.mxu0 0.0
    %1231 = vmatpush1.msra.mxu0 0.0
    %1232 = vmatprep.subr.mxu0 0.0
    %1233 = vmatpush1.msra.mxu0 0.0
    %1234 = vmatprep.subr.mxu0 0.0
    %1235 = vmatpush1.msra.mxu0 0.0
    %1236 = vmatprep.subr.mxu0 0.0
    %1237 = vmatpush1.msra.mxu0 0.0
    %1238 = vmatprep.subr.mxu0 0.0
    %1239 = vmatpush1.msra.mxu0 0.0
    %1240 = vmatprep.subr.mxu0 0.0
    %1241 = vmatpush1.msra.mxu0 0.0
    %1242 = vmatprep.subr.mxu0 0.0
    %1243 = vmatpush1.msra.mxu0 0.0
    %1244 = vmatprep.subr.mxu0 0.0
    %1245 = vmatpush1.msra.mxu0 0.0
    %1246 = vmatprep.subr.mxu0 0.0
    %1247 = vmatpush1.msra.mxu0 0.0
    %1248 = vmatprep.mubr.f32.mxu0 0.0
    %1249 = vmatmul.mubr.f32.gmra.mrb[0].mxu0 %v1161
    %v1250 = vpop.f32.mrb[0].mxu0
    %v1251 = vadd.f32 0.0, %v1250
    %v1252 = vpop.f32.mrb[0].mxu0
    %1253 = vmatprep.mubr.f32.mxu0 0.0
    %1254 = vmatmul.mubr.f32.gmra.mrb[0].mxu0 %v1164
    %v1255 = vpop.f32.mrb[0].mxu0
    %v1256 = vadd.f32 0.0, %v1255
    %v1257 = vpop.f32.mrb[0].mxu0
    %1258 = vmatprep.mubr.f32.mxu0 0.0
    %1259 = vmatmul.mubr.f32.gmra.mrb[0].mxu0 %v1167
    %v1260 = vpop.f32.mrb[0].mxu0
    %v1261 = vadd.f32 0.0, %v1260
    %v1262 = vpop.f32.mrb[0].mxu0
    %1263 = vmatprep.mubr.f32.mxu0 0.0
    %1264 = vmatmul.mubr.f32.gmra.mrb[0].mxu0 %v1170
    %v1265 = vpop.f32.mrb[0].mxu0
    %v1266 = vadd.f32 0.0, %v1265
    %v1267 = vpop.f32.mrb[0].mxu0
    %1268 = vmatprep.mubr.f32.mxu0 0.0
    %1269 = vmatmul.mubr.f32.gmra.mrb[0].mxu0 %v1173
    %v1270 = vpop.f32.mrb[0].mxu0
    %v1271 = vadd.f32 0.0, %v1270
    %v1272 = vpop.f32.mrb[0].mxu0
    %1273 = vmatprep.mubr.f32.mxu0 0.0
    %1274 = vmatmul.mubr.f32.gmra.mrb[0].mxu0 %v1176
    %v1275 = vpop.f32.mrb[0].mxu0
    %v1276 = vadd.f32 0.0, %v1275
    %v1277 = vpop.f32.mrb[0].mxu0
    %1278 = vmatprep.mubr.f32.mxu0 0.0
    %1279 = vmatmul.mubr.f32.gmra.mrb[0].mxu0 %v1179
    %v1280 = vpop.f32.mrb[0].mxu0
    %v1281 = vadd.f32 0.0, %v1280
    %v1282 = vpop.f32.mrb[0].mxu0
    %1283 = vmatprep.mubr.f32.mxu0 0.0
    %1284 = vmatmul.mubr.f32.gmra.mrb[0].mxu0 %v1182
    %v1285 = vpop.f32.mrb[0].mxu0
    %v1286 = vadd.f32 0.0, %v1285
    %v1287 = vpop.f32.mrb[0].mxu0
    %1288 = vdwg.mxu0
    %v1290 = vsel %vm1092, %v1113, 0
    %v1293 = vsel %vm1092, %v1115, 0
    %v1296 = vsel %vm1092, %v1117, 0
    %v1299 = vsel %vm1092, %v1119, 0
    %v1302 = vsel %vm1092, %v1121, 0
    %v1305 = vsel %vm1092, %v1123, 0
    %v1308 = vsel %vm1092, %v1125, 0
    %v1311 = vsel %vm1092, %v1127, 0
    %1313 = vmatprep.subr.mxu0 0.0
    %1314 = vmatpush1.msra.mxu0 %v1110
    %1315 = vmatprep.subr.mxu0 0.0
    %1316 = vmatpush1.msra.mxu0 0.0
    %1317 = vmatprep.subr.mxu0 0.0
    %1318 = vmatpush1.msra.mxu0 0.0
    %1319 = vmatprep.subr.mxu0 0.0
    %1320 = vmatpush1.msra.mxu0 0.0
    %1321 = vmatprep.subr.mxu0 0.0
    %1322 = vmatpush1.msra.mxu0 0.0
    %1323 = vmatprep.subr.mxu0 0.0
    %1324 = vmatpush1.msra.mxu0 0.0
    %1325 = vmatprep.subr.mxu0 0.0
    %1326 = vmatpush1.msra.mxu0 0.0
    %1327 = vmatprep.subr.mxu0 0.0
    %1328 = vmatpush1.msra.mxu0 0.0
    %1329 = vmatprep.subr.mxu0 0.0
    %1330 = vmatpush1.msra.mxu0 0.0
    %1331 = vmatprep.subr.mxu0 0.0
    %1332 = vmatpush1.msra.mxu0 0.0
    %1333 = vmatprep.subr.mxu0 0.0
    %1334 = vmatpush1.msra.mxu0 0.0
    %1335 = vmatprep.subr.mxu0 0.0
    %1336 = vmatpush1.msra.mxu0 0.0
    %1337 = vmatprep.subr.mxu0 0.0
    %1338 = vmatpush1.msra.mxu0 0.0
    %1339 = vmatprep.subr.mxu0 0.0
    %1340 = vmatpush1.msra.mxu0 0.0
    %1341 = vmatprep.subr.mxu0 0.0
    %1342 = vmatpush1.msra.mxu0 0.0
    %1343 = vmatprep.subr.mxu0 0.0
    %1344 = vmatpush1.msra.mxu0 0.0
    %1345 = vmatprep.subr.mxu0 0.0
    %1346 = vmatpush1.msra.mxu0 0.0
    %1347 = vmatprep.subr.mxu0 0.0
    %1348 = vmatpush1.msra.mxu0 0.0
    %1349 = vmatprep.subr.mxu0 0.0
    %1350 = vmatpush1.msra.mxu0 0.0
    %1351 = vmatprep.subr.mxu0 0.0
    %1352 = vmatpush1.msra.mxu0 0.0
    %1353 = vmatprep.subr.mxu0 0.0
    %1354 = vmatpush1.msra.mxu0 0.0
    %1355 = vmatprep.subr.mxu0 0.0
    %1356 = vmatpush1.msra.mxu0 0.0
    %1357 = vmatprep.subr.mxu0 0.0
    %1358 = vmatpush1.msra.mxu0 0.0
    %1359 = vmatprep.subr.mxu0 0.0
    %1360 = vmatpush1.msra.mxu0 0.0
    %1361 = vmatprep.subr.mxu0 0.0
    %1362 = vmatpush1.msra.mxu0 0.0
    %1363 = vmatprep.subr.mxu0 0.0
    %1364 = vmatpush1.msra.mxu0 0.0
    %1365 = vmatprep.subr.mxu0 0.0
    %1366 = vmatpush1.msra.mxu0 0.0
    %1367 = vmatprep.subr.mxu0 0.0
    %1368 = vmatpush1.msra.mxu0 0.0
    %1369 = vmatprep.subr.mxu0 0.0
    %1370 = vmatpush1.msra.mxu0 0.0
    %1371 = vmatprep.subr.mxu0 0.0
    %1372 = vmatpush1.msra.mxu0 0.0
    %1373 = vmatprep.subr.mxu0 0.0
    %1374 = vmatpush1.msra.mxu0 0.0
    %1375 = vmatprep.subr.mxu0 0.0
    %1376 = vmatpush1.msra.mxu0 0.0
    %1377 = vmatprep.mubr.f32.mxu0 0.0
    %1378 = vmatmul.mubr.f32.gmra.mrb[0].mxu0 %v1290
    %v1379 = vpop.f32.mrb[0].mxu0
    %v1380 = vadd.f32 %v1251, %v1379
    %v1381 = vpop.f32.mrb[0].mxu0
    %1382 = vmatprep.mubr.f32.mxu0 0.0
    %1383 = vmatmul.mubr.f32.gmra.mrb[0].mxu0 %v1293
    %v1384 = vpop.f32.mrb[0].mxu0
    %v1385 = vadd.f32 %v1256, %v1384
    %v1386 = vpop.f32.mrb[0].mxu0
    %1387 = vmatprep.mubr.f32.mxu0 0.0
    %1388 = vmatmul.mubr.f32.gmra.mrb[0].mxu0 %v1296
    %v1389 = vpop.f32.mrb[0].mxu0
    %v1390 = vadd.f32 %v1261, %v1389
    %v1391 = vpop.f32.mrb[0].mxu0
    %1392 = vmatprep.mubr.f32.mxu0 0.0
    %1393 = vmatmul.mubr.f32.gmra.mrb[0].mxu0 %v1299
    %v1394 = vpop.f32.mrb[0].mxu0
    %v1395 = vadd.f32 %v1266, %v1394
    %v1396 = vpop.f32.mrb[0].mxu0
    %1397 = vmatprep.mubr.f32.mxu0 0.0
    %1398 = vmatmul.mubr.f32.gmra.mrb[0].mxu0 %v1302
    %v1399 = vpop.f32.mrb[0].mxu0
    %v1400 = vadd.f32 %v1271, %v1399
    %v1401 = vpop.f32.mrb[0].mxu0
    %1402 = vmatprep.mubr.f32.mxu0 0.0
    %1403 = vmatmul.mubr.f32.gmra.mrb[0].mxu0 %v1305
    %v1404 = vpop.f32.mrb[0].mxu0
    %v1405 = vadd.f32 %v1276, %v1404
    %v1406 = vpop.f32.mrb[0].mxu0
    %1407 = vmatprep.mubr.f32.mxu0 0.0
    %1408 = vmatmul.mubr.f32.gmra.mrb[0].mxu0 %v1308
    %v1409 = vpop.f32.mrb[0].mxu0
    %v1410 = vadd.f32 %v1281, %v1409
    %v1411 = vpop.f32.mrb[0].mxu0
    %1412 = vmatprep.mubr.f32.mxu0 0.0
    %1413 = vmatmul.mubr.f32.gmra.mrb[0].mxu0 %v1311
    %v1414 = vpop.f32.mrb[0].mxu0
    %v1415 = vadd.f32 %v1286, %v1414
    %v1416 = vpop.f32.mrb[0].mxu0
    %1417 = vdwg.mxu0
    %v1419 = vsel %vm1092, %v1145, 0
    %v1422 = vsel %vm1092, %v1147, 0
    %v1425 = vsel %vm1092, %v1149, 0
    %v1428 = vsel %vm1092, %v1151, 0
    %v1431 = vsel %vm1092, %v1153, 0
    %v1434 = vsel %vm1092, %v1155, 0
    %v1437 = vsel %vm1092, %v1157, 0
    %v1440 = vsel %vm1092, %v1159, 0
    %1442 = vmatprep.subr.mxu0 0.0
    %1443 = vmatpush1.msra.mxu0 %v1111
    %1444 = vmatprep.subr.mxu0 0.0
    %1445 = vmatpush1.msra.mxu0 0.0
    %1446 = vmatprep.subr.mxu0 0.0
    %1447 = vmatpush1.msra.mxu0 0.0
    %1448 = vmatprep.subr.mxu0 0.0
    %1449 = vmatpush1.msra.mxu0 0.0
    %1450 = vmatprep.subr.mxu0 0.0
    %1451 = vmatpush1.msra.mxu0 0.0
    %1452 = vmatprep.subr.mxu0 0.0
    %1453 = vmatpush1.msra.mxu0 0.0
    %1454 = vmatprep.subr.mxu0 0.0
    %1455 = vmatpush1.msra.mxu0 0.0
    %1456 = vmatprep.subr.mxu0 0.0
    %1457 = vmatpush1.msra.mxu0 0.0
    %1458 = vmatprep.subr.mxu0 0.0
    %1459 = vmatpush1.msra.mxu0 0.0
    %1460 = vmatprep.subr.mxu0 0.0
    %1461 = vmatpush1.msra.mxu0 0.0
    %1462 = vmatprep.subr.mxu0 0.0
    %1463 = vmatpush1.msra.mxu0 0.0
    %1464 = vmatprep.subr.mxu0 0.0
    %1465 = vmatpush1.msra.mxu0 0.0
    %1466 = vmatprep.subr.mxu0 0.0
    %1467 = vmatpush1.msra.mxu0 0.0
    %1468 = vmatprep.subr.mxu0 0.0
    %1469 = vmatpush1.msra.mxu0 0.0
    %1470 = vmatprep.subr.mxu0 0.0
    %1471 = vmatpush1.msra.mxu0 0.0
    %1472 = vmatprep.subr.mxu0 0.0
    %1473 = vmatpush1.msra.mxu0 0.0
    %1474 = vmatprep.subr.mxu0 0.0
    %1475 = vmatpush1.msra.mxu0 0.0
    %1476 = vmatprep.subr.mxu0 0.0
    %1477 = vmatpush1.msra.mxu0 0.0
    %1478 = vmatprep.subr.mxu0 0.0
    %1479 = vmatpush1.msra.mxu0 0.0
    %1480 = vmatprep.subr.mxu0 0.0
    %1481 = vmatpush1.msra.mxu0 0.0
    %1482 = vmatprep.subr.mxu0 0.0
    %1483 = vmatpush1.msra.mxu0 0.0
    %1484 = vmatprep.subr.mxu0 0.0
    %1485 = vmatpush1.msra.mxu0 0.0
    %1486 = vmatprep.subr.mxu0 0.0
    %1487 = vmatpush1.msra.mxu0 0.0
    %1488 = vmatprep.subr.mxu0 0.0
    %1489 = vmatpush1.msra.mxu0 0.0
    %1490 = vmatprep.subr.mxu0 0.0
    %1491 = vmatpush1.msra.mxu0 0.0
    %1492 = vmatprep.subr.mxu0 0.0
    %1493 = vmatpush1.msra.mxu0 0.0
    %1494 = vmatprep.subr.mxu0 0.0
    %1495 = vmatpush1.msra.mxu0 0.0
    %1496 = vmatprep.subr.mxu0 0.0
    %1497 = vmatpush1.msra.mxu0 0.0
    %1498 = vmatprep.subr.mxu0 0.0
    %1499 = vmatpush1.msra.mxu0 0.0
    %1500 = vmatprep.subr.mxu0 0.0
    %1501 = vmatpush1.msra.mxu0 0.0
    %1502 = vmatprep.subr.mxu0 0.0
    %1503 = vmatpush1.msra.mxu0 0.0
    %1504 = vmatprep.subr.mxu0 0.0
    %1505 = vmatpush1.msra.mxu0 0.0
    %1506 = vmatprep.mubr.f32.mxu0 0.0
    %1507 = vmatmul.mubr.f32.gmra.mrb[0].mxu0 %v1419
    %v1508 = vpop.f32.mrb[0].mxu0
    %v1509 = vadd.f32 0.0, %v1508
    %v1510 = vpop.f32.mrb[0].mxu0
    %1511 = vmatprep.mubr.f32.mxu0 0.0
    %1512 = vmatmul.mubr.f32.gmra.mrb[0].mxu0 %v1422
    %v1513 = vpop.f32.mrb[0].mxu0
    %v1514 = vadd.f32 0.0, %v1513
    %v1515 = vpop.f32.mrb[0].mxu0
    %1516 = vmatprep.mubr.f32.mxu0 0.0
    %1517 = vmatmul.mubr.f32.gmra.mrb[0].mxu0 %v1425
    %v1518 = vpop.f32.mrb[0].mxu0
    %v1519 = vadd.f32 0.0, %v1518
    %v1520 = vpop.f32.mrb[0].mxu0
    %1521 = vmatprep.mubr.f32.mxu0 0.0
    %1522 = vmatmul.mubr.f32.gmra.mrb[0].mxu0 %v1428
    %v1523 = vpop.f32.mrb[0].mxu0
    %v1524 = vadd.f32 0.0, %v1523
    %v1525 = vpop.f32.mrb[0].mxu0
    %1526 = vmatprep.mubr.f32.mxu0 0.0
    %1527 = vmatmul.mubr.f32.gmra.mrb[0].mxu0 %v1431
    %v1528 = vpop.f32.mrb[0].mxu0
    %v1529 = vadd.f32 0.0, %v1528
    %v1530 = vpop.f32.mrb[0].mxu0
    %1531 = vmatprep.mubr.f32.mxu0 0.0
    %1532 = vmatmul.mubr.f32.gmra.mrb[0].mxu0 %v1434
    %v1533 = vpop.f32.mrb[0].mxu0
    %v1534 = vadd.f32 0.0, %v1533
    %v1535 = vpop.f32.mrb[0].mxu0
    %1536 = vmatprep.mubr.f32.mxu0 0.0
    %1537 = vmatmul.mubr.f32.gmra.mrb[0].mxu0 %v1437
    %v1538 = vpop.f32.mrb[0].mxu0
    %v1539 = vadd.f32 0.0, %v1538
    %v1540 = vpop.f32.mrb[0].mxu0
    %1541 = vmatprep.mubr.f32.mxu0 0.0
    %1542 = vmatmul.mubr.f32.gmra.mrb[0].mxu0 %v1440
    %v1543 = vpop.f32.mrb[0].mxu0
    %v1544 = vadd.f32 0.0, %v1543
    %v1545 = vpop.f32.mrb[0].mxu0
    %1546 = vdwg.mxu0
    %1547 = vmatprep.subr.mxu0 0.0
    %1548 = vmatpush1.msra.mxu0 %v1110
    %1549 = vmatprep.subr.mxu0 0.0
    %1550 = vmatpush1.msra.mxu0 0.0
    %1551 = vmatprep.subr.mxu0 0.0
    %1552 = vmatpush1.msra.mxu0 0.0
    %1553 = vmatprep.subr.mxu0 0.0
    %1554 = vmatpush1.msra.mxu0 0.0
    %1555 = vmatprep.subr.mxu0 0.0
    %1556 = vmatpush1.msra.mxu0 0.0
    %1557 = vmatprep.subr.mxu0 0.0
    %1558 = vmatpush1.msra.mxu0 0.0
    %1559 = vmatprep.subr.mxu0 0.0
    %1560 = vmatpush1.msra.mxu0 0.0
    %1561 = vmatprep.subr.mxu0 0.0
    %1562 = vmatpush1.msra.mxu0 0.0
    %1563 = vmatprep.subr.mxu0 0.0
    %1564 = vmatpush1.msra.mxu0 0.0
    %1565 = vmatprep.subr.mxu0 0.0
    %1566 = vmatpush1.msra.mxu0 0.0
    %1567 = vmatprep.subr.mxu0 0.0
    %1568 = vmatpush1.msra.mxu0 0.0
    %1569 = vmatprep.subr.mxu0 0.0
    %1570 = vmatpush1.msra.mxu0 0.0
    %1571 = vmatprep.subr.mxu0 0.0
    %1572 = vmatpush1.msra.mxu0 0.0
    %1573 = vmatprep.subr.mxu0 0.0
    %1574 = vmatpush1.msra.mxu0 0.0
    %1575 = vmatprep.subr.mxu0 0.0
    %1576 = vmatpush1.msra.mxu0 0.0
    %1577 = vmatprep.subr.mxu0 0.0
    %1578 = vmatpush1.msra.mxu0 0.0
    %1579 = vmatprep.subr.mxu0 0.0
    %1580 = vmatpush1.msra.mxu0 0.0
    %1581 = vmatprep.subr.mxu0 0.0
    %1582 = vmatpush1.msra.mxu0 0.0
    %1583 = vmatprep.subr.mxu0 0.0
    %1584 = vmatpush1.msra.mxu0 0.0
    %1585 = vmatprep.subr.mxu0 0.0
    %1586 = vmatpush1.msra.mxu0 0.0
    %1587 = vmatprep.subr.mxu0 0.0
    %1588 = vmatpush1.msra.mxu0 0.0
    %1589 = vmatprep.subr.mxu0 0.0
    %1590 = vmatpush1.msra.mxu0 0.0
    %1591 = vmatprep.subr.mxu0 0.0
    %1592 = vmatpush1.msra.mxu0 0.0
    %1593 = vmatprep.subr.mxu0 0.0
    %1594 = vmatpush1.msra.mxu0 0.0
    %1595 = vmatprep.subr.mxu0 0.0
    %1596 = vmatpush1.msra.mxu0 0.0
    %1597 = vmatprep.subr.mxu0 0.0
    %1598 = vmatpush1.msra.mxu0 0.0
    %1599 = vmatprep.subr.mxu0 0.0
    %1600 = vmatpush1.msra.mxu0 0.0
    %1601 = vmatprep.subr.mxu0 0.0
    %1602 = vmatpush1.msra.mxu0 0.0
    %1603 = vmatprep.subr.mxu0 0.0
    %1604 = vmatpush1.msra.mxu0 0.0
    %1605 = vmatprep.subr.mxu0 0.0
    %1606 = vmatpush1.msra.mxu0 0.0
    %1607 = vmatprep.subr.mxu0 0.0
    %1608 = vmatpush1.msra.mxu0 0.0
    %1609 = vmatprep.subr.mxu0 0.0
    %1610 = vmatpush1.msra.mxu0 0.0
    %1611 = vmatprep.mubr.f32.mxu0 0.0
    %1612 = vmatmul.mubr.f32.gmra.mrb[0].mxu0 %v1161
    %v1613 = vpop.f32.mrb[0].mxu0
    %v1614 = vadd.f32 %v1509, %v1613
    %v1615 = vpop.f32.mrb[0].mxu0
    %1616 = vmatprep.mubr.f32.mxu0 0.0
    %1617 = vmatmul.mubr.f32.gmra.mrb[0].mxu0 %v1164
    %v1618 = vpop.f32.mrb[0].mxu0
    %v1619 = vadd.f32 %v1514, %v1618
    %v1620 = vpop.f32.mrb[0].mxu0
    %1621 = vmatprep.mubr.f32.mxu0 0.0
    %1622 = vmatmul.mubr.f32.gmra.mrb[0].mxu0 %v1167
    %v1623 = vpop.f32.mrb[0].mxu0
    %v1624 = vadd.f32 %v1519, %v1623
    %v1625 = vpop.f32.mrb[0].mxu0
    %1626 = vmatprep.mubr.f32.mxu0 0.0
    %1627 = vmatmul.mubr.f32.gmra.mrb[0].mxu0 %v1170
    %v1628 = vpop.f32.mrb[0].mxu0
    %v1629 = vadd.f32 %v1524, %v1628
    %v1630 = vpop.f32.mrb[0].mxu0
    %1631 = vmatprep.mubr.f32.mxu0 0.0
    %1632 = vmatmul.mubr.f32.gmra.mrb[0].mxu0 %v1173
    %v1633 = vpop.f32.mrb[0].mxu0
    %v1634 = vadd.f32 %v1529, %v1633
    %v1635 = vpop.f32.mrb[0].mxu0
    %1636 = vmatprep.mubr.f32.mxu0 0.0
    %1637 = vmatmul.mubr.f32.gmra.mrb[0].mxu0 %v1176
    %v1638 = vpop.f32.mrb[0].mxu0
    %v1639 = vadd.f32 %v1534, %v1638
    %v1640 = vpop.f32.mrb[0].mxu0
    %1641 = vmatprep.mubr.f32.mxu0 0.0
    %1642 = vmatmul.mubr.f32.gmra.mrb[0].mxu0 %v1179
    %v1643 = vpop.f32.mrb[0].mxu0
    %v1644 = vadd.f32 %v1539, %v1643
    %v1645 = vpop.f32.mrb[0].mxu0
    %1646 = vmatprep.mubr.f32.mxu0 0.0
    %1647 = vmatmul.mubr.f32.gmra.mrb[0].mxu0 %v1182
    %v1648 = vpop.f32.mrb[0].mxu0
    %v1649 = vadd.f32 %v1544, %v1648
    %v1650 = vpop.f32.mrb[0].mxu0
    %1651 = vdwg.mxu0
    %v1652 = vmax.f32 %v1380, %v1614
    %v1653 = vmax.f32 %v1385, %v1619
    %v1654 = vmax.f32 %v1390, %v1624
    %v1655 = vmax.f32 %v1395, %v1629
    %v1656 = vmax.f32 %v1400, %v1634
    %v1657 = vmax.f32 %v1405, %v1639
    %v1658 = vmax.f32 %v1410, %v1644
    %v1659 = vmax.f32 %v1415, %v1649
    %v1661 = vlaneseq
    %v1662 = vshrl.u32 %v1661, 7
    %v1663 = vsub.s32 0, %v1662
    %v1664 = vrot.slane %v1112, %v1663
    %v1666 = vadd.f32 %v1652, %v1664
    %v1667 = vadd.f32 %v1653, %v1664
    %v1668 = vadd.f32 %v1654, %v1664
    %v1669 = vadd.f32 %v1655, %v1664
    %v1670 = vadd.f32 %v1656, %v1664
    %v1671 = vadd.f32 %v1657, %v1664
    %v1672 = vadd.f32 %v1658, %v1664
    %v1673 = vadd.f32 %v1659, %v1664
    %v1674 = vmax.f32 %v1666, 0.0
    %v1675 = vmax.f32 %v1667, 0.0
    %v1676 = vmax.f32 %v1668, 0.0
    %v1677 = vmax.f32 %v1669, 0.0
    %v1678 = vmax.f32 %v1670, 0.0
    %v1679 = vmax.f32 %v1671, 0.0
    %v1680 = vmax.f32 %v1672, 0.0
    %v1681 = vmax.f32 %v1673, 0.0
    %vm1682 = vcmask 130048
    %1683 = vst.msk [vmem:[#allocation3] sm:$0xff] %vm1682, %v1674
    %1684 = vst.msk [vmem:[#allocation3 + $0x8] sm:$0xff] %vm1682, %v1675
    %1685 = vst.msk [vmem:[#allocation3 + $0x10] sm:$0xff] %vm1682, %v1676
    %1686 = vst.msk [vmem:[#allocation3 + $0x18] sm:$0xff] %vm1682, %v1677
    %1687 = vst.msk [vmem:[#allocation3 + $0x20] sm:$0xff] %vm1682, %v1678
    %1688 = vst.msk [vmem:[#allocation3 + $0x28] sm:$0xff] %vm1682, %v1679
    %1689 = vst.msk [vmem:[#allocation3 + $0x30] sm:$0xff] %vm1682, %v1680
    %vm1690 = vcmask 129024
    %1691 = vst.msk [vmem:[#allocation3 + $0x38] sm:$0x7f] %vm1690, %v1681
    %v1692 = vld [vmem:[#allocation16] sm:$0xff]
    %v1693 = vld [vmem:[#allocation16 + $0x8] sm:$0xff]
    %v1694 = vld [vmem:[#allocation18] sm:$0xff]
    %v1695 = vld [vmem:[#allocation18 + $0x8] sm:$0xff]
    %v1696 = vld [vmem:[#allocation19] sm:$0x1]
    %v1697 = vld [vmem:[#allocation3] ss:$2 sm:$0xff]
    %s1698 = scalar_lea.vmem [#allocation3], 16
    %v1699 = vld [vmem:[%s1698] ss:$2 sm:$0xff]
    %s1700 = scalar_lea.vmem [#allocation3], 32
    %v1701 = vld [vmem:[%s1700] ss:$2 sm:$0xff]
    %s1702 = scalar_lea.vmem [#allocation3], 48
    %v1703 = vld [vmem:[%s1702] ss:$2 sm:$0x7f]
    %s1704 = scalar_lea.vmem [#allocation3], 1
    %v1705 = vld [vmem:[%s1704] ss:$2 sm:$0xff]
    %s1706 = scalar_lea.vmem [#allocation3], 17
    %v1707 = vld [vmem:[%s1706] ss:$2 sm:$0xff]
    %s1708 = scalar_lea.vmem [#allocation3], 33
    %v1709 = vld [vmem:[%s1708] ss:$2 sm:$0xff]
    %s1710 = scalar_lea.vmem [#allocation3], 49
    %v1711 = vld [vmem:[%s1710] ss:$2 sm:$0x7f]
    %s1712 = scalar_lea.vmem [#allocation3], 2
    %v1713 = vld [vmem:[%s1712] ss:$2 sm:$0xff]
    %s1714 = scalar_lea.vmem [#allocation3], 18
    %v1715 = vld [vmem:[%s1714] ss:$2 sm:$0xff]
    %s1716 = scalar_lea.vmem [#allocation3], 34
    %v1717 = vld [vmem:[%s1716] ss:$2 sm:$0xff]
    %s1718 = scalar_lea.vmem [#allocation3], 50
    %v1719 = vld [vmem:[%s1718] ss:$2 sm:$0x7f]
    %v1721 = vsel %vm1682, %v1705, 0
    %v1724 = vsel %vm1682, %v1707, 0
    %v1727 = vsel %vm1682, %v1709, 0
    %v1730 = vsel %vm1682, %v1711, 0
    %1732 = vmatprep.subr.mxu0 0.0
    %1733 = vmatpush1.msra.mxu0 %v1694
    %1734 = vmatprep.subr.mxu0 0.0
    %1735 = vmatpush1.msra.mxu0 %v1695
    %1736 = vmatprep.subr.mxu0 0.0
    %1737 = vmatpush1.msra.mxu0 0.0
    %1738 = vmatprep.subr.mxu0 0.0
    %1739 = vmatpush1.msra.mxu0 0.0
    %1740 = vmatprep.subr.mxu0 0.0
    %1741 = vmatpush1.msra.mxu0 0.0
    %1742 = vmatprep.subr.mxu0 0.0
    %1743 = vmatpush1.msra.mxu0 0.0
    %1744 = vmatprep.subr.mxu0 0.0
    %1745 = vmatpush1.msra.mxu0 0.0
    %1746 = vmatprep.subr.mxu0 0.0
    %1747 = vmatpush1.msra.mxu0 0.0
    %1748 = vmatprep.subr.mxu0 0.0
    %1749 = vmatpush1.msra.mxu0 0.0
    %1750 = vmatprep.subr.mxu0 0.0
    %1751 = vmatpush1.msra.mxu0 0.0
    %1752 = vmatprep.subr.mxu0 0.0
    %1753 = vmatpush1.msra.mxu0 0.0
    %1754 = vmatprep.subr.mxu0 0.0
    %1755 = vmatpush1.msra.mxu0 0.0
    %1756 = vmatprep.subr.mxu0 0.0
    %1757 = vmatpush1.msra.mxu0 0.0
    %1758 = vmatprep.subr.mxu0 0.0
    %1759 = vmatpush1.msra.mxu0 0.0
    %1760 = vmatprep.subr.mxu0 0.0
    %1761 = vmatpush1.msra.mxu0 0.0
    %1762 = vmatprep.subr.mxu0 0.0
    %1763 = vmatpush1.msra.mxu0 0.0
    %1764 = vmatprep.subr.mxu0 0.0
    %1765 = vmatpush1.msra.mxu0 0.0
    %1766 = vmatprep.subr.mxu0 0.0
    %1767 = vmatpush1.msra.mxu0 0.0
    %1768 = vmatprep.subr.mxu0 0.0
    %1769 = vmatpush1.msra.mxu0 0.0
    %1770 = vmatprep.subr.mxu0 0.0
    %1771 = vmatpush1.msra.mxu0 0.0
    %1772 = vmatprep.subr.mxu0 0.0
    %1773 = vmatpush1.msra.mxu0 0.0
    %1774 = vmatprep.subr.mxu0 0.0
    %1775 = vmatpush1.msra.mxu0 0.0
    %1776 = vmatprep.subr.mxu0 0.0
    %1777 = vmatpush1.msra.mxu0 0.0
    %1778 = vmatprep.subr.mxu0 0.0
    %1779 = vmatpush1.msra.mxu0 0.0
    %1780 = vmatprep.subr.mxu0 0.0
    %1781 = vmatpush1.msra.mxu0 0.0
    %1782 = vmatprep.subr.mxu0 0.0
    %1783 = vmatpush1.msra.mxu0 0.0
    %1784 = vmatprep.subr.mxu0 0.0
    %1785 = vmatpush1.msra.mxu0 0.0
    %1786 = vmatprep.subr.mxu0 0.0
    %1787 = vmatpush1.msra.mxu0 0.0
    %1788 = vmatprep.subr.mxu0 0.0
    %1789 = vmatpush1.msra.mxu0 0.0
    %1790 = vmatprep.subr.mxu0 0.0
    %1791 = vmatpush1.msra.mxu0 0.0
    %1792 = vmatprep.subr.mxu0 0.0
    %1793 = vmatpush1.msra.mxu0 0.0
    %1794 = vmatprep.subr.mxu0 0.0
    %1795 = vmatpush1.msra.mxu0 0.0
    %1796 = vmatprep.mubr.f32.mxu0 0.0
    %1797 = vmatmul.mubr.f32.gmra.mrb[0].mxu0 %v1721
    %v1798 = vpop.f32.mrb[0].mxu0
    %v1799 = vadd.f32 0.0, %v1798
    %v1800 = vpop.f32.mrb[0].mxu0
    %1801 = vmatprep.mubr.f32.mxu0 0.0
    %1802 = vmatmul.mubr.f32.gmra.mrb[0].mxu0 %v1724
    %v1803 = vpop.f32.mrb[0].mxu0
    %v1804 = vadd.f32 0.0, %v1803
    %v1805 = vpop.f32.mrb[0].mxu0
    %1806 = vmatprep.mubr.f32.mxu0 0.0
    %1807 = vmatmul.mubr.f32.gmra.mrb[0].mxu0 %v1727
    %v1808 = vpop.f32.mrb[0].mxu0
    %v1809 = vadd.f32 0.0, %v1808
    %v1810 = vpop.f32.mrb[0].mxu0
    %1811 = vmatprep.mubr.f32.mxu0 0.0
    %1812 = vmatmul.mubr.f32.gmra.mrb[0].mxu0 %v1730
    %v1813 = vpop.f32.mrb[0].mxu0
    %v1814 = vadd.f32 0.0, %v1813
    %v1815 = vpop.f32.mrb[0].mxu0
    %1816 = vdwg.mxu0
    %v1818 = vsel %vm1682, %v1697, 0
    %v1821 = vsel %vm1682, %v1699, 0
    %v1824 = vsel %vm1682, %v1701, 0
    %v1827 = vsel %vm1682, %v1703, 0
    %1829 = vmatprep.subr.mxu0 0.0
    %1830 = vmatpush1.msra.mxu0 %v1692
    %1831 = vmatprep.subr.mxu0 0.0
    %1832 = vmatpush1.msra.mxu0 %v1693
    %1833 = vmatprep.subr.mxu0 0.0
    %1834 = vmatpush1.msra.mxu0 0.0
    %1835 = vmatprep.subr.mxu0 0.0
    %1836 = vmatpush1.msra.mxu0 0.0
    %1837 = vmatprep.subr.mxu0 0.0
    %1838 = vmatpush1.msra.mxu0 0.0
    %1839 = vmatprep.subr.mxu0 0.0
    %1840 = vmatpush1.msra.mxu0 0.0
    %1841 = vmatprep.subr.mxu0 0.0
    %1842 = vmatpush1.msra.mxu0 0.0
    %1843 = vmatprep.subr.mxu0 0.0
    %1844 = vmatpush1.msra.mxu0 0.0
    %1845 = vmatprep.subr.mxu0 0.0
    %1846 = vmatpush1.msra.mxu0 0.0
    %1847 = vmatprep.subr.mxu0 0.0
    %1848 = vmatpush1.msra.mxu0 0.0
    %1849 = vmatprep.subr.mxu0 0.0
    %1850 = vmatpush1.msra.mxu0 0.0
    %1851 = vmatprep.subr.mxu0 0.0
    %1852 = vmatpush1.msra.mxu0 0.0
    %1853 = vmatprep.subr.mxu0 0.0
    %1854 = vmatpush1.msra.mxu0 0.0
    %1855 = vmatprep.subr.mxu0 0.0
    %1856 = vmatpush1.msra.mxu0 0.0
    %1857 = vmatprep.subr.mxu0 0.0
    %1858 = vmatpush1.msra.mxu0 0.0
    %1859 = vmatprep.subr.mxu0 0.0
    %1860 = vmatpush1.msra.mxu0 0.0
    %1861 = vmatprep.subr.mxu0 0.0
    %1862 = vmatpush1.msra.mxu0 0.0
    %1863 = vmatprep.subr.mxu0 0.0
    %1864 = vmatpush1.msra.mxu0 0.0
    %1865 = vmatprep.subr.mxu0 0.0
    %1866 = vmatpush1.msra.mxu0 0.0
    %1867 = vmatprep.subr.mxu0 0.0
    %1868 = vmatpush1.msra.mxu0 0.0
    %1869 = vmatprep.subr.mxu0 0.0
    %1870 = vmatpush1.msra.mxu0 0.0
    %1871 = vmatprep.subr.mxu0 0.0
    %1872 = vmatpush1.msra.mxu0 0.0
    %1873 = vmatprep.subr.mxu0 0.0
    %1874 = vmatpush1.msra.mxu0 0.0
    %1875 = vmatprep.subr.mxu0 0.0
    %1876 = vmatpush1.msra.mxu0 0.0
    %1877 = vmatprep.subr.mxu0 0.0
    %1878 = vmatpush1.msra.mxu0 0.0
    %1879 = vmatprep.subr.mxu0 0.0
    %1880 = vmatpush1.msra.mxu0 0.0
    %1881 = vmatprep.subr.mxu0 0.0
    %1882 = vmatpush1.msra.mxu0 0.0
    %1883 = vmatprep.subr.mxu0 0.0
    %1884 = vmatpush1.msra.mxu0 0.0
    %1885 = vmatprep.subr.mxu0 0.0
    %1886 = vmatpush1.msra.mxu0 0.0
    %1887 = vmatprep.subr.mxu0 0.0
    %1888 = vmatpush1.msra.mxu0 0.0
    %1889 = vmatprep.subr.mxu0 0.0
    %1890 = vmatpush1.msra.mxu0 0.0
    %1891 = vmatprep.subr.mxu0 0.0
    %1892 = vmatpush1.msra.mxu0 0.0
    %1893 = vmatprep.mubr.f32.mxu0 0.0
    %1894 = vmatmul.mubr.f32.gmra.mrb[0].mxu0 %v1818
    %v1895 = vpop.f32.mrb[0].mxu0
    %v1896 = vadd.f32 %v1799, %v1895
    %v1897 = vpop.f32.mrb[0].mxu0
    %1898 = vmatprep.mubr.f32.mxu0 0.0
    %1899 = vmatmul.mubr.f32.gmra.mrb[0].mxu0 %v1821
    %v1900 = vpop.f32.mrb[0].mxu0
    %v1901 = vadd.f32 %v1804, %v1900
    %v1902 = vpop.f32.mrb[0].mxu0
    %1903 = vmatprep.mubr.f32.mxu0 0.0
    %1904 = vmatmul.mubr.f32.gmra.mrb[0].mxu0 %v1824
    %v1905 = vpop.f32.mrb[0].mxu0
    %v1906 = vadd.f32 %v1809, %v1905
    %v1907 = vpop.f32.mrb[0].mxu0
    %1908 = vmatprep.mubr.f32.mxu0 0.0
    %1909 = vmatmul.mubr.f32.gmra.mrb[0].mxu0 %v1827
    %v1910 = vpop.f32.mrb[0].mxu0
    %v1911 = vadd.f32 %v1814, %v1910
    %v1912 = vpop.f32.mrb[0].mxu0
    %1913 = vdwg.mxu0
    %v1915 = vsel %vm1682, %v1713, 0
    %v1918 = vsel %vm1682, %v1715, 0
    %v1921 = vsel %vm1682, %v1717, 0
    %v1924 = vsel %vm1682, %v1719, 0
    %1926 = vmatprep.subr.mxu0 0.0
    %1927 = vmatpush1.msra.mxu0 %v1694
    %1928 = vmatprep.subr.mxu0 0.0
    %1929 = vmatpush1.msra.mxu0 %v1695
    %1930 = vmatprep.subr.mxu0 0.0
    %1931 = vmatpush1.msra.mxu0 0.0
    %1932 = vmatprep.subr.mxu0 0.0
    %1933 = vmatpush1.msra.mxu0 0.0
    %1934 = vmatprep.subr.mxu0 0.0
    %1935 = vmatpush1.msra.mxu0 0.0
    %1936 = vmatprep.subr.mxu0 0.0
    %1937 = vmatpush1.msra.mxu0 0.0
    %1938 = vmatprep.subr.mxu0 0.0
    %1939 = vmatpush1.msra.mxu0 0.0
    %1940 = vmatprep.subr.mxu0 0.0
    %1941 = vmatpush1.msra.mxu0 0.0
    %1942 = vmatprep.subr.mxu0 0.0
    %1943 = vmatpush1.msra.mxu0 0.0
    %1944 = vmatprep.subr.mxu0 0.0
    %1945 = vmatpush1.msra.mxu0 0.0
    %1946 = vmatprep.subr.mxu0 0.0
    %1947 = vmatpush1.msra.mxu0 0.0
    %1948 = vmatprep.subr.mxu0 0.0
    %1949 = vmatpush1.msra.mxu0 0.0
    %1950 = vmatprep.subr.mxu0 0.0
    %1951 = vmatpush1.msra.mxu0 0.0
    %1952 = vmatprep.subr.mxu0 0.0
    %1953 = vmatpush1.msra.mxu0 0.0
    %1954 = vmatprep.subr.mxu0 0.0
    %1955 = vmatpush1.msra.mxu0 0.0
    %1956 = vmatprep.subr.mxu0 0.0
    %1957 = vmatpush1.msra.mxu0 0.0
    %1958 = vmatprep.subr.mxu0 0.0
    %1959 = vmatpush1.msra.mxu0 0.0
    %1960 = vmatprep.subr.mxu0 0.0
    %1961 = vmatpush1.msra.mxu0 0.0
    %1962 = vmatprep.subr.mxu0 0.0
    %1963 = vmatpush1.msra.mxu0 0.0
    %1964 = vmatprep.subr.mxu0 0.0
    %1965 = vmatpush1.msra.mxu0 0.0
    %1966 = vmatprep.subr.mxu0 0.0
    %1967 = vmatpush1.msra.mxu0 0.0
    %1968 = vmatprep.subr.mxu0 0.0
    %1969 = vmatpush1.msra.mxu0 0.0
    %1970 = vmatprep.subr.mxu0 0.0
    %1971 = vmatpush1.msra.mxu0 0.0
    %1972 = vmatprep.subr.mxu0 0.0
    %1973 = vmatpush1.msra.mxu0 0.0
    %1974 = vmatprep.subr.mxu0 0.0
    %1975 = vmatpush1.msra.mxu0 0.0
    %1976 = vmatprep.subr.mxu0 0.0
    %1977 = vmatpush1.msra.mxu0 0.0
    %1978 = vmatprep.subr.mxu0 0.0
    %1979 = vmatpush1.msra.mxu0 0.0
    %1980 = vmatprep.subr.mxu0 0.0
    %1981 = vmatpush1.msra.mxu0 0.0
    %1982 = vmatprep.subr.mxu0 0.0
    %1983 = vmatpush1.msra.mxu0 0.0
    %1984 = vmatprep.subr.mxu0 0.0
    %1985 = vmatpush1.msra.mxu0 0.0
    %1986 = vmatprep.subr.mxu0 0.0
    %1987 = vmatpush1.msra.mxu0 0.0
    %1988 = vmatprep.subr.mxu0 0.0
    %1989 = vmatpush1.msra.mxu0 0.0
    %1990 = vmatprep.mubr.f32.mxu0 0.0
    %1991 = vmatmul.mubr.f32.gmra.mrb[0].mxu0 %v1915
    %v1992 = vpop.f32.mrb[0].mxu0
    %v1993 = vadd.f32 0.0, %v1992
    %v1994 = vpop.f32.mrb[0].mxu0
    %1995 = vmatprep.mubr.f32.mxu0 0.0
    %1996 = vmatmul.mubr.f32.gmra.mrb[0].mxu0 %v1918
    %v1997 = vpop.f32.mrb[0].mxu0
    %v1998 = vadd.f32 0.0, %v1997
    %v1999 = vpop.f32.mrb[0].mxu0
    %2000 = vmatprep.mubr.f32.mxu0 0.0
    %2001 = vmatmul.mubr.f32.gmra.mrb[0].mxu0 %v1921
    %v2002 = vpop.f32.mrb[0].mxu0
    %v2003 = vadd.f32 0.0, %v2002
    %v2004 = vpop.f32.mrb[0].mxu0
    %2005 = vmatprep.mubr.f32.mxu0 0.0
    %2006 = vmatmul.mubr.f32.gmra.mrb[0].mxu0 %v1924
    %v2007 = vpop.f32.mrb[0].mxu0
    %v2008 = vadd.f32 0.0, %v2007
    %v2009 = vpop.f32.mrb[0].mxu0
    %2010 = vdwg.mxu0
    %2011 = vmatprep.subr.mxu0 0.0
    %2012 = vmatpush1.msra.mxu0 %v1692
    %2013 = vmatprep.subr.mxu0 0.0
    %2014 = vmatpush1.msra.mxu0 %v1693
    %2015 = vmatprep.subr.mxu0 0.0
    %2016 = vmatpush1.msra.mxu0 0.0
    %2017 = vmatprep.subr.mxu0 0.0
    %2018 = vmatpush1.msra.mxu0 0.0
    %2019 = vmatprep.subr.mxu0 0.0
    %2020 = vmatpush1.msra.mxu0 0.0
    %2021 = vmatprep.subr.mxu0 0.0
    %2022 = vmatpush1.msra.mxu0 0.0
    %2023 = vmatprep.subr.mxu0 0.0
    %2024 = vmatpush1.msra.mxu0 0.0
    %2025 = vmatprep.subr.mxu0 0.0
    %2026 = vmatpush1.msra.mxu0 0.0
    %2027 = vmatprep.subr.mxu0 0.0
    %2028 = vmatpush1.msra.mxu0 0.0
    %2029 = vmatprep.subr.mxu0 0.0
    %2030 = vmatpush1.msra.mxu0 0.0
    %2031 = vmatprep.subr.mxu0 0.0
    %2032 = vmatpush1.msra.mxu0 0.0
    %2033 = vmatprep.subr.mxu0 0.0
    %2034 = vmatpush1.msra.mxu0 0.0
    %2035 = vmatprep.subr.mxu0 0.0
    %2036 = vmatpush1.msra.mxu0 0.0
    %2037 = vmatprep.subr.mxu0 0.0
    %2038 = vmatpush1.msra.mxu0 0.0
    %2039 = vmatprep.subr.mxu0 0.0
    %2040 = vmatpush1.msra.mxu0 0.0
    %2041 = vmatprep.subr.mxu0 0.0
    %2042 = vmatpush1.msra.mxu0 0.0
    %2043 = vmatprep.subr.mxu0 0.0
    %2044 = vmatpush1.msra.mxu0 0.0
    %2045 = vmatprep.subr.mxu0 0.0
    %2046 = vmatpush1.msra.mxu0 0.0
    %2047 = vmatprep.subr.mxu0 0.0
    %2048 = vmatpush1.msra.mxu0 0.0
    %2049 = vmatprep.subr.mxu0 0.0
    %2050 = vmatpush1.msra.mxu0 0.0
    %2051 = vmatprep.subr.mxu0 0.0
    %2052 = vmatpush1.msra.mxu0 0.0
    %2053 = vmatprep.subr.mxu0 0.0
    %2054 = vmatpush1.msra.mxu0 0.0
    %2055 = vmatprep.subr.mxu0 0.0
    %2056 = vmatpush1.msra.mxu0 0.0
    %2057 = vmatprep.subr.mxu0 0.0
    %2058 = vmatpush1.msra.mxu0 0.0
    %2059 = vmatprep.subr.mxu0 0.0
    %2060 = vmatpush1.msra.mxu0 0.0
    %2061 = vmatprep.subr.mxu0 0.0
    %2062 = vmatpush1.msra.mxu0 0.0
    %2063 = vmatprep.subr.mxu0 0.0
    %2064 = vmatpush1.msra.mxu0 0.0
    %2065 = vmatprep.subr.mxu0 0.0
    %2066 = vmatpush1.msra.mxu0 0.0
    %2067 = vmatprep.subr.mxu0 0.0
    %2068 = vmatpush1.msra.mxu0 0.0
    %2069 = vmatprep.subr.mxu0 0.0
    %2070 = vmatpush1.msra.mxu0 0.0
    %2071 = vmatprep.subr.mxu0 0.0
    %2072 = vmatpush1.msra.mxu0 0.0
    %2073 = vmatprep.subr.mxu0 0.0
    %2074 = vmatpush1.msra.mxu0 0.0
    %2075 = vmatprep.mubr.f32.mxu0 0.0
    %2076 = vmatmul.mubr.f32.gmra.mrb[0].mxu0 %v1721
    %v2077 = vpop.f32.mrb[0].mxu0
    %v2078 = vadd.f32 %v1993, %v2077
    %v2079 = vpop.f32.mrb[0].mxu0
    %2080 = vmatprep.mubr.f32.mxu0 0.0
    %2081 = vmatmul.mubr.f32.gmra.mrb[0].mxu0 %v1724
    %v2082 = vpop.f32.mrb[0].mxu0
    %v2083 = vadd.f32 %v1998, %v2082
    %v2084 = vpop.f32.mrb[0].mxu0
    %2085 = vmatprep.mubr.f32.mxu0 0.0
    %2086 = vmatmul.mubr.f32.gmra.mrb[0].mxu0 %v1727
    %v2087 = vpop.f32.mrb[0].mxu0
    %v2088 = vadd.f32 %v2003, %v2087
    %v2089 = vpop.f32.mrb[0].mxu0
    %2090 = vmatprep.mubr.f32.mxu0 0.0
    %2091 = vmatmul.mubr.f32.gmra.mrb[0].mxu0 %v1730
    %v2092 = vpop.f32.mrb[0].mxu0
    %v2093 = vadd.f32 %v2008, %v2092
    %v2094 = vpop.f32.mrb[0].mxu0
    %2095 = vdwg.mxu0
    %v2096 = vmax.f32 %v1896, %v2078
    %v2097 = vmax.f32 %v1901, %v2083
    %v2098 = vmax.f32 %v1906, %v2088
    %v2099 = vmax.f32 %v1911, %v2093
    %v2101 = vlaneseq
    %v2102 = vshrl.u32 %v2101, 7
    %v2103 = vsub.s32 0, %v2102
    %v2104 = vrot.slane %v1696, %v2103
    %v2106 = vadd.f32 %v2096, %v2104
    %v2107 = vadd.f32 %v2097, %v2104
    %v2108 = vadd.f32 %v2098, %v2104
    %v2109 = vadd.f32 %v2099, %v2104
    %v2110 = vmax.f32 %v2106, 0.0
    %v2111 = vmax.f32 %v2107, 0.0
    %v2112 = vmax.f32 %v2108, 0.0
    %v2113 = vmax.f32 %v2109, 0.0
    %vm2114 = vcmask 261120
    %2115 = vst.msk [vmem:[#allocation4] sm:$0xff] %vm2114, %v2110
    %2116 = vst.msk [vmem:[#allocation4 + $0x8] sm:$0xff] %vm2114, %v2111
    %2117 = vst.msk [vmem:[#allocation4 + $0x10] sm:$0xff] %vm2114, %v2112
    %vm2118 = vcmask 260096
    %2119 = vst.msk [vmem:[#allocation4 + $0x18] sm:$0x7f] %vm2118, %v2113
    %v2120 = vld [vmem:[#allocation21] sm:$0xff]
    %v2121 = vld [vmem:[#allocation21 + $0x8] sm:$0xff]
    %v2122 = vld [vmem:[#allocation21 + $0x10] sm:$0xff]
    %v2123 = vld [vmem:[#allocation21 + $0x18] sm:$0xff]
    %v2124 = vld [vmem:[#allocation22] sm:$0xff]
    %v2125 = vld [vmem:[#allocation22 + $0x8] sm:$0xff]
    %v2126 = vld [vmem:[#allocation22 + $0x10] sm:$0xff]
    %v2127 = vld [vmem:[#allocation22 + $0x18] sm:$0xff]
    %v2128 = vld [vmem:[%s12] sm:$0x1]
    %v2129 = vld [vmem:[#allocation4] ss:$2 sm:$0xff]
    %s2130 = scalar_lea.vmem [#allocation4], 16
    %v2131 = vld [vmem:[%s2130] ss:$2 sm:$0x7f]
    %s2132 = scalar_lea.vmem [#allocation4], 1
    %v2133 = vld [vmem:[%s2132] ss:$2 sm:$0xff]
    %s2134 = scalar_lea.vmem [#allocation4], 17
    %v2135 = vld [vmem:[%s2134] ss:$2 sm:$0x7f]
    %s2136 = scalar_lea.vmem [#allocation4], 2
    %v2137 = vld [vmem:[%s2136] ss:$2 sm:$0xff]
    %s2138 = scalar_lea.vmem [#allocation4], 18
    %v2139 = vld [vmem:[%s2138] ss:$2 sm:$0x7f]
    %v2141 = vsel %vm2114, %v2133, 0
    %v2144 = vsel %vm2114, %v2135, 0
    %2146 = vmatprep.subr.mxu0 0.0
    %2147 = vmatpush1.msra.mxu0 %v2124
    %2148 = vmatprep.subr.mxu0 0.0
    %2149 = vmatpush1.msra.mxu0 %v2125
    %2150 = vmatprep.subr.mxu0 0.0
    %2151 = vmatpush1.msra.mxu0 %v2126
    %2152 = vmatprep.subr.mxu0 0.0
    %2153 = vmatpush1.msra.mxu0 %v2127
    %2154 = vmatprep.subr.mxu0 0.0
    %2155 = vmatpush1.msra.mxu0 0.0
    %2156 = vmatprep.subr.mxu0 0.0
    %2157 = vmatpush1.msra.mxu0 0.0
    %2158 = vmatprep.subr.mxu0 0.0
    %2159 = vmatpush1.msra.mxu0 0.0
    %2160 = vmatprep.subr.mxu0 0.0
    %2161 = vmatpush1.msra.mxu0 0.0
    %2162 = vmatprep.subr.mxu0 0.0
    %2163 = vmatpush1.msra.mxu0 0.0
    %2164 = vmatprep.subr.mxu0 0.0
    %2165 = vmatpush1.msra.mxu0 0.0
    %2166 = vmatprep.subr.mxu0 0.0
    %2167 = vmatpush1.msra.mxu0 0.0
    %2168 = vmatprep.subr.mxu0 0.0
    %2169 = vmatpush1.msra.mxu0 0.0
    %2170 = vmatprep.subr.mxu0 0.0
    %2171 = vmatpush1.msra.mxu0 0.0
    %2172 = vmatprep.subr.mxu0 0.0
    %2173 = vmatpush1.msra.mxu0 0.0
    %2174 = vmatprep.subr.mxu0 0.0
    %2175 = vmatpush1.msra.mxu0 0.0
    %2176 = vmatprep.subr.mxu0 0.0
    %2177 = vmatpush1.msra.mxu0 0.0
    %2178 = vmatprep.subr.mxu0 0.0
    %2179 = vmatpush1.msra.mxu0 0.0
    %2180 = vmatprep.subr.mxu0 0.0
    %2181 = vmatpush1.msra.mxu0 0.0
    %2182 = vmatprep.subr.mxu0 0.0
    %2183 = vmatpush1.msra.mxu0 0.0
    %2184 = vmatprep.subr.mxu0 0.0
    %2185 = vmatpush1.msra.mxu0 0.0
    %2186 = vmatprep.subr.mxu0 0.0
    %2187 = vmatpush1.msra.mxu0 0.0
    %2188 = vmatprep.subr.mxu0 0.0
    %2189 = vmatpush1.msra.mxu0 0.0
    %2190 = vmatprep.subr.mxu0 0.0
    %2191 = vmatpush1.msra.mxu0 0.0
    %2192 = vmatprep.subr.mxu0 0.0
    %2193 = vmatpush1.msra.mxu0 0.0
    %2194 = vmatprep.subr.mxu0 0.0
    %2195 = vmatpush1.msra.mxu0 0.0
    %2196 = vmatprep.subr.mxu0 0.0
    %2197 = vmatpush1.msra.mxu0 0.0
    %2198 = vmatprep.subr.mxu0 0.0
    %2199 = vmatpush1.msra.mxu0 0.0
    %2200 = vmatprep.subr.mxu0 0.0
    %2201 = vmatpush1.msra.mxu0 0.0
    %2202 = vmatprep.subr.mxu0 0.0
    %2203 = vmatpush1.msra.mxu0 0.0
    %2204 = vmatprep.subr.mxu0 0.0
    %2205 = vmatpush1.msra.mxu0 0.0
    %2206 = vmatprep.subr.mxu0 0.0
    %2207 = vmatpush1.msra.mxu0 0.0
    %2208 = vmatprep.subr.mxu0 0.0
    %2209 = vmatpush1.msra.mxu0 0.0
    %2210 = vmatprep.mubr.f32.mxu0 0.0
    %2211 = vmatmul.mubr.f32.gmra.mrb[0].mxu0 %v2141
    %v2212 = vpop.f32.mrb[0].mxu0
    %v2213 = vadd.f32 0.0, %v2212
    %v2214 = vpop.f32.mrb[0].mxu0
    %2215 = vmatprep.mubr.f32.mxu0 0.0
    %2216 = vmatmul.mubr.f32.gmra.mrb[0].mxu0 %v2144
    %v2217 = vpop.f32.mrb[0].mxu0
    %v2218 = vadd.f32 0.0, %v2217
    %v2219 = vpop.f32.mrb[0].mxu0
    %2220 = vdwg.mxu0
    %v2222 = vsel %vm2114, %v2129, 0
    %v2225 = vsel %vm2114, %v2131, 0
    %2227 = vmatprep.subr.mxu0 0.0
    %2228 = vmatpush1.msra.mxu0 %v2120
    %2229 = vmatprep.subr.mxu0 0.0
    %2230 = vmatpush1.msra.mxu0 %v2121
    %2231 = vmatprep.subr.mxu0 0.0
    %2232 = vmatpush1.msra.mxu0 %v2122
    %2233 = vmatprep.subr.mxu0 0.0
    %2234 = vmatpush1.msra.mxu0 %v2123
    %2235 = vmatprep.subr.mxu0 0.0
    %2236 = vmatpush1.msra.mxu0 0.0
    %2237 = vmatprep.subr.mxu0 0.0
    %2238 = vmatpush1.msra.mxu0 0.0
    %2239 = vmatprep.subr.mxu0 0.0
    %2240 = vmatpush1.msra.mxu0 0.0
    %2241 = vmatprep.subr.mxu0 0.0
    %2242 = vmatpush1.msra.mxu0 0.0
    %2243 = vmatprep.subr.mxu0 0.0
    %2244 = vmatpush1.msra.mxu0 0.0
    %2245 = vmatprep.subr.mxu0 0.0
    %2246 = vmatpush1.msra.mxu0 0.0
    %2247 = vmatprep.subr.mxu0 0.0
    %2248 = vmatpush1.msra.mxu0 0.0
    %2249 = vmatprep.subr.mxu0 0.0
    %2250 = vmatpush1.msra.mxu0 0.0
    %2251 = vmatprep.subr.mxu0 0.0
    %2252 = vmatpush1.msra.mxu0 0.0
    %2253 = vmatprep.subr.mxu0 0.0
    %2254 = vmatpush1.msra.mxu0 0.0
    %2255 = vmatprep.subr.mxu0 0.0
    %2256 = vmatpush1.msra.mxu0 0.0
    %2257 = vmatprep.subr.mxu0 0.0
    %2258 = vmatpush1.msra.mxu0 0.0
    %2259 = vmatprep.subr.mxu0 0.0
    %2260 = vmatpush1.msra.mxu0 0.0
    %2261 = vmatprep.subr.mxu0 0.0
    %2262 = vmatpush1.msra.mxu0 0.0
    %2263 = vmatprep.subr.mxu0 0.0
    %2264 = vmatpush1.msra.mxu0 0.0
    %2265 = vmatprep.subr.mxu0 0.0
    %2266 = vmatpush1.msra.mxu0 0.0
    %2267 = vmatprep.subr.mxu0 0.0
    %2268 = vmatpush1.msra.mxu0 0.0
    %2269 = vmatprep.subr.mxu0 0.0
    %2270 = vmatpush1.msra.mxu0 0.0
    %2271 = vmatprep.subr.mxu0 0.0
    %2272 = vmatpush1.msra.mxu0 0.0
    %2273 = vmatprep.subr.mxu0 0.0
    %2274 = vmatpush1.msra.mxu0 0.0
    %2275 = vmatprep.subr.mxu0 0.0
    %2276 = vmatpush1.msra.mxu0 0.0
    %2277 = vmatprep.subr.mxu0 0.0
    %2278 = vmatpush1.msra.mxu0 0.0
    %2279 = vmatprep.subr.mxu0 0.0
    %2280 = vmatpush1.msra.mxu0 0.0
    %2281 = vmatprep.subr.mxu0 0.0
    %2282 = vmatpush1.msra.mxu0 0.0
    %2283 = vmatprep.subr.mxu0 0.0
    %2284 = vmatpush1.msra.mxu0 0.0
    %2285 = vmatprep.subr.mxu0 0.0
    %2286 = vmatpush1.msra.mxu0 0.0
    %2287 = vmatprep.subr.mxu0 0.0
    %2288 = vmatpush1.msra.mxu0 0.0
    %2289 = vmatprep.subr.mxu0 0.0
    %2290 = vmatpush1.msra.mxu0 0.0
    %2291 = vmatprep.mubr.f32.mxu0 0.0
    %2292 = vmatmul.mubr.f32.gmra.mrb[0].mxu0 %v2222
    %v2293 = vpop.f32.mrb[0].mxu0
    %v2294 = vadd.f32 %v2213, %v2293
    %v2295 = vpop.f32.mrb[0].mxu0
    %2296 = vmatprep.mubr.f32.mxu0 0.0
    %2297 = vmatmul.mubr.f32.gmra.mrb[0].mxu0 %v2225
    %v2298 = vpop.f32.mrb[0].mxu0
    %v2299 = vadd.f32 %v2218, %v2298
    %v2300 = vpop.f32.mrb[0].mxu0
    %2301 = vdwg.mxu0
    %v2303 = vsel %vm2114, %v2137, 0
    %v2306 = vsel %vm2114, %v2139, 0
    %2308 = vmatprep.subr.mxu0 0.0
    %2309 = vmatpush1.msra.mxu0 %v2124
    %2310 = vmatprep.subr.mxu0 0.0
    %2311 = vmatpush1.msra.mxu0 %v2125
    %2312 = vmatprep.subr.mxu0 0.0
    %2313 = vmatpush1.msra.mxu0 %v2126
    %2314 = vmatprep.subr.mxu0 0.0
    %2315 = vmatpush1.msra.mxu0 %v2127
    %2316 = vmatprep.subr.mxu0 0.0
    %2317 = vmatpush1.msra.mxu0 0.0
    %2318 = vmatprep.subr.mxu0 0.0
    %2319 = vmatpush1.msra.mxu0 0.0
    %2320 = vmatprep.subr.mxu0 0.0
    %2321 = vmatpush1.msra.mxu0 0.0
    %2322 = vmatprep.subr.mxu0 0.0
    %2323 = vmatpush1.msra.mxu0 0.0
    %2324 = vmatprep.subr.mxu0 0.0
    %2325 = vmatpush1.msra.mxu0 0.0
    %2326 = vmatprep.subr.mxu0 0.0
    %2327 = vmatpush1.msra.mxu0 0.0
    %2328 = vmatprep.subr.mxu0 0.0
    %2329 = vmatpush1.msra.mxu0 0.0
    %2330 = vmatprep.subr.mxu0 0.0
    %2331 = vmatpush1.msra.mxu0 0.0
    %2332 = vmatprep.subr.mxu0 0.0
    %2333 = vmatpush1.msra.mxu0 0.0
    %2334 = vmatprep.subr.mxu0 0.0
    %2335 = vmatpush1.msra.mxu0 0.0
    %2336 = vmatprep.subr.mxu0 0.0
    %2337 = vmatpush1.msra.mxu0 0.0
    %2338 = vmatprep.subr.mxu0 0.0
    %2339 = vmatpush1.msra.mxu0 0.0
    %2340 = vmatprep.subr.mxu0 0.0
    %2341 = vmatpush1.msra.mxu0 0.0
    %2342 = vmatprep.subr.mxu0 0.0
    %2343 = vmatpush1.msra.mxu0 0.0
    %2344 = vmatprep.subr.mxu0 0.0
    %2345 = vmatpush1.msra.mxu0 0.0
    %2346 = vmatprep.subr.mxu0 0.0
    %2347 = vmatpush1.msra.mxu0 0.0
    %2348 = vmatprep.subr.mxu0 0.0
    %2349 = vmatpush1.msra.mxu0 0.0
    %2350 = vmatprep.subr.mxu0 0.0
    %2351 = vmatpush1.msra.mxu0 0.0
    %2352 = vmatprep.subr.mxu0 0.0
    %2353 = vmatpush1.msra.mxu0 0.0
    %2354 = vmatprep.subr.mxu0 0.0
    %2355 = vmatpush1.msra.mxu0 0.0
    %2356 = vmatprep.subr.mxu0 0.0
    %2357 = vmatpush1.msra.mxu0 0.0
    %2358 = vmatprep.subr.mxu0 0.0
    %2359 = vmatpush1.msra.mxu0 0.0
    %2360 = vmatprep.subr.mxu0 0.0
    %2361 = vmatpush1.msra.mxu0 0.0
    %2362 = vmatprep.subr.mxu0 0.0
    %2363 = vmatpush1.msra.mxu0 0.0
    %2364 = vmatprep.subr.mxu0 0.0
    %2365 = vmatpush1.msra.mxu0 0.0
    %2366 = vmatprep.subr.mxu0 0.0
    %2367 = vmatpush1.msra.mxu0 0.0
    %2368 = vmatprep.subr.mxu0 0.0
    %2369 = vmatpush1.msra.mxu0 0.0
    %2370 = vmatprep.subr.mxu0 0.0
    %2371 = vmatpush1.msra.mxu0 0.0
    %2372 = vmatprep.mubr.f32.mxu0 0.0
    %2373 = vmatmul.mubr.f32.gmra.mrb[0].mxu0 %v2303
    %v2374 = vpop.f32.mrb[0].mxu0
    %v2375 = vadd.f32 0.0, %v2374
    %v2376 = vpop.f32.mrb[0].mxu0
    %2377 = vmatprep.mubr.f32.mxu0 0.0
    %2378 = vmatmul.mubr.f32.gmra.mrb[0].mxu0 %v2306
    %v2379 = vpop.f32.mrb[0].mxu0
    %v2380 = vadd.f32 0.0, %v2379
    %v2381 = vpop.f32.mrb[0].mxu0
    %2382 = vdwg.mxu0
    %2383 = vmatprep.subr.mxu0 0.0
    %2384 = vmatpush1.msra.mxu0 %v2120
    %2385 = vmatprep.subr.mxu0 0.0
    %2386 = vmatpush1.msra.mxu0 %v2121
    %2387 = vmatprep.subr.mxu0 0.0
    %2388 = vmatpush1.msra.mxu0 %v2122
    %2389 = vmatprep.subr.mxu0 0.0
    %2390 = vmatpush1.msra.mxu0 %v2123
    %2391 = vmatprep.subr.mxu0 0.0
    %2392 = vmatpush1.msra.mxu0 0.0
    %2393 = vmatprep.subr.mxu0 0.0
    %2394 = vmatpush1.msra.mxu0 0.0
    %2395 = vmatprep.subr.mxu0 0.0
    %2396 = vmatpush1.msra.mxu0 0.0
    %2397 = vmatprep.subr.mxu0 0.0
    %2398 = vmatpush1.msra.mxu0 0.0
    %2399 = vmatprep.subr.mxu0 0.0
    %2400 = vmatpush1.msra.mxu0 0.0
    %2401 = vmatprep.subr.mxu0 0.0
    %2402 = vmatpush1.msra.mxu0 0.0
    %2403 = vmatprep.subr.mxu0 0.0
    %2404 = vmatpush1.msra.mxu0 0.0
    %2405 = vmatprep.subr.mxu0 0.0
    %2406 = vmatpush1.msra.mxu0 0.0
    %2407 = vmatprep.subr.mxu0 0.0
    %2408 = vmatpush1.msra.mxu0 0.0
    %2409 = vmatprep.subr.mxu0 0.0
    %2410 = vmatpush1.msra.mxu0 0.0
    %2411 = vmatprep.subr.mxu0 0.0
    %2412 = vmatpush1.msra.mxu0 0.0
    %2413 = vmatprep.subr.mxu0 0.0
    %2414 = vmatpush1.msra.mxu0 0.0
    %2415 = vmatprep.subr.mxu0 0.0
    %2416 = vmatpush1.msra.mxu0 0.0
    %2417 = vmatprep.subr.mxu0 0.0
    %2418 = vmatpush1.msra.mxu0 0.0
    %2419 = vmatprep.subr.mxu0 0.0
    %2420 = vmatpush1.msra.mxu0 0.0
    %2421 = vmatprep.subr.mxu0 0.0
    %2422 = vmatpush1.msra.mxu0 0.0
    %2423 = vmatprep.subr.mxu0 0.0
    %2424 = vmatpush1.msra.mxu0 0.0
    %2425 = vmatprep.subr.mxu0 0.0
    %2426 = vmatpush1.msra.mxu0 0.0
    %2427 = vmatprep.subr.mxu0 0.0
    %2428 = vmatpush1.msra.mxu0 0.0
    %2429 = vmatprep.subr.mxu0 0.0
    %2430 = vmatpush1.msra.mxu0 0.0
    %2431 = vmatprep.subr.mxu0 0.0
    %2432 = vmatpush1.msra.mxu0 0.0
    %2433 = vmatprep.subr.mxu0 0.0
    %2434 = vmatpush1.msra.mxu0 0.0
    %2435 = vmatprep.subr.mxu0 0.0
    %2436 = vmatpush1.msra.mxu0 0.0
    %2437 = vmatprep.subr.mxu0 0.0
    %2438 = vmatpush1.msra.mxu0 0.0
    %2439 = vmatprep.subr.mxu0 0.0
    %2440 = vmatpush1.msra.mxu0 0.0
    %2441 = vmatprep.subr.mxu0 0.0
    %2442 = vmatpush1.msra.mxu0 0.0
    %2443 = vmatprep.subr.mxu0 0.0
    %2444 = vmatpush1.msra.mxu0 0.0
    %2445 = vmatprep.subr.mxu0 0.0
    %2446 = vmatpush1.msra.mxu0 0.0
    %2447 = vmatprep.mubr.f32.mxu0 0.0
    %2448 = vmatmul.mubr.f32.gmra.mrb[0].mxu0 %v2141
    %v2449 = vpop.f32.mrb[0].mxu0
    %v2450 = vadd.f32 %v2375, %v2449
    %v2451 = vpop.f32.mrb[0].mxu0
    %2452 = vmatprep.mubr.f32.mxu0 0.0
    %2453 = vmatmul.mubr.f32.gmra.mrb[0].mxu0 %v2144
    %v2454 = vpop.f32.mrb[0].mxu0
    %v2455 = vadd.f32 %v2380, %v2454
    %v2456 = vpop.f32.mrb[0].mxu0
    %2457 = vdwg.mxu0
    %v2458 = vmax.f32 %v2294, %v2450
    %v2459 = vmax.f32 %v2299, %v2455
    %v2461 = vlaneseq
    %v2462 = vshrl.u32 %v2461, 7
    %v2463 = vsub.s32 0, %v2462
    %v2464 = vrot.slane %v2128, %v2463
    %v2466 = vadd.f32 %v2458, %v2464
    %v2467 = vadd.f32 %v2459, %v2464
    %v2468 = vmax.f32 %v2466, 0.0
    %v2469 = vmax.f32 %v2467, 0.0
    %vm2470 = vcmask 523264
    %2471 = vst.msk [vmem:[#allocation5] sm:$0xff] %vm2470, %v2468
    %vm2472 = vcmask 522240
    %2473 = vst.msk [vmem:[#allocation5 + $0x8] sm:$0x7f] %vm2472, %v2469
    %v2474 = vld [vmem:[%s13] sm:$0xff]
    %v2475 = vld [vmem:[%s13 + $0x8] sm:$0xff]
    %v2476 = vld [vmem:[%s13 + $0x10] sm:$0xff]
    %v2477 = vld [vmem:[%s13 + $0x18] sm:$0xff]
    %v2478 = vld [vmem:[%s13 + $0x20] sm:$0xff]
    %v2479 = vld [vmem:[%s13 + $0x28] sm:$0xff]
    %v2480 = vld [vmem:[%s13 + $0x30] sm:$0xff]
    %v2481 = vld [vmem:[%s13 + $0x38] sm:$0xff]
    %v2482 = vld [vmem:[#allocation24] sm:$0xff]
    %v2483 = vld [vmem:[#allocation24 + $0x8] sm:$0xff]
    %v2484 = vld [vmem:[#allocation24 + $0x10] sm:$0xff]
    %v2485 = vld [vmem:[#allocation24 + $0x18] sm:$0xff]
    %v2486 = vld [vmem:[#allocation24 + $0x20] sm:$0xff]
    %v2487 = vld [vmem:[#allocation24 + $0x28] sm:$0xff]
    %v2488 = vld [vmem:[#allocation24 + $0x30] sm:$0xff]
    %v2489 = vld [vmem:[#allocation24 + $0x38] sm:$0xff]
    %v2490 = vld [vmem:[%s15] sm:$0x1]
    %v2491 = vld [vmem:[#allocation5] ss:$2 sm:$0x7f]
    %s2492 = scalar_lea.vmem [#allocation5], 1
    %v2493 = vld [vmem:[%s2492] ss:$2 sm:$0x7f]
    %s2494 = scalar_lea.vmem [#allocation5], 2
    %v2495 = vld [vmem:[%s2494] ss:$2 sm:$0x7f]
    %v2497 = vsel %vm2470, %v2493, 0
    %2499 = vmatprep.subr.mxu0 0.0
    %2500 = vmatpush1.msra.mxu0 %v2482
    %2501 = vmatprep.subr.mxu0 0.0
    %2502 = vmatpush1.msra.mxu0 %v2483
    %2503 = vmatprep.subr.mxu0 0.0
    %2504 = vmatpush1.msra.mxu0 %v2484
    %2505 = vmatprep.subr.mxu0 0.0
    %2506 = vmatpush1.msra.mxu0 %v2485
    %2507 = vmatprep.subr.mxu0 0.0
    %2508 = vmatpush1.msra.mxu0 %v2486
    %2509 = vmatprep.subr.mxu0 0.0
    %2510 = vmatpush1.msra.mxu0 %v2487
    %2511 = vmatprep.subr.mxu0 0.0
    %2512 = vmatpush1.msra.mxu0 %v2488
    %2513 = vmatprep.subr.mxu0 0.0
    %2514 = vmatpush1.msra.mxu0 %v2489
    %2515 = vmatprep.subr.mxu0 0.0
    %2516 = vmatpush1.msra.mxu0 0.0
    %2517 = vmatprep.subr.mxu0 0.0
    %2518 = vmatpush1.msra.mxu0 0.0
    %2519 = vmatprep.subr.mxu0 0.0
    %2520 = vmatpush1.msra.mxu0 0.0
    %2521 = vmatprep.subr.mxu0 0.0
    %2522 = vmatpush1.msra.mxu0 0.0
    %2523 = vmatprep.subr.mxu0 0.0
    %2524 = vmatpush1.msra.mxu0 0.0
    %2525 = vmatprep.subr.mxu0 0.0
    %2526 = vmatpush1.msra.mxu0 0.0
    %2527 = vmatprep.subr.mxu0 0.0
    %2528 = vmatpush1.msra.mxu0 0.0
    %2529 = vmatprep.subr.mxu0 0.0
    %2530 = vmatpush1.msra.mxu0 0.0
    %2531 = vmatprep.subr.mxu0 0.0
    %2532 = vmatpush1.msra.mxu0 0.0
    %2533 = vmatprep.subr.mxu0 0.0
    %2534 = vmatpush1.msra.mxu0 0.0
    %2535 = vmatprep.subr.mxu0 0.0
    %2536 = vmatpush1.msra.mxu0 0.0
    %2537 = vmatprep.subr.mxu0 0.0
    %2538 = vmatpush1.msra.mxu0 0.0
    %2539 = vmatprep.subr.mxu0 0.0
    %2540 = vmatpush1.msra.mxu0 0.0
    %2541 = vmatprep.subr.mxu0 0.0
    %2542 = vmatpush1.msra.mxu0 0.0
    %2543 = vmatprep.subr.mxu0 0.0
    %2544 = vmatpush1.msra.mxu0 0.0
    %2545 = vmatprep.subr.mxu0 0.0
    %2546 = vmatpush1.msra.mxu0 0.0
    %2547 = vmatprep.subr.mxu0 0.0
    %2548 = vmatpush1.msra.mxu0 0.0
    %2549 = vmatprep.subr.mxu0 0.0
    %2550 = vmatpush1.msra.mxu0 0.0
    %2551 = vmatprep.subr.mxu0 0.0
    %2552 = vmatpush1.msra.mxu0 0.0
    %2553 = vmatprep.subr.mxu0 0.0
    %2554 = vmatpush1.msra.mxu0 0.0
    %2555 = vmatprep.subr.mxu0 0.0
    %2556 = vmatpush1.msra.mxu0 0.0
    %2557 = vmatprep.subr.mxu0 0.0
    %2558 = vmatpush1.msra.mxu0 0.0
    %2559 = vmatprep.subr.mxu0 0.0
    %2560 = vmatpush1.msra.mxu0 0.0
    %2561 = vmatprep.subr.mxu0 0.0
    %2562 = vmatpush1.msra.mxu0 0.0
    %2563 = vmatprep.mubr.f32.mxu0 0.0
    %2564 = vmatmul.mubr.f32.gmra.mrb[0].mxu0 %v2497
    %v2565 = vpop.f32.mrb[0].mxu0
    %v2566 = vadd.f32 0.0, %v2565
    %v2567 = vpop.f32.mrb[0].mxu0
    %2568 = vdwg.mxu0
    %v2570 = vsel %vm2470, %v2491, 0
    %2572 = vmatprep.subr.mxu0 0.0
    %2573 = vmatpush1.msra.mxu0 %v2474
    %2574 = vmatprep.subr.mxu0 0.0
    %2575 = vmatpush1.msra.mxu0 %v2475
    %2576 = vmatprep.subr.mxu0 0.0
    %2577 = vmatpush1.msra.mxu0 %v2476
    %2578 = vmatprep.subr.mxu0 0.0
    %2579 = vmatpush1.msra.mxu0 %v2477
    %2580 = vmatprep.subr.mxu0 0.0
    %2581 = vmatpush1.msra.mxu0 %v2478
    %2582 = vmatprep.subr.mxu0 0.0
    %2583 = vmatpush1.msra.mxu0 %v2479
    %2584 = vmatprep.subr.mxu0 0.0
    %2585 = vmatpush1.msra.mxu0 %v2480
    %2586 = vmatprep.subr.mxu0 0.0
    %2587 = vmatpush1.msra.mxu0 %v2481
    %2588 = vmatprep.subr.mxu0 0.0
    %2589 = vmatpush1.msra.mxu0 0.0
    %2590 = vmatprep.subr.mxu0 0.0
    %2591 = vmatpush1.msra.mxu0 0.0
    %2592 = vmatprep.subr.mxu0 0.0
    %2593 = vmatpush1.msra.mxu0 0.0
    %2594 = vmatprep.subr.mxu0 0.0
    %2595 = vmatpush1.msra.mxu0 0.0
    %2596 = vmatprep.subr.mxu0 0.0
    %2597 = vmatpush1.msra.mxu0 0.0
    %2598 = vmatprep.subr.mxu0 0.0
    %2599 = vmatpush1.msra.mxu0 0.0
    %2600 = vmatprep.subr.mxu0 0.0
    %2601 = vmatpush1.msra.mxu0 0.0
    %2602 = vmatprep.subr.mxu0 0.0
    %2603 = vmatpush1.msra.mxu0 0.0
    %2604 = vmatprep.subr.mxu0 0.0
    %2605 = vmatpush1.msra.mxu0 0.0
    %2606 = vmatprep.subr.mxu0 0.0
    %2607 = vmatpush1.msra.mxu0 0.0
    %2608 = vmatprep.subr.mxu0 0.0
    %2609 = vmatpush1.msra.mxu0 0.0
    %2610 = vmatprep.subr.mxu0 0.0
    %2611 = vmatpush1.msra.mxu0 0.0
    %2612 = vmatprep.subr.mxu0 0.0
    %2613 = vmatpush1.msra.mxu0 0.0
    %2614 = vmatprep.subr.mxu0 0.0
    %2615 = vmatpush1.msra.mxu0 0.0
    %2616 = vmatprep.subr.mxu0 0.0
    %2617 = vmatpush1.msra.mxu0 0.0
    %2618 = vmatprep.subr.mxu0 0.0
    %2619 = vmatpush1.msra.mxu0 0.0
    %2620 = vmatprep.subr.mxu0 0.0
    %2621 = vmatpush1.msra.mxu0 0.0
    %2622 = vmatprep.subr.mxu0 0.0
    %2623 = vmatpush1.msra.mxu0 0.0
    %2624 = vmatprep.subr.mxu0 0.0
    %2625 = vmatpush1.msra.mxu0 0.0
    %2626 = vmatprep.subr.mxu0 0.0
    %2627 = vmatpush1.msra.mxu0 0.0
    %2628 = vmatprep.subr.mxu0 0.0
    %2629 = vmatpush1.msra.mxu0 0.0
    %2630 = vmatprep.subr.mxu0 0.0
    %2631 = vmatpush1.msra.mxu0 0.0
    %2632 = vmatprep.subr.mxu0 0.0
    %2633 = vmatpush1.msra.mxu0 0.0
    %2634 = vmatprep.subr.mxu0 0.0
    %2635 = vmatpush1.msra.mxu0 0.0
    %2636 = vmatprep.mubr.f32.mxu0 0.0
    %2637 = vmatmul.mubr.f32.gmra.mrb[0].mxu0 %v2570
    %v2638 = vpop.f32.mrb[0].mxu0
    %v2639 = vadd.f32 %v2566, %v2638
    %v2640 = vpop.f32.mrb[0].mxu0
    %2641 = vdwg.mxu0
    %v2643 = vsel %vm2470, %v2495, 0
    %2645 = vmatprep.subr.mxu0 0.0
    %2646 = vmatpush1.msra.mxu0 %v2482
    %2647 = vmatprep.subr.mxu0 0.0
    %2648 = vmatpush1.msra.mxu0 %v2483
    %2649 = vmatprep.subr.mxu0 0.0
    %2650 = vmatpush1.msra.mxu0 %v2484
    %2651 = vmatprep.subr.mxu0 0.0
    %2652 = vmatpush1.msra.mxu0 %v2485
    %2653 = vmatprep.subr.mxu0 0.0
    %2654 = vmatpush1.msra.mxu0 %v2486
    %2655 = vmatprep.subr.mxu0 0.0
    %2656 = vmatpush1.msra.mxu0 %v2487
    %2657 = vmatprep.subr.mxu0 0.0
    %2658 = vmatpush1.msra.mxu0 %v2488
    %2659 = vmatprep.subr.mxu0 0.0
    %2660 = vmatpush1.msra.mxu0 %v2489
    %2661 = vmatprep.subr.mxu0 0.0
    %2662 = vmatpush1.msra.mxu0 0.0
    %2663 = vmatprep.subr.mxu0 0.0
    %2664 = vmatpush1.msra.mxu0 0.0
    %2665 = vmatprep.subr.mxu0 0.0
    %2666 = vmatpush1.msra.mxu0 0.0
    %2667 = vmatprep.subr.mxu0 0.0
    %2668 = vmatpush1.msra.mxu0 0.0
    %2669 = vmatprep.subr.mxu0 0.0
    %2670 = vmatpush1.msra.mxu0 0.0
    %2671 = vmatprep.subr.mxu0 0.0
    %2672 = vmatpush1.msra.mxu0 0.0
    %2673 = vmatprep.subr.mxu0 0.0
    %2674 = vmatpush1.msra.mxu0 0.0
    %2675 = vmatprep.subr.mxu0 0.0
    %2676 = vmatpush1.msra.mxu0 0.0
    %2677 = vmatprep.subr.mxu0 0.0
    %2678 = vmatpush1.msra.mxu0 0.0
    %2679 = vmatprep.subr.mxu0 0.0
    %2680 = vmatpush1.msra.mxu0 0.0
    %2681 = vmatprep.subr.mxu0 0.0
    %2682 = vmatpush1.msra.mxu0 0.0
    %2683 = vmatprep.subr.mxu0 0.0
    %2684 = vmatpush1.msra.mxu0 0.0
    %2685 = vmatprep.subr.mxu0 0.0
    %2686 = vmatpush1.msra.mxu0 0.0
    %2687 = vmatprep.subr.mxu0 0.0
    %2688 = vmatpush1.msra.mxu0 0.0
    %2689 = vmatprep.subr.mxu0 0.0
    %2690 = vmatpush1.msra.mxu0 0.0
    %2691 = vmatprep.subr.mxu0 0.0
    %2692 = vmatpush1.msra.mxu0 0.0
    %2693 = vmatprep.subr.mxu0 0.0
    %2694 = vmatpush1.msra.mxu0 0.0
    %2695 = vmatprep.subr.mxu0 0.0
    %2696 = vmatpush1.msra.mxu0 0.0
    %2697 = vmatprep.subr.mxu0 0.0
    %2698 = vmatpush1.msra.mxu0 0.0
    %2699 = vmatprep.subr.mxu0 0.0
    %2700 = vmatpush1.msra.mxu0 0.0
    %2701 = vmatprep.subr.mxu0 0.0
    %2702 = vmatpush1.msra.mxu0 0.0
    %2703 = vmatprep.subr.mxu0 0.0
    %2704 = vmatpush1.msra.mxu0 0.0
    %2705 = vmatprep.subr.mxu0 0.0
    %2706 = vmatpush1.msra.mxu0 0.0
    %2707 = vmatprep.subr.mxu0 0.0
    %2708 = vmatpush1.msra.mxu0 0.0
    %2709 = vmatprep.mubr.f32.mxu0 0.0
    %2710 = vmatmul.mubr.f32.gmra.mrb[0].mxu0 %v2643
    %v2711 = vpop.f32.mrb[0].mxu0
    %v2712 = vadd.f32 0.0, %v2711
    %v2713 = vpop.f32.mrb[0].mxu0
    %2714 = vdwg.mxu0
    %2715 = vmatprep.subr.mxu0 0.0
    %2716 = vmatpush1.msra.mxu0 %v2474
    %2717 = vmatprep.subr.mxu0 0.0
    %2718 = vmatpush1.msra.mxu0 %v2475
    %2719 = vmatprep.subr.mxu0 0.0
    %2720 = vmatpush1.msra.mxu0 %v2476
    %2721 = vmatprep.subr.mxu0 0.0
    %2722 = vmatpush1.msra.mxu0 %v2477
    %2723 = vmatprep.subr.mxu0 0.0
    %2724 = vmatpush1.msra.mxu0 %v2478
    %2725 = vmatprep.subr.mxu0 0.0
    %2726 = vmatpush1.msra.mxu0 %v2479
    %2727 = vmatprep.subr.mxu0 0.0
    %2728 = vmatpush1.msra.mxu0 %v2480
    %2729 = vmatprep.subr.mxu0 0.0
    %2730 = vmatpush1.msra.mxu0 %v2481
    %2731 = vmatprep.subr.mxu0 0.0
    %2732 = vmatpush1.msra.mxu0 0.0
    %2733 = vmatprep.subr.mxu0 0.0
    %2734 = vmatpush1.msra.mxu0 0.0
    %2735 = vmatprep.subr.mxu0 0.0
    %2736 = vmatpush1.msra.mxu0 0.0
    %2737 = vmatprep.subr.mxu0 0.0
    %2738 = vmatpush1.msra.mxu0 0.0
    %2739 = vmatprep.subr.mxu0 0.0
    %2740 = vmatpush1.msra.mxu0 0.0
    %2741 = vmatprep.subr.mxu0 0.0
    %2742 = vmatpush1.msra.mxu0 0.0
    %2743 = vmatprep.subr.mxu0 0.0
    %2744 = vmatpush1.msra.mxu0 0.0
    %2745 = vmatprep.subr.mxu0 0.0
    %2746 = vmatpush1.msra.mxu0 0.0
    %2747 = vmatprep.subr.mxu0 0.0
    %2748 = vmatpush1.msra.mxu0 0.0
    %2749 = vmatprep.subr.mxu0 0.0
    %2750 = vmatpush1.msra.mxu0 0.0
    %2751 = vmatprep.subr.mxu0 0.0
    %2752 = vmatpush1.msra.mxu0 0.0
    %2753 = vmatprep.subr.mxu0 0.0
    %2754 = vmatpush1.msra.mxu0 0.0
    %2755 = vmatprep.subr.mxu0 0.0
    %2756 = vmatpush1.msra.mxu0 0.0
    %2757 = vmatprep.subr.mxu0 0.0
    %2758 = vmatpush1.msra.mxu0 0.0
    %2759 = vmatprep.subr.mxu0 0.0
    %2760 = vmatpush1.msra.mxu0 0.0
    %2761 = vmatprep.subr.mxu0 0.0
    %2762 = vmatpush1.msra.mxu0 0.0
    %2763 = vmatprep.subr.mxu0 0.0
    %2764 = vmatpush1.msra.mxu0 0.0
    %2765 = vmatprep.subr.mxu0 0.0
    %2766 = vmatpush1.msra.mxu0 0.0
    %2767 = vmatprep.subr.mxu0 0.0
    %2768 = vmatpush1.msra.mxu0 0.0
    %2769 = vmatprep.subr.mxu0 0.0
    %2770 = vmatpush1.msra.mxu0 0.0
    %2771 = vmatprep.subr.mxu0 0.0
    %2772 = vmatpush1.msra.mxu0 0.0
    %2773 = vmatprep.subr.mxu0 0.0
    %2774 = vmatpush1.msra.mxu0 0.0
    %2775 = vmatprep.subr.mxu0 0.0
    %2776 = vmatpush1.msra.mxu0 0.0
    %2777 = vmatprep.subr.mxu0 0.0
    %2778 = vmatpush1.msra.mxu0 0.0
    %2779 = vmatprep.mubr.f32.mxu0 0.0
    %2780 = vmatmul.mubr.f32.gmra.mrb[0].mxu0 %v2497
    %v2781 = vpop.f32.mrb[0].mxu0
    %v2782 = vadd.f32 %v2712, %v2781
    %v2783 = vpop.f32.mrb[0].mxu0
    %2784 = vdwg.mxu0
    %v2785 = vmax.f32 %v2639, %v2782
    %v2787 = vlaneseq
    %v2788 = vshrl.u32 %v2787, 7
    %v2789 = vsub.s32 0, %v2788
    %v2790 = vrot.slane %v2490, %v2789
    %v2792 = vadd.f32 %v2785, %v2790
    %v2793 = vmax.f32 %v2792, 0.0
    %2794 = vst [vmem:[#allocation6] sm:$0x7f] %v2793
    %v2795 = vld [vmem:[%s16] sm:$0xff]
    %v2796 = vld [vmem:[%s16 + $0x8] sm:$0xff]
    %v2797 = vld [vmem:[%s16 + $0x10] sm:$0xff]
    %v2798 = vld [vmem:[%s16 + $0x18] sm:$0xff]
    %v2799 = vld [vmem:[%s16 + $0x20] sm:$0xff]
    %v2800 = vld [vmem:[%s16 + $0x28] sm:$0xff]
    %v2801 = vld [vmem:[%s16 + $0x30] sm:$0xff]
    %v2802 = vld [vmem:[%s16 + $0x38] sm:$0xff]
    %v2803 = vld [vmem:[%s16 + $0x40] sm:$0xff]
    %v2804 = vld [vmem:[%s16 + $0x48] sm:$0xff]
    %v2805 = vld [vmem:[%s16 + $0x50] sm:$0xff]
    %v2806 = vld [vmem:[%s16 + $0x58] sm:$0xff]
    %v2807 = vld [vmem:[%s16 + $0x60] sm:$0xff]
    %v2808 = vld [vmem:[%s16 + $0x68] sm:$0xff]
    %v2809 = vld [vmem:[%s16 + $0x70] sm:$0xff]
    %v2810 = vld [vmem:[%s16 + $0x78] sm:$0xff]
    %v2811 = vld [vmem:[%s16 + $0x80] sm:$0xff]
    %v2812 = vld [vmem:[%s16 + $0x88] sm:$0xff]
    %v2813 = vld [vmem:[%s16 + $0x90] sm:$0xff]
    %v2814 = vld [vmem:[%s16 + $0x98] sm:$0xff]
    %v2815 = vld [vmem:[%s16 + $0xa0] sm:$0xff]
    %v2816 = vld [vmem:[%s16 + $0xa8] sm:$0xff]
    %v2817 = vld [vmem:[%s16 + $0xb0] sm:$0xff]
    %v2818 = vld [vmem:[%s16 + $0xb8] sm:$0xff]
    %v2819 = vld [vmem:[%s16 + $0xc0] sm:$0xff]
    %v2820 = vld [vmem:[%s16 + $0xc8] sm:$0xff]
    %v2821 = vld [vmem:[%s16 + $0xd0] sm:$0xff]
    %v2822 = vld [vmem:[%s16 + $0xd8] sm:$0xff]
    %v2823 = vld [vmem:[%s16 + $0xe0] sm:$0xff]
    %v2824 = vld [vmem:[%s16 + $0xe8] sm:$0xff]
    %v2825 = vld [vmem:[%s16 + $0xf0] sm:$0xff]
    %v2826 = vld [vmem:[%s16 + $0xf8] sm:$0xff]
    %v2827 = vld [vmem:[%s17] sm:$0xff]
    %v2828 = vld [vmem:[%s17 + $0x8] sm:$0xff]
    %v2829 = vld [vmem:[%s17 + $0x10] sm:$0xff]
    %v2830 = vld [vmem:[%s17 + $0x18] sm:$0xff]
    %v2831 = vld [vmem:[%s17 + $0x20] sm:$0xff]
    %v2832 = vld [vmem:[%s17 + $0x28] sm:$0xff]
    %v2833 = vld [vmem:[%s17 + $0x30] sm:$0xff]
    %v2834 = vld [vmem:[%s17 + $0x38] sm:$0xff]
    %v2835 = vld [vmem:[%s17 + $0x40] sm:$0xff]
    %v2836 = vld [vmem:[%s17 + $0x48] sm:$0xff]
    %v2837 = vld [vmem:[%s17 + $0x50] sm:$0xff]
    %v2838 = vld [vmem:[%s17 + $0x58] sm:$0xff]
    %v2839 = vld [vmem:[%s17 + $0x60] sm:$0xff]
    %v2840 = vld [vmem:[%s17 + $0x68] sm:$0xff]
    %v2841 = vld [vmem:[%s17 + $0x70] sm:$0xff]
    %v2842 = vld [vmem:[%s17 + $0x78] sm:$0xff]
    %v2843 = vld [vmem:[%s17 + $0x80] sm:$0xff]
    %v2844 = vld [vmem:[%s17 + $0x88] sm:$0xff]
    %v2845 = vld [vmem:[%s17 + $0x90] sm:$0xff]
    %v2846 = vld [vmem:[%s17 + $0x98] sm:$0xff]
    %v2847 = vld [vmem:[%s17 + $0xa0] sm:$0xff]
    %v2848 = vld [vmem:[%s17 + $0xa8] sm:$0xff]
    %v2849 = vld [vmem:[%s17 + $0xb0] sm:$0xff]
    %v2850 = vld [vmem:[%s17 + $0xb8] sm:$0xff]
    %v2851 = vld [vmem:[%s17 + $0xc0] sm:$0xff]
    %v2852 = vld [vmem:[%s17 + $0xc8] sm:$0xff]
    %v2853 = vld [vmem:[%s17 + $0xd0] sm:$0xff]
    %v2854 = vld [vmem:[%s17 + $0xd8] sm:$0xff]
    %v2855 = vld [vmem:[%s17 + $0xe0] sm:$0xff]
    %v2856 = vld [vmem:[%s17 + $0xe8] sm:$0xff]
    %v2857 = vld [vmem:[%s17 + $0xf0] sm:$0xff]
    %v2858 = vld [vmem:[%s17 + $0xf8] sm:$0xff]
    %v2859 = vld [vmem:[%s18] sm:$0x3]
    %v2860 = vld [vmem:[#allocation6] ss:$2 sm:$0x7]
    %s2861 = scalar_lea.vmem [#allocation6], 1
    %v2862 = vld [vmem:[%s2861] ss:$2 sm:$0x7]
    %s2863 = scalar_lea.vmem [#allocation6], 2
    %v2864 = vld [vmem:[%s2863] ss:$2 sm:$0x7]
    %2865 = vmatprep.subr.mxu0 %v2796
    %2866 = vmatpush1.msra.mxu0 %v2795
    %2867 = vmatprep.subr.mxu0 %v2798
    %2868 = vmatpush1.msra.mxu0 %v2797
    %2869 = vmatprep.subr.mxu0 %v2800
    %2870 = vmatpush1.msra.mxu0 %v2799
    %2871 = vmatprep.subr.mxu0 %v2802
    %2872 = vmatpush1.msra.mxu0 %v2801
    %2873 = vmatprep.subr.mxu0 %v2804
    %2874 = vmatpush1.msra.mxu0 %v2803
    %2875 = vmatprep.subr.mxu0 %v2806
    %2876 = vmatpush1.msra.mxu0 %v2805
    %2877 = vmatprep.subr.mxu0 %v2808
    %2878 = vmatpush1.msra.mxu0 %v2807
    %2879 = vmatprep.subr.mxu0 %v2810
    %2880 = vmatpush1.msra.mxu0 %v2809
    %2881 = vmatprep.subr.mxu0 %v2812
    %2882 = vmatpush1.msra.mxu0 %v2811
    %2883 = vmatprep.subr.mxu0 %v2814
    %2884 = vmatpush1.msra.mxu0 %v2813
    %2885 = vmatprep.subr.mxu0 %v2816
    %2886 = vmatpush1.msra.mxu0 %v2815
    %2887 = vmatprep.subr.mxu0 %v2818
    %2888 = vmatpush1.msra.mxu0 %v2817
    %2889 = vmatprep.subr.mxu0 %v2820
    %2890 = vmatpush1.msra.mxu0 %v2819
    %2891 = vmatprep.subr.mxu0 %v2822
    %2892 = vmatpush1.msra.mxu0 %v2821
    %2893 = vmatprep.subr.mxu0 %v2824
    %2894 = vmatpush1.msra.mxu0 %v2823
    %2895 = vmatprep.subr.mxu0 %v2826
    %2896 = vmatpush1.msra.mxu0 %v2825
    %2897 = vmatprep.subr.mxu0 %v2828
    %2898 = vmatpush1.msra.mxu0 %v2827
    %2899 = vmatprep.subr.mxu0 %v2830
    %2900 = vmatpush1.msra.mxu0 %v2829
    %2901 = vmatprep.subr.mxu0 %v2832
    %2902 = vmatpush1.msra.mxu0 %v2831
    %2903 = vmatprep.subr.mxu0 %v2834
    %2904 = vmatpush1.msra.mxu0 %v2833
    %2905 = vmatprep.subr.mxu0 %v2836
    %2906 = vmatpush1.msra.mxu0 %v2835
    %2907 = vmatprep.subr.mxu0 %v2838
    %2908 = vmatpush1.msra.mxu0 %v2837
    %2909 = vmatprep.subr.mxu0 %v2840
    %2910 = vmatpush1.msra.mxu0 %v2839
    %2911 = vmatprep.subr.mxu0 %v2842
    %2912 = vmatpush1.msra.mxu0 %v2841
    %2913 = vmatprep.subr.mxu0 %v2844
    %2914 = vmatpush1.msra.mxu0 %v2843
    %2915 = vmatprep.subr.mxu0 %v2846
    %2916 = vmatpush1.msra.mxu0 %v2845
    %2917 = vmatprep.subr.mxu0 %v2848
    %2918 = vmatpush1.msra.mxu0 %v2847
    %2919 = vmatprep.subr.mxu0 %v2850
    %2920 = vmatpush1.msra.mxu0 %v2849
    %2921 = vmatprep.subr.mxu0 %v2852
    %2922 = vmatpush1.msra.mxu0 %v2851
    %2923 = vmatprep.subr.mxu0 %v2854
    %2924 = vmatpush1.msra.mxu0 %v2853
    %2925 = vmatprep.subr.mxu0 %v2856
    %2926 = vmatpush1.msra.mxu0 %v2855
    %2927 = vmatprep.subr.mxu0 %v2858
    %2928 = vmatpush1.msra.mxu0 %v2857
    %2929 = vmatprep.mubr.f32.mxu0 %v2862
    %2930 = vmatmul.mubr.f32.gmra.mrb[0].mxu0 %v2860
    %v2931 = vpop.f32.mrb[0].mxu0
    %v2932 = vadd.f32 0.0, %v2931
    %v2933 = vpop.f32.mrb[0].mxu0
    %v2934 = vadd.f32 0.0, %v2933
    %2935 = vdwg.mxu0
    %2936 = vmatprep.subr.mxu0 %v2796
    %2937 = vmatpush1.msra.mxu0 %v2795
    %2938 = vmatprep.subr.mxu0 %v2798
    %2939 = vmatpush1.msra.mxu0 %v2797
    %2940 = vmatprep.subr.mxu0 %v2800
    %2941 = vmatpush1.msra.mxu0 %v2799
    %2942 = vmatprep.subr.mxu0 %v2802
    %2943 = vmatpush1.msra.mxu0 %v2801
    %2944 = vmatprep.subr.mxu0 %v2804
    %2945 = vmatpush1.msra.mxu0 %v2803
    %2946 = vmatprep.subr.mxu0 %v2806
    %2947 = vmatpush1.msra.mxu0 %v2805
    %2948 = vmatprep.subr.mxu0 %v2808
    %2949 = vmatpush1.msra.mxu0 %v2807
    %2950 = vmatprep.subr.mxu0 %v2810
    %2951 = vmatpush1.msra.mxu0 %v2809
    %2952 = vmatprep.subr.mxu0 %v2812
    %2953 = vmatpush1.msra.mxu0 %v2811
    %2954 = vmatprep.subr.mxu0 %v2814
    %2955 = vmatpush1.msra.mxu0 %v2813
    %2956 = vmatprep.subr.mxu0 %v2816
    %2957 = vmatpush1.msra.mxu0 %v2815
    %2958 = vmatprep.subr.mxu0 %v2818
    %2959 = vmatpush1.msra.mxu0 %v2817
    %2960 = vmatprep.subr.mxu0 %v2820
    %2961 = vmatpush1.msra.mxu0 %v2819
    %2962 = vmatprep.subr.mxu0 %v2822
    %2963 = vmatpush1.msra.mxu0 %v2821
    %2964 = vmatprep.subr.mxu0 %v2824
    %2965 = vmatpush1.msra.mxu0 %v2823
    %2966 = vmatprep.subr.mxu0 %v2826
    %2967 = vmatpush1.msra.mxu0 %v2825
    %2968 = vmatprep.subr.mxu0 %v2828
    %2969 = vmatpush1.msra.mxu0 %v2827
    %2970 = vmatprep.subr.mxu0 %v2830
    %2971 = vmatpush1.msra.mxu0 %v2829
    %2972 = vmatprep.subr.mxu0 %v2832
    %2973 = vmatpush1.msra.mxu0 %v2831
    %2974 = vmatprep.subr.mxu0 %v2834
    %2975 = vmatpush1.msra.mxu0 %v2833
    %2976 = vmatprep.subr.mxu0 %v2836
    %2977 = vmatpush1.msra.mxu0 %v2835
    %2978 = vmatprep.subr.mxu0 %v2838
    %2979 = vmatpush1.msra.mxu0 %v2837
    %2980 = vmatprep.subr.mxu0 %v2840
    %2981 = vmatpush1.msra.mxu0 %v2839
    %2982 = vmatprep.subr.mxu0 %v2842
    %2983 = vmatpush1.msra.mxu0 %v2841
    %2984 = vmatprep.subr.mxu0 %v2844
    %2985 = vmatpush1.msra.mxu0 %v2843
    %2986 = vmatprep.subr.mxu0 %v2846
    %2987 = vmatpush1.msra.mxu0 %v2845
    %2988 = vmatprep.subr.mxu0 %v2848
    %2989 = vmatpush1.msra.mxu0 %v2847
    %2990 = vmatprep.subr.mxu0 %v2850
    %2991 = vmatpush1.msra.mxu0 %v2849
    %2992 = vmatprep.subr.mxu0 %v2852
    %2993 = vmatpush1.msra.mxu0 %v2851
    %2994 = vmatprep.subr.mxu0 %v2854
    %2995 = vmatpush1.msra.mxu0 %v2853
    %2996 = vmatprep.subr.mxu0 %v2856
    %2997 = vmatpush1.msra.mxu0 %v2855
    %2998 = vmatprep.subr.mxu0 %v2858
    %2999 = vmatpush1.msra.mxu0 %v2857
    %3000 = vmatprep.mubr.f32.mxu0 %v2864
    %3001 = vmatmul.mubr.f32.gmra.mrb[0].mxu0 %v2862
    %v3002 = vpop.f32.mrb[0].mxu0
    %v3003 = vadd.f32 0.0, %v3002
    %v3004 = vpop.f32.mrb[0].mxu0
    %v3005 = vadd.f32 0.0, %v3004
    %3006 = vdwg.mxu0
    %v3007 = vmax.f32 %v2932, %v3003
    %v3008 = vmax.f32 %v2934, %v3005
    %v3010 = vlaneseq
    %v3011 = vshrl.u32 %v3010, 7
    %v3012 = vsub.s32 0, %v3011
    %v3013 = vrot.slane %v2859, %v3012
    %v3014 = vlaneseq
    %v3015 = vshrl.u32 %v3014, 7
    %v3016 = vsub.s32 1, %v3015
    %v3017 = vrot.slane %v2859, %v3016
    %v3020 = vadd.f32 %v3007, %v3013
    %v3021 = vadd.f32 %v3008, %v3017
    %v3022 = vmax.f32 %v3020, 0.0
    %v3023 = vmax.f32 %v3021, 0.0
    %v3024 = vld [vmem:[%s20] sm:$0x1]
    %v3025 = vld [vmem:[%s19] sm:$0x77]
    %v3027 = vcombine.high %v3025, %v3025
    %v3029 = vmul.f32 %v3022, %v3025
    %v3030 = vmul.f32 %v3023, %v3027
    %v3031 = vsel %vm355, %v3029, 0.0
    %v3032 = vsel %vm355, %v3030, 0.0
    %v3033 = vadd.f32 %v3031, %v3032
    %3034 = vadd.xlane.f32.xlu0 %v3033
    %v3035 = vpop.xlane.xlu0 %3034
    %v3036 = vsel %vm355, %v3035, 0.0
    %v3037 = vrot.slane %v3036, 4
    %v3038 = vadd.f32 %v3036, %v3037
    %v3039 = vrot.slane %v3038, 2
    %v3040 = vadd.f32 %v3038, %v3039
    %v3041 = vrot.slane %v3040, 1
    %v3042 = vadd.f32 %v3040, %v3041
    %vm3043 = vcmp.eq.s32.totalorder %v207, 0
    %v3044 = vsel %vm3043, %v3042, 0.0
    %v3045 = vadd.f32 %v3024, %v3044
    %s3046 = scalar_lea.vmem %s19, 8
    %v3047 = vld [vmem:[%s3046] sm:$0x77]
    %v3049 = vcombine.high %v3047, %v3047
    %v3051 = vmul.f32 %v3022, %v3047
    %v3052 = vmul.f32 %v3023, %v3049
    %v3053 = vsel %vm355, %v3051, 0.0
    %v3054 = vsel %vm355, %v3052, 0.0
    %v3055 = vadd.f32 %v3053, %v3054
    %3056 = vadd.xlane.f32.xlu0 %v3055
    %v3057 = vpop.xlane.xlu0 %3056
    %v3058 = vsel %vm355, %v3057, 0.0
    %v3059 = vrot.slane %v3058, 4
    %v3060 = vadd.f32 %v3058, %v3059
    %v3061 = vrot.slane %v3060, 2
    %v3062 = vadd.f32 %v3060, %v3061
    %v3063 = vrot.slane %v3062, 1
    %v3064 = vadd.f32 %v3062, %v3063
    %vm3065 = vcmp.eq.s32.totalorder %v207, 1
    %v3066 = vsel %vm3065, %v3064, 0.0
    %v3067 = vadd.f32 %v3045, %v3066
    %vm3068 = vcmask 8192
    %3069 = vst.msk [vmem:[#allocation25] sm:$0x1] %vm3068, %v3067
    %v3070 = vld [vmem:[#allocation7] sm:$0x7]
    %v3071 = vld [vmem:[#allocation10] sm:$0x7]
    %v3072 = vld [vmem:[%s3] sm:$0x1]
    %s3073 = scalar_lea.vmem %s0, 256
    %v3074 = vld [vmem:[%s3073] ss:$2 sm:$0xff]
    %s3075 = scalar_lea.vmem %s0, 272
    %v3076 = vld [vmem:[%s3075] ss:$2 sm:$0xff]
    %s3077 = scalar_lea.vmem %s0, 288
    %v3078 = vld [vmem:[%s3077] ss:$2 sm:$0xff]
    %s3079 = scalar_lea.vmem %s0, 304
    %v3080 = vld [vmem:[%s3079] ss:$2 sm:$0xff]
    %s3081 = scalar_lea.vmem %s0, 320
    %v3082 = vld [vmem:[%s3081] ss:$2 sm:$0xff]
    %s3083 = scalar_lea.vmem %s0, 336
    %v3084 = vld [vmem:[%s3083] ss:$2 sm:$0xff]
    %s3085 = scalar_lea.vmem %s0, 352
    %v3086 = vld [vmem:[%s3085] ss:$2 sm:$0xff]
    %s3087 = scalar_lea.vmem %s0, 368
    %v3088 = vld [vmem:[%s3087] ss:$2 sm:$0xff]
    %s3089 = scalar_lea.vmem %s0, 384
    %v3090 = vld [vmem:[%s3089] ss:$2 sm:$0xff]
    %s3091 = scalar_lea.vmem %s0, 400
    %v3092 = vld [vmem:[%s3091] ss:$2 sm:$0xff]
    %s3093 = scalar_lea.vmem %s0, 416
    %v3094 = vld [vmem:[%s3093] ss:$2 sm:$0xff]
    %s3095 = scalar_lea.vmem %s0, 432
    %v3096 = vld [vmem:[%s3095] ss:$2 sm:$0xff]
    %s3097 = scalar_lea.vmem %s0, 448
    %v3098 = vld [vmem:[%s3097] ss:$2 sm:$0xff]
    %s3099 = scalar_lea.vmem %s0, 464
    %v3100 = vld [vmem:[%s3099] ss:$2 sm:$0xff]
    %s3101 = scalar_lea.vmem %s0, 480
    %v3102 = vld [vmem:[%s3101] ss:$2 sm:$0xff]
    %s3103 = scalar_lea.vmem %s0, 496
    %v3104 = vld [vmem:[%s3103] ss:$2 sm:$0x7f]
    %s3105 = scalar_lea.vmem %s0, 257
    %v3106 = vld [vmem:[%s3105] ss:$2 sm:$0xff]
    %s3107 = scalar_lea.vmem %s0, 273
    %v3108 = vld [vmem:[%s3107] ss:$2 sm:$0xff]
    %s3109 = scalar_lea.vmem %s0, 289
    %v3110 = vld [vmem:[%s3109] ss:$2 sm:$0xff]
    %s3111 = scalar_lea.vmem %s0, 305
    %v3112 = vld [vmem:[%s3111] ss:$2 sm:$0xff]
    %s3113 = scalar_lea.vmem %s0, 321
    %v3114 = vld [vmem:[%s3113] ss:$2 sm:$0xff]
    %s3115 = scalar_lea.vmem %s0, 337
    %v3116 = vld [vmem:[%s3115] ss:$2 sm:$0xff]
    %s3117 = scalar_lea.vmem %s0, 353
    %v3118 = vld [vmem:[%s3117] ss:$2 sm:$0xff]
    %s3119 = scalar_lea.vmem %s0, 369
    %v3120 = vld [vmem:[%s3119] ss:$2 sm:$0xff]
    %s3121 = scalar_lea.vmem %s0, 385
    %v3122 = vld [vmem:[%s3121] ss:$2 sm:$0xff]
    %s3123 = scalar_lea.vmem %s0, 401
    %v3124 = vld [vmem:[%s3123] ss:$2 sm:$0xff]
    %s3125 = scalar_lea.vmem %s0, 417
    %v3126 = vld [vmem:[%s3125] ss:$2 sm:$0xff]
    %s3127 = scalar_lea.vmem %s0, 433
    %v3128 = vld [vmem:[%s3127] ss:$2 sm:$0xff]
    %s3129 = scalar_lea.vmem %s0, 449
    %v3130 = vld [vmem:[%s3129] ss:$2 sm:$0xff]
    %s3131 = scalar_lea.vmem %s0, 465
    %v3132 = vld [vmem:[%s3131] ss:$2 sm:$0xff]
    %s3133 = scalar_lea.vmem %s0, 481
    %v3134 = vld [vmem:[%s3133] ss:$2 sm:$0xff]
    %s3135 = scalar_lea.vmem %s0, 497
    %v3136 = vld [vmem:[%s3135] ss:$2 sm:$0x7f]
    %s3137 = scalar_lea.vmem %s0, 258
    %v3138 = vld [vmem:[%s3137] ss:$2 sm:$0xff]
    %s3139 = scalar_lea.vmem %s0, 274
    %v3140 = vld [vmem:[%s3139] ss:$2 sm:$0xff]
    %s3141 = scalar_lea.vmem %s0, 290
    %v3142 = vld [vmem:[%s3141] ss:$2 sm:$0xff]
    %s3143 = scalar_lea.vmem %s0, 306
    %v3144 = vld [vmem:[%s3143] ss:$2 sm:$0xff]
    %s3145 = scalar_lea.vmem %s0, 322
    %v3146 = vld [vmem:[%s3145] ss:$2 sm:$0xff]
    %s3147 = scalar_lea.vmem %s0, 338
    %v3148 = vld [vmem:[%s3147] ss:$2 sm:$0xff]
    %s3149 = scalar_lea.vmem %s0, 354
    %v3150 = vld [vmem:[%s3149] ss:$2 sm:$0xff]
    %s3151 = scalar_lea.vmem %s0, 370
    %v3152 = vld [vmem:[%s3151] ss:$2 sm:$0xff]
    %s3153 = scalar_lea.vmem %s0, 386
    %v3154 = vld [vmem:[%s3153] ss:$2 sm:$0xff]
    %s3155 = scalar_lea.vmem %s0, 402
    %v3156 = vld [vmem:[%s3155] ss:$2 sm:$0xff]
    %s3157 = scalar_lea.vmem %s0, 418
    %v3158 = vld [vmem:[%s3157] ss:$2 sm:$0xff]
    %s3159 = scalar_lea.vmem %s0, 434
    %v3160 = vld [vmem:[%s3159] ss:$2 sm:$0xff]
    %s3161 = scalar_lea.vmem %s0, 450
    %v3162 = vld [vmem:[%s3161] ss:$2 sm:$0xff]
    %s3163 = scalar_lea.vmem %s0, 466
    %v3164 = vld [vmem:[%s3163] ss:$2 sm:$0xff]
    %s3165 = scalar_lea.vmem %s0, 482
    %v3166 = vld [vmem:[%s3165] ss:$2 sm:$0xff]
    %s3167 = scalar_lea.vmem %s0, 498
    %v3168 = vld [vmem:[%s3167] ss:$2 sm:$0x7f]
    %v3170 = vsel %vm306, %v3106, 0
    %v3173 = vsel %vm306, %v3108, 0
    %v3176 = vsel %vm306, %v3110, 0
    %v3179 = vsel %vm306, %v3112, 0
    %v3182 = vsel %vm306, %v3114, 0
    %v3185 = vsel %vm306, %v3116, 0
    %v3188 = vsel %vm306, %v3118, 0
    %v3191 = vsel %vm306, %v3120, 0
    %v3194 = vsel %vm306, %v3122, 0
    %v3197 = vsel %vm306, %v3124, 0
    %v3200 = vsel %vm306, %v3126, 0
    %v3203 = vsel %vm306, %v3128, 0
    %v3206 = vsel %vm306, %v3130, 0
    %v3209 = vsel %vm306, %v3132, 0
    %v3212 = vsel %vm306, %v3134, 0
    %v3215 = vsel %vm306, %v3136, 0
    %v3218 = vsel %vm355, %v3071, 0
    %3220 = vmatprep.subr.mxu0 0.0
    %3221 = vmatpush1.msra.mxu0 %v3218
    %3222 = vmatprep.subr.mxu0 0.0
    %3223 = vmatpush1.msra.mxu0 0.0
    %3224 = vmatprep.subr.mxu0 0.0
    %3225 = vmatpush1.msra.mxu0 0.0
    %3226 = vmatprep.subr.mxu0 0.0
    %3227 = vmatpush1.msra.mxu0 0.0
    %3228 = vmatprep.subr.mxu0 0.0
    %3229 = vmatpush1.msra.mxu0 0.0
    %3230 = vmatprep.subr.mxu0 0.0
    %3231 = vmatpush1.msra.mxu0 0.0
    %3232 = vmatprep.subr.mxu0 0.0
    %3233 = vmatpush1.msra.mxu0 0.0
    %3234 = vmatprep.subr.mxu0 0.0
    %3235 = vmatpush1.msra.mxu0 0.0
    %3236 = vmatprep.subr.mxu0 0.0
    %3237 = vmatpush1.msra.mxu0 0.0
    %3238 = vmatprep.subr.mxu0 0.0
    %3239 = vmatpush1.msra.mxu0 0.0
    %3240 = vmatprep.subr.mxu0 0.0
    %3241 = vmatpush1.msra.mxu0 0.0
    %3242 = vmatprep.subr.mxu0 0.0
    %3243 = vmatpush1.msra.mxu0 0.0
    %3244 = vmatprep.subr.mxu0 0.0
    %3245 = vmatpush1.msra.mxu0 0.0
    %3246 = vmatprep.subr.mxu0 0.0
    %3247 = vmatpush1.msra.mxu0 0.0
    %3248 = vmatprep.subr.mxu0 0.0
    %3249 = vmatpush1.msra.mxu0 0.0
    %3250 = vmatprep.subr.mxu0 0.0
    %3251 = vmatpush1.msra.mxu0 0.0
    %3252 = vmatprep.subr.mxu0 0.0
    %3253 = vmatpush1.msra.mxu0 0.0
    %3254 = vmatprep.subr.mxu0 0.0
    %3255 = vmatpush1.msra.mxu0 0.0
    %3256 = vmatprep.subr.mxu0 0.0
    %3257 = vmatpush1.msra.mxu0 0.0
    %3258 = vmatprep.subr.mxu0 0.0
    %3259 = vmatpush1.msra.mxu0 0.0
    %3260 = vmatprep.subr.mxu0 0.0
    %3261 = vmatpush1.msra.mxu0 0.0
    %3262 = vmatprep.subr.mxu0 0.0
    %3263 = vmatpush1.msra.mxu0 0.0
    %3264 = vmatprep.subr.mxu0 0.0
    %3265 = vmatpush1.msra.mxu0 0.0
    %3266 = vmatprep.subr.mxu0 0.0
    %3267 = vmatpush1.msra.mxu0 0.0
    %3268 = vmatprep.subr.mxu0 0.0
    %3269 = vmatpush1.msra.mxu0 0.0
    %3270 = vmatprep.subr.mxu0 0.0
    %3271 = vmatpush1.msra.mxu0 0.0
    %3272 = vmatprep.subr.mxu0 0.0
    %3273 = vmatpush1.msra.mxu0 0.0
    %3274 = vmatprep.subr.mxu0 0.0
    %3275 = vmatpush1.msra.mxu0 0.0
    %3276 = vmatprep.subr.mxu0 0.0
    %3277 = vmatpush1.msra.mxu0 0.0
    %3278 = vmatprep.subr.mxu0 0.0
    %3279 = vmatpush1.msra.mxu0 0.0
    %3280 = vmatprep.subr.mxu0 0.0
    %3281 = vmatpush1.msra.mxu0 0.0
    %3282 = vmatprep.subr.mxu0 0.0
    %3283 = vmatpush1.msra.mxu0 0.0
    %3284 = vmatprep.mubr.f32.mxu0 0.0
    %3285 = vmatmul.mubr.f32.gmra.mrb[0].mxu0 %v3170
    %v3286 = vpop.f32.mrb[0].mxu0
    %v3287 = vadd.f32 0.0, %v3286
    %v3288 = vpop.f32.mrb[0].mxu0
    %3289 = vmatprep.mubr.f32.mxu0 0.0
    %3290 = vmatmul.mubr.f32.gmra.mrb[0].mxu0 %v3173
    %v3291 = vpop.f32.mrb[0].mxu0
    %v3292 = vadd.f32 0.0, %v3291
    %v3293 = vpop.f32.mrb[0].mxu0
    %3294 = vmatprep.mubr.f32.mxu0 0.0
    %3295 = vmatmul.mubr.f32.gmra.mrb[0].mxu0 %v3176
    %v3296 = vpop.f32.mrb[0].mxu0
    %v3297 = vadd.f32 0.0, %v3296
    %v3298 = vpop.f32.mrb[0].mxu0
    %3299 = vmatprep.mubr.f32.mxu0 0.0
    %3300 = vmatmul.mubr.f32.gmra.mrb[0].mxu0 %v3179
    %v3301 = vpop.f32.mrb[0].mxu0
    %v3302 = vadd.f32 0.0, %v3301
    %v3303 = vpop.f32.mrb[0].mxu0
    %3304 = vmatprep.mubr.f32.mxu0 0.0
    %3305 = vmatmul.mubr.f32.gmra.mrb[0].mxu0 %v3182
    %v3306 = vpop.f32.mrb[0].mxu0
    %v3307 = vadd.f32 0.0, %v3306
    %v3308 = vpop.f32.mrb[0].mxu0
    %3309 = vmatprep.mubr.f32.mxu0 0.0
    %3310 = vmatmul.mubr.f32.gmra.mrb[0].mxu0 %v3185
    %v3311 = vpop.f32.mrb[0].mxu0
    %v3312 = vadd.f32 0.0, %v3311
    %v3313 = vpop.f32.mrb[0].mxu0
    %3314 = vmatprep.mubr.f32.mxu0 0.0
    %3315 = vmatmul.mubr.f32.gmra.mrb[0].mxu0 %v3188
    %v3316 = vpop.f32.mrb[0].mxu0
    %v3317 = vadd.f32 0.0, %v3316
    %v3318 = vpop.f32.mrb[0].mxu0
    %3319 = vmatprep.mubr.f32.mxu0 0.0
    %3320 = vmatmul.mubr.f32.gmra.mrb[0].mxu0 %v3191
    %v3321 = vpop.f32.mrb[0].mxu0
    %v3322 = vadd.f32 0.0, %v3321
    %v3323 = vpop.f32.mrb[0].mxu0
    %3324 = vmatprep.mubr.f32.mxu0 0.0
    %3325 = vmatmul.mubr.f32.gmra.mrb[0].mxu0 %v3194
    %v3326 = vpop.f32.mrb[0].mxu0
    %v3327 = vadd.f32 0.0, %v3326
    %v3328 = vpop.f32.mrb[0].mxu0
    %3329 = vmatprep.mubr.f32.mxu0 0.0
    %3330 = vmatmul.mubr.f32.gmra.mrb[0].mxu0 %v3197
    %v3331 = vpop.f32.mrb[0].mxu0
    %v3332 = vadd.f32 0.0, %v3331
    %v3333 = vpop.f32.mrb[0].mxu0
    %3334 = vmatprep.mubr.f32.mxu0 0.0
    %3335 = vmatmul.mubr.f32.gmra.mrb[0].mxu0 %v3200
    %v3336 = vpop.f32.mrb[0].mxu0
    %v3337 = vadd.f32 0.0, %v3336
    %v3338 = vpop.f32.mrb[0].mxu0
    %3339 = vmatprep.mubr.f32.mxu0 0.0
    %3340 = vmatmul.mubr.f32.gmra.mrb[0].mxu0 %v3203
    %v3341 = vpop.f32.mrb[0].mxu0
    %v3342 = vadd.f32 0.0, %v3341
    %v3343 = vpop.f32.mrb[0].mxu0
    %3344 = vmatprep.mubr.f32.mxu0 0.0
    %3345 = vmatmul.mubr.f32.gmra.mrb[0].mxu0 %v3206
    %v3346 = vpop.f32.mrb[0].mxu0
    %v3347 = vadd.f32 0.0, %v3346
    %v3348 = vpop.f32.mrb[0].mxu0
    %3349 = vmatprep.mubr.f32.mxu0 0.0
    %3350 = vmatmul.mubr.f32.gmra.mrb[0].mxu0 %v3209
    %v3351 = vpop.f32.mrb[0].mxu0
    %v3352 = vadd.f32 0.0, %v3351
    %v3353 = vpop.f32.mrb[0].mxu0
    %3354 = vmatprep.mubr.f32.mxu0 0.0
    %3355 = vmatmul.mubr.f32.gmra.mrb[0].mxu0 %v3212
    %v3356 = vpop.f32.mrb[0].mxu0
    %v3357 = vadd.f32 0.0, %v3356
    %v3358 = vpop.f32.mrb[0].mxu0
    %3359 = vmatprep.mubr.f32.mxu0 0.0
    %3360 = vmatmul.mubr.f32.gmra.mrb[0].mxu0 %v3215
    %v3361 = vpop.f32.mrb[0].mxu0
    %v3362 = vadd.f32 0.0, %v3361
    %v3363 = vpop.f32.mrb[0].mxu0
    %3364 = vdwg.mxu0
    %v3366 = vsel %vm306, %v3074, 0
    %v3369 = vsel %vm306, %v3076, 0
    %v3372 = vsel %vm306, %v3078, 0
    %v3375 = vsel %vm306, %v3080, 0
    %v3378 = vsel %vm306, %v3082, 0
    %v3381 = vsel %vm306, %v3084, 0
    %v3384 = vsel %vm306, %v3086, 0
    %v3387 = vsel %vm306, %v3088, 0
    %v3390 = vsel %vm306, %v3090, 0
    %v3393 = vsel %vm306, %v3092, 0
    %v3396 = vsel %vm306, %v3094, 0
    %v3399 = vsel %vm306, %v3096, 0
    %v3402 = vsel %vm306, %v3098, 0
    %v3405 = vsel %vm306, %v3100, 0
    %v3408 = vsel %vm306, %v3102, 0
    %v3411 = vsel %vm306, %v3104, 0
    %v3414 = vsel %vm355, %v3070, 0
    %3416 = vmatprep.subr.mxu0 0.0
    %3417 = vmatpush1.msra.mxu0 %v3414
    %3418 = vmatprep.subr.mxu0 0.0
    %3419 = vmatpush1.msra.mxu0 0.0
    %3420 = vmatprep.subr.mxu0 0.0
    %3421 = vmatpush1.msra.mxu0 0.0
    %3422 = vmatprep.subr.mxu0 0.0
    %3423 = vmatpush1.msra.mxu0 0.0
    %3424 = vmatprep.subr.mxu0 0.0
    %3425 = vmatpush1.msra.mxu0 0.0
    %3426 = vmatprep.subr.mxu0 0.0
    %3427 = vmatpush1.msra.mxu0 0.0
    %3428 = vmatprep.subr.mxu0 0.0
    %3429 = vmatpush1.msra.mxu0 0.0
    %3430 = vmatprep.subr.mxu0 0.0
    %3431 = vmatpush1.msra.mxu0 0.0
    %3432 = vmatprep.subr.mxu0 0.0
    %3433 = vmatpush1.msra.mxu0 0.0
    %3434 = vmatprep.subr.mxu0 0.0
    %3435 = vmatpush1.msra.mxu0 0.0
    %3436 = vmatprep.subr.mxu0 0.0
    %3437 = vmatpush1.msra.mxu0 0.0
    %3438 = vmatprep.subr.mxu0 0.0
    %3439 = vmatpush1.msra.mxu0 0.0
    %3440 = vmatprep.subr.mxu0 0.0
    %3441 = vmatpush1.msra.mxu0 0.0
    %3442 = vmatprep.subr.mxu0 0.0
    %3443 = vmatpush1.msra.mxu0 0.0
    %3444 = vmatprep.subr.mxu0 0.0
    %3445 = vmatpush1.msra.mxu0 0.0
    %3446 = vmatprep.subr.mxu0 0.0
    %3447 = vmatpush1.msra.mxu0 0.0
    %3448 = vmatprep.subr.mxu0 0.0
    %3449 = vmatpush1.msra.mxu0 0.0
    %3450 = vmatprep.subr.mxu0 0.0
    %3451 = vmatpush1.msra.mxu0 0.0
    %3452 = vmatprep.subr.mxu0 0.0
    %3453 = vmatpush1.msra.mxu0 0.0
    %3454 = vmatprep.subr.mxu0 0.0
    %3455 = vmatpush1.msra.mxu0 0.0
    %3456 = vmatprep.subr.mxu0 0.0
    %3457 = vmatpush1.msra.mxu0 0.0
    %3458 = vmatprep.subr.mxu0 0.0
    %3459 = vmatpush1.msra.mxu0 0.0
    %3460 = vmatprep.subr.mxu0 0.0
    %3461 = vmatpush1.msra.mxu0 0.0
    %3462 = vmatprep.subr.mxu0 0.0
    %3463 = vmatpush1.msra.mxu0 0.0
    %3464 = vmatprep.subr.mxu0 0.0
    %3465 = vmatpush1.msra.mxu0 0.0
    %3466 = vmatprep.subr.mxu0 0.0
    %3467 = vmatpush1.msra.mxu0 0.0
    %3468 = vmatprep.subr.mxu0 0.0
    %3469 = vmatpush1.msra.mxu0 0.0
    %3470 = vmatprep.subr.mxu0 0.0
    %3471 = vmatpush1.msra.mxu0 0.0
    %3472 = vmatprep.subr.mxu0 0.0
    %3473 = vmatpush1.msra.mxu0 0.0
    %3474 = vmatprep.subr.mxu0 0.0
    %3475 = vmatpush1.msra.mxu0 0.0
    %3476 = vmatprep.subr.mxu0 0.0
    %3477 = vmatpush1.msra.mxu0 0.0
    %3478 = vmatprep.subr.mxu0 0.0
    %3479 = vmatpush1.msra.mxu0 0.0
    %3480 = vmatprep.mubr.f32.mxu0 0.0
    %3481 = vmatmul.mubr.f32.gmra.mrb[0].mxu0 %v3366
    %v3482 = vpop.f32.mrb[0].mxu0
    %v3483 = vadd.f32 %v3287, %v3482
    %v3484 = vpop.f32.mrb[0].mxu0
    %3485 = vmatprep.mubr.f32.mxu0 0.0
    %3486 = vmatmul.mubr.f32.gmra.mrb[0].mxu0 %v3369
    %v3487 = vpop.f32.mrb[0].mxu0
    %v3488 = vadd.f32 %v3292, %v3487
    %v3489 = vpop.f32.mrb[0].mxu0
    %3490 = vmatprep.mubr.f32.mxu0 0.0
    %3491 = vmatmul.mubr.f32.gmra.mrb[0].mxu0 %v3372
    %v3492 = vpop.f32.mrb[0].mxu0
    %v3493 = vadd.f32 %v3297, %v3492
    %v3494 = vpop.f32.mrb[0].mxu0
    %3495 = vmatprep.mubr.f32.mxu0 0.0
    %3496 = vmatmul.mubr.f32.gmra.mrb[0].mxu0 %v3375
    %v3497 = vpop.f32.mrb[0].mxu0
    %v3498 = vadd.f32 %v3302, %v3497
    %v3499 = vpop.f32.mrb[0].mxu0
    %3500 = vmatprep.mubr.f32.mxu0 0.0
    %3501 = vmatmul.mubr.f32.gmra.mrb[0].mxu0 %v3378
    %v3502 = vpop.f32.mrb[0].mxu0
    %v3503 = vadd.f32 %v3307, %v3502
    %v3504 = vpop.f32.mrb[0].mxu0
    %3505 = vmatprep.mubr.f32.mxu0 0.0
    %3506 = vmatmul.mubr.f32.gmra.mrb[0].mxu0 %v3381
    %v3507 = vpop.f32.mrb[0].mxu0
    %v3508 = vadd.f32 %v3312, %v3507
    %v3509 = vpop.f32.mrb[0].mxu0
    %3510 = vmatprep.mubr.f32.mxu0 0.0
    %3511 = vmatmul.mubr.f32.gmra.mrb[0].mxu0 %v3384
    %v3512 = vpop.f32.mrb[0].mxu0
    %v3513 = vadd.f32 %v3317, %v3512
    %v3514 = vpop.f32.mrb[0].mxu0
    %3515 = vmatprep.mubr.f32.mxu0 0.0
    %3516 = vmatmul.mubr.f32.gmra.mrb[0].mxu0 %v3387
    %v3517 = vpop.f32.mrb[0].mxu0
    %v3518 = vadd.f32 %v3322, %v3517
    %v3519 = vpop.f32.mrb[0].mxu0
    %3520 = vmatprep.mubr.f32.mxu0 0.0
    %3521 = vmatmul.mubr.f32.gmra.mrb[0].mxu0 %v3390
    %v3522 = vpop.f32.mrb[0].mxu0
    %v3523 = vadd.f32 %v3327, %v3522
    %v3524 = vpop.f32.mrb[0].mxu0
    %3525 = vmatprep.mubr.f32.mxu0 0.0
    %3526 = vmatmul.mubr.f32.gmra.mrb[0].mxu0 %v3393
    %v3527 = vpop.f32.mrb[0].mxu0
    %v3528 = vadd.f32 %v3332, %v3527
    %v3529 = vpop.f32.mrb[0].mxu0
    %3530 = vmatprep.mubr.f32.mxu0 0.0
    %3531 = vmatmul.mubr.f32.gmra.mrb[0].mxu0 %v3396
    %v3532 = vpop.f32.mrb[0].mxu0
    %v3533 = vadd.f32 %v3337, %v3532
    %v3534 = vpop.f32.mrb[0].mxu0
    %3535 = vmatprep.mubr.f32.mxu0 0.0
    %3536 = vmatmul.mubr.f32.gmra.mrb[0].mxu0 %v3399
    %v3537 = vpop.f32.mrb[0].mxu0
    %v3538 = vadd.f32 %v3342, %v3537
    %v3539 = vpop.f32.mrb[0].mxu0
    %3540 = vmatprep.mubr.f32.mxu0 0.0
    %3541 = vmatmul.mubr.f32.gmra.mrb[0].mxu0 %v3402
    %v3542 = vpop.f32.mrb[0].mxu0
    %v3543 = vadd.f32 %v3347, %v3542
    %v3544 = vpop.f32.mrb[0].mxu0
    %3545 = vmatprep.mubr.f32.mxu0 0.0
    %3546 = vmatmul.mubr.f32.gmra.mrb[0].mxu0 %v3405
    %v3547 = vpop.f32.mrb[0].mxu0
    %v3548 = vadd.f32 %v3352, %v3547
    %v3549 = vpop.f32.mrb[0].mxu0
    %3550 = vmatprep.mubr.f32.mxu0 0.0
    %3551 = vmatmul.mubr.f32.gmra.mrb[0].mxu0 %v3408
    %v3552 = vpop.f32.mrb[0].mxu0
    %v3553 = vadd.f32 %v3357, %v3552
    %v3554 = vpop.f32.mrb[0].mxu0
    %3555 = vmatprep.mubr.f32.mxu0 0.0
    %3556 = vmatmul.mubr.f32.gmra.mrb[0].mxu0 %v3411
    %v3557 = vpop.f32.mrb[0].mxu0
    %v3558 = vadd.f32 %v3362, %v3557
    %v3559 = vpop.f32.mrb[0].mxu0
    %3560 = vdwg.mxu0
    %v3562 = vsel %vm306, %v3138, 0
    %v3565 = vsel %vm306, %v3140, 0
    %v3568 = vsel %vm306, %v3142, 0
    %v3571 = vsel %vm306, %v3144, 0
    %v3574 = vsel %vm306, %v3146, 0
    %v3577 = vsel %vm306, %v3148, 0
    %v3580 = vsel %vm306, %v3150, 0
    %v3583 = vsel %vm306, %v3152, 0
    %v3586 = vsel %vm306, %v3154, 0
    %v3589 = vsel %vm306, %v3156, 0
    %v3592 = vsel %vm306, %v3158, 0
    %v3595 = vsel %vm306, %v3160, 0
    %v3598 = vsel %vm306, %v3162, 0
    %v3601 = vsel %vm306, %v3164, 0
    %v3604 = vsel %vm306, %v3166, 0
    %v3607 = vsel %vm306, %v3168, 0
    %3609 = vmatprep.subr.mxu0 0.0
    %3610 = vmatpush1.msra.mxu0 %v3218
    %3611 = vmatprep.subr.mxu0 0.0
    %3612 = vmatpush1.msra.mxu0 0.0
    %3613 = vmatprep.subr.mxu0 0.0
    %3614 = vmatpush1.msra.mxu0 0.0
    %3615 = vmatprep.subr.mxu0 0.0
    %3616 = vmatpush1.msra.mxu0 0.0
    %3617 = vmatprep.subr.mxu0 0.0
    %3618 = vmatpush1.msra.mxu0 0.0
    %3619 = vmatprep.subr.mxu0 0.0
    %3620 = vmatpush1.msra.mxu0 0.0
    %3621 = vmatprep.subr.mxu0 0.0
    %3622 = vmatpush1.msra.mxu0 0.0
    %3623 = vmatprep.subr.mxu0 0.0
    %3624 = vmatpush1.msra.mxu0 0.0
    %3625 = vmatprep.subr.mxu0 0.0
    %3626 = vmatpush1.msra.mxu0 0.0
    %3627 = vmatprep.subr.mxu0 0.0
    %3628 = vmatpush1.msra.mxu0 0.0
    %3629 = vmatprep.subr.mxu0 0.0
    %3630 = vmatpush1.msra.mxu0 0.0
    %3631 = vmatprep.subr.mxu0 0.0
    %3632 = vmatpush1.msra.mxu0 0.0
    %3633 = vmatprep.subr.mxu0 0.0
    %3634 = vmatpush1.msra.mxu0 0.0
    %3635 = vmatprep.subr.mxu0 0.0
    %3636 = vmatpush1.msra.mxu0 0.0
    %3637 = vmatprep.subr.mxu0 0.0
    %3638 = vmatpush1.msra.mxu0 0.0
    %3639 = vmatprep.subr.mxu0 0.0
    %3640 = vmatpush1.msra.mxu0 0.0
    %3641 = vmatprep.subr.mxu0 0.0
    %3642 = vmatpush1.msra.mxu0 0.0
    %3643 = vmatprep.subr.mxu0 0.0
    %3644 = vmatpush1.msra.mxu0 0.0
    %3645 = vmatprep.subr.mxu0 0.0
    %3646 = vmatpush1.msra.mxu0 0.0
    %3647 = vmatprep.subr.mxu0 0.0
    %3648 = vmatpush1.msra.mxu0 0.0
    %3649 = vmatprep.subr.mxu0 0.0
    %3650 = vmatpush1.msra.mxu0 0.0
    %3651 = vmatprep.subr.mxu0 0.0
    %3652 = vmatpush1.msra.mxu0 0.0
    %3653 = vmatprep.subr.mxu0 0.0
    %3654 = vmatpush1.msra.mxu0 0.0
    %3655 = vmatprep.subr.mxu0 0.0
    %3656 = vmatpush1.msra.mxu0 0.0
    %3657 = vmatprep.subr.mxu0 0.0
    %3658 = vmatpush1.msra.mxu0 0.0
    %3659 = vmatprep.subr.mxu0 0.0
    %3660 = vmatpush1.msra.mxu0 0.0
    %3661 = vmatprep.subr.mxu0 0.0
    %3662 = vmatpush1.msra.mxu0 0.0
    %3663 = vmatprep.subr.mxu0 0.0
    %3664 = vmatpush1.msra.mxu0 0.0
    %3665 = vmatprep.subr.mxu0 0.0
    %3666 = vmatpush1.msra.mxu0 0.0
    %3667 = vmatprep.subr.mxu0 0.0
    %3668 = vmatpush1.msra.mxu0 0.0
    %3669 = vmatprep.subr.mxu0 0.0
    %3670 = vmatpush1.msra.mxu0 0.0
    %3671 = vmatprep.subr.mxu0 0.0
    %3672 = vmatpush1.msra.mxu0 0.0
    %3673 = vmatprep.mubr.f32.mxu0 0.0
    %3674 = vmatmul.mubr.f32.gmra.mrb[0].mxu0 %v3562
    %v3675 = vpop.f32.mrb[0].mxu0
    %v3676 = vadd.f32 0.0, %v3675
    %v3677 = vpop.f32.mrb[0].mxu0
    %3678 = vmatprep.mubr.f32.mxu0 0.0
    %3679 = vmatmul.mubr.f32.gmra.mrb[0].mxu0 %v3565
    %v3680 = vpop.f32.mrb[0].mxu0
    %v3681 = vadd.f32 0.0, %v3680
    %v3682 = vpop.f32.mrb[0].mxu0
    %3683 = vmatprep.mubr.f32.mxu0 0.0
    %3684 = vmatmul.mubr.f32.gmra.mrb[0].mxu0 %v3568
    %v3685 = vpop.f32.mrb[0].mxu0
    %v3686 = vadd.f32 0.0, %v3685
    %v3687 = vpop.f32.mrb[0].mxu0
    %3688 = vmatprep.mubr.f32.mxu0 0.0
    %3689 = vmatmul.mubr.f32.gmra.mrb[0].mxu0 %v3571
    %v3690 = vpop.f32.mrb[0].mxu0
    %v3691 = vadd.f32 0.0, %v3690
    %v3692 = vpop.f32.mrb[0].mxu0
    %3693 = vmatprep.mubr.f32.mxu0 0.0
    %3694 = vmatmul.mubr.f32.gmra.mrb[0].mxu0 %v3574
    %v3695 = vpop.f32.mrb[0].mxu0
    %v3696 = vadd.f32 0.0, %v3695
    %v3697 = vpop.f32.mrb[0].mxu0
    %3698 = vmatprep.mubr.f32.mxu0 0.0
    %3699 = vmatmul.mubr.f32.gmra.mrb[0].mxu0 %v3577
    %v3700 = vpop.f32.mrb[0].mxu0
    %v3701 = vadd.f32 0.0, %v3700
    %v3702 = vpop.f32.mrb[0].mxu0
    %3703 = vmatprep.mubr.f32.mxu0 0.0
    %3704 = vmatmul.mubr.f32.gmra.mrb[0].mxu0 %v3580
    %v3705 = vpop.f32.mrb[0].mxu0
    %v3706 = vadd.f32 0.0, %v3705
    %v3707 = vpop.f32.mrb[0].mxu0
    %3708 = vmatprep.mubr.f32.mxu0 0.0
    %3709 = vmatmul.mubr.f32.gmra.mrb[0].mxu0 %v3583
    %v3710 = vpop.f32.mrb[0].mxu0
    %v3711 = vadd.f32 0.0, %v3710
    %v3712 = vpop.f32.mrb[0].mxu0
    %3713 = vmatprep.mubr.f32.mxu0 0.0
    %3714 = vmatmul.mubr.f32.gmra.mrb[0].mxu0 %v3586
    %v3715 = vpop.f32.mrb[0].mxu0
    %v3716 = vadd.f32 0.0, %v3715
    %v3717 = vpop.f32.mrb[0].mxu0
    %3718 = vmatprep.mubr.f32.mxu0 0.0
    %3719 = vmatmul.mubr.f32.gmra.mrb[0].mxu0 %v3589
    %v3720 = vpop.f32.mrb[0].mxu0
    %v3721 = vadd.f32 0.0, %v3720
    %v3722 = vpop.f32.mrb[0].mxu0
    %3723 = vmatprep.mubr.f32.mxu0 0.0
    %3724 = vmatmul.mubr.f32.gmra.mrb[0].mxu0 %v3592
    %v3725 = vpop.f32.mrb[0].mxu0
    %v3726 = vadd.f32 0.0, %v3725
    %v3727 = vpop.f32.mrb[0].mxu0
    %3728 = vmatprep.mubr.f32.mxu0 0.0
    %3729 = vmatmul.mubr.f32.gmra.mrb[0].mxu0 %v3595
    %v3730 = vpop.f32.mrb[0].mxu0
    %v3731 = vadd.f32 0.0, %v3730
    %v3732 = vpop.f32.mrb[0].mxu0
    %3733 = vmatprep.mubr.f32.mxu0 0.0
    %3734 = vmatmul.mubr.f32.gmra.mrb[0].mxu0 %v3598
    %v3735 = vpop.f32.mrb[0].mxu0
    %v3736 = vadd.f32 0.0, %v3735
    %v3737 = vpop.f32.mrb[0].mxu0
    %3738 = vmatprep.mubr.f32.mxu0 0.0
    %3739 = vmatmul.mubr.f32.gmra.mrb[0].mxu0 %v3601
    %v3740 = vpop.f32.mrb[0].mxu0
    %v3741 = vadd.f32 0.0, %v3740
    %v3742 = vpop.f32.mrb[0].mxu0
    %3743 = vmatprep.mubr.f32.mxu0 0.0
    %3744 = vmatmul.mubr.f32.gmra.mrb[0].mxu0 %v3604
    %v3745 = vpop.f32.mrb[0].mxu0
    %v3746 = vadd.f32 0.0, %v3745
    %v3747 = vpop.f32.mrb[0].mxu0
    %3748 = vmatprep.mubr.f32.mxu0 0.0
    %3749 = vmatmul.mubr.f32.gmra.mrb[0].mxu0 %v3607
    %v3750 = vpop.f32.mrb[0].mxu0
    %v3751 = vadd.f32 0.0, %v3750
    %v3752 = vpop.f32.mrb[0].mxu0
    %3753 = vdwg.mxu0
    %3754 = vmatprep.subr.mxu0 0.0
    %3755 = vmatpush1.msra.mxu0 %v3414
    %3756 = vmatprep.subr.mxu0 0.0
    %3757 = vmatpush1.msra.mxu0 0.0
    %3758 = vmatprep.subr.mxu0 0.0
    %3759 = vmatpush1.msra.mxu0 0.0
    %3760 = vmatprep.subr.mxu0 0.0
    %3761 = vmatpush1.msra.mxu0 0.0
    %3762 = vmatprep.subr.mxu0 0.0
    %3763 = vmatpush1.msra.mxu0 0.0
    %3764 = vmatprep.subr.mxu0 0.0
    %3765 = vmatpush1.msra.mxu0 0.0
    %3766 = vmatprep.subr.mxu0 0.0
    %3767 = vmatpush1.msra.mxu0 0.0
    %3768 = vmatprep.subr.mxu0 0.0
    %3769 = vmatpush1.msra.mxu0 0.0
    %3770 = vmatprep.subr.mxu0 0.0
    %3771 = vmatpush1.msra.mxu0 0.0
    %3772 = vmatprep.subr.mxu0 0.0
    %3773 = vmatpush1.msra.mxu0 0.0
    %3774 = vmatprep.subr.mxu0 0.0
    %3775 = vmatpush1.msra.mxu0 0.0
    %3776 = vmatprep.subr.mxu0 0.0
    %3777 = vmatpush1.msra.mxu0 0.0
    %3778 = vmatprep.subr.mxu0 0.0
    %3779 = vmatpush1.msra.mxu0 0.0
    %3780 = vmatprep.subr.mxu0 0.0
    %3781 = vmatpush1.msra.mxu0 0.0
    %3782 = vmatprep.subr.mxu0 0.0
    %3783 = vmatpush1.msra.mxu0 0.0
    %3784 = vmatprep.subr.mxu0 0.0
    %3785 = vmatpush1.msra.mxu0 0.0
    %3786 = vmatprep.subr.mxu0 0.0
    %3787 = vmatpush1.msra.mxu0 0.0
    %3788 = vmatprep.subr.mxu0 0.0
    %3789 = vmatpush1.msra.mxu0 0.0
    %3790 = vmatprep.subr.mxu0 0.0
    %3791 = vmatpush1.msra.mxu0 0.0
    %3792 = vmatprep.subr.mxu0 0.0
    %3793 = vmatpush1.msra.mxu0 0.0
    %3794 = vmatprep.subr.mxu0 0.0
    %3795 = vmatpush1.msra.mxu0 0.0
    %3796 = vmatprep.subr.mxu0 0.0
    %3797 = vmatpush1.msra.mxu0 0.0
    %3798 = vmatprep.subr.mxu0 0.0
    %3799 = vmatpush1.msra.mxu0 0.0
    %3800 = vmatprep.subr.mxu0 0.0
    %3801 = vmatpush1.msra.mxu0 0.0
    %3802 = vmatprep.subr.mxu0 0.0
    %3803 = vmatpush1.msra.mxu0 0.0
    %3804 = vmatprep.subr.mxu0 0.0
    %3805 = vmatpush1.msra.mxu0 0.0
    %3806 = vmatprep.subr.mxu0 0.0
    %3807 = vmatpush1.msra.mxu0 0.0
    %3808 = vmatprep.subr.mxu0 0.0
    %3809 = vmatpush1.msra.mxu0 0.0
    %3810 = vmatprep.subr.mxu0 0.0
    %3811 = vmatpush1.msra.mxu0 0.0
    %3812 = vmatprep.subr.mxu0 0.0
    %3813 = vmatpush1.msra.mxu0 0.0
    %3814 = vmatprep.subr.mxu0 0.0
    %3815 = vmatpush1.msra.mxu0 0.0
    %3816 = vmatprep.subr.mxu0 0.0
    %3817 = vmatpush1.msra.mxu0 0.0
    %3818 = vmatprep.mubr.f32.mxu0 0.0
    %3819 = vmatmul.mubr.f32.gmra.mrb[0].mxu0 %v3170
    %v3820 = vpop.f32.mrb[0].mxu0
    %v3821 = vadd.f32 %v3676, %v3820
    %v3822 = vpop.f32.mrb[0].mxu0
    %3823 = vmatprep.mubr.f32.mxu0 0.0
    %3824 = vmatmul.mubr.f32.gmra.mrb[0].mxu0 %v3173
    %v3825 = vpop.f32.mrb[0].mxu0
    %v3826 = vadd.f32 %v3681, %v3825
    %v3827 = vpop.f32.mrb[0].mxu0
    %3828 = vmatprep.mubr.f32.mxu0 0.0
    %3829 = vmatmul.mubr.f32.gmra.mrb[0].mxu0 %v3176
    %v3830 = vpop.f32.mrb[0].mxu0
    %v3831 = vadd.f32 %v3686, %v3830
    %v3832 = vpop.f32.mrb[0].mxu0
    %3833 = vmatprep.mubr.f32.mxu0 0.0
    %3834 = vmatmul.mubr.f32.gmra.mrb[0].mxu0 %v3179
    %v3835 = vpop.f32.mrb[0].mxu0
    %v3836 = vadd.f32 %v3691, %v3835
    %v3837 = vpop.f32.mrb[0].mxu0
    %3838 = vmatprep.mubr.f32.mxu0 0.0
    %3839 = vmatmul.mubr.f32.gmra.mrb[0].mxu0 %v3182
    %v3840 = vpop.f32.mrb[0].mxu0
    %v3841 = vadd.f32 %v3696, %v3840
    %v3842 = vpop.f32.mrb[0].mxu0
    %3843 = vmatprep.mubr.f32.mxu0 0.0
    %3844 = vmatmul.mubr.f32.gmra.mrb[0].mxu0 %v3185
    %v3845 = vpop.f32.mrb[0].mxu0
    %v3846 = vadd.f32 %v3701, %v3845
    %v3847 = vpop.f32.mrb[0].mxu0
    %3848 = vmatprep.mubr.f32.mxu0 0.0
    %3849 = vmatmul.mubr.f32.gmra.mrb[0].mxu0 %v3188
    %v3850 = vpop.f32.mrb[0].mxu0
    %v3851 = vadd.f32 %v3706, %v3850
    %v3852 = vpop.f32.mrb[0].mxu0
    %3853 = vmatprep.mubr.f32.mxu0 0.0
    %3854 = vmatmul.mubr.f32.gmra.mrb[0].mxu0 %v3191
    %v3855 = vpop.f32.mrb[0].mxu0
    %v3856 = vadd.f32 %v3711, %v3855
    %v3857 = vpop.f32.mrb[0].mxu0
    %3858 = vmatprep.mubr.f32.mxu0 0.0
    %3859 = vmatmul.mubr.f32.gmra.mrb[0].mxu0 %v3194
    %v3860 = vpop.f32.mrb[0].mxu0
    %v3861 = vadd.f32 %v3716, %v3860
    %v3862 = vpop.f32.mrb[0].mxu0
    %3863 = vmatprep.mubr.f32.mxu0 0.0
    %3864 = vmatmul.mubr.f32.gmra.mrb[0].mxu0 %v3197
    %v3865 = vpop.f32.mrb[0].mxu0
    %v3866 = vadd.f32 %v3721, %v3865
    %v3867 = vpop.f32.mrb[0].mxu0
    %3868 = vmatprep.mubr.f32.mxu0 0.0
    %3869 = vmatmul.mubr.f32.gmra.mrb[0].mxu0 %v3200
    %v3870 = vpop.f32.mrb[0].mxu0
    %v3871 = vadd.f32 %v3726, %v3870
    %v3872 = vpop.f32.mrb[0].mxu0
    %3873 = vmatprep.mubr.f32.mxu0 0.0
    %3874 = vmatmul.mubr.f32.gmra.mrb[0].mxu0 %v3203
    %v3875 = vpop.f32.mrb[0].mxu0
    %v3876 = vadd.f32 %v3731, %v3875
    %v3877 = vpop.f32.mrb[0].mxu0
    %3878 = vmatprep.mubr.f32.mxu0 0.0
    %3879 = vmatmul.mubr.f32.gmra.mrb[0].mxu0 %v3206
    %v3880 = vpop.f32.mrb[0].mxu0
    %v3881 = vadd.f32 %v3736, %v3880
    %v3882 = vpop.f32.mrb[0].mxu0
    %3883 = vmatprep.mubr.f32.mxu0 0.0
    %3884 = vmatmul.mubr.f32.gmra.mrb[0].mxu0 %v3209
    %v3885 = vpop.f32.mrb[0].mxu0
    %v3886 = vadd.f32 %v3741, %v3885
    %v3887 = vpop.f32.mrb[0].mxu0
    %3888 = vmatprep.mubr.f32.mxu0 0.0
    %3889 = vmatmul.mubr.f32.gmra.mrb[0].mxu0 %v3212
    %v3890 = vpop.f32.mrb[0].mxu0
    %v3891 = vadd.f32 %v3746, %v3890
    %v3892 = vpop.f32.mrb[0].mxu0
    %3893 = vmatprep.mubr.f32.mxu0 0.0
    %3894 = vmatmul.mubr.f32.gmra.mrb[0].mxu0 %v3215
    %v3895 = vpop.f32.mrb[0].mxu0
    %v3896 = vadd.f32 %v3751, %v3895
    %v3897 = vpop.f32.mrb[0].mxu0
    %3898 = vdwg.mxu0
    %v3899 = vmax.f32 %v3483, %v3821
    %v3900 = vmax.f32 %v3488, %v3826
    %v3901 = vmax.f32 %v3493, %v3831
    %v3902 = vmax.f32 %v3498, %v3836
    %v3903 = vmax.f32 %v3503, %v3841
    %v3904 = vmax.f32 %v3508, %v3846
    %v3905 = vmax.f32 %v3513, %v3851
    %v3906 = vmax.f32 %v3518, %v3856
    %v3907 = vmax.f32 %v3523, %v3861
    %v3908 = vmax.f32 %v3528, %v3866
    %v3909 = vmax.f32 %v3533, %v3871
    %v3910 = vmax.f32 %v3538, %v3876
    %v3911 = vmax.f32 %v3543, %v3881
    %v3912 = vmax.f32 %v3548, %v3886
    %v3913 = vmax.f32 %v3553, %v3891
    %v3914 = vmax.f32 %v3558, %v3896
    %v3916 = vlaneseq
    %v3917 = vshrl.u32 %v3916, 7
    %v3918 = vsub.s32 0, %v3917
    %v3919 = vrot.slane %v3072, %v3918
    %v3921 = vadd.f32 %v3899, %v3919
    %v3922 = vadd.f32 %v3900, %v3919
    %v3923 = vadd.f32 %v3901, %v3919
    %v3924 = vadd.f32 %v3902, %v3919
    %v3925 = vadd.f32 %v3903, %v3919
    %v3926 = vadd.f32 %v3904, %v3919
    %v3927 = vadd.f32 %v3905, %v3919
    %v3928 = vadd.f32 %v3906, %v3919
    %v3929 = vadd.f32 %v3907, %v3919
    %v3930 = vadd.f32 %v3908, %v3919
    %v3931 = vadd.f32 %v3909, %v3919
    %v3932 = vadd.f32 %v3910, %v3919
    %v3933 = vadd.f32 %v3911, %v3919
    %v3934 = vadd.f32 %v3912, %v3919
    %v3935 = vadd.f32 %v3913, %v3919
    %v3936 = vadd.f32 %v3914, %v3919
    %v3937 = vmax.f32 %v3921, 0.0
    %v3938 = vmax.f32 %v3922, 0.0
    %v3939 = vmax.f32 %v3923, 0.0
    %v3940 = vmax.f32 %v3924, 0.0
    %v3941 = vmax.f32 %v3925, 0.0
    %v3942 = vmax.f32 %v3926, 0.0
    %v3943 = vmax.f32 %v3927, 0.0
    %v3944 = vmax.f32 %v3928, 0.0
    %v3945 = vmax.f32 %v3929, 0.0
    %v3946 = vmax.f32 %v3930, 0.0
    %v3947 = vmax.f32 %v3931, 0.0
    %v3948 = vmax.f32 %v3932, 0.0
    %v3949 = vmax.f32 %v3933, 0.0
    %v3950 = vmax.f32 %v3934, 0.0
    %v3951 = vmax.f32 %v3935, 0.0
    %v3952 = vmax.f32 %v3936, 0.0
    %3953 = vst.msk [vmem:[#allocation2] sm:$0xff] %vm1092, %v3937
    %3954 = vst.msk [vmem:[#allocation2 + $0x8] sm:$0xff] %vm1092, %v3938
    %3955 = vst.msk [vmem:[#allocation2 + $0x10] sm:$0xff] %vm1092, %v3939
    %3956 = vst.msk [vmem:[#allocation2 + $0x18] sm:$0xff] %vm1092, %v3940
    %3957 = vst.msk [vmem:[#allocation2 + $0x20] sm:$0xff] %vm1092, %v3941
    %3958 = vst.msk [vmem:[#allocation2 + $0x28] sm:$0xff] %vm1092, %v3942
    %3959 = vst.msk [vmem:[#allocation2 + $0x30] sm:$0xff] %vm1092, %v3943
    %3960 = vst.msk [vmem:[#allocation2 + $0x38] sm:$0xff] %vm1092, %v3944
    %3961 = vst.msk [vmem:[#allocation2 + $0x40] sm:$0xff] %vm1092, %v3945
    %3962 = vst.msk [vmem:[#allocation2 + $0x48] sm:$0xff] %vm1092, %v3946
    %3963 = vst.msk [vmem:[#allocation2 + $0x50] sm:$0xff] %vm1092, %v3947
    %3964 = vst.msk [vmem:[#allocation2 + $0x58] sm:$0xff] %vm1092, %v3948
    %3965 = vst.msk [vmem:[#allocation2 + $0x60] sm:$0xff] %vm1092, %v3949
    %3966 = vst.msk [vmem:[#allocation2 + $0x68] sm:$0xff] %vm1092, %v3950
    %3967 = vst.msk [vmem:[#allocation2 + $0x70] sm:$0xff] %vm1092, %v3951
    %3968 = vst.msk [vmem:[#allocation2 + $0x78] sm:$0x7f] %vm1108, %v3952
    %v3969 = vld [vmem:[#allocation12] sm:$0xff]
    %v3970 = vld [vmem:[#allocation13] sm:$0xff]
    %v3971 = vld [vmem:[#allocation15] sm:$0x1]
    %v3972 = vld [vmem:[#allocation2] ss:$2 sm:$0xff]
    %v3973 = vld [vmem:[%s1114] ss:$2 sm:$0xff]
    %v3974 = vld [vmem:[%s1116] ss:$2 sm:$0xff]
    %v3975 = vld [vmem:[%s1118] ss:$2 sm:$0xff]
    %v3976 = vld [vmem:[%s1120] ss:$2 sm:$0xff]
    %v3977 = vld [vmem:[%s1122] ss:$2 sm:$0xff]
    %v3978 = vld [vmem:[%s1124] ss:$2 sm:$0xff]
    %v3979 = vld [vmem:[%s1126] ss:$2 sm:$0x7f]
    %v3980 = vld [vmem:[%s1128] ss:$2 sm:$0xff]
    %v3981 = vld [vmem:[%s1130] ss:$2 sm:$0xff]
    %v3982 = vld [vmem:[%s1132] ss:$2 sm:$0xff]
    %v3983 = vld [vmem:[%s1134] ss:$2 sm:$0xff]
    %v3984 = vld [vmem:[%s1136] ss:$2 sm:$0xff]
    %v3985 = vld [vmem:[%s1138] ss:$2 sm:$0xff]
    %v3986 = vld [vmem:[%s1140] ss:$2 sm:$0xff]
    %v3987 = vld [vmem:[%s1142] ss:$2 sm:$0x7f]
    %v3988 = vld [vmem:[%s1144] ss:$2 sm:$0xff]
    %v3989 = vld [vmem:[%s1146] ss:$2 sm:$0xff]
    %v3990 = vld [vmem:[%s1148] ss:$2 sm:$0xff]
    %v3991 = vld [vmem:[%s1150] ss:$2 sm:$0xff]
    %v3992 = vld [vmem:[%s1152] ss:$2 sm:$0xff]
    %v3993 = vld [vmem:[%s1154] ss:$2 sm:$0xff]
    %v3994 = vld [vmem:[%s1156] ss:$2 sm:$0xff]
    %v3995 = vld [vmem:[%s1158] ss:$2 sm:$0x7f]
    %v3997 = vsel %vm1092, %v3980, 0
    %v4000 = vsel %vm1092, %v3981, 0
    %v4003 = vsel %vm1092, %v3982, 0
    %v4006 = vsel %vm1092, %v3983, 0
    %v4009 = vsel %vm1092, %v3984, 0
    %v4012 = vsel %vm1092, %v3985, 0
    %v4015 = vsel %vm1092, %v3986, 0
    %v4018 = vsel %vm1092, %v3987, 0
    %4020 = vmatprep.subr.mxu0 0.0
    %4021 = vmatpush1.msra.mxu0 %v3970
    %4022 = vmatprep.subr.mxu0 0.0
    %4023 = vmatpush1.msra.mxu0 0.0
    %4024 = vmatprep.subr.mxu0 0.0
    %4025 = vmatpush1.msra.mxu0 0.0
    %4026 = vmatprep.subr.mxu0 0.0
    %4027 = vmatpush1.msra.mxu0 0.0
    %4028 = vmatprep.subr.mxu0 0.0
    %4029 = vmatpush1.msra.mxu0 0.0
    %4030 = vmatprep.subr.mxu0 0.0
    %4031 = vmatpush1.msra.mxu0 0.0
    %4032 = vmatprep.subr.mxu0 0.0
    %4033 = vmatpush1.msra.mxu0 0.0
    %4034 = vmatprep.subr.mxu0 0.0
    %4035 = vmatpush1.msra.mxu0 0.0
    %4036 = vmatprep.subr.mxu0 0.0
    %4037 = vmatpush1.msra.mxu0 0.0
    %4038 = vmatprep.subr.mxu0 0.0
    %4039 = vmatpush1.msra.mxu0 0.0
    %4040 = vmatprep.subr.mxu0 0.0
    %4041 = vmatpush1.msra.mxu0 0.0
    %4042 = vmatprep.subr.mxu0 0.0
    %4043 = vmatpush1.msra.mxu0 0.0
    %4044 = vmatprep.subr.mxu0 0.0
    %4045 = vmatpush1.msra.mxu0 0.0
    %4046 = vmatprep.subr.mxu0 0.0
    %4047 = vmatpush1.msra.mxu0 0.0
    %4048 = vmatprep.subr.mxu0 0.0
    %4049 = vmatpush1.msra.mxu0 0.0
    %4050 = vmatprep.subr.mxu0 0.0
    %4051 = vmatpush1.msra.mxu0 0.0
    %4052 = vmatprep.subr.mxu0 0.0
    %4053 = vmatpush1.msra.mxu0 0.0
    %4054 = vmatprep.subr.mxu0 0.0
    %4055 = vmatpush1.msra.mxu0 0.0
    %4056 = vmatprep.subr.mxu0 0.0
    %4057 = vmatpush1.msra.mxu0 0.0
    %4058 = vmatprep.subr.mxu0 0.0
    %4059 = vmatpush1.msra.mxu0 0.0
    %4060 = vmatprep.subr.mxu0 0.0
    %4061 = vmatpush1.msra.mxu0 0.0
    %4062 = vmatprep.subr.mxu0 0.0
    %4063 = vmatpush1.msra.mxu0 0.0
    %4064 = vmatprep.subr.mxu0 0.0
    %4065 = vmatpush1.msra.mxu0 0.0
    %4066 = vmatprep.subr.mxu0 0.0
    %4067 = vmatpush1.msra.mxu0 0.0
    %4068 = vmatprep.subr.mxu0 0.0
    %4069 = vmatpush1.msra.mxu0 0.0
    %4070 = vmatprep.subr.mxu0 0.0
    %4071 = vmatpush1.msra.mxu0 0.0
    %4072 = vmatprep.subr.mxu0 0.0
    %4073 = vmatpush1.msra.mxu0 0.0
    %4074 = vmatprep.subr.mxu0 0.0
    %4075 = vmatpush1.msra.mxu0 0.0
    %4076 = vmatprep.subr.mxu0 0.0
    %4077 = vmatpush1.msra.mxu0 0.0
    %4078 = vmatprep.subr.mxu0 0.0
    %4079 = vmatpush1.msra.mxu0 0.0
    %4080 = vmatprep.subr.mxu0 0.0
    %4081 = vmatpush1.msra.mxu0 0.0
    %4082 = vmatprep.subr.mxu0 0.0
    %4083 = vmatpush1.msra.mxu0 0.0
    %4084 = vmatprep.mubr.f32.mxu0 0.0
    %4085 = vmatmul.mubr.f32.gmra.mrb[0].mxu0 %v3997
    %v4086 = vpop.f32.mrb[0].mxu0
    %v4087 = vadd.f32 0.0, %v4086
    %v4088 = vpop.f32.mrb[0].mxu0
    %4089 = vmatprep.mubr.f32.mxu0 0.0
    %4090 = vmatmul.mubr.f32.gmra.mrb[0].mxu0 %v4000
    %v4091 = vpop.f32.mrb[0].mxu0
    %v4092 = vadd.f32 0.0, %v4091
    %v4093 = vpop.f32.mrb[0].mxu0
    %4094 = vmatprep.mubr.f32.mxu0 0.0
    %4095 = vmatmul.mubr.f32.gmra.mrb[0].mxu0 %v4003
    %v4096 = vpop.f32.mrb[0].mxu0
    %v4097 = vadd.f32 0.0, %v4096
    %v4098 = vpop.f32.mrb[0].mxu0
    %4099 = vmatprep.mubr.f32.mxu0 0.0
    %4100 = vmatmul.mubr.f32.gmra.mrb[0].mxu0 %v4006
    %v4101 = vpop.f32.mrb[0].mxu0
    %v4102 = vadd.f32 0.0, %v4101
    %v4103 = vpop.f32.mrb[0].mxu0
    %4104 = vmatprep.mubr.f32.mxu0 0.0
    %4105 = vmatmul.mubr.f32.gmra.mrb[0].mxu0 %v4009
    %v4106 = vpop.f32.mrb[0].mxu0
    %v4107 = vadd.f32 0.0, %v4106
    %v4108 = vpop.f32.mrb[0].mxu0
    %4109 = vmatprep.mubr.f32.mxu0 0.0
    %4110 = vmatmul.mubr.f32.gmra.mrb[0].mxu0 %v4012
    %v4111 = vpop.f32.mrb[0].mxu0
    %v4112 = vadd.f32 0.0, %v4111
    %v4113 = vpop.f32.mrb[0].mxu0
    %4114 = vmatprep.mubr.f32.mxu0 0.0
    %4115 = vmatmul.mubr.f32.gmra.mrb[0].mxu0 %v4015
    %v4116 = vpop.f32.mrb[0].mxu0
    %v4117 = vadd.f32 0.0, %v4116
    %v4118 = vpop.f32.mrb[0].mxu0
    %4119 = vmatprep.mubr.f32.mxu0 0.0
    %4120 = vmatmul.mubr.f32.gmra.mrb[0].mxu0 %v4018
    %v4121 = vpop.f32.mrb[0].mxu0
    %v4122 = vadd.f32 0.0, %v4121
    %v4123 = vpop.f32.mrb[0].mxu0
    %4124 = vdwg.mxu0
    %v4126 = vsel %vm1092, %v3972, 0
    %v4129 = vsel %vm1092, %v3973, 0
    %v4132 = vsel %vm1092, %v3974, 0
    %v4135 = vsel %vm1092, %v3975, 0
    %v4138 = vsel %vm1092, %v3976, 0
    %v4141 = vsel %vm1092, %v3977, 0
    %v4144 = vsel %vm1092, %v3978, 0
    %v4147 = vsel %vm1092, %v3979, 0
    %4149 = vmatprep.subr.mxu0 0.0
    %4150 = vmatpush1.msra.mxu0 %v3969
    %4151 = vmatprep.subr.mxu0 0.0
    %4152 = vmatpush1.msra.mxu0 0.0
    %4153 = vmatprep.subr.mxu0 0.0
    %4154 = vmatpush1.msra.mxu0 0.0
    %4155 = vmatprep.subr.mxu0 0.0
    %4156 = vmatpush1.msra.mxu0 0.0
    %4157 = vmatprep.subr.mxu0 0.0
    %4158 = vmatpush1.msra.mxu0 0.0
    %4159 = vmatprep.subr.mxu0 0.0
    %4160 = vmatpush1.msra.mxu0 0.0
    %4161 = vmatprep.subr.mxu0 0.0
    %4162 = vmatpush1.msra.mxu0 0.0
    %4163 = vmatprep.subr.mxu0 0.0
    %4164 = vmatpush1.msra.mxu0 0.0
    %4165 = vmatprep.subr.mxu0 0.0
    %4166 = vmatpush1.msra.mxu0 0.0
    %4167 = vmatprep.subr.mxu0 0.0
    %4168 = vmatpush1.msra.mxu0 0.0
    %4169 = vmatprep.subr.mxu0 0.0
    %4170 = vmatpush1.msra.mxu0 0.0
    %4171 = vmatprep.subr.mxu0 0.0
    %4172 = vmatpush1.msra.mxu0 0.0
    %4173 = vmatprep.subr.mxu0 0.0
    %4174 = vmatpush1.msra.mxu0 0.0
    %4175 = vmatprep.subr.mxu0 0.0
    %4176 = vmatpush1.msra.mxu0 0.0
    %4177 = vmatprep.subr.mxu0 0.0
    %4178 = vmatpush1.msra.mxu0 0.0
    %4179 = vmatprep.subr.mxu0 0.0
    %4180 = vmatpush1.msra.mxu0 0.0
    %4181 = vmatprep.subr.mxu0 0.0
    %4182 = vmatpush1.msra.mxu0 0.0
    %4183 = vmatprep.subr.mxu0 0.0
    %4184 = vmatpush1.msra.mxu0 0.0
    %4185 = vmatprep.subr.mxu0 0.0
    %4186 = vmatpush1.msra.mxu0 0.0
    %4187 = vmatprep.subr.mxu0 0.0
    %4188 = vmatpush1.msra.mxu0 0.0
    %4189 = vmatprep.subr.mxu0 0.0
    %4190 = vmatpush1.msra.mxu0 0.0
    %4191 = vmatprep.subr.mxu0 0.0
    %4192 = vmatpush1.msra.mxu0 0.0
    %4193 = vmatprep.subr.mxu0 0.0
    %4194 = vmatpush1.msra.mxu0 0.0
    %4195 = vmatprep.subr.mxu0 0.0
    %4196 = vmatpush1.msra.mxu0 0.0
    %4197 = vmatprep.subr.mxu0 0.0
    %4198 = vmatpush1.msra.mxu0 0.0
    %4199 = vmatprep.subr.mxu0 0.0
    %4200 = vmatpush1.msra.mxu0 0.0
    %4201 = vmatprep.subr.mxu0 0.0
    %4202 = vmatpush1.msra.mxu0 0.0
    %4203 = vmatprep.subr.mxu0 0.0
    %4204 = vmatpush1.msra.mxu0 0.0
    %4205 = vmatprep.subr.mxu0 0.0
    %4206 = vmatpush1.msra.mxu0 0.0
    %4207 = vmatprep.subr.mxu0 0.0
    %4208 = vmatpush1.msra.mxu0 0.0
    %4209 = vmatprep.subr.mxu0 0.0
    %4210 = vmatpush1.msra.mxu0 0.0
    %4211 = vmatprep.subr.mxu0 0.0
    %4212 = vmatpush1.msra.mxu0 0.0
    %4213 = vmatprep.mubr.f32.mxu0 0.0
    %4214 = vmatmul.mubr.f32.gmra.mrb[0].mxu0 %v4126
    %v4215 = vpop.f32.mrb[0].mxu0
    %v4216 = vadd.f32 %v4087, %v4215
    %v4217 = vpop.f32.mrb[0].mxu0
    %4218 = vmatprep.mubr.f32.mxu0 0.0
    %4219 = vmatmul.mubr.f32.gmra.mrb[0].mxu0 %v4129
    %v4220 = vpop.f32.mrb[0].mxu0
    %v4221 = vadd.f32 %v4092, %v4220
    %v4222 = vpop.f32.mrb[0].mxu0
    %4223 = vmatprep.mubr.f32.mxu0 0.0
    %4224 = vmatmul.mubr.f32.gmra.mrb[0].mxu0 %v4132
    %v4225 = vpop.f32.mrb[0].mxu0
    %v4226 = vadd.f32 %v4097, %v4225
    %v4227 = vpop.f32.mrb[0].mxu0
    %4228 = vmatprep.mubr.f32.mxu0 0.0
    %4229 = vmatmul.mubr.f32.gmra.mrb[0].mxu0 %v4135
    %v4230 = vpop.f32.mrb[0].mxu0
    %v4231 = vadd.f32 %v4102, %v4230
    %v4232 = vpop.f32.mrb[0].mxu0
    %4233 = vmatprep.mubr.f32.mxu0 0.0
    %4234 = vmatmul.mubr.f32.gmra.mrb[0].mxu0 %v4138
    %v4235 = vpop.f32.mrb[0].mxu0
    %v4236 = vadd.f32 %v4107, %v4235
    %v4237 = vpop.f32.mrb[0].mxu0
    %4238 = vmatprep.mubr.f32.mxu0 0.0
    %4239 = vmatmul.mubr.f32.gmra.mrb[0].mxu0 %v4141
    %v4240 = vpop.f32.mrb[0].mxu0
    %v4241 = vadd.f32 %v4112, %v4240
    %v4242 = vpop.f32.mrb[0].mxu0
    %4243 = vmatprep.mubr.f32.mxu0 0.0
    %4244 = vmatmul.mubr.f32.gmra.mrb[0].mxu0 %v4144
    %v4245 = vpop.f32.mrb[0].mxu0
    %v4246 = vadd.f32 %v4117, %v4245
    %v4247 = vpop.f32.mrb[0].mxu0
    %4248 = vmatprep.mubr.f32.mxu0 0.0
    %4249 = vmatmul.mubr.f32.gmra.mrb[0].mxu0 %v4147
    %v4250 = vpop.f32.mrb[0].mxu0
    %v4251 = vadd.f32 %v4122, %v4250
    %v4252 = vpop.f32.mrb[0].mxu0
    %4253 = vdwg.mxu0
    %v4255 = vsel %vm1092, %v3988, 0
    %v4258 = vsel %vm1092, %v3989, 0
    %v4261 = vsel %vm1092, %v3990, 0
    %v4264 = vsel %vm1092, %v3991, 0
    %v4267 = vsel %vm1092, %v3992, 0
    %v4270 = vsel %vm1092, %v3993, 0
    %v4273 = vsel %vm1092, %v3994, 0
    %v4276 = vsel %vm1092, %v3995, 0
    %4278 = vmatprep.subr.mxu0 0.0
    %4279 = vmatpush1.msra.mxu0 %v3970
    %4280 = vmatprep.subr.mxu0 0.0
    %4281 = vmatpush1.msra.mxu0 0.0
    %4282 = vmatprep.subr.mxu0 0.0
    %4283 = vmatpush1.msra.mxu0 0.0
    %4284 = vmatprep.subr.mxu0 0.0
    %4285 = vmatpush1.msra.mxu0 0.0
    %4286 = vmatprep.subr.mxu0 0.0
    %4287 = vmatpush1.msra.mxu0 0.0
    %4288 = vmatprep.subr.mxu0 0.0
    %4289 = vmatpush1.msra.mxu0 0.0
    %4290 = vmatprep.subr.mxu0 0.0
    %4291 = vmatpush1.msra.mxu0 0.0
    %4292 = vmatprep.subr.mxu0 0.0
    %4293 = vmatpush1.msra.mxu0 0.0
    %4294 = vmatprep.subr.mxu0 0.0
    %4295 = vmatpush1.msra.mxu0 0.0
    %4296 = vmatprep.subr.mxu0 0.0
    %4297 = vmatpush1.msra.mxu0 0.0
    %4298 = vmatprep.subr.mxu0 0.0
    %4299 = vmatpush1.msra.mxu0 0.0
    %4300 = vmatprep.subr.mxu0 0.0
    %4301 = vmatpush1.msra.mxu0 0.0
    %4302 = vmatprep.subr.mxu0 0.0
    %4303 = vmatpush1.msra.mxu0 0.0
    %4304 = vmatprep.subr.mxu0 0.0
    %4305 = vmatpush1.msra.mxu0 0.0
    %4306 = vmatprep.subr.mxu0 0.0
    %4307 = vmatpush1.msra.mxu0 0.0
    %4308 = vmatprep.subr.mxu0 0.0
    %4309 = vmatpush1.msra.mxu0 0.0
    %4310 = vmatprep.subr.mxu0 0.0
    %4311 = vmatpush1.msra.mxu0 0.0
    %4312 = vmatprep.subr.mxu0 0.0
    %4313 = vmatpush1.msra.mxu0 0.0
    %4314 = vmatprep.subr.mxu0 0.0
    %4315 = vmatpush1.msra.mxu0 0.0
    %4316 = vmatprep.subr.mxu0 0.0
    %4317 = vmatpush1.msra.mxu0 0.0
    %4318 = vmatprep.subr.mxu0 0.0
    %4319 = vmatpush1.msra.mxu0 0.0
    %4320 = vmatprep.subr.mxu0 0.0
    %4321 = vmatpush1.msra.mxu0 0.0
    %4322 = vmatprep.subr.mxu0 0.0
    %4323 = vmatpush1.msra.mxu0 0.0
    %4324 = vmatprep.subr.mxu0 0.0
    %4325 = vmatpush1.msra.mxu0 0.0
    %4326 = vmatprep.subr.mxu0 0.0
    %4327 = vmatpush1.msra.mxu0 0.0
    %4328 = vmatprep.subr.mxu0 0.0
    %4329 = vmatpush1.msra.mxu0 0.0
    %4330 = vmatprep.subr.mxu0 0.0
    %4331 = vmatpush1.msra.mxu0 0.0
    %4332 = vmatprep.subr.mxu0 0.0
    %4333 = vmatpush1.msra.mxu0 0.0
    %4334 = vmatprep.subr.mxu0 0.0
    %4335 = vmatpush1.msra.mxu0 0.0
    %4336 = vmatprep.subr.mxu0 0.0
    %4337 = vmatpush1.msra.mxu0 0.0
    %4338 = vmatprep.subr.mxu0 0.0
    %4339 = vmatpush1.msra.mxu0 0.0
    %4340 = vmatprep.subr.mxu0 0.0
    %4341 = vmatpush1.msra.mxu0 0.0
    %4342 = vmatprep.mubr.f32.mxu0 0.0
    %4343 = vmatmul.mubr.f32.gmra.mrb[0].mxu0 %v4255
    %v4344 = vpop.f32.mrb[0].mxu0
    %v4345 = vadd.f32 0.0, %v4344
    %v4346 = vpop.f32.mrb[0].mxu0
    %4347 = vmatprep.mubr.f32.mxu0 0.0
    %4348 = vmatmul.mubr.f32.gmra.mrb[0].mxu0 %v4258
    %v4349 = vpop.f32.mrb[0].mxu0
    %v4350 = vadd.f32 0.0, %v4349
    %v4351 = vpop.f32.mrb[0].mxu0
    %4352 = vmatprep.mubr.f32.mxu0 0.0
    %4353 = vmatmul.mubr.f32.gmra.mrb[0].mxu0 %v4261
    %v4354 = vpop.f32.mrb[0].mxu0
    %v4355 = vadd.f32 0.0, %v4354
    %v4356 = vpop.f32.mrb[0].mxu0
    %4357 = vmatprep.mubr.f32.mxu0 0.0
    %4358 = vmatmul.mubr.f32.gmra.mrb[0].mxu0 %v4264
    %v4359 = vpop.f32.mrb[0].mxu0
    %v4360 = vadd.f32 0.0, %v4359
    %v4361 = vpop.f32.mrb[0].mxu0
    %4362 = vmatprep.mubr.f32.mxu0 0.0
    %4363 = vmatmul.mubr.f32.gmra.mrb[0].mxu0 %v4267
    %v4364 = vpop.f32.mrb[0].mxu0
    %v4365 = vadd.f32 0.0, %v4364
    %v4366 = vpop.f32.mrb[0].mxu0
    %4367 = vmatprep.mubr.f32.mxu0 0.0
    %4368 = vmatmul.mubr.f32.gmra.mrb[0].mxu0 %v4270
    %v4369 = vpop.f32.mrb[0].mxu0
    %v4370 = vadd.f32 0.0, %v4369
    %v4371 = vpop.f32.mrb[0].mxu0
    %4372 = vmatprep.mubr.f32.mxu0 0.0
    %4373 = vmatmul.mubr.f32.gmra.mrb[0].mxu0 %v4273
    %v4374 = vpop.f32.mrb[0].mxu0
    %v4375 = vadd.f32 0.0, %v4374
    %v4376 = vpop.f32.mrb[0].mxu0
    %4377 = vmatprep.mubr.f32.mxu0 0.0
    %4378 = vmatmul.mubr.f32.gmra.mrb[0].mxu0 %v4276
    %v4379 = vpop.f32.mrb[0].mxu0
    %v4380 = vadd.f32 0.0, %v4379
    %v4381 = vpop.f32.mrb[0].mxu0
    %4382 = vdwg.mxu0
    %4383 = vmatprep.subr.mxu0 0.0
    %4384 = vmatpush1.msra.mxu0 %v3969
    %4385 = vmatprep.subr.mxu0 0.0
    %4386 = vmatpush1.msra.mxu0 0.0
    %4387 = vmatprep.subr.mxu0 0.0
    %4388 = vmatpush1.msra.mxu0 0.0
    %4389 = vmatprep.subr.mxu0 0.0
    %4390 = vmatpush1.msra.mxu0 0.0
    %4391 = vmatprep.subr.mxu0 0.0
    %4392 = vmatpush1.msra.mxu0 0.0
    %4393 = vmatprep.subr.mxu0 0.0
    %4394 = vmatpush1.msra.mxu0 0.0
    %4395 = vmatprep.subr.mxu0 0.0
    %4396 = vmatpush1.msra.mxu0 0.0
    %4397 = vmatprep.subr.mxu0 0.0
    %4398 = vmatpush1.msra.mxu0 0.0
    %4399 = vmatprep.subr.mxu0 0.0
    %4400 = vmatpush1.msra.mxu0 0.0
    %4401 = vmatprep.subr.mxu0 0.0
    %4402 = vmatpush1.msra.mxu0 0.0
    %4403 = vmatprep.subr.mxu0 0.0
    %4404 = vmatpush1.msra.mxu0 0.0
    %4405 = vmatprep.subr.mxu0 0.0
    %4406 = vmatpush1.msra.mxu0 0.0
    %4407 = vmatprep.subr.mxu0 0.0
    %4408 = vmatpush1.msra.mxu0 0.0
    %4409 = vmatprep.subr.mxu0 0.0
    %4410 = vmatpush1.msra.mxu0 0.0
    %4411 = vmatprep.subr.mxu0 0.0
    %4412 = vmatpush1.msra.mxu0 0.0
    %4413 = vmatprep.subr.mxu0 0.0
    %4414 = vmatpush1.msra.mxu0 0.0
    %4415 = vmatprep.subr.mxu0 0.0
    %4416 = vmatpush1.msra.mxu0 0.0
    %4417 = vmatprep.subr.mxu0 0.0
    %4418 = vmatpush1.msra.mxu0 0.0
    %4419 = vmatprep.subr.mxu0 0.0
    %4420 = vmatpush1.msra.mxu0 0.0
    %4421 = vmatprep.subr.mxu0 0.0
    %4422 = vmatpush1.msra.mxu0 0.0
    %4423 = vmatprep.subr.mxu0 0.0
    %4424 = vmatpush1.msra.mxu0 0.0
    %4425 = vmatprep.subr.mxu0 0.0
    %4426 = vmatpush1.msra.mxu0 0.0
    %4427 = vmatprep.subr.mxu0 0.0
    %4428 = vmatpush1.msra.mxu0 0.0
    %4429 = vmatprep.subr.mxu0 0.0
    %4430 = vmatpush1.msra.mxu0 0.0
    %4431 = vmatprep.subr.mxu0 0.0
    %4432 = vmatpush1.msra.mxu0 0.0
    %4433 = vmatprep.subr.mxu0 0.0
    %4434 = vmatpush1.msra.mxu0 0.0
    %4435 = vmatprep.subr.mxu0 0.0
    %4436 = vmatpush1.msra.mxu0 0.0
    %4437 = vmatprep.subr.mxu0 0.0
    %4438 = vmatpush1.msra.mxu0 0.0
    %4439 = vmatprep.subr.mxu0 0.0
    %4440 = vmatpush1.msra.mxu0 0.0
    %4441 = vmatprep.subr.mxu0 0.0
    %4442 = vmatpush1.msra.mxu0 0.0
    %4443 = vmatprep.subr.mxu0 0.0
    %4444 = vmatpush1.msra.mxu0 0.0
    %4445 = vmatprep.subr.mxu0 0.0
    %4446 = vmatpush1.msra.mxu0 0.0
    %4447 = vmatprep.mubr.f32.mxu0 0.0
    %4448 = vmatmul.mubr.f32.gmra.mrb[0].mxu0 %v3997
    %v4449 = vpop.f32.mrb[0].mxu0
    %v4450 = vadd.f32 %v4345, %v4449
    %v4451 = vpop.f32.mrb[0].mxu0
    %4452 = vmatprep.mubr.f32.mxu0 0.0
    %4453 = vmatmul.mubr.f32.gmra.mrb[0].mxu0 %v4000
    %v4454 = vpop.f32.mrb[0].mxu0
    %v4455 = vadd.f32 %v4350, %v4454
    %v4456 = vpop.f32.mrb[0].mxu0
    %4457 = vmatprep.mubr.f32.mxu0 0.0
    %4458 = vmatmul.mubr.f32.gmra.mrb[0].mxu0 %v4003
    %v4459 = vpop.f32.mrb[0].mxu0
    %v4460 = vadd.f32 %v4355, %v4459
    %v4461 = vpop.f32.mrb[0].mxu0
    %4462 = vmatprep.mubr.f32.mxu0 0.0
    %4463 = vmatmul.mubr.f32.gmra.mrb[0].mxu0 %v4006
    %v4464 = vpop.f32.mrb[0].mxu0
    %v4465 = vadd.f32 %v4360, %v4464
    %v4466 = vpop.f32.mrb[0].mxu0
    %4467 = vmatprep.mubr.f32.mxu0 0.0
    %4468 = vmatmul.mubr.f32.gmra.mrb[0].mxu0 %v4009
    %v4469 = vpop.f32.mrb[0].mxu0
    %v4470 = vadd.f32 %v4365, %v4469
    %v4471 = vpop.f32.mrb[0].mxu0
    %4472 = vmatprep.mubr.f32.mxu0 0.0
    %4473 = vmatmul.mubr.f32.gmra.mrb[0].mxu0 %v4012
    %v4474 = vpop.f32.mrb[0].mxu0
    %v4475 = vadd.f32 %v4370, %v4474
    %v4476 = vpop.f32.mrb[0].mxu0
    %4477 = vmatprep.mubr.f32.mxu0 0.0
    %4478 = vmatmul.mubr.f32.gmra.mrb[0].mxu0 %v4015
    %v4479 = vpop.f32.mrb[0].mxu0
    %v4480 = vadd.f32 %v4375, %v4479
    %v4481 = vpop.f32.mrb[0].mxu0
    %4482 = vmatprep.mubr.f32.mxu0 0.0
    %4483 = vmatmul.mubr.f32.gmra.mrb[0].mxu0 %v4018
    %v4484 = vpop.f32.mrb[0].mxu0
    %v4485 = vadd.f32 %v4380, %v4484
    %v4486 = vpop.f32.mrb[0].mxu0
    %4487 = vdwg.mxu0
    %v4488 = vmax.f32 %v4216, %v4450
    %v4489 = vmax.f32 %v4221, %v4455
    %v4490 = vmax.f32 %v4226, %v4460
    %v4491 = vmax.f32 %v4231, %v4465
    %v4492 = vmax.f32 %v4236, %v4470
    %v4493 = vmax.f32 %v4241, %v4475
    %v4494 = vmax.f32 %v4246, %v4480
    %v4495 = vmax.f32 %v4251, %v4485
    %v4497 = vlaneseq
    %v4498 = vshrl.u32 %v4497, 7
    %v4499 = vsub.s32 0, %v4498
    %v4500 = vrot.slane %v3971, %v4499
    %v4502 = vadd.f32 %v4488, %v4500
    %v4503 = vadd.f32 %v4489, %v4500
    %v4504 = vadd.f32 %v4490, %v4500
    %v4505 = vadd.f32 %v4491, %v4500
    %v4506 = vadd.f32 %v4492, %v4500
    %v4507 = vadd.f32 %v4493, %v4500
    %v4508 = vadd.f32 %v4494, %v4500
    %v4509 = vadd.f32 %v4495, %v4500
    %v4510 = vmax.f32 %v4502, 0.0
    %v4511 = vmax.f32 %v4503, 0.0
    %v4512 = vmax.f32 %v4504, 0.0
    %v4513 = vmax.f32 %v4505, 0.0
    %v4514 = vmax.f32 %v4506, 0.0
    %v4515 = vmax.f32 %v4507, 0.0
    %v4516 = vmax.f32 %v4508, 0.0
    %v4517 = vmax.f32 %v4509, 0.0
    %4518 = vst.msk [vmem:[#allocation3] sm:$0xff] %vm1682, %v4510
    %4519 = vst.msk [vmem:[#allocation3 + $0x8] sm:$0xff] %vm1682, %v4511
    %4520 = vst.msk [vmem:[#allocation3 + $0x10] sm:$0xff] %vm1682, %v4512
    %4521 = vst.msk [vmem:[#allocation3 + $0x18] sm:$0xff] %vm1682, %v4513
    %4522 = vst.msk [vmem:[#allocation3 + $0x20] sm:$0xff] %vm1682, %v4514
    %4523 = vst.msk [vmem:[#allocation3 + $0x28] sm:$0xff] %vm1682, %v4515
    %4524 = vst.msk [vmem:[#allocation3 + $0x30] sm:$0xff] %vm1682, %v4516
    %4525 = vst.msk [vmem:[#allocation3 + $0x38] sm:$0x7f] %vm1690, %v4517
    %v4526 = vld [vmem:[#allocation16] sm:$0xff]
    %v4527 = vld [vmem:[#allocation16 + $0x8] sm:$0xff]
    %v4528 = vld [vmem:[#allocation18] sm:$0xff]
    %v4529 = vld [vmem:[#allocation18 + $0x8] sm:$0xff]
    %v4530 = vld [vmem:[#allocation19] sm:$0x1]
    %v4531 = vld [vmem:[#allocation3] ss:$2 sm:$0xff]
    %v4532 = vld [vmem:[%s1698] ss:$2 sm:$0xff]
    %v4533 = vld [vmem:[%s1700] ss:$2 sm:$0xff]
    %v4534 = vld [vmem:[%s1702] ss:$2 sm:$0x7f]
    %v4535 = vld [vmem:[%s1704] ss:$2 sm:$0xff]
    %v4536 = vld [vmem:[%s1706] ss:$2 sm:$0xff]
    %v4537 = vld [vmem:[%s1708] ss:$2 sm:$0xff]
    %v4538 = vld [vmem:[%s1710] ss:$2 sm:$0x7f]
    %v4539 = vld [vmem:[%s1712] ss:$2 sm:$0xff]
    %v4540 = vld [vmem:[%s1714] ss:$2 sm:$0xff]
    %v4541 = vld [vmem:[%s1716] ss:$2 sm:$0xff]
    %v4542 = vld [vmem:[%s1718] ss:$2 sm:$0x7f]
    %v4544 = vsel %vm1682, %v4535, 0
    %v4547 = vsel %vm1682, %v4536, 0
    %v4550 = vsel %vm1682, %v4537, 0
    %v4553 = vsel %vm1682, %v4538, 0
    %4555 = vmatprep.subr.mxu0 0.0
    %4556 = vmatpush1.msra.mxu0 %v4528
    %4557 = vmatprep.subr.mxu0 0.0
    %4558 = vmatpush1.msra.mxu0 %v4529
    %4559 = vmatprep.subr.mxu0 0.0
    %4560 = vmatpush1.msra.mxu0 0.0
    %4561 = vmatprep.subr.mxu0 0.0
    %4562 = vmatpush1.msra.mxu0 0.0
    %4563 = vmatprep.subr.mxu0 0.0
    %4564 = vmatpush1.msra.mxu0 0.0
    %4565 = vmatprep.subr.mxu0 0.0
    %4566 = vmatpush1.msra.mxu0 0.0
    %4567 = vmatprep.subr.mxu0 0.0
    %4568 = vmatpush1.msra.mxu0 0.0
    %4569 = vmatprep.subr.mxu0 0.0
    %4570 = vmatpush1.msra.mxu0 0.0
    %4571 = vmatprep.subr.mxu0 0.0
    %4572 = vmatpush1.msra.mxu0 0.0
    %4573 = vmatprep.subr.mxu0 0.0
    %4574 = vmatpush1.msra.mxu0 0.0
    %4575 = vmatprep.subr.mxu0 0.0
    %4576 = vmatpush1.msra.mxu0 0.0
    %4577 = vmatprep.subr.mxu0 0.0
    %4578 = vmatpush1.msra.mxu0 0.0
    %4579 = vmatprep.subr.mxu0 0.0
    %4580 = vmatpush1.msra.mxu0 0.0
    %4581 = vmatprep.subr.mxu0 0.0
    %4582 = vmatpush1.msra.mxu0 0.0
    %4583 = vmatprep.subr.mxu0 0.0
    %4584 = vmatpush1.msra.mxu0 0.0
    %4585 = vmatprep.subr.mxu0 0.0
    %4586 = vmatpush1.msra.mxu0 0.0
    %4587 = vmatprep.subr.mxu0 0.0
    %4588 = vmatpush1.msra.mxu0 0.0
    %4589 = vmatprep.subr.mxu0 0.0
    %4590 = vmatpush1.msra.mxu0 0.0
    %4591 = vmatprep.subr.mxu0 0.0
    %4592 = vmatpush1.msra.mxu0 0.0
    %4593 = vmatprep.subr.mxu0 0.0
    %4594 = vmatpush1.msra.mxu0 0.0
    %4595 = vmatprep.subr.mxu0 0.0
    %4596 = vmatpush1.msra.mxu0 0.0
    %4597 = vmatprep.subr.mxu0 0.0
    %4598 = vmatpush1.msra.mxu0 0.0
    %4599 = vmatprep.subr.mxu0 0.0
    %4600 = vmatpush1.msra.mxu0 0.0
    %4601 = vmatprep.subr.mxu0 0.0
    %4602 = vmatpush1.msra.mxu0 0.0
    %4603 = vmatprep.subr.mxu0 0.0
    %4604 = vmatpush1.msra.mxu0 0.0
    %4605 = vmatprep.subr.mxu0 0.0
    %4606 = vmatpush1.msra.mxu0 0.0
    %4607 = vmatprep.subr.mxu0 0.0
    %4608 = vmatpush1.msra.mxu0 0.0
    %4609 = vmatprep.subr.mxu0 0.0
    %4610 = vmatpush1.msra.mxu0 0.0
    %4611 = vmatprep.subr.mxu0 0.0
    %4612 = vmatpush1.msra.mxu0 0.0
    %4613 = vmatprep.subr.mxu0 0.0
    %4614 = vmatpush1.msra.mxu0 0.0
    %4615 = vmatprep.subr.mxu0 0.0
    %4616 = vmatpush1.msra.mxu0 0.0
    %4617 = vmatprep.subr.mxu0 0.0
    %4618 = vmatpush1.msra.mxu0 0.0
    %4619 = vmatprep.mubr.f32.mxu0 0.0
    %4620 = vmatmul.mubr.f32.gmra.mrb[0].mxu0 %v4544
    %v4621 = vpop.f32.mrb[0].mxu0
    %v4622 = vadd.f32 0.0, %v4621
    %v4623 = vpop.f32.mrb[0].mxu0
    %4624 = vmatprep.mubr.f32.mxu0 0.0
    %4625 = vmatmul.mubr.f32.gmra.mrb[0].mxu0 %v4547
    %v4626 = vpop.f32.mrb[0].mxu0
    %v4627 = vadd.f32 0.0, %v4626
    %v4628 = vpop.f32.mrb[0].mxu0
    %4629 = vmatprep.mubr.f32.mxu0 0.0
    %4630 = vmatmul.mubr.f32.gmra.mrb[0].mxu0 %v4550
    %v4631 = vpop.f32.mrb[0].mxu0
    %v4632 = vadd.f32 0.0, %v4631
    %v4633 = vpop.f32.mrb[0].mxu0
    %4634 = vmatprep.mubr.f32.mxu0 0.0
    %4635 = vmatmul.mubr.f32.gmra.mrb[0].mxu0 %v4553
    %v4636 = vpop.f32.mrb[0].mxu0
    %v4637 = vadd.f32 0.0, %v4636
    %v4638 = vpop.f32.mrb[0].mxu0
    %4639 = vdwg.mxu0
    %v4641 = vsel %vm1682, %v4531, 0
    %v4644 = vsel %vm1682, %v4532, 0
    %v4647 = vsel %vm1682, %v4533, 0
    %v4650 = vsel %vm1682, %v4534, 0
    %4652 = vmatprep.subr.mxu0 0.0
    %4653 = vmatpush1.msra.mxu0 %v4526
    %4654 = vmatprep.subr.mxu0 0.0
    %4655 = vmatpush1.msra.mxu0 %v4527
    %4656 = vmatprep.subr.mxu0 0.0
    %4657 = vmatpush1.msra.mxu0 0.0
    %4658 = vmatprep.subr.mxu0 0.0
    %4659 = vmatpush1.msra.mxu0 0.0
    %4660 = vmatprep.subr.mxu0 0.0
    %4661 = vmatpush1.msra.mxu0 0.0
    %4662 = vmatprep.subr.mxu0 0.0
    %4663 = vmatpush1.msra.mxu0 0.0
    %4664 = vmatprep.subr.mxu0 0.0
    %4665 = vmatpush1.msra.mxu0 0.0
    %4666 = vmatprep.subr.mxu0 0.0
    %4667 = vmatpush1.msra.mxu0 0.0
    %4668 = vmatprep.subr.mxu0 0.0
    %4669 = vmatpush1.msra.mxu0 0.0
    %4670 = vmatprep.subr.mxu0 0.0
    %4671 = vmatpush1.msra.mxu0 0.0
    %4672 = vmatprep.subr.mxu0 0.0
    %4673 = vmatpush1.msra.mxu0 0.0
    %4674 = vmatprep.subr.mxu0 0.0
    %4675 = vmatpush1.msra.mxu0 0.0
    %4676 = vmatprep.subr.mxu0 0.0
    %4677 = vmatpush1.msra.mxu0 0.0
    %4678 = vmatprep.subr.mxu0 0.0
    %4679 = vmatpush1.msra.mxu0 0.0
    %4680 = vmatprep.subr.mxu0 0.0
    %4681 = vmatpush1.msra.mxu0 0.0
    %4682 = vmatprep.subr.mxu0 0.0
    %4683 = vmatpush1.msra.mxu0 0.0
    %4684 = vmatprep.subr.mxu0 0.0
    %4685 = vmatpush1.msra.mxu0 0.0
    %4686 = vmatprep.subr.mxu0 0.0
    %4687 = vmatpush1.msra.mxu0 0.0
    %4688 = vmatprep.subr.mxu0 0.0
    %4689 = vmatpush1.msra.mxu0 0.0
    %4690 = vmatprep.subr.mxu0 0.0
    %4691 = vmatpush1.msra.mxu0 0.0
    %4692 = vmatprep.subr.mxu0 0.0
    %4693 = vmatpush1.msra.mxu0 0.0
    %4694 = vmatprep.subr.mxu0 0.0
    %4695 = vmatpush1.msra.mxu0 0.0
    %4696 = vmatprep.subr.mxu0 0.0
    %4697 = vmatpush1.msra.mxu0 0.0
    %4698 = vmatprep.subr.mxu0 0.0
    %4699 = vmatpush1.msra.mxu0 0.0
    %4700 = vmatprep.subr.mxu0 0.0
    %4701 = vmatpush1.msra.mxu0 0.0
    %4702 = vmatprep.subr.mxu0 0.0
    %4703 = vmatpush1.msra.mxu0 0.0
    %4704 = vmatprep.subr.mxu0 0.0
    %4705 = vmatpush1.msra.mxu0 0.0
    %4706 = vmatprep.subr.mxu0 0.0
    %4707 = vmatpush1.msra.mxu0 0.0
    %4708 = vmatprep.subr.mxu0 0.0
    %4709 = vmatpush1.msra.mxu0 0.0
    %4710 = vmatprep.subr.mxu0 0.0
    %4711 = vmatpush1.msra.mxu0 0.0
    %4712 = vmatprep.subr.mxu0 0.0
    %4713 = vmatpush1.msra.mxu0 0.0
    %4714 = vmatprep.subr.mxu0 0.0
    %4715 = vmatpush1.msra.mxu0 0.0
    %4716 = vmatprep.mubr.f32.mxu0 0.0
    %4717 = vmatmul.mubr.f32.gmra.mrb[0].mxu0 %v4641
    %v4718 = vpop.f32.mrb[0].mxu0
    %v4719 = vadd.f32 %v4622, %v4718
    %v4720 = vpop.f32.mrb[0].mxu0
    %4721 = vmatprep.mubr.f32.mxu0 0.0
    %4722 = vmatmul.mubr.f32.gmra.mrb[0].mxu0 %v4644
    %v4723 = vpop.f32.mrb[0].mxu0
    %v4724 = vadd.f32 %v4627, %v4723
    %v4725 = vpop.f32.mrb[0].mxu0
    %4726 = vmatprep.mubr.f32.mxu0 0.0
    %4727 = vmatmul.mubr.f32.gmra.mrb[0].mxu0 %v4647
    %v4728 = vpop.f32.mrb[0].mxu0
    %v4729 = vadd.f32 %v4632, %v4728
    %v4730 = vpop.f32.mrb[0].mxu0
    %4731 = vmatprep.mubr.f32.mxu0 0.0
    %4732 = vmatmul.mubr.f32.gmra.mrb[0].mxu0 %v4650
    %v4733 = vpop.f32.mrb[0].mxu0
    %v4734 = vadd.f32 %v4637, %v4733
    %v4735 = vpop.f32.mrb[0].mxu0
    %4736 = vdwg.mxu0
    %v4738 = vsel %vm1682, %v4539, 0
    %v4741 = vsel %vm1682, %v4540, 0
    %v4744 = vsel %vm1682, %v4541, 0
    %v4747 = vsel %vm1682, %v4542, 0
    %4749 = vmatprep.subr.mxu0 0.0
    %4750 = vmatpush1.msra.mxu0 %v4528
    %4751 = vmatprep.subr.mxu0 0.0
    %4752 = vmatpush1.msra.mxu0 %v4529
    %4753 = vmatprep.subr.mxu0 0.0
    %4754 = vmatpush1.msra.mxu0 0.0
    %4755 = vmatprep.subr.mxu0 0.0
    %4756 = vmatpush1.msra.mxu0 0.0
    %4757 = vmatprep.subr.mxu0 0.0
    %4758 = vmatpush1.msra.mxu0 0.0
    %4759 = vmatprep.subr.mxu0 0.0
    %4760 = vmatpush1.msra.mxu0 0.0
    %4761 = vmatprep.subr.mxu0 0.0
    %4762 = vmatpush1.msra.mxu0 0.0
    %4763 = vmatprep.subr.mxu0 0.0
    %4764 = vmatpush1.msra.mxu0 0.0
    %4765 = vmatprep.subr.mxu0 0.0
    %4766 = vmatpush1.msra.mxu0 0.0
    %4767 = vmatprep.subr.mxu0 0.0
    %4768 = vmatpush1.msra.mxu0 0.0
    %4769 = vmatprep.subr.mxu0 0.0
    %4770 = vmatpush1.msra.mxu0 0.0
    %4771 = vmatprep.subr.mxu0 0.0
    %4772 = vmatpush1.msra.mxu0 0.0
    %4773 = vmatprep.subr.mxu0 0.0
    %4774 = vmatpush1.msra.mxu0 0.0
    %4775 = vmatprep.subr.mxu0 0.0
    %4776 = vmatpush1.msra.mxu0 0.0
    %4777 = vmatprep.subr.mxu0 0.0
    %4778 = vmatpush1.msra.mxu0 0.0
    %4779 = vmatprep.subr.mxu0 0.0
    %4780 = vmatpush1.msra.mxu0 0.0
    %4781 = vmatprep.subr.mxu0 0.0
    %4782 = vmatpush1.msra.mxu0 0.0
    %4783 = vmatprep.subr.mxu0 0.0
    %4784 = vmatpush1.msra.mxu0 0.0
    %4785 = vmatprep.subr.mxu0 0.0
    %4786 = vmatpush1.msra.mxu0 0.0
    %4787 = vmatprep.subr.mxu0 0.0
    %4788 = vmatpush1.msra.mxu0 0.0
    %4789 = vmatprep.subr.mxu0 0.0
    %4790 = vmatpush1.msra.mxu0 0.0
    %4791 = vmatprep.subr.mxu0 0.0
    %4792 = vmatpush1.msra.mxu0 0.0
    %4793 = vmatprep.subr.mxu0 0.0
    %4794 = vmatpush1.msra.mxu0 0.0
    %4795 = vmatprep.subr.mxu0 0.0
    %4796 = vmatpush1.msra.mxu0 0.0
    %4797 = vmatprep.subr.mxu0 0.0
    %4798 = vmatpush1.msra.mxu0 0.0
    %4799 = vmatprep.subr.mxu0 0.0
    %4800 = vmatpush1.msra.mxu0 0.0
    %4801 = vmatprep.subr.mxu0 0.0
    %4802 = vmatpush1.msra.mxu0 0.0
    %4803 = vmatprep.subr.mxu0 0.0
    %4804 = vmatpush1.msra.mxu0 0.0
    %4805 = vmatprep.subr.mxu0 0.0
    %4806 = vmatpush1.msra.mxu0 0.0
    %4807 = vmatprep.subr.mxu0 0.0
    %4808 = vmatpush1.msra.mxu0 0.0
    %4809 = vmatprep.subr.mxu0 0.0
    %4810 = vmatpush1.msra.mxu0 0.0
    %4811 = vmatprep.subr.mxu0 0.0
    %4812 = vmatpush1.msra.mxu0 0.0
    %4813 = vmatprep.mubr.f32.mxu0 0.0
    %4814 = vmatmul.mubr.f32.gmra.mrb[0].mxu0 %v4738
    %v4815 = vpop.f32.mrb[0].mxu0
    %v4816 = vadd.f32 0.0, %v4815
    %v4817 = vpop.f32.mrb[0].mxu0
    %4818 = vmatprep.mubr.f32.mxu0 0.0
    %4819 = vmatmul.mubr.f32.gmra.mrb[0].mxu0 %v4741
    %v4820 = vpop.f32.mrb[0].mxu0
    %v4821 = vadd.f32 0.0, %v4820
    %v4822 = vpop.f32.mrb[0].mxu0
    %4823 = vmatprep.mubr.f32.mxu0 0.0
    %4824 = vmatmul.mubr.f32.gmra.mrb[0].mxu0 %v4744
    %v4825 = vpop.f32.mrb[0].mxu0
    %v4826 = vadd.f32 0.0, %v4825
    %v4827 = vpop.f32.mrb[0].mxu0
    %4828 = vmatprep.mubr.f32.mxu0 0.0
    %4829 = vmatmul.mubr.f32.gmra.mrb[0].mxu0 %v4747
    %v4830 = vpop.f32.mrb[0].mxu0
    %v4831 = vadd.f32 0.0, %v4830
    %v4832 = vpop.f32.mrb[0].mxu0
    %4833 = vdwg.mxu0
    %4834 = vmatprep.subr.mxu0 0.0
    %4835 = vmatpush1.msra.mxu0 %v4526
    %4836 = vmatprep.subr.mxu0 0.0
    %4837 = vmatpush1.msra.mxu0 %v4527
    %4838 = vmatprep.subr.mxu0 0.0
    %4839 = vmatpush1.msra.mxu0 0.0
    %4840 = vmatprep.subr.mxu0 0.0
    %4841 = vmatpush1.msra.mxu0 0.0
    %4842 = vmatprep.subr.mxu0 0.0
    %4843 = vmatpush1.msra.mxu0 0.0
    %4844 = vmatprep.subr.mxu0 0.0
    %4845 = vmatpush1.msra.mxu0 0.0
    %4846 = vmatprep.subr.mxu0 0.0
    %4847 = vmatpush1.msra.mxu0 0.0
    %4848 = vmatprep.subr.mxu0 0.0
    %4849 = vmatpush1.msra.mxu0 0.0
    %4850 = vmatprep.subr.mxu0 0.0
    %4851 = vmatpush1.msra.mxu0 0.0
    %4852 = vmatprep.subr.mxu0 0.0
    %4853 = vmatpush1.msra.mxu0 0.0
    %4854 = vmatprep.subr.mxu0 0.0
    %4855 = vmatpush1.msra.mxu0 0.0
    %4856 = vmatprep.subr.mxu0 0.0
    %4857 = vmatpush1.msra.mxu0 0.0
    %4858 = vmatprep.subr.mxu0 0.0
    %4859 = vmatpush1.msra.mxu0 0.0
    %4860 = vmatprep.subr.mxu0 0.0
    %4861 = vmatpush1.msra.mxu0 0.0
    %4862 = vmatprep.subr.mxu0 0.0
    %4863 = vmatpush1.msra.mxu0 0.0
    %4864 = vmatprep.subr.mxu0 0.0
    %4865 = vmatpush1.msra.mxu0 0.0
    %4866 = vmatprep.subr.mxu0 0.0
    %4867 = vmatpush1.msra.mxu0 0.0
    %4868 = vmatprep.subr.mxu0 0.0
    %4869 = vmatpush1.msra.mxu0 0.0
    %4870 = vmatprep.subr.mxu0 0.0
    %4871 = vmatpush1.msra.mxu0 0.0
    %4872 = vmatprep.subr.mxu0 0.0
    %4873 = vmatpush1.msra.mxu0 0.0
    %4874 = vmatprep.subr.mxu0 0.0
    %4875 = vmatpush1.msra.mxu0 0.0
    %4876 = vmatprep.subr.mxu0 0.0
    %4877 = vmatpush1.msra.mxu0 0.0
    %4878 = vmatprep.subr.mxu0 0.0
    %4879 = vmatpush1.msra.mxu0 0.0
    %4880 = vmatprep.subr.mxu0 0.0
    %4881 = vmatpush1.msra.mxu0 0.0
    %4882 = vmatprep.subr.mxu0 0.0
    %4883 = vmatpush1.msra.mxu0 0.0
    %4884 = vmatprep.subr.mxu0 0.0
    %4885 = vmatpush1.msra.mxu0 0.0
    %4886 = vmatprep.subr.mxu0 0.0
    %4887 = vmatpush1.msra.mxu0 0.0
    %4888 = vmatprep.subr.mxu0 0.0
    %4889 = vmatpush1.msra.mxu0 0.0
    %4890 = vmatprep.subr.mxu0 0.0
    %4891 = vmatpush1.msra.mxu0 0.0
    %4892 = vmatprep.subr.mxu0 0.0
    %4893 = vmatpush1.msra.mxu0 0.0
    %4894 = vmatprep.subr.mxu0 0.0
    %4895 = vmatpush1.msra.mxu0 0.0
    %4896 = vmatprep.subr.mxu0 0.0
    %4897 = vmatpush1.msra.mxu0 0.0
    %4898 = vmatprep.mubr.f32.mxu0 0.0
    %4899 = vmatmul.mubr.f32.gmra.mrb[0].mxu0 %v4544
    %v4900 = vpop.f32.mrb[0].mxu0
    %v4901 = vadd.f32 %v4816, %v4900
    %v4902 = vpop.f32.mrb[0].mxu0
    %4903 = vmatprep.mubr.f32.mxu0 0.0
    %4904 = vmatmul.mubr.f32.gmra.mrb[0].mxu0 %v4547
    %v4905 = vpop.f32.mrb[0].mxu0
    %v4906 = vadd.f32 %v4821, %v4905
    %v4907 = vpop.f32.mrb[0].mxu0
    %4908 = vmatprep.mubr.f32.mxu0 0.0
    %4909 = vmatmul.mubr.f32.gmra.mrb[0].mxu0 %v4550
    %v4910 = vpop.f32.mrb[0].mxu0
    %v4911 = vadd.f32 %v4826, %v4910
    %v4912 = vpop.f32.mrb[0].mxu0
    %4913 = vmatprep.mubr.f32.mxu0 0.0
    %4914 = vmatmul.mubr.f32.gmra.mrb[0].mxu0 %v4553
    %v4915 = vpop.f32.mrb[0].mxu0
    %v4916 = vadd.f32 %v4831, %v4915
    %v4917 = vpop.f32.mrb[0].mxu0
    %4918 = vdwg.mxu0
    %v4919 = vmax.f32 %v4719, %v4901
    %v4920 = vmax.f32 %v4724, %v4906
    %v4921 = vmax.f32 %v4729, %v4911
    %v4922 = vmax.f32 %v4734, %v4916
    %v4924 = vlaneseq
    %v4925 = vshrl.u32 %v4924, 7
    %v4926 = vsub.s32 0, %v4925
    %v4927 = vrot.slane %v4530, %v4926
    %v4929 = vadd.f32 %v4919, %v4927
    %v4930 = vadd.f32 %v4920, %v4927
    %v4931 = vadd.f32 %v4921, %v4927
    %v4932 = vadd.f32 %v4922, %v4927
    %v4933 = vmax.f32 %v4929, 0.0
    %v4934 = vmax.f32 %v4930, 0.0
    %v4935 = vmax.f32 %v4931, 0.0
    %v4936 = vmax.f32 %v4932, 0.0
    %4937 = vst.msk [vmem:[#allocation4] sm:$0xff] %vm2114, %v4933
    %4938 = vst.msk [vmem:[#allocation4 + $0x8] sm:$0xff] %vm2114, %v4934
    %4939 = vst.msk [vmem:[#allocation4 + $0x10] sm:$0xff] %vm2114, %v4935
    %4940 = vst.msk [vmem:[#allocation4 + $0x18] sm:$0x7f] %vm2118, %v4936
    %v4941 = vld [vmem:[#allocation21] sm:$0xff]
    %v4942 = vld [vmem:[#allocation21 + $0x8] sm:$0xff]
    %v4943 = vld [vmem:[#allocation21 + $0x10] sm:$0xff]
    %v4944 = vld [vmem:[#allocation21 + $0x18] sm:$0xff]
    %v4945 = vld [vmem:[#allocation22] sm:$0xff]
    %v4946 = vld [vmem:[#allocation22 + $0x8] sm:$0xff]
    %v4947 = vld [vmem:[#allocation22 + $0x10] sm:$0xff]
    %v4948 = vld [vmem:[#allocation22 + $0x18] sm:$0xff]
    %v4949 = vld [vmem:[%s12] sm:$0x1]
    %v4950 = vld [vmem:[#allocation4] ss:$2 sm:$0xff]
    %v4951 = vld [vmem:[%s2130] ss:$2 sm:$0x7f]
    %v4952 = vld [vmem:[%s2132] ss:$2 sm:$0xff]
    %v4953 = vld [vmem:[%s2134] ss:$2 sm:$0x7f]
    %v4954 = vld [vmem:[%s2136] ss:$2 sm:$0xff]
    %v4955 = vld [vmem:[%s2138] ss:$2 sm:$0x7f]
    %v4957 = vsel %vm2114, %v4952, 0
    %v4960 = vsel %vm2114, %v4953, 0
    %4962 = vmatprep.subr.mxu0 0.0
    %4963 = vmatpush1.msra.mxu0 %v4945
    %4964 = vmatprep.subr.mxu0 0.0
    %4965 = vmatpush1.msra.mxu0 %v4946
    %4966 = vmatprep.subr.mxu0 0.0
    %4967 = vmatpush1.msra.mxu0 %v4947
    %4968 = vmatprep.subr.mxu0 0.0
    %4969 = vmatpush1.msra.mxu0 %v4948
    %4970 = vmatprep.subr.mxu0 0.0
    %4971 = vmatpush1.msra.mxu0 0.0
    %4972 = vmatprep.subr.mxu0 0.0
    %4973 = vmatpush1.msra.mxu0 0.0
    %4974 = vmatprep.subr.mxu0 0.0
    %4975 = vmatpush1.msra.mxu0 0.0
    %4976 = vmatprep.subr.mxu0 0.0
    %4977 = vmatpush1.msra.mxu0 0.0
    %4978 = vmatprep.subr.mxu0 0.0
    %4979 = vmatpush1.msra.mxu0 0.0
    %4980 = vmatprep.subr.mxu0 0.0
    %4981 = vmatpush1.msra.mxu0 0.0
    %4982 = vmatprep.subr.mxu0 0.0
    %4983 = vmatpush1.msra.mxu0 0.0
    %4984 = vmatprep.subr.mxu0 0.0
    %4985 = vmatpush1.msra.mxu0 0.0
    %4986 = vmatprep.subr.mxu0 0.0
    %4987 = vmatpush1.msra.mxu0 0.0
    %4988 = vmatprep.subr.mxu0 0.0
    %4989 = vmatpush1.msra.mxu0 0.0
    %4990 = vmatprep.subr.mxu0 0.0
    %4991 = vmatpush1.msra.mxu0 0.0
    %4992 = vmatprep.subr.mxu0 0.0
    %4993 = vmatpush1.msra.mxu0 0.0
    %4994 = vmatprep.subr.mxu0 0.0
    %4995 = vmatpush1.msra.mxu0 0.0
    %4996 = vmatprep.subr.mxu0 0.0
    %4997 = vmatpush1.msra.mxu0 0.0
    %4998 = vmatprep.subr.mxu0 0.0
    %4999 = vmatpush1.msra.mxu0 0.0
    %5000 = vmatprep.subr.mxu0 0.0
    %5001 = vmatpush1.msra.mxu0 0.0
    %5002 = vmatprep.subr.mxu0 0.0
    %5003 = vmatpush1.msra.mxu0 0.0
    %5004 = vmatprep.subr.mxu0 0.0
    %5005 = vmatpush1.msra.mxu0 0.0
    %5006 = vmatprep.subr.mxu0 0.0
    %5007 = vmatpush1.msra.mxu0 0.0
    %5008 = vmatprep.subr.mxu0 0.0
    %5009 = vmatpush1.msra.mxu0 0.0
    %5010 = vmatprep.subr.mxu0 0.0
    %5011 = vmatpush1.msra.mxu0 0.0
    %5012 = vmatprep.subr.mxu0 0.0
    %5013 = vmatpush1.msra.mxu0 0.0
    %5014 = vmatprep.subr.mxu0 0.0
    %5015 = vmatpush1.msra.mxu0 0.0
    %5016 = vmatprep.subr.mxu0 0.0
    %5017 = vmatpush1.msra.mxu0 0.0
    %5018 = vmatprep.subr.mxu0 0.0
    %5019 = vmatpush1.msra.mxu0 0.0
    %5020 = vmatprep.subr.mxu0 0.0
    %5021 = vmatpush1.msra.mxu0 0.0
    %5022 = vmatprep.subr.mxu0 0.0
    %5023 = vmatpush1.msra.mxu0 0.0
    %5024 = vmatprep.subr.mxu0 0.0
    %5025 = vmatpush1.msra.mxu0 0.0
    %5026 = vmatprep.mubr.f32.mxu0 0.0
    %5027 = vmatmul.mubr.f32.gmra.mrb[0].mxu0 %v4957
    %v5028 = vpop.f32.mrb[0].mxu0
    %v5029 = vadd.f32 0.0, %v5028
    %v5030 = vpop.f32.mrb[0].mxu0
    %5031 = vmatprep.mubr.f32.mxu0 0.0
    %5032 = vmatmul.mubr.f32.gmra.mrb[0].mxu0 %v4960
    %v5033 = vpop.f32.mrb[0].mxu0
    %v5034 = vadd.f32 0.0, %v5033
    %v5035 = vpop.f32.mrb[0].mxu0
    %5036 = vdwg.mxu0
    %v5038 = vsel %vm2114, %v4950, 0
    %v5041 = vsel %vm2114, %v4951, 0
    %5043 = vmatprep.subr.mxu0 0.0
    %5044 = vmatpush1.msra.mxu0 %v4941
    %5045 = vmatprep.subr.mxu0 0.0
    %5046 = vmatpush1.msra.mxu0 %v4942
    %5047 = vmatprep.subr.mxu0 0.0
    %5048 = vmatpush1.msra.mxu0 %v4943
    %5049 = vmatprep.subr.mxu0 0.0
    %5050 = vmatpush1.msra.mxu0 %v4944
    %5051 = vmatprep.subr.mxu0 0.0
    %5052 = vmatpush1.msra.mxu0 0.0
    %5053 = vmatprep.subr.mxu0 0.0
    %5054 = vmatpush1.msra.mxu0 0.0
    %5055 = vmatprep.subr.mxu0 0.0
    %5056 = vmatpush1.msra.mxu0 0.0
    %5057 = vmatprep.subr.mxu0 0.0
    %5058 = vmatpush1.msra.mxu0 0.0
    %5059 = vmatprep.subr.mxu0 0.0
    %5060 = vmatpush1.msra.mxu0 0.0
    %5061 = vmatprep.subr.mxu0 0.0
    %5062 = vmatpush1.msra.mxu0 0.0
    %5063 = vmatprep.subr.mxu0 0.0
    %5064 = vmatpush1.msra.mxu0 0.0
    %5065 = vmatprep.subr.mxu0 0.0
    %5066 = vmatpush1.msra.mxu0 0.0
    %5067 = vmatprep.subr.mxu0 0.0
    %5068 = vmatpush1.msra.mxu0 0.0
    %5069 = vmatprep.subr.mxu0 0.0
    %5070 = vmatpush1.msra.mxu0 0.0
    %5071 = vmatprep.subr.mxu0 0.0
    %5072 = vmatpush1.msra.mxu0 0.0
    %5073 = vmatprep.subr.mxu0 0.0
    %5074 = vmatpush1.msra.mxu0 0.0
    %5075 = vmatprep.subr.mxu0 0.0
    %5076 = vmatpush1.msra.mxu0 0.0
    %5077 = vmatprep.subr.mxu0 0.0
    %5078 = vmatpush1.msra.mxu0 0.0
    %5079 = vmatprep.subr.mxu0 0.0
    %5080 = vmatpush1.msra.mxu0 0.0
    %5081 = vmatprep.subr.mxu0 0.0
    %5082 = vmatpush1.msra.mxu0 0.0
    %5083 = vmatprep.subr.mxu0 0.0
    %5084 = vmatpush1.msra.mxu0 0.0
    %5085 = vmatprep.subr.mxu0 0.0
    %5086 = vmatpush1.msra.mxu0 0.0
    %5087 = vmatprep.subr.mxu0 0.0
    %5088 = vmatpush1.msra.mxu0 0.0
    %5089 = vmatprep.subr.mxu0 0.0
    %5090 = vmatpush1.msra.mxu0 0.0
    %5091 = vmatprep.subr.mxu0 0.0
    %5092 = vmatpush1.msra.mxu0 0.0
    %5093 = vmatprep.subr.mxu0 0.0
    %5094 = vmatpush1.msra.mxu0 0.0
    %5095 = vmatprep.subr.mxu0 0.0
    %5096 = vmatpush1.msra.mxu0 0.0
    %5097 = vmatprep.subr.mxu0 0.0
    %5098 = vmatpush1.msra.mxu0 0.0
    %5099 = vmatprep.subr.mxu0 0.0
    %5100 = vmatpush1.msra.mxu0 0.0
    %5101 = vmatprep.subr.mxu0 0.0
    %5102 = vmatpush1.msra.mxu0 0.0
    %5103 = vmatprep.subr.mxu0 0.0
    %5104 = vmatpush1.msra.mxu0 0.0
    %5105 = vmatprep.subr.mxu0 0.0
    %5106 = vmatpush1.msra.mxu0 0.0
    %5107 = vmatprep.mubr.f32.mxu0 0.0
    %5108 = vmatmul.mubr.f32.gmra.mrb[0].mxu0 %v5038
    %v5109 = vpop.f32.mrb[0].mxu0
    %v5110 = vadd.f32 %v5029, %v5109
    %v5111 = vpop.f32.mrb[0].mxu0
    %5112 = vmatprep.mubr.f32.mxu0 0.0
    %5113 = vmatmul.mubr.f32.gmra.mrb[0].mxu0 %v5041
    %v5114 = vpop.f32.mrb[0].mxu0
    %v5115 = vadd.f32 %v5034, %v5114
    %v5116 = vpop.f32.mrb[0].mxu0
    %5117 = vdwg.mxu0
    %v5119 = vsel %vm2114, %v4954, 0
    %v5122 = vsel %vm2114, %v4955, 0
    %5124 = vmatprep.subr.mxu0 0.0
    %5125 = vmatpush1.msra.mxu0 %v4945
    %5126 = vmatprep.subr.mxu0 0.0
    %5127 = vmatpush1.msra.mxu0 %v4946
    %5128 = vmatprep.subr.mxu0 0.0
    %5129 = vmatpush1.msra.mxu0 %v4947
    %5130 = vmatprep.subr.mxu0 0.0
    %5131 = vmatpush1.msra.mxu0 %v4948
    %5132 = vmatprep.subr.mxu0 0.0
    %5133 = vmatpush1.msra.mxu0 0.0
    %5134 = vmatprep.subr.mxu0 0.0
    %5135 = vmatpush1.msra.mxu0 0.0
    %5136 = vmatprep.subr.mxu0 0.0
    %5137 = vmatpush1.msra.mxu0 0.0
    %5138 = vmatprep.subr.mxu0 0.0
    %5139 = vmatpush1.msra.mxu0 0.0
    %5140 = vmatprep.subr.mxu0 0.0
    %5141 = vmatpush1.msra.mxu0 0.0
    %5142 = vmatprep.subr.mxu0 0.0
    %5143 = vmatpush1.msra.mxu0 0.0
    %5144 = vmatprep.subr.mxu0 0.0
    %5145 = vmatpush1.msra.mxu0 0.0
    %5146 = vmatprep.subr.mxu0 0.0
    %5147 = vmatpush1.msra.mxu0 0.0
    %5148 = vmatprep.subr.mxu0 0.0
    %5149 = vmatpush1.msra.mxu0 0.0
    %5150 = vmatprep.subr.mxu0 0.0
    %5151 = vmatpush1.msra.mxu0 0.0
    %5152 = vmatprep.subr.mxu0 0.0
    %5153 = vmatpush1.msra.mxu0 0.0
    %5154 = vmatprep.subr.mxu0 0.0
    %5155 = vmatpush1.msra.mxu0 0.0
    %5156 = vmatprep.subr.mxu0 0.0
    %5157 = vmatpush1.msra.mxu0 0.0
    %5158 = vmatprep.subr.mxu0 0.0
    %5159 = vmatpush1.msra.mxu0 0.0
    %5160 = vmatprep.subr.mxu0 0.0
    %5161 = vmatpush1.msra.mxu0 0.0
    %5162 = vmatprep.subr.mxu0 0.0
    %5163 = vmatpush1.msra.mxu0 0.0
    %5164 = vmatprep.subr.mxu0 0.0
    %5165 = vmatpush1.msra.mxu0 0.0
    %5166 = vmatprep.subr.mxu0 0.0
    %5167 = vmatpush1.msra.mxu0 0.0
    %5168 = vmatprep.subr.mxu0 0.0
    %5169 = vmatpush1.msra.mxu0 0.0
    %5170 = vmatprep.subr.mxu0 0.0
    %5171 = vmatpush1.msra.mxu0 0.0
    %5172 = vmatprep.subr.mxu0 0.0
    %5173 = vmatpush1.msra.mxu0 0.0
    %5174 = vmatprep.subr.mxu0 0.0
    %5175 = vmatpush1.msra.mxu0 0.0
    %5176 = vmatprep.subr.mxu0 0.0
    %5177 = vmatpush1.msra.mxu0 0.0
    %5178 = vmatprep.subr.mxu0 0.0
    %5179 = vmatpush1.msra.mxu0 0.0
    %5180 = vmatprep.subr.mxu0 0.0
    %5181 = vmatpush1.msra.mxu0 0.0
    %5182 = vmatprep.subr.mxu0 0.0
    %5183 = vmatpush1.msra.mxu0 0.0
    %5184 = vmatprep.subr.mxu0 0.0
    %5185 = vmatpush1.msra.mxu0 0.0
    %5186 = vmatprep.subr.mxu0 0.0
    %5187 = vmatpush1.msra.mxu0 0.0
    %5188 = vmatprep.mubr.f32.mxu0 0.0
    %5189 = vmatmul.mubr.f32.gmra.mrb[0].mxu0 %v5119
    %v5190 = vpop.f32.mrb[0].mxu0
    %v5191 = vadd.f32 0.0, %v5190
    %v5192 = vpop.f32.mrb[0].mxu0
    %5193 = vmatprep.mubr.f32.mxu0 0.0
    %5194 = vmatmul.mubr.f32.gmra.mrb[0].mxu0 %v5122
    %v5195 = vpop.f32.mrb[0].mxu0
    %v5196 = vadd.f32 0.0, %v5195
    %v5197 = vpop.f32.mrb[0].mxu0
    %5198 = vdwg.mxu0
    %5199 = vmatprep.subr.mxu0 0.0
    %5200 = vmatpush1.msra.mxu0 %v4941
    %5201 = vmatprep.subr.mxu0 0.0
    %5202 = vmatpush1.msra.mxu0 %v4942
    %5203 = vmatprep.subr.mxu0 0.0
    %5204 = vmatpush1.msra.mxu0 %v4943
    %5205 = vmatprep.subr.mxu0 0.0
    %5206 = vmatpush1.msra.mxu0 %v4944
    %5207 = vmatprep.subr.mxu0 0.0
    %5208 = vmatpush1.msra.mxu0 0.0
    %5209 = vmatprep.subr.mxu0 0.0
    %5210 = vmatpush1.msra.mxu0 0.0
    %5211 = vmatprep.subr.mxu0 0.0
    %5212 = vmatpush1.msra.mxu0 0.0
    %5213 = vmatprep.subr.mxu0 0.0
    %5214 = vmatpush1.msra.mxu0 0.0
    %5215 = vmatprep.subr.mxu0 0.0
    %5216 = vmatpush1.msra.mxu0 0.0
    %5217 = vmatprep.subr.mxu0 0.0
    %5218 = vmatpush1.msra.mxu0 0.0
    %5219 = vmatprep.subr.mxu0 0.0
    %5220 = vmatpush1.msra.mxu0 0.0
    %5221 = vmatprep.subr.mxu0 0.0
    %5222 = vmatpush1.msra.mxu0 0.0
    %5223 = vmatprep.subr.mxu0 0.0
    %5224 = vmatpush1.msra.mxu0 0.0
    %5225 = vmatprep.subr.mxu0 0.0
    %5226 = vmatpush1.msra.mxu0 0.0
    %5227 = vmatprep.subr.mxu0 0.0
    %5228 = vmatpush1.msra.mxu0 0.0
    %5229 = vmatprep.subr.mxu0 0.0
    %5230 = vmatpush1.msra.mxu0 0.0
    %5231 = vmatprep.subr.mxu0 0.0
    %5232 = vmatpush1.msra.mxu0 0.0
    %5233 = vmatprep.subr.mxu0 0.0
    %5234 = vmatpush1.msra.mxu0 0.0
    %5235 = vmatprep.subr.mxu0 0.0
    %5236 = vmatpush1.msra.mxu0 0.0
    %5237 = vmatprep.subr.mxu0 0.0
    %5238 = vmatpush1.msra.mxu0 0.0
    %5239 = vmatprep.subr.mxu0 0.0
    %5240 = vmatpush1.msra.mxu0 0.0
    %5241 = vmatprep.subr.mxu0 0.0
    %5242 = vmatpush1.msra.mxu0 0.0
    %5243 = vmatprep.subr.mxu0 0.0
    %5244 = vmatpush1.msra.mxu0 0.0
    %5245 = vmatprep.subr.mxu0 0.0
    %5246 = vmatpush1.msra.mxu0 0.0
    %5247 = vmatprep.subr.mxu0 0.0
    %5248 = vmatpush1.msra.mxu0 0.0
    %5249 = vmatprep.subr.mxu0 0.0
    %5250 = vmatpush1.msra.mxu0 0.0
    %5251 = vmatprep.subr.mxu0 0.0
    %5252 = vmatpush1.msra.mxu0 0.0
    %5253 = vmatprep.subr.mxu0 0.0
    %5254 = vmatpush1.msra.mxu0 0.0
    %5255 = vmatprep.subr.mxu0 0.0
    %5256 = vmatpush1.msra.mxu0 0.0
    %5257 = vmatprep.subr.mxu0 0.0
    %5258 = vmatpush1.msra.mxu0 0.0
    %5259 = vmatprep.subr.mxu0 0.0
    %5260 = vmatpush1.msra.mxu0 0.0
    %5261 = vmatprep.subr.mxu0 0.0
    %5262 = vmatpush1.msra.mxu0 0.0
    %5263 = vmatprep.mubr.f32.mxu0 0.0
    %5264 = vmatmul.mubr.f32.gmra.mrb[0].mxu0 %v4957
    %v5265 = vpop.f32.mrb[0].mxu0
    %v5266 = vadd.f32 %v5191, %v5265
    %v5267 = vpop.f32.mrb[0].mxu0
    %5268 = vmatprep.mubr.f32.mxu0 0.0
    %5269 = vmatmul.mubr.f32.gmra.mrb[0].mxu0 %v4960
    %v5270 = vpop.f32.mrb[0].mxu0
    %v5271 = vadd.f32 %v5196, %v5270
    %v5272 = vpop.f32.mrb[0].mxu0
    %5273 = vdwg.mxu0
    %v5274 = vmax.f32 %v5110, %v5266
    %v5275 = vmax.f32 %v5115, %v5271
    %v5277 = vlaneseq
    %v5278 = vshrl.u32 %v5277, 7
    %v5279 = vsub.s32 0, %v5278
    %v5280 = vrot.slane %v4949, %v5279
    %v5282 = vadd.f32 %v5274, %v5280
    %v5283 = vadd.f32 %v5275, %v5280
    %v5284 = vmax.f32 %v5282, 0.0
    %v5285 = vmax.f32 %v5283, 0.0
    %5286 = vst.msk [vmem:[#allocation5] sm:$0xff] %vm2470, %v5284
    %5287 = vst.msk [vmem:[#allocation5 + $0x8] sm:$0x7f] %vm2472, %v5285
    %v5288 = vld [vmem:[%s13] sm:$0xff]
    %v5289 = vld [vmem:[%s13 + $0x8] sm:$0xff]
    %v5290 = vld [vmem:[%s13 + $0x10] sm:$0xff]
    %v5291 = vld [vmem:[%s13 + $0x18] sm:$0xff]
    %v5292 = vld [vmem:[%s13 + $0x20] sm:$0xff]
    %v5293 = vld [vmem:[%s13 + $0x28] sm:$0xff]
    %v5294 = vld [vmem:[%s13 + $0x30] sm:$0xff]
    %v5295 = vld [vmem:[%s13 + $0x38] sm:$0xff]
    %v5296 = vld [vmem:[#allocation24] sm:$0xff]
    %v5297 = vld [vmem:[#allocation24 + $0x8] sm:$0xff]
    %v5298 = vld [vmem:[#allocation24 + $0x10] sm:$0xff]
    %v5299 = vld [vmem:[#allocation24 + $0x18] sm:$0xff]
    %v5300 = vld [vmem:[#allocation24 + $0x20] sm:$0xff]
    %v5301 = vld [vmem:[#allocation24 + $0x28] sm:$0xff]
    %v5302 = vld [vmem:[#allocation24 + $0x30] sm:$0xff]
    %v5303 = vld [vmem:[#allocation24 + $0x38] sm:$0xff]
    %v5304 = vld [vmem:[%s15] sm:$0x1]
    %v5305 = vld [vmem:[#allocation5] ss:$2 sm:$0x7f]
    %v5306 = vld [vmem:[%s2492] ss:$2 sm:$0x7f]
    %v5307 = vld [vmem:[%s2494] ss:$2 sm:$0x7f]
    %v5309 = vsel %vm2470, %v5306, 0
    %5311 = vmatprep.subr.mxu0 0.0
    %5312 = vmatpush1.msra.mxu0 %v5296
    %5313 = vmatprep.subr.mxu0 0.0
    %5314 = vmatpush1.msra.mxu0 %v5297
    %5315 = vmatprep.subr.mxu0 0.0
    %5316 = vmatpush1.msra.mxu0 %v5298
    %5317 = vmatprep.subr.mxu0 0.0
    %5318 = vmatpush1.msra.mxu0 %v5299
    %5319 = vmatprep.subr.mxu0 0.0
    %5320 = vmatpush1.msra.mxu0 %v5300
    %5321 = vmatprep.subr.mxu0 0.0
    %5322 = vmatpush1.msra.mxu0 %v5301
    %5323 = vmatprep.subr.mxu0 0.0
    %5324 = vmatpush1.msra.mxu0 %v5302
    %5325 = vmatprep.subr.mxu0 0.0
    %5326 = vmatpush1.msra.mxu0 %v5303
    %5327 = vmatprep.subr.mxu0 0.0
    %5328 = vmatpush1.msra.mxu0 0.0
    %5329 = vmatprep.subr.mxu0 0.0
    %5330 = vmatpush1.msra.mxu0 0.0
    %5331 = vmatprep.subr.mxu0 0.0
    %5332 = vmatpush1.msra.mxu0 0.0
    %5333 = vmatprep.subr.mxu0 0.0
    %5334 = vmatpush1.msra.mxu0 0.0
    %5335 = vmatprep.subr.mxu0 0.0
    %5336 = vmatpush1.msra.mxu0 0.0
    %5337 = vmatprep.subr.mxu0 0.0
    %5338 = vmatpush1.msra.mxu0 0.0
    %5339 = vmatprep.subr.mxu0 0.0
    %5340 = vmatpush1.msra.mxu0 0.0
    %5341 = vmatprep.subr.mxu0 0.0
    %5342 = vmatpush1.msra.mxu0 0.0
    %5343 = vmatprep.subr.mxu0 0.0
    %5344 = vmatpush1.msra.mxu0 0.0
    %5345 = vmatprep.subr.mxu0 0.0
    %5346 = vmatpush1.msra.mxu0 0.0
    %5347 = vmatprep.subr.mxu0 0.0
    %5348 = vmatpush1.msra.mxu0 0.0
    %5349 = vmatprep.subr.mxu0 0.0
    %5350 = vmatpush1.msra.mxu0 0.0
    %5351 = vmatprep.subr.mxu0 0.0
    %5352 = vmatpush1.msra.mxu0 0.0
    %5353 = vmatprep.subr.mxu0 0.0
    %5354 = vmatpush1.msra.mxu0 0.0
    %5355 = vmatprep.subr.mxu0 0.0
    %5356 = vmatpush1.msra.mxu0 0.0
    %5357 = vmatprep.subr.mxu0 0.0
    %5358 = vmatpush1.msra.mxu0 0.0
    %5359 = vmatprep.subr.mxu0 0.0
    %5360 = vmatpush1.msra.mxu0 0.0
    %5361 = vmatprep.subr.mxu0 0.0
    %5362 = vmatpush1.msra.mxu0 0.0
    %5363 = vmatprep.subr.mxu0 0.0
    %5364 = vmatpush1.msra.mxu0 0.0
    %5365 = vmatprep.subr.mxu0 0.0
    %5366 = vmatpush1.msra.mxu0 0.0
    %5367 = vmatprep.subr.mxu0 0.0
    %5368 = vmatpush1.msra.mxu0 0.0
    %5369 = vmatprep.subr.mxu0 0.0
    %5370 = vmatpush1.msra.mxu0 0.0
    %5371 = vmatprep.subr.mxu0 0.0
    %5372 = vmatpush1.msra.mxu0 0.0
    %5373 = vmatprep.subr.mxu0 0.0
    %5374 = vmatpush1.msra.mxu0 0.0
    %5375 = vmatprep.mubr.f32.mxu0 0.0
    %5376 = vmatmul.mubr.f32.gmra.mrb[0].mxu0 %v5309
    %v5377 = vpop.f32.mrb[0].mxu0
    %v5378 = vadd.f32 0.0, %v5377
    %v5379 = vpop.f32.mrb[0].mxu0
    %5380 = vdwg.mxu0
    %v5382 = vsel %vm2470, %v5305, 0
    %5384 = vmatprep.subr.mxu0 0.0
    %5385 = vmatpush1.msra.mxu0 %v5288
    %5386 = vmatprep.subr.mxu0 0.0
    %5387 = vmatpush1.msra.mxu0 %v5289
    %5388 = vmatprep.subr.mxu0 0.0
    %5389 = vmatpush1.msra.mxu0 %v5290
    %5390 = vmatprep.subr.mxu0 0.0
    %5391 = vmatpush1.msra.mxu0 %v5291
    %5392 = vmatprep.subr.mxu0 0.0
    %5393 = vmatpush1.msra.mxu0 %v5292
    %5394 = vmatprep.subr.mxu0 0.0
    %5395 = vmatpush1.msra.mxu0 %v5293
    %5396 = vmatprep.subr.mxu0 0.0
    %5397 = vmatpush1.msra.mxu0 %v5294
    %5398 = vmatprep.subr.mxu0 0.0
    %5399 = vmatpush1.msra.mxu0 %v5295
    %5400 = vmatprep.subr.mxu0 0.0
    %5401 = vmatpush1.msra.mxu0 0.0
    %5402 = vmatprep.subr.mxu0 0.0
    %5403 = vmatpush1.msra.mxu0 0.0
    %5404 = vmatprep.subr.mxu0 0.0
    %5405 = vmatpush1.msra.mxu0 0.0
    %5406 = vmatprep.subr.mxu0 0.0
    %5407 = vmatpush1.msra.mxu0 0.0
    %5408 = vmatprep.subr.mxu0 0.0
    %5409 = vmatpush1.msra.mxu0 0.0
    %5410 = vmatprep.subr.mxu0 0.0
    %5411 = vmatpush1.msra.mxu0 0.0
    %5412 = vmatprep.subr.mxu0 0.0
    %5413 = vmatpush1.msra.mxu0 0.0
    %5414 = vmatprep.subr.mxu0 0.0
    %5415 = vmatpush1.msra.mxu0 0.0
    %5416 = vmatprep.subr.mxu0 0.0
    %5417 = vmatpush1.msra.mxu0 0.0
    %5418 = vmatprep.subr.mxu0 0.0
    %5419 = vmatpush1.msra.mxu0 0.0
    %5420 = vmatprep.subr.mxu0 0.0
    %5421 = vmatpush1.msra.mxu0 0.0
    %5422 = vmatprep.subr.mxu0 0.0
    %5423 = vmatpush1.msra.mxu0 0.0
    %5424 = vmatprep.subr.mxu0 0.0
    %5425 = vmatpush1.msra.mxu0 0.0
    %5426 = vmatprep.subr.mxu0 0.0
    %5427 = vmatpush1.msra.mxu0 0.0
    %5428 = vmatprep.subr.mxu0 0.0
    %5429 = vmatpush1.msra.mxu0 0.0
    %5430 = vmatprep.subr.mxu0 0.0
    %5431 = vmatpush1.msra.mxu0 0.0
    %5432 = vmatprep.subr.mxu0 0.0
    %5433 = vmatpush1.msra.mxu0 0.0
    %5434 = vmatprep.subr.mxu0 0.0
    %5435 = vmatpush1.msra.mxu0 0.0
    %5436 = vmatprep.subr.mxu0 0.0
    %5437 = vmatpush1.msra.mxu0 0.0
    %5438 = vmatprep.subr.mxu0 0.0
    %5439 = vmatpush1.msra.mxu0 0.0
    %5440 = vmatprep.subr.mxu0 0.0
    %5441 = vmatpush1.msra.mxu0 0.0
    %5442 = vmatprep.subr.mxu0 0.0
    %5443 = vmatpush1.msra.mxu0 0.0
    %5444 = vmatprep.subr.mxu0 0.0
    %5445 = vmatpush1.msra.mxu0 0.0
    %5446 = vmatprep.subr.mxu0 0.0
    %5447 = vmatpush1.msra.mxu0 0.0
    %5448 = vmatprep.mubr.f32.mxu0 0.0
    %5449 = vmatmul.mubr.f32.gmra.mrb[0].mxu0 %v5382
    %v5450 = vpop.f32.mrb[0].mxu0
    %v5451 = vadd.f32 %v5378, %v5450
    %v5452 = vpop.f32.mrb[0].mxu0
    %5453 = vdwg.mxu0
    %v5455 = vsel %vm2470, %v5307, 0
    %5457 = vmatprep.subr.mxu0 0.0
    %5458 = vmatpush1.msra.mxu0 %v5296
    %5459 = vmatprep.subr.mxu0 0.0
    %5460 = vmatpush1.msra.mxu0 %v5297
    %5461 = vmatprep.subr.mxu0 0.0
    %5462 = vmatpush1.msra.mxu0 %v5298
    %5463 = vmatprep.subr.mxu0 0.0
    %5464 = vmatpush1.msra.mxu0 %v5299
    %5465 = vmatprep.subr.mxu0 0.0
    %5466 = vmatpush1.msra.mxu0 %v5300
    %5467 = vmatprep.subr.mxu0 0.0
    %5468 = vmatpush1.msra.mxu0 %v5301
    %5469 = vmatprep.subr.mxu0 0.0
    %5470 = vmatpush1.msra.mxu0 %v5302
    %5471 = vmatprep.subr.mxu0 0.0
    %5472 = vmatpush1.msra.mxu0 %v5303
    %5473 = vmatprep.subr.mxu0 0.0
    %5474 = vmatpush1.msra.mxu0 0.0
    %5475 = vmatprep.subr.mxu0 0.0
    %5476 = vmatpush1.msra.mxu0 0.0
    %5477 = vmatprep.subr.mxu0 0.0
    %5478 = vmatpush1.msra.mxu0 0.0
    %5479 = vmatprep.subr.mxu0 0.0
    %5480 = vmatpush1.msra.mxu0 0.0
    %5481 = vmatprep.subr.mxu0 0.0
    %5482 = vmatpush1.msra.mxu0 0.0
    %5483 = vmatprep.subr.mxu0 0.0
    %5484 = vmatpush1.msra.mxu0 0.0
    %5485 = vmatprep.subr.mxu0 0.0
    %5486 = vmatpush1.msra.mxu0 0.0
    %5487 = vmatprep.subr.mxu0 0.0
    %5488 = vmatpush1.msra.mxu0 0.0
    %5489 = vmatprep.subr.mxu0 0.0
    %5490 = vmatpush1.msra.mxu0 0.0
    %5491 = vmatprep.subr.mxu0 0.0
    %5492 = vmatpush1.msra.mxu0 0.0
    %5493 = vmatprep.subr.mxu0 0.0
    %5494 = vmatpush1.msra.mxu0 0.0
    %5495 = vmatprep.subr.mxu0 0.0
    %5496 = vmatpush1.msra.mxu0 0.0
    %5497 = vmatprep.subr.mxu0 0.0
    %5498 = vmatpush1.msra.mxu0 0.0
    %5499 = vmatprep.subr.mxu0 0.0
    %5500 = vmatpush1.msra.mxu0 0.0
    %5501 = vmatprep.subr.mxu0 0.0
    %5502 = vmatpush1.msra.mxu0 0.0
    %5503 = vmatprep.subr.mxu0 0.0
    %5504 = vmatpush1.msra.mxu0 0.0
    %5505 = vmatprep.subr.mxu0 0.0
    %5506 = vmatpush1.msra.mxu0 0.0
    %5507 = vmatprep.subr.mxu0 0.0
    %5508 = vmatpush1.msra.mxu0 0.0
    %5509 = vmatprep.subr.mxu0 0.0
    %5510 = vmatpush1.msra.mxu0 0.0
    %5511 = vmatprep.subr.mxu0 0.0
    %5512 = vmatpush1.msra.mxu0 0.0
    %5513 = vmatprep.subr.mxu0 0.0
    %5514 = vmatpush1.msra.mxu0 0.0
    %5515 = vmatprep.subr.mxu0 0.0
    %5516 = vmatpush1.msra.mxu0 0.0
    %5517 = vmatprep.subr.mxu0 0.0
    %5518 = vmatpush1.msra.mxu0 0.0
    %5519 = vmatprep.subr.mxu0 0.0
    %5520 = vmatpush1.msra.mxu0 0.0
    %5521 = vmatprep.mubr.f32.mxu0 0.0
    %5522 = vmatmul.mubr.f32.gmra.mrb[0].mxu0 %v5455
    %v5523 = vpop.f32.mrb[0].mxu0
    %v5524 = vadd.f32 0.0, %v5523
    %v5525 = vpop.f32.mrb[0].mxu0
    %5526 = vdwg.mxu0
    %5527 = vmatprep.subr.mxu0 0.0
    %5528 = vmatpush1.msra.mxu0 %v5288
    %5529 = vmatprep.subr.mxu0 0.0
    %5530 = vmatpush1.msra.mxu0 %v5289
    %5531 = vmatprep.subr.mxu0 0.0
    %5532 = vmatpush1.msra.mxu0 %v5290
    %5533 = vmatprep.subr.mxu0 0.0
    %5534 = vmatpush1.msra.mxu0 %v5291
    %5535 = vmatprep.subr.mxu0 0.0
    %5536 = vmatpush1.msra.mxu0 %v5292
    %5537 = vmatprep.subr.mxu0 0.0
    %5538 = vmatpush1.msra.mxu0 %v5293
    %5539 = vmatprep.subr.mxu0 0.0
    %5540 = vmatpush1.msra.mxu0 %v5294
    %5541 = vmatprep.subr.mxu0 0.0
    %5542 = vmatpush1.msra.mxu0 %v5295
    %5543 = vmatprep.subr.mxu0 0.0
    %5544 = vmatpush1.msra.mxu0 0.0
    %5545 = vmatprep.subr.mxu0 0.0
    %5546 = vmatpush1.msra.mxu0 0.0
    %5547 = vmatprep.subr.mxu0 0.0
    %5548 = vmatpush1.msra.mxu0 0.0
    %5549 = vmatprep.subr.mxu0 0.0
    %5550 = vmatpush1.msra.mxu0 0.0
    %5551 = vmatprep.subr.mxu0 0.0
    %5552 = vmatpush1.msra.mxu0 0.0
    %5553 = vmatprep.subr.mxu0 0.0
    %5554 = vmatpush1.msra.mxu0 0.0
    %5555 = vmatprep.subr.mxu0 0.0
    %5556 = vmatpush1.msra.mxu0 0.0
    %5557 = vmatprep.subr.mxu0 0.0
    %5558 = vmatpush1.msra.mxu0 0.0
    %5559 = vmatprep.subr.mxu0 0.0
    %5560 = vmatpush1.msra.mxu0 0.0
    %5561 = vmatprep.subr.mxu0 0.0
    %5562 = vmatpush1.msra.mxu0 0.0
    %5563 = vmatprep.subr.mxu0 0.0
    %5564 = vmatpush1.msra.mxu0 0.0
    %5565 = vmatprep.subr.mxu0 0.0
    %5566 = vmatpush1.msra.mxu0 0.0
    %5567 = vmatprep.subr.mxu0 0.0
    %5568 = vmatpush1.msra.mxu0 0.0
    %5569 = vmatprep.subr.mxu0 0.0
    %5570 = vmatpush1.msra.mxu0 0.0
    %5571 = vmatprep.subr.mxu0 0.0
    %5572 = vmatpush1.msra.mxu0 0.0
    %5573 = vmatprep.subr.mxu0 0.0
    %5574 = vmatpush1.msra.mxu0 0.0
    %5575 = vmatprep.subr.mxu0 0.0
    %5576 = vmatpush1.msra.mxu0 0.0
    %5577 = vmatprep.subr.mxu0 0.0
    %5578 = vmatpush1.msra.mxu0 0.0
    %5579 = vmatprep.subr.mxu0 0.0
    %5580 = vmatpush1.msra.mxu0 0.0
    %5581 = vmatprep.subr.mxu0 0.0
    %5582 = vmatpush1.msra.mxu0 0.0
    %5583 = vmatprep.subr.mxu0 0.0
    %5584 = vmatpush1.msra.mxu0 0.0
    %5585 = vmatprep.subr.mxu0 0.0
    %5586 = vmatpush1.msra.mxu0 0.0
    %5587 = vmatprep.subr.mxu0 0.0
    %5588 = vmatpush1.msra.mxu0 0.0
    %5589 = vmatprep.subr.mxu0 0.0
    %5590 = vmatpush1.msra.mxu0 0.0
    %5591 = vmatprep.mubr.f32.mxu0 0.0
    %5592 = vmatmul.mubr.f32.gmra.mrb[0].mxu0 %v5309
    %v5593 = vpop.f32.mrb[0].mxu0
    %v5594 = vadd.f32 %v5524, %v5593
    %v5595 = vpop.f32.mrb[0].mxu0
    %5596 = vdwg.mxu0
    %v5597 = vmax.f32 %v5451, %v5594
    %v5599 = vlaneseq
    %v5600 = vshrl.u32 %v5599, 7
    %v5601 = vsub.s32 0, %v5600
    %v5602 = vrot.slane %v5304, %v5601
    %v5604 = vadd.f32 %v5597, %v5602
    %v5605 = vmax.f32 %v5604, 0.0
    %5606 = vst [vmem:[#allocation6] sm:$0x7f] %v5605
    %v5607 = vld [vmem:[%s16] sm:$0xff]
    %v5608 = vld [vmem:[%s16 + $0x8] sm:$0xff]
    %v5609 = vld [vmem:[%s16 + $0x10] sm:$0xff]
    %v5610 = vld [vmem:[%s16 + $0x18] sm:$0xff]
    %v5611 = vld [vmem:[%s16 + $0x20] sm:$0xff]
    %v5612 = vld [vmem:[%s16 + $0x28] sm:$0xff]
    %v5613 = vld [vmem:[%s16 + $0x30] sm:$0xff]
    %v5614 = vld [vmem:[%s16 + $0x38] sm:$0xff]
    %v5615 = vld [vmem:[%s16 + $0x40] sm:$0xff]
    %v5616 = vld [vmem:[%s16 + $0x48] sm:$0xff]
    %v5617 = vld [vmem:[%s16 + $0x50] sm:$0xff]
    %v5618 = vld [vmem:[%s16 + $0x58] sm:$0xff]
    %v5619 = vld [vmem:[%s16 + $0x60] sm:$0xff]
    %v5620 = vld [vmem:[%s16 + $0x68] sm:$0xff]
    %v5621 = vld [vmem:[%s16 + $0x70] sm:$0xff]
    %v5622 = vld [vmem:[%s16 + $0x78] sm:$0xff]
    %v5623 = vld [vmem:[%s16 + $0x80] sm:$0xff]
    %v5624 = vld [vmem:[%s16 + $0x88] sm:$0xff]
    %v5625 = vld [vmem:[%s16 + $0x90] sm:$0xff]
    %v5626 = vld [vmem:[%s16 + $0x98] sm:$0xff]
    %v5627 = vld [vmem:[%s16 + $0xa0] sm:$0xff]
    %v5628 = vld [vmem:[%s16 + $0xa8] sm:$0xff]
    %v5629 = vld [vmem:[%s16 + $0xb0] sm:$0xff]
    %v5630 = vld [vmem:[%s16 + $0xb8] sm:$0xff]
    %v5631 = vld [vmem:[%s16 + $0xc0] sm:$0xff]
    %v5632 = vld [vmem:[%s16 + $0xc8] sm:$0xff]
    %v5633 = vld [vmem:[%s16 + $0xd0] sm:$0xff]
    %v5634 = vld [vmem:[%s16 + $0xd8] sm:$0xff]
    %v5635 = vld [vmem:[%s16 + $0xe0] sm:$0xff]
    %v5636 = vld [vmem:[%s16 + $0xe8] sm:$0xff]
    %v5637 = vld [vmem:[%s16 + $0xf0] sm:$0xff]
    %v5638 = vld [vmem:[%s16 + $0xf8] sm:$0xff]
    %v5639 = vld [vmem:[%s17] sm:$0xff]
    %v5640 = vld [vmem:[%s17 + $0x8] sm:$0xff]
    %v5641 = vld [vmem:[%s17 + $0x10] sm:$0xff]
    %v5642 = vld [vmem:[%s17 + $0x18] sm:$0xff]
    %v5643 = vld [vmem:[%s17 + $0x20] sm:$0xff]
    %v5644 = vld [vmem:[%s17 + $0x28] sm:$0xff]
    %v5645 = vld [vmem:[%s17 + $0x30] sm:$0xff]
    %v5646 = vld [vmem:[%s17 + $0x38] sm:$0xff]
    %v5647 = vld [vmem:[%s17 + $0x40] sm:$0xff]
    %v5648 = vld [vmem:[%s17 + $0x48] sm:$0xff]
    %v5649 = vld [vmem:[%s17 + $0x50] sm:$0xff]
    %v5650 = vld [vmem:[%s17 + $0x58] sm:$0xff]
    %v5651 = vld [vmem:[%s17 + $0x60] sm:$0xff]
    %v5652 = vld [vmem:[%s17 + $0x68] sm:$0xff]
    %v5653 = vld [vmem:[%s17 + $0x70] sm:$0xff]
    %v5654 = vld [vmem:[%s17 + $0x78] sm:$0xff]
    %v5655 = vld [vmem:[%s17 + $0x80] sm:$0xff]
    %v5656 = vld [vmem:[%s17 + $0x88] sm:$0xff]
    %v5657 = vld [vmem:[%s17 + $0x90] sm:$0xff]
    %v5658 = vld [vmem:[%s17 + $0x98] sm:$0xff]
    %v5659 = vld [vmem:[%s17 + $0xa0] sm:$0xff]
    %v5660 = vld [vmem:[%s17 + $0xa8] sm:$0xff]
    %v5661 = vld [vmem:[%s17 + $0xb0] sm:$0xff]
    %v5662 = vld [vmem:[%s17 + $0xb8] sm:$0xff]
    %v5663 = vld [vmem:[%s17 + $0xc0] sm:$0xff]
    %v5664 = vld [vmem:[%s17 + $0xc8] sm:$0xff]
    %v5665 = vld [vmem:[%s17 + $0xd0] sm:$0xff]
    %v5666 = vld [vmem:[%s17 + $0xd8] sm:$0xff]
    %v5667 = vld [vmem:[%s17 + $0xe0] sm:$0xff]
    %v5668 = vld [vmem:[%s17 + $0xe8] sm:$0xff]
    %v5669 = vld [vmem:[%s17 + $0xf0] sm:$0xff]
    %v5670 = vld [vmem:[%s17 + $0xf8] sm:$0xff]
    %v5671 = vld [vmem:[%s18] sm:$0x3]
    %v5672 = vld [vmem:[#allocation6] ss:$2 sm:$0x7]
    %v5673 = vld [vmem:[%s2861] ss:$2 sm:$0x7]
    %v5674 = vld [vmem:[%s2863] ss:$2 sm:$0x7]
    %5675 = vmatprep.subr.mxu0 %v5608
    %5676 = vmatpush1.msra.mxu0 %v5607
    %5677 = vmatprep.subr.mxu0 %v5610
    %5678 = vmatpush1.msra.mxu0 %v5609
    %5679 = vmatprep.subr.mxu0 %v5612
    %5680 = vmatpush1.msra.mxu0 %v5611
    %5681 = vmatprep.subr.mxu0 %v5614
    %5682 = vmatpush1.msra.mxu0 %v5613
    %5683 = vmatprep.subr.mxu0 %v5616
    %5684 = vmatpush1.msra.mxu0 %v5615
    %5685 = vmatprep.subr.mxu0 %v5618
    %5686 = vmatpush1.msra.mxu0 %v5617
    %5687 = vmatprep.subr.mxu0 %v5620
    %5688 = vmatpush1.msra.mxu0 %v5619
    %5689 = vmatprep.subr.mxu0 %v5622
    %5690 = vmatpush1.msra.mxu0 %v5621
    %5691 = vmatprep.subr.mxu0 %v5624
    %5692 = vmatpush1.msra.mxu0 %v5623
    %5693 = vmatprep.subr.mxu0 %v5626
    %5694 = vmatpush1.msra.mxu0 %v5625
    %5695 = vmatprep.subr.mxu0 %v5628
    %5696 = vmatpush1.msra.mxu0 %v5627
    %5697 = vmatprep.subr.mxu0 %v5630
    %5698 = vmatpush1.msra.mxu0 %v5629
    %5699 = vmatprep.subr.mxu0 %v5632
    %5700 = vmatpush1.msra.mxu0 %v5631
    %5701 = vmatprep.subr.mxu0 %v5634
    %5702 = vmatpush1.msra.mxu0 %v5633
    %5703 = vmatprep.subr.mxu0 %v5636
    %5704 = vmatpush1.msra.mxu0 %v5635
    %5705 = vmatprep.subr.mxu0 %v5638
    %5706 = vmatpush1.msra.mxu0 %v5637
    %5707 = vmatprep.subr.mxu0 %v5640
    %5708 = vmatpush1.msra.mxu0 %v5639
    %5709 = vmatprep.subr.mxu0 %v5642
    %5710 = vmatpush1.msra.mxu0 %v5641
    %5711 = vmatprep.subr.mxu0 %v5644
    %5712 = vmatpush1.msra.mxu0 %v5643
    %5713 = vmatprep.subr.mxu0 %v5646
    %5714 = vmatpush1.msra.mxu0 %v5645
    %5715 = vmatprep.subr.mxu0 %v5648
    %5716 = vmatpush1.msra.mxu0 %v5647
    %5717 = vmatprep.subr.mxu0 %v5650
    %5718 = vmatpush1.msra.mxu0 %v5649
    %5719 = vmatprep.subr.mxu0 %v5652
    %5720 = vmatpush1.msra.mxu0 %v5651
    %5721 = vmatprep.subr.mxu0 %v5654
    %5722 = vmatpush1.msra.mxu0 %v5653
    %5723 = vmatprep.subr.mxu0 %v5656
    %5724 = vmatpush1.msra.mxu0 %v5655
    %5725 = vmatprep.subr.mxu0 %v5658
    %5726 = vmatpush1.msra.mxu0 %v5657
    %5727 = vmatprep.subr.mxu0 %v5660
    %5728 = vmatpush1.msra.mxu0 %v5659
    %5729 = vmatprep.subr.mxu0 %v5662
    %5730 = vmatpush1.msra.mxu0 %v5661
    %5731 = vmatprep.subr.mxu0 %v5664
    %5732 = vmatpush1.msra.mxu0 %v5663
    %5733 = vmatprep.subr.mxu0 %v5666
    %5734 = vmatpush1.msra.mxu0 %v5665
    %5735 = vmatprep.subr.mxu0 %v5668
    %5736 = vmatpush1.msra.mxu0 %v5667
    %5737 = vmatprep.subr.mxu0 %v5670
    %5738 = vmatpush1.msra.mxu0 %v5669
    %5739 = vmatprep.mubr.f32.mxu0 %v5673
    %5740 = vmatmul.mubr.f32.gmra.mrb[0].mxu0 %v5672
    %v5741 = vpop.f32.mrb[0].mxu0
    %v5742 = vadd.f32 0.0, %v5741
    %v5743 = vpop.f32.mrb[0].mxu0
    %v5744 = vadd.f32 0.0, %v5743
    %5745 = vdwg.mxu0
    %5746 = vmatprep.subr.mxu0 %v5608
    %5747 = vmatpush1.msra.mxu0 %v5607
    %5748 = vmatprep.subr.mxu0 %v5610
    %5749 = vmatpush1.msra.mxu0 %v5609
    %5750 = vmatprep.subr.mxu0 %v5612
    %5751 = vmatpush1.msra.mxu0 %v5611
    %5752 = vmatprep.subr.mxu0 %v5614
    %5753 = vmatpush1.msra.mxu0 %v5613
    %5754 = vmatprep.subr.mxu0 %v5616
    %5755 = vmatpush1.msra.mxu0 %v5615
    %5756 = vmatprep.subr.mxu0 %v5618
    %5757 = vmatpush1.msra.mxu0 %v5617
    %5758 = vmatprep.subr.mxu0 %v5620
    %5759 = vmatpush1.msra.mxu0 %v5619
    %5760 = vmatprep.subr.mxu0 %v5622
    %5761 = vmatpush1.msra.mxu0 %v5621
    %5762 = vmatprep.subr.mxu0 %v5624
    %5763 = vmatpush1.msra.mxu0 %v5623
    %5764 = vmatprep.subr.mxu0 %v5626
    %5765 = vmatpush1.msra.mxu0 %v5625
    %5766 = vmatprep.subr.mxu0 %v5628
    %5767 = vmatpush1.msra.mxu0 %v5627
    %5768 = vmatprep.subr.mxu0 %v5630
    %5769 = vmatpush1.msra.mxu0 %v5629
    %5770 = vmatprep.subr.mxu0 %v5632
    %5771 = vmatpush1.msra.mxu0 %v5631
    %5772 = vmatprep.subr.mxu0 %v5634
    %5773 = vmatpush1.msra.mxu0 %v5633
    %5774 = vmatprep.subr.mxu0 %v5636
    %5775 = vmatpush1.msra.mxu0 %v5635
    %5776 = vmatprep.subr.mxu0 %v5638
    %5777 = vmatpush1.msra.mxu0 %v5637
    %5778 = vmatprep.subr.mxu0 %v5640
    %5779 = vmatpush1.msra.mxu0 %v5639
    %5780 = vmatprep.subr.mxu0 %v5642
    %5781 = vmatpush1.msra.mxu0 %v5641
    %5782 = vmatprep.subr.mxu0 %v5644
    %5783 = vmatpush1.msra.mxu0 %v5643
    %5784 = vmatprep.subr.mxu0 %v5646
    %5785 = vmatpush1.msra.mxu0 %v5645
    %5786 = vmatprep.subr.mxu0 %v5648
    %5787 = vmatpush1.msra.mxu0 %v5647
    %5788 = vmatprep.subr.mxu0 %v5650
    %5789 = vmatpush1.msra.mxu0 %v5649
    %5790 = vmatprep.subr.mxu0 %v5652
    %5791 = vmatpush1.msra.mxu0 %v5651
    %5792 = vmatprep.subr.mxu0 %v5654
    %5793 = vmatpush1.msra.mxu0 %v5653
    %5794 = vmatprep.subr.mxu0 %v5656
    %5795 = vmatpush1.msra.mxu0 %v5655
    %5796 = vmatprep.subr.mxu0 %v5658
    %5797 = vmatpush1.msra.mxu0 %v5657
    %5798 = vmatprep.subr.mxu0 %v5660
    %5799 = vmatpush1.msra.mxu0 %v5659
    %5800 = vmatprep.subr.mxu0 %v5662
    %5801 = vmatpush1.msra.mxu0 %v5661
    %5802 = vmatprep.subr.mxu0 %v5664
    %5803 = vmatpush1.msra.mxu0 %v5663
    %5804 = vmatprep.subr.mxu0 %v5666
    %5805 = vmatpush1.msra.mxu0 %v5665
    %5806 = vmatprep.subr.mxu0 %v5668
    %5807 = vmatpush1.msra.mxu0 %v5667
    %5808 = vmatprep.subr.mxu0 %v5670
    %5809 = vmatpush1.msra.mxu0 %v5669
    %5810 = vmatprep.mubr.f32.mxu0 %v5674
    %5811 = vmatmul.mubr.f32.gmra.mrb[0].mxu0 %v5673
    %v5812 = vpop.f32.mrb[0].mxu0
    %v5813 = vadd.f32 0.0, %v5812
    %v5814 = vpop.f32.mrb[0].mxu0
    %v5815 = vadd.f32 0.0, %v5814
    %5816 = vdwg.mxu0
    %v5817 = vmax.f32 %v5742, %v5813
    %v5818 = vmax.f32 %v5744, %v5815
    %v5820 = vlaneseq
    %v5821 = vshrl.u32 %v5820, 7
    %v5822 = vsub.s32 0, %v5821
    %v5823 = vrot.slane %v5671, %v5822
    %v5824 = vlaneseq
    %v5825 = vshrl.u32 %v5824, 7
    %v5826 = vsub.s32 1, %v5825
    %v5827 = vrot.slane %v5671, %v5826
    %v5830 = vadd.f32 %v5817, %v5823
    %v5831 = vadd.f32 %v5818, %v5827
    %v5832 = vmax.f32 %v5830, 0.0
    %v5833 = vmax.f32 %v5831, 0.0
    %v5834 = vld [vmem:[%s20] sm:$0x1]
    %v5835 = vld [vmem:[%s19] sm:$0x77]
    %v5837 = vcombine.high %v5835, %v5835
    %v5839 = vmul.f32 %v5832, %v5835
    %v5840 = vmul.f32 %v5833, %v5837
    %v5841 = vsel %vm355, %v5839, 0.0
    %v5842 = vsel %vm355, %v5840, 0.0
    %v5843 = vadd.f32 %v5841, %v5842
    %5844 = vadd.xlane.f32.xlu0 %v5843
    %v5845 = vpop.xlane.xlu0 %5844
    %v5846 = vsel %vm355, %v5845, 0.0
    %v5847 = vrot.slane %v5846, 4
    %v5848 = vadd.f32 %v5846, %v5847
    %v5849 = vrot.slane %v5848, 2
    %v5850 = vadd.f32 %v5848, %v5849
    %v5851 = vrot.slane %v5850, 1
    %v5852 = vadd.f32 %v5850, %v5851
    %v5853 = vsel %vm3043, %v5852, 0.0
    %v5854 = vadd.f32 %v5834, %v5853
    %v5855 = vld [vmem:[%s3046] sm:$0x77]
    %v5857 = vcombine.high %v5855, %v5855
    %v5859 = vmul.f32 %v5832, %v5855
    %v5860 = vmul.f32 %v5833, %v5857
    %v5861 = vsel %vm355, %v5859, 0.0
    %v5862 = vsel %vm355, %v5860, 0.0
    %v5863 = vadd.f32 %v5861, %v5862
    %5864 = vadd.xlane.f32.xlu0 %v5863
    %v5865 = vpop.xlane.xlu0 %5864
    %v5866 = vsel %vm355, %v5865, 0.0
    %v5867 = vrot.slane %v5866, 4
    %v5868 = vadd.f32 %v5866, %v5867
    %v5869 = vrot.slane %v5868, 2
    %v5870 = vadd.f32 %v5868, %v5869
    %v5871 = vrot.slane %v5870, 1
    %v5872 = vadd.f32 %v5870, %v5871
    %v5873 = vsel %vm3065, %v5872, 0.0
    %v5874 = vadd.f32 %v5854, %v5873
    %5875 = vst.msk [vmem:[#allocation25 + $0x1] sm:$0x1] %vm3068, %v5874
    // Predicated region
    $region130: #{tpu_custom_call.1} parent=1 // pred_check
      _
    $region131: #{tpu_custom_call.1} parent=1 // pred_check_branch
      %5877 = sbr.rel (0) target = $region133
    $region132: #{tpu_custom_call.1} parent=1 // pred_region
      %s5879 = ssub.s32 32, 32
      %5880 = vsyncadd [#allocation9], %s5879
      %s5882 = sshll.u32 [#allocation25], 4
      %s5883 = int_to_ptr.vmem [resolvable:$true] %s5882
      %5885 = dma.vmem_to_hbm [thread:$0]  %s5883, 32, %s21, [#allocation9]
    $region133: #{tpu_custom_call.1} parent=1 // pred_fallthru
      _
    // Predicated region
    $region134: #{tpu_custom_call.1} parent=1 // pred_check
      _
    $region135: #{tpu_custom_call.1} parent=1 // pred_check_branch
      %5887 = sbr.rel (0) target = $region137
    $region136: #{tpu_custom_call.1} parent=1 // pred_region
      %5888 = dma.done [#allocation9], 32
    $region137: #{tpu_custom_call.1} parent=1 // pred_fallthru
      _
    %5889 = vsyncpa [#allocation8], 1
    %5890 = vsyncpa [#allocation11], 1
    %5891 = vsyncpa [#allocation14], 1
    %5892 = vsyncpa [#allocation17], 1
    %5893 = vsyncpa [#allocation20], 1
    %5894 = vsyncpa [#allocation23], 1
    %5895 = vsyncpa [#allocation9], 1

</llo_original>
